<compile_context>
chip_gen: v6e
topology: v6e:2x2x1
jax: 0.10.0
libtpu: 0.0.40
codegen_flags: <defaults>
</compile_context>

<pallas_src>
import math

import jax
import jax.numpy as jnp
from jax.experimental import pallas as pl
from jax.experimental.pallas import tpu as pltpu

N_MODELS = 4            # 4 Convnet branches
BPS = 2                 # branches per grid step -> grid=(2,), one step per TC on v7x
C_IN, L_IN = 2, 63
K1, S1 = 3, 3
L1 = (L_IN - K1) // S1 + 1      # 21 conv output positions (kernel == stride == 3)
C1, C2, C3 = 5, 10, 20
CPAD = 20                       # conv channel dims padded to 20 -> uniform (20,20) matmuls
F_IN = C_IN * K1                # 6 conv1 input features per position (ci*3 + k)
F3 = L1 * C3                    # 420 == PyTorch Flatten size
FC1_OUT = 630
FC1_PAD = 640                   # 5*128 lane-dense fc1 hidden
FC2_OUT = 63
FC2_PAD = 128                   # lane-dense fc2 output, sliced back to 63 on host


# ---------------------------------------------------------------------------
# Fused kernel: one grid step = 2 branches; conv1/2/3 + fc1 + fc2 per branch.
# ---------------------------------------------------------------------------
def _make_kernel(np_):
    def kernel(x_ref, cw_ref, wfc1_ref, wfc2_ref, fcb_ref, out_ref):
        x = x_ref[...]                                     # (L1*np_, CPAD) f32, shared input
        for j in range(BPS):                               # 2 branches, unrolled
            # --- conv chain: three compact (CPAD, CPAD) channel-mixing matmuls + ReLU ---
            h = x
            for k in range(3):
                w = cw_ref[j, k]                           # (CPAD, CPAD) f32 compact weight
                b = cw_ref[j, 3, k:k + 1, :]               # (1, CPAD) conv bias (zero-padded)
                h = jnp.maximum(
                    jnp.dot(h, w, preferred_element_type=jnp.float32) + b, 0.0)
            # h: (L1*np_, CPAD); rows [l*np_, (l+1)*np_) hold conv position l for all samples.

            # --- fc1: channel-major Flatten folded into wfc1's per-position (c, j) blocks ---
            acc = jnp.zeros((np_, FC1_PAD), jnp.float32)
            for l in range(L1):
                hl = h[l * np_:(l + 1) * np_, :].astype(jnp.bfloat16)   # (np_, 20), aligned
                acc = acc + jnp.dot(hl, wfc1_ref[j, l],                 # (20, 640) bf16
                                    preferred_element_type=jnp.float32)
            h4 = jnp.maximum(acc + fcb_ref[j, :, 0:FC1_PAD], 0.0)       # (np_, 640)

            # Dropout(p=0.5): eval-mode identity.  TODO(synk): train-mode dropout not modeled.
            y = (jnp.dot(h4.astype(jnp.bfloat16), wfc2_ref[j],          # (640, 128) bf16
                         preferred_element_type=jnp.float32)
                 + fcb_ref[j, :, FC1_PAD:FC1_PAD + FC2_PAD])
            out_ref[j] = y.astype(out_ref.dtype)                        # lane-dense (np_, 128)
    return kernel


def network_forward(x, params):
    """x: (N, 2, 63) float32 (PyTorch NCL). Returns (4, N, 63) = torch.stack([x1..x4])."""
    n = x.shape[0]
    assert x.shape == (n, C_IN, L_IN)
    np_ = max(8, -(-n // 8) * 8)        # pad batch to a sublane multiple -> unmasked row tiles

    # Host glue: non-overlapping conv1 patches, rows ordered (position, sample),
    # features ordered ci*3+k, channels zero-padded to CPAD.
    xr = x.reshape(n, C_IN, L1, K1).transpose(2, 0, 1, 3).reshape(L1, n, F_IN)
    xp = jnp.zeros((L1, np_, CPAD), jnp.float32).at[:, :n, :F_IN].set(xr)
    xp = xp.reshape(L1 * np_, CPAD)

    out = pl.pallas_call(
        _make_kernel(np_),
        out_shape=jax.ShapeDtypeStruct((N_MODELS, np_, FC2_PAD), jnp.float32),
        grid_spec=pltpu.PrefetchScalarGridSpec(
            num_scalar_prefetch=0,
            grid=(N_MODELS // BPS,),
            in_specs=[
                pl.BlockSpec((L1 * np_, CPAD), lambda s: (0, 0)),            # shared input
                pl.BlockSpec((BPS, 4, CPAD, CPAD), lambda s: (s, 0, 0, 0)),  # conv w + b
                pl.BlockSpec((BPS, L1, C3, FC1_PAD), lambda s: (s, 0, 0, 0)),  # wfc1 (bf16)
                pl.BlockSpec((BPS, FC1_PAD, FC2_PAD), lambda s: (s, 0, 0)),    # wfc2 (bf16)
                pl.BlockSpec((BPS, 1, FC1_PAD + FC2_PAD), lambda s: (s, 0, 0)),  # fc biases
            ],
            out_specs=pl.BlockSpec((BPS, np_, FC2_PAD), lambda s: (s, 0, 0)),
        ),
        compiler_params=pltpu.CompilerParams(dimension_semantics=("parallel",)),
    )(xp, params["cw"], params["wfc1"], params["wfc2"], params["fcb"])
    return out[:, :n, :FC2_OUT]


# ---------------------------------------------------------------------------
# Parameter init: PyTorch-shaped weights, re-laid-out once for the kernel.
# ---------------------------------------------------------------------------
def init_params(key):
    def uinit(k, shape, fan_in):
        bnd = 1.0 / math.sqrt(fan_in)
        return jax.random.uniform(k, shape, jnp.float32, -bnd, bnd)

    names_pt = ["w1", "b1", "w2", "b2", "w3", "b3", "wfc1", "bfc1", "wfc2", "bfc2"]
    pt = {k: [] for k in names_pt}
    cw_l, wfc1_l, wfc2_l, fcb_l = [], [], [], []

    for mk in jax.random.split(key, N_MODELS):
        ks = jax.random.split(mk, 10)
        w1_pt = uinit(ks[0], (C1, C_IN, K1), C_IN * K1)       # Conv1d(2,5,3,stride=3)
        b1_pt = uinit(ks[1], (C1,), C_IN * K1)
        w2_pt = uinit(ks[2], (C2, C1, 1), C1)                 # Conv1d(5,10,1)
        b2_pt = uinit(ks[3], (C2,), C1)
        w3_pt = uinit(ks[4], (C3, C2, 1), C2)                 # Conv1d(10,20,1)
        b3_pt = uinit(ks[5], (C3,), C2)
        wfc1_pt = uinit(ks[6], (FC1_OUT, F3), F3)             # Linear(420,630)
        bfc1_pt = uinit(ks[7], (FC1_OUT,), F3)
        wfc2_pt = uinit(ks[8], (FC2_OUT, FC1_OUT), FC1_OUT)   # Linear(630,63)
        bfc2_pt = uinit(ks[9], (FC2_OUT,), FC1_OUT)

        for nme, val in zip(names_pt, [w1_pt, b1_pt, w2_pt, b2_pt, w3_pt, b3_pt,
                                       wfc1_pt, bfc1_pt, wfc2_pt, bfc2_pt]):
            pt[nme].append(val)

        # Compact per-position conv matrices, zero-padded to (CPAD, CPAD); slot 3 = biases.
        w1c = w1_pt.reshape(C1, C_IN * K1).T                  # (6, 5), row = ci*3+k
        w2c = w2_pt.reshape(C2, C1).T                         # (5, 10)
        w3c = w3_pt.reshape(C3, C2).T                         # (10, 20)
        cw = jnp.zeros((4, CPAD, CPAD), jnp.float32)
        cw = cw.at[0, :C_IN * K1, :C1].set(w1c)
        cw = cw.at[1, :C1, :C2].set(w2c)
        cw = cw.at[2, :C2, :C3].set(w3c)
        cw = cw.at[3, 0, :C1].set(b1_pt)
        cw = cw.at[3, 1, :C2].set(b2_pt)
        cw = cw.at[3, 2, :C3].set(b3_pt)
        cw_l.append(cw)

        # fc1: per-position (c, j) blocks; row (l, c) = PyTorch flatten feature c*21 + l.
        wfc1_r = wfc1_pt.T.reshape(C3, L1, FC1_OUT).transpose(1, 0, 2)     # (21, 20, 630)
        wfc1_l.append(jnp.pad(
            wfc1_r, ((0, 0), (0, 0), (0, FC1_PAD - FC1_OUT))).astype(jnp.bfloat16))

        # fc2: (640, 128) bf16, zero row/col padding -> lane-dense output.
        wfc2_l.append(jnp.pad(
            wfc2_pt.T, ((0, FC1_PAD - FC1_OUT), (0, FC2_PAD - FC2_OUT))).astype(jnp.bfloat16))

        # fc biases packed into one f32 buffer: [0:630]=bfc1, [640:703]=bfc2 (rest zero).
        fcb = jnp.zeros((1, FC1_PAD + FC2_PAD), jnp.float32)
        fcb = fcb.at[0, :FC1_OUT].set(bfc1_pt)
        fcb = fcb.at[0, FC1_PAD:FC1_PAD + FC2_OUT].set(bfc2_pt)
        fcb_l.append(fcb)

    params = {"cw": jnp.stack(cw_l), "wfc1": jnp.stack(wfc1_l),
              "wfc2": jnp.stack(wfc2_l), "fcb": jnp.stack(fcb_l)}
    return params, {k: jnp.stack(v) for k, v in pt.items()}


# ---------------------------------------------------------------------------
# Pure-JAX reference (PyTorch semantics, eval mode, same bf16 FC weight precision).
# ---------------------------------------------------------------------------
def reference_forward(x, pt):
    n = x.shape[0]
    hp = jax.lax.Precision.HIGHEST
    xp = x.reshape(n, C_IN, L1, K1)
    outs = []
    for m in range(N_MODELS):
        h1 = jax.nn.relu(jnp.einsum("nclk,ock->nol", xp, pt["w1"][m], precision=hp)
                         + pt["b1"][m][None, :, None])
        h2 = jax.nn.relu(jnp.einsum("ncl,oc->nol", h1, pt["w2"][m][:, :, 0], precision=hp)
                         + pt["b2"][m][None, :, None])
        h3 = jax.nn.relu(jnp.einsum("ncl,oc->nol", h2, pt["w3"][m][:, :, 0], precision=hp)
                         + pt["b3"][m][None, :, None])
        flat = h3.reshape(n, C3 * L1)                          # channel-major Flatten
        h4 = jax.nn.relu(
            jnp.dot(flat.astype(jnp.bfloat16), pt["wfc1"][m].T.astype(jnp.bfloat16),
                    preferred_element_type=jnp.float32) + pt["bfc1"][m])
        y = jnp.dot(h4.astype(jnp.bfloat16), pt["wfc2"][m].T.astype(jnp.bfloat16),
                    preferred_element_type=jnp.float32) + pt["bfc2"][m]
        outs.append(y)
    return jnp.stack(outs)                                     # (4, N, 63)


if __name__ == "__main__":
    key = jax.random.PRNGKey(0)
    pk, xk = jax.random.split(key)
    params, pt_params = init_params(pk)
    x = jax.random.normal(xk, (2, C_IN, L_IN), jnp.float32)    # N=2, C=2, L=63

    out = jax.block_until_ready(jax.jit(network_forward)(x, params))
    assert out.shape == (N_MODELS, 2, FC2_OUT), out.shape

    ref = jax.block_until_ready(jax.jit(reference_forward)(x, pt_params))
    max_err = float(jnp.max(jnp.abs(out - ref)))
    assert max_err < 2e-2, f"max abs err {max_err}"
    print("KERNEL_OK")
</pallas_src>

<mosaic_0001>
module attributes {stable_mosaic.version = 11 : i64} {
  func.func @kernel(%arg0: i32, %arg1: memref<168x20xf32, #tpu.memory_space<vmem>>, %arg2: memref<2x4x20x20xf32, #tpu.memory_space<vmem>>, %arg3: memref<2x21x20x640xbf16, #tpu.memory_space<vmem>>, %arg4: memref<2x640x128xbf16, #tpu.memory_space<vmem>>, %arg5: memref<2x1x768xf32, #tpu.memory_space<vmem>>, %arg6: memref<2x8x128xf32, #tpu.memory_space<vmem>>) attributes {dimension_semantics = [#tpu.dimension_semantics<parallel>], iteration_bounds = array<i64: 2>, scalar_prefetch = 0 : i64, scratch_operands = 0 : i64, tpu.core_type = #tpu.core_type<tc>, window_params = [{pipeline_mode = #tpu.pipeline_mode<synchronous>, transform_indices = @transform_0, window_bounds = array<i64: 168, 20>}, {transform_indices = @transform_1, window_bounds = array<i64: 2, 4, 20, 20>}, {transform_indices = @transform_2, window_bounds = array<i64: 2, 21, 20, 640>}, {transform_indices = @transform_3, window_bounds = array<i64: 2, 640, 128>}, {transform_indices = @transform_4, window_bounds = array<i64: 2, 1, 768>}, {transform_indices = @transform_5, window_bounds = array<i64: 2, 8, 128>}]} {
    %c0 = arith.constant 0 : index
    %c0_0 = arith.constant 0 : index
    %0 = vector.load %arg1[%c0, %c0_0] : memref<168x20xf32, #tpu.memory_space<vmem>>, vector<168x20xf32>
    %c0_1 = arith.constant 0 : index
    %c0_2 = arith.constant 0 : index
    %c0_3 = arith.constant 0 : index
    %c0_4 = arith.constant 0 : index
    %1 = vector.load %arg2[%c0_1, %c0_2, %c0_3, %c0_4] : memref<2x4x20x20xf32, #tpu.memory_space<vmem>>, vector<1x1x20x20xf32>
    %2 = vector.shape_cast %1 : vector<1x1x20x20xf32> to vector<20x20xf32>
    %c0_5 = arith.constant 0 : index
    %c3 = arith.constant 3 : index
    %c0_6 = arith.constant 0 : index
    %c0_7 = arith.constant 0 : index
    %3 = vector.load %arg2[%c0_5, %c3, %c0_6, %c0_7] : memref<2x4x20x20xf32, #tpu.memory_space<vmem>>, vector<1x1x1x20xf32>
    %4 = vector.shape_cast %3 : vector<1x1x1x20xf32> to vector<1x20xf32>
    %cst = arith.constant dense<0.000000e+00> : vector<168x20xf32>
    %5 = tpu.matmul %0, %2, %cst {dimension_numbers = #tpu.dot_dimension_numbers<[1], [0], [0], [1], [0, 0, 1, 1], [], []>} : vector<168x20xf32>, vector<20x20xf32>, vector<168x20xf32> -> vector<168x20xf32>
    %6 = vector.broadcast %4 : vector<1x20xf32> to vector<168x20xf32>
    %7 = arith.addf %5, %6 : vector<168x20xf32>
    %cst_8 = arith.constant 0.000000e+00 : f32
    %8 = vector.broadcast %cst_8 : f32 to vector<168x20xf32>
    %9 = arith.maximumf %7, %8 : vector<168x20xf32>
    %c0_9 = arith.constant 0 : index
    %c1 = arith.constant 1 : index
    %c0_10 = arith.constant 0 : index
    %c0_11 = arith.constant 0 : index
    %10 = vector.load %arg2[%c0_9, %c1, %c0_10, %c0_11] : memref<2x4x20x20xf32, #tpu.memory_space<vmem>>, vector<1x1x20x20xf32>
    %11 = vector.shape_cast %10 : vector<1x1x20x20xf32> to vector<20x20xf32>
    %c0_12 = arith.constant 0 : index
    %c3_13 = arith.constant 3 : index
    %c1_14 = arith.constant 1 : index
    %c0_15 = arith.constant 0 : index
    %12 = vector.load %arg2[%c0_12, %c3_13, %c1_14, %c0_15] : memref<2x4x20x20xf32, #tpu.memory_space<vmem>>, vector<1x1x1x20xf32>
    %13 = vector.shape_cast %12 : vector<1x1x1x20xf32> to vector<1x20xf32>
    %cst_16 = arith.constant dense<0.000000e+00> : vector<168x20xf32>
    %14 = tpu.matmul %9, %11, %cst_16 {dimension_numbers = #tpu.dot_dimension_numbers<[1], [0], [0], [1], [0, 0, 1, 1], [], []>} : vector<168x20xf32>, vector<20x20xf32>, vector<168x20xf32> -> vector<168x20xf32>
    %15 = vector.broadcast %13 : vector<1x20xf32> to vector<168x20xf32>
    %16 = arith.addf %14, %15 : vector<168x20xf32>
    %cst_17 = arith.constant 0.000000e+00 : f32
    %17 = vector.broadcast %cst_17 : f32 to vector<168x20xf32>
    %18 = arith.maximumf %16, %17 : vector<168x20xf32>
    %c0_18 = arith.constant 0 : index
    %c2 = arith.constant 2 : index
    %c0_19 = arith.constant 0 : index
    %c0_20 = arith.constant 0 : index
    %19 = vector.load %arg2[%c0_18, %c2, %c0_19, %c0_20] : memref<2x4x20x20xf32, #tpu.memory_space<vmem>>, vector<1x1x20x20xf32>
    %20 = vector.shape_cast %19 : vector<1x1x20x20xf32> to vector<20x20xf32>
    %c0_21 = arith.constant 0 : index
    %c3_22 = arith.constant 3 : index
    %c2_23 = arith.constant 2 : index
    %c0_24 = arith.constant 0 : index
    %21 = vector.load %arg2[%c0_21, %c3_22, %c2_23, %c0_24] : memref<2x4x20x20xf32, #tpu.memory_space<vmem>>, vector<1x1x1x20xf32>
    %22 = vector.shape_cast %21 : vector<1x1x1x20xf32> to vector<1x20xf32>
    %cst_25 = arith.constant dense<0.000000e+00> : vector<168x20xf32>
    %23 = tpu.matmul %18, %20, %cst_25 {dimension_numbers = #tpu.dot_dimension_numbers<[1], [0], [0], [1], [0, 0, 1, 1], [], []>} : vector<168x20xf32>, vector<20x20xf32>, vector<168x20xf32> -> vector<168x20xf32>
    %24 = vector.broadcast %22 : vector<1x20xf32> to vector<168x20xf32>
    %25 = arith.addf %23, %24 : vector<168x20xf32>
    %cst_26 = arith.constant 0.000000e+00 : f32
    %26 = vector.broadcast %cst_26 : f32 to vector<168x20xf32>
    %27 = arith.maximumf %25, %26 : vector<168x20xf32>
    %cst_27 = arith.constant 0.000000e+00 : f32
    %28 = vector.broadcast %cst_27 : f32 to vector<8x640xf32>
    %29 = vector.extract_strided_slice %27 {offsets = [0, 0], sizes = [8, 20], strides = [1, 1]} : vector<168x20xf32> to vector<8x20xf32>
    %30 = arith.truncf %29 : vector<8x20xf32> to vector<8x20xbf16>
    %c0_28 = arith.constant 0 : index
    %c0_29 = arith.constant 0 : index
    %c0_30 = arith.constant 0 : index
    %c0_31 = arith.constant 0 : index
    %31 = vector.load %arg3[%c0_28, %c0_29, %c0_30, %c0_31] : memref<2x21x20x640xbf16, #tpu.memory_space<vmem>>, vector<1x1x20x640xbf16>
    %32 = vector.shape_cast %31 : vector<1x1x20x640xbf16> to vector<20x640xbf16>
    %cst_32 = arith.constant dense<0.000000e+00> : vector<8x640xf32>
    %33 = tpu.matmul %30, %32, %cst_32 {dimension_numbers = #tpu.dot_dimension_numbers<[1], [0], [0], [1], [0, 0, 1, 1], [], []>} : vector<8x20xbf16>, vector<20x640xbf16>, vector<8x640xf32> -> vector<8x640xf32>
    %34 = arith.addf %28, %33 : vector<8x640xf32>
    %35 = vector.extract_strided_slice %27 {offsets = [8, 0], sizes = [8, 20], strides = [1, 1]} : vector<168x20xf32> to vector<8x20xf32>
    %36 = arith.truncf %35 : vector<8x20xf32> to vector<8x20xbf16>
    %c0_33 = arith.constant 0 : index
    %c1_34 = arith.constant 1 : index
    %c0_35 = arith.constant 0 : index
    %c0_36 = arith.constant 0 : index
    %37 = vector.load %arg3[%c0_33, %c1_34, %c0_35, %c0_36] : memref<2x21x20x640xbf16, #tpu.memory_space<vmem>>, vector<1x1x20x640xbf16>
    %38 = vector.shape_cast %37 : vector<1x1x20x640xbf16> to vector<20x640xbf16>
    %cst_37 = arith.constant dense<0.000000e+00> : vector<8x640xf32>
    %39 = tpu.matmul %36, %38, %cst_37 {dimension_numbers = #tpu.dot_dimension_numbers<[1], [0], [0], [1], [0, 0, 1, 1], [], []>} : vector<8x20xbf16>, vector<20x640xbf16>, vector<8x640xf32> -> vector<8x640xf32>
    %40 = arith.addf %34, %39 : vector<8x640xf32>
    %41 = vector.extract_strided_slice %27 {offsets = [16, 0], sizes = [8, 20], strides = [1, 1]} : vector<168x20xf32> to vector<8x20xf32>
    %42 = arith.truncf %41 : vector<8x20xf32> to vector<8x20xbf16>
    %c0_38 = arith.constant 0 : index
    %c2_39 = arith.constant 2 : index
    %c0_40 = arith.constant 0 : index
    %c0_41 = arith.constant 0 : index
    %43 = vector.load %arg3[%c0_38, %c2_39, %c0_40, %c0_41] : memref<2x21x20x640xbf16, #tpu.memory_space<vmem>>, vector<1x1x20x640xbf16>
    %44 = vector.shape_cast %43 : vector<1x1x20x640xbf16> to vector<20x640xbf16>
    %cst_42 = arith.constant dense<0.000000e+00> : vector<8x640xf32>
    %45 = tpu.matmul %42, %44, %cst_42 {dimension_numbers = #tpu.dot_dimension_numbers<[1], [0], [0], [1], [0, 0, 1, 1], [], []>} : vector<8x20xbf16>, vector<20x640xbf16>, vector<8x640xf32> -> vector<8x640xf32>
    %46 = arith.addf %40, %45 : vector<8x640xf32>
    %47 = vector.extract_strided_slice %27 {offsets = [24, 0], sizes = [8, 20], strides = [1, 1]} : vector<168x20xf32> to vector<8x20xf32>
    %48 = arith.truncf %47 : vector<8x20xf32> to vector<8x20xbf16>
    %c0_43 = arith.constant 0 : index
    %c3_44 = arith.constant 3 : index
    %c0_45 = arith.constant 0 : index
    %c0_46 = arith.constant 0 : index
    %49 = vector.load %arg3[%c0_43, %c3_44, %c0_45, %c0_46] : memref<2x21x20x640xbf16, #tpu.memory_space<vmem>>, vector<1x1x20x640xbf16>
    %50 = vector.shape_cast %49 : vector<1x1x20x640xbf16> to vector<20x640xbf16>
    %cst_47 = arith.constant dense<0.000000e+00> : vector<8x640xf32>
    %51 = tpu.matmul %48, %50, %cst_47 {dimension_numbers = #tpu.dot_dimension_numbers<[1], [0], [0], [1], [0, 0, 1, 1], [], []>} : vector<8x20xbf16>, vector<20x640xbf16>, vector<8x640xf32> -> vector<8x640xf32>
    %52 = arith.addf %46, %51 : vector<8x640xf32>
    %53 = vector.extract_strided_slice %27 {offsets = [32, 0], sizes = [8, 20], strides = [1, 1]} : vector<168x20xf32> to vector<8x20xf32>
    %54 = arith.truncf %53 : vector<8x20xf32> to vector<8x20xbf16>
    %c0_48 = arith.constant 0 : index
    %c4 = arith.constant 4 : index
    %c0_49 = arith.constant 0 : index
    %c0_50 = arith.constant 0 : index
    %55 = vector.load %arg3[%c0_48, %c4, %c0_49, %c0_50] : memref<2x21x20x640xbf16, #tpu.memory_space<vmem>>, vector<1x1x20x640xbf16>
    %56 = vector.shape_cast %55 : vector<1x1x20x640xbf16> to vector<20x640xbf16>
    %cst_51 = arith.constant dense<0.000000e+00> : vector<8x640xf32>
    %57 = tpu.matmul %54, %56, %cst_51 {dimension_numbers = #tpu.dot_dimension_numbers<[1], [0], [0], [1], [0, 0, 1, 1], [], []>} : vector<8x20xbf16>, vector<20x640xbf16>, vector<8x640xf32> -> vector<8x640xf32>
    %58 = arith.addf %52, %57 : vector<8x640xf32>
    %59 = vector.extract_strided_slice %27 {offsets = [40, 0], sizes = [8, 20], strides = [1, 1]} : vector<168x20xf32> to vector<8x20xf32>
    %60 = arith.truncf %59 : vector<8x20xf32> to vector<8x20xbf16>
    %c0_52 = arith.constant 0 : index
    %c5 = arith.constant 5 : index
    %c0_53 = arith.constant 0 : index
    %c0_54 = arith.constant 0 : index
    %61 = vector.load %arg3[%c0_52, %c5, %c0_53, %c0_54] : memref<2x21x20x640xbf16, #tpu.memory_space<vmem>>, vector<1x1x20x640xbf16>
    %62 = vector.shape_cast %61 : vector<1x1x20x640xbf16> to vector<20x640xbf16>
    %cst_55 = arith.constant dense<0.000000e+00> : vector<8x640xf32>
    %63 = tpu.matmul %60, %62, %cst_55 {dimension_numbers = #tpu.dot_dimension_numbers<[1], [0], [0], [1], [0, 0, 1, 1], [], []>} : vector<8x20xbf16>, vector<20x640xbf16>, vector<8x640xf32> -> vector<8x640xf32>
    %64 = arith.addf %58, %63 : vector<8x640xf32>
    %65 = vector.extract_strided_slice %27 {offsets = [48, 0], sizes = [8, 20], strides = [1, 1]} : vector<168x20xf32> to vector<8x20xf32>
    %66 = arith.truncf %65 : vector<8x20xf32> to vector<8x20xbf16>
    %c0_56 = arith.constant 0 : index
    %c6 = arith.constant 6 : index
    %c0_57 = arith.constant 0 : index
    %c0_58 = arith.constant 0 : index
    %67 = vector.load %arg3[%c0_56, %c6, %c0_57, %c0_58] : memref<2x21x20x640xbf16, #tpu.memory_space<vmem>>, vector<1x1x20x640xbf16>
    %68 = vector.shape_cast %67 : vector<1x1x20x640xbf16> to vector<20x640xbf16>
    %cst_59 = arith.constant dense<0.000000e+00> : vector<8x640xf32>
    %69 = tpu.matmul %66, %68, %cst_59 {dimension_numbers = #tpu.dot_dimension_numbers<[1], [0], [0], [1], [0, 0, 1, 1], [], []>} : vector<8x20xbf16>, vector<20x640xbf16>, vector<8x640xf32> -> vector<8x640xf32>
    %70 = arith.addf %64, %69 : vector<8x640xf32>
    %71 = vector.extract_strided_slice %27 {offsets = [56, 0], sizes = [8, 20], strides = [1, 1]} : vector<168x20xf32> to vector<8x20xf32>
    %72 = arith.truncf %71 : vector<8x20xf32> to vector<8x20xbf16>
    %c0_60 = arith.constant 0 : index
    %c7 = arith.constant 7 : index
    %c0_61 = arith.constant 0 : index
    %c0_62 = arith.constant 0 : index
    %73 = vector.load %arg3[%c0_60, %c7, %c0_61, %c0_62] : memref<2x21x20x640xbf16, #tpu.memory_space<vmem>>, vector<1x1x20x640xbf16>
    %74 = vector.shape_cast %73 : vector<1x1x20x640xbf16> to vector<20x640xbf16>
    %cst_63 = arith.constant dense<0.000000e+00> : vector<8x640xf32>
    %75 = tpu.matmul %72, %74, %cst_63 {dimension_numbers = #tpu.dot_dimension_numbers<[1], [0], [0], [1], [0, 0, 1, 1], [], []>} : vector<8x20xbf16>, vector<20x640xbf16>, vector<8x640xf32> -> vector<8x640xf32>
    %76 = arith.addf %70, %75 : vector<8x640xf32>
    %77 = vector.extract_strided_slice %27 {offsets = [64, 0], sizes = [8, 20], strides = [1, 1]} : vector<168x20xf32> to vector<8x20xf32>
    %78 = arith.truncf %77 : vector<8x20xf32> to vector<8x20xbf16>
    %c0_64 = arith.constant 0 : index
    %c8 = arith.constant 8 : index
    %c0_65 = arith.constant 0 : index
    %c0_66 = arith.constant 0 : index
    %79 = vector.load %arg3[%c0_64, %c8, %c0_65, %c0_66] : memref<2x21x20x640xbf16, #tpu.memory_space<vmem>>, vector<1x1x20x640xbf16>
    %80 = vector.shape_cast %79 : vector<1x1x20x640xbf16> to vector<20x640xbf16>
    %cst_67 = arith.constant dense<0.000000e+00> : vector<8x640xf32>
    %81 = tpu.matmul %78, %80, %cst_67 {dimension_numbers = #tpu.dot_dimension_numbers<[1], [0], [0], [1], [0, 0, 1, 1], [], []>} : vector<8x20xbf16>, vector<20x640xbf16>, vector<8x640xf32> -> vector<8x640xf32>
    %82 = arith.addf %76, %81 : vector<8x640xf32>
    %83 = vector.extract_strided_slice %27 {offsets = [72, 0], sizes = [8, 20], strides = [1, 1]} : vector<168x20xf32> to vector<8x20xf32>
    %84 = arith.truncf %83 : vector<8x20xf32> to vector<8x20xbf16>
    %c0_68 = arith.constant 0 : index
    %c9 = arith.constant 9 : index
    %c0_69 = arith.constant 0 : index
    %c0_70 = arith.constant 0 : index
    %85 = vector.load %arg3[%c0_68, %c9, %c0_69, %c0_70] : memref<2x21x20x640xbf16, #tpu.memory_space<vmem>>, vector<1x1x20x640xbf16>
    %86 = vector.shape_cast %85 : vector<1x1x20x640xbf16> to vector<20x640xbf16>
    %cst_71 = arith.constant dense<0.000000e+00> : vector<8x640xf32>
    %87 = tpu.matmul %84, %86, %cst_71 {dimension_numbers = #tpu.dot_dimension_numbers<[1], [0], [0], [1], [0, 0, 1, 1], [], []>} : vector<8x20xbf16>, vector<20x640xbf16>, vector<8x640xf32> -> vector<8x640xf32>
    %88 = arith.addf %82, %87 : vector<8x640xf32>
    %89 = vector.extract_strided_slice %27 {offsets = [80, 0], sizes = [8, 20], strides = [1, 1]} : vector<168x20xf32> to vector<8x20xf32>
    %90 = arith.truncf %89 : vector<8x20xf32> to vector<8x20xbf16>
    %c0_72 = arith.constant 0 : index
    %c10 = arith.constant 10 : index
    %c0_73 = arith.constant 0 : index
    %c0_74 = arith.constant 0 : index
    %91 = vector.load %arg3[%c0_72, %c10, %c0_73, %c0_74] : memref<2x21x20x640xbf16, #tpu.memory_space<vmem>>, vector<1x1x20x640xbf16>
    %92 = vector.shape_cast %91 : vector<1x1x20x640xbf16> to vector<20x640xbf16>
    %cst_75 = arith.constant dense<0.000000e+00> : vector<8x640xf32>
    %93 = tpu.matmul %90, %92, %cst_75 {dimension_numbers = #tpu.dot_dimension_numbers<[1], [0], [0], [1], [0, 0, 1, 1], [], []>} : vector<8x20xbf16>, vector<20x640xbf16>, vector<8x640xf32> -> vector<8x640xf32>
    %94 = arith.addf %88, %93 : vector<8x640xf32>
    %95 = vector.extract_strided_slice %27 {offsets = [88, 0], sizes = [8, 20], strides = [1, 1]} : vector<168x20xf32> to vector<8x20xf32>
    %96 = arith.truncf %95 : vector<8x20xf32> to vector<8x20xbf16>
    %c0_76 = arith.constant 0 : index
    %c11 = arith.constant 11 : index
    %c0_77 = arith.constant 0 : index
    %c0_78 = arith.constant 0 : index
    %97 = vector.load %arg3[%c0_76, %c11, %c0_77, %c0_78] : memref<2x21x20x640xbf16, #tpu.memory_space<vmem>>, vector<1x1x20x640xbf16>
    %98 = vector.shape_cast %97 : vector<1x1x20x640xbf16> to vector<20x640xbf16>
    %cst_79 = arith.constant dense<0.000000e+00> : vector<8x640xf32>
    %99 = tpu.matmul %96, %98, %cst_79 {dimension_numbers = #tpu.dot_dimension_numbers<[1], [0], [0], [1], [0, 0, 1, 1], [], []>} : vector<8x20xbf16>, vector<20x640xbf16>, vector<8x640xf32> -> vector<8x640xf32>
    %100 = arith.addf %94, %99 : vector<8x640xf32>
    %101 = vector.extract_strided_slice %27 {offsets = [96, 0], sizes = [8, 20], strides = [1, 1]} : vector<168x20xf32> to vector<8x20xf32>
    %102 = arith.truncf %101 : vector<8x20xf32> to vector<8x20xbf16>
    %c0_80 = arith.constant 0 : index
    %c12 = arith.constant 12 : index
    %c0_81 = arith.constant 0 : index
    %c0_82 = arith.constant 0 : index
    %103 = vector.load %arg3[%c0_80, %c12, %c0_81, %c0_82] : memref<2x21x20x640xbf16, #tpu.memory_space<vmem>>, vector<1x1x20x640xbf16>
    %104 = vector.shape_cast %103 : vector<1x1x20x640xbf16> to vector<20x640xbf16>
    %cst_83 = arith.constant dense<0.000000e+00> : vector<8x640xf32>
    %105 = tpu.matmul %102, %104, %cst_83 {dimension_numbers = #tpu.dot_dimension_numbers<[1], [0], [0], [1], [0, 0, 1, 1], [], []>} : vector<8x20xbf16>, vector<20x640xbf16>, vector<8x640xf32> -> vector<8x640xf32>
    %106 = arith.addf %100, %105 : vector<8x640xf32>
    %107 = vector.extract_strided_slice %27 {offsets = [104, 0], sizes = [8, 20], strides = [1, 1]} : vector<168x20xf32> to vector<8x20xf32>
    %108 = arith.truncf %107 : vector<8x20xf32> to vector<8x20xbf16>
    %c0_84 = arith.constant 0 : index
    %c13 = arith.constant 13 : index
    %c0_85 = arith.constant 0 : index
    %c0_86 = arith.constant 0 : index
    %109 = vector.load %arg3[%c0_84, %c13, %c0_85, %c0_86] : memref<2x21x20x640xbf16, #tpu.memory_space<vmem>>, vector<1x1x20x640xbf16>
    %110 = vector.shape_cast %109 : vector<1x1x20x640xbf16> to vector<20x640xbf16>
    %cst_87 = arith.constant dense<0.000000e+00> : vector<8x640xf32>
    %111 = tpu.matmul %108, %110, %cst_87 {dimension_numbers = #tpu.dot_dimension_numbers<[1], [0], [0], [1], [0, 0, 1, 1], [], []>} : vector<8x20xbf16>, vector<20x640xbf16>, vector<8x640xf32> -> vector<8x640xf32>
    %112 = arith.addf %106, %111 : vector<8x640xf32>
    %113 = vector.extract_strided_slice %27 {offsets = [112, 0], sizes = [8, 20], strides = [1, 1]} : vector<168x20xf32> to vector<8x20xf32>
    %114 = arith.truncf %113 : vector<8x20xf32> to vector<8x20xbf16>
    %c0_88 = arith.constant 0 : index
    %c14 = arith.constant 14 : index
    %c0_89 = arith.constant 0 : index
    %c0_90 = arith.constant 0 : index
    %115 = vector.load %arg3[%c0_88, %c14, %c0_89, %c0_90] : memref<2x21x20x640xbf16, #tpu.memory_space<vmem>>, vector<1x1x20x640xbf16>
    %116 = vector.shape_cast %115 : vector<1x1x20x640xbf16> to vector<20x640xbf16>
    %cst_91 = arith.constant dense<0.000000e+00> : vector<8x640xf32>
    %117 = tpu.matmul %114, %116, %cst_91 {dimension_numbers = #tpu.dot_dimension_numbers<[1], [0], [0], [1], [0, 0, 1, 1], [], []>} : vector<8x20xbf16>, vector<20x640xbf16>, vector<8x640xf32> -> vector<8x640xf32>
    %118 = arith.addf %112, %117 : vector<8x640xf32>
    %119 = vector.extract_strided_slice %27 {offsets = [120, 0], sizes = [8, 20], strides = [1, 1]} : vector<168x20xf32> to vector<8x20xf32>
    %120 = arith.truncf %119 : vector<8x20xf32> to vector<8x20xbf16>
    %c0_92 = arith.constant 0 : index
    %c15 = arith.constant 15 : index
    %c0_93 = arith.constant 0 : index
    %c0_94 = arith.constant 0 : index
    %121 = vector.load %arg3[%c0_92, %c15, %c0_93, %c0_94] : memref<2x21x20x640xbf16, #tpu.memory_space<vmem>>, vector<1x1x20x640xbf16>
    %122 = vector.shape_cast %121 : vector<1x1x20x640xbf16> to vector<20x640xbf16>
    %cst_95 = arith.constant dense<0.000000e+00> : vector<8x640xf32>
    %123 = tpu.matmul %120, %122, %cst_95 {dimension_numbers = #tpu.dot_dimension_numbers<[1], [0], [0], [1], [0, 0, 1, 1], [], []>} : vector<8x20xbf16>, vector<20x640xbf16>, vector<8x640xf32> -> vector<8x640xf32>
    %124 = arith.addf %118, %123 : vector<8x640xf32>
    %125 = vector.extract_strided_slice %27 {offsets = [128, 0], sizes = [8, 20], strides = [1, 1]} : vector<168x20xf32> to vector<8x20xf32>
    %126 = arith.truncf %125 : vector<8x20xf32> to vector<8x20xbf16>
    %c0_96 = arith.constant 0 : index
    %c16 = arith.constant 16 : index
    %c0_97 = arith.constant 0 : index
    %c0_98 = arith.constant 0 : index
    %127 = vector.load %arg3[%c0_96, %c16, %c0_97, %c0_98] : memref<2x21x20x640xbf16, #tpu.memory_space<vmem>>, vector<1x1x20x640xbf16>
    %128 = vector.shape_cast %127 : vector<1x1x20x640xbf16> to vector<20x640xbf16>
    %cst_99 = arith.constant dense<0.000000e+00> : vector<8x640xf32>
    %129 = tpu.matmul %126, %128, %cst_99 {dimension_numbers = #tpu.dot_dimension_numbers<[1], [0], [0], [1], [0, 0, 1, 1], [], []>} : vector<8x20xbf16>, vector<20x640xbf16>, vector<8x640xf32> -> vector<8x640xf32>
    %130 = arith.addf %124, %129 : vector<8x640xf32>
    %131 = vector.extract_strided_slice %27 {offsets = [136, 0], sizes = [8, 20], strides = [1, 1]} : vector<168x20xf32> to vector<8x20xf32>
    %132 = arith.truncf %131 : vector<8x20xf32> to vector<8x20xbf16>
    %c0_100 = arith.constant 0 : index
    %c17 = arith.constant 17 : index
    %c0_101 = arith.constant 0 : index
    %c0_102 = arith.constant 0 : index
    %133 = vector.load %arg3[%c0_100, %c17, %c0_101, %c0_102] : memref<2x21x20x640xbf16, #tpu.memory_space<vmem>>, vector<1x1x20x640xbf16>
    %134 = vector.shape_cast %133 : vector<1x1x20x640xbf16> to vector<20x640xbf16>
    %cst_103 = arith.constant dense<0.000000e+00> : vector<8x640xf32>
    %135 = tpu.matmul %132, %134, %cst_103 {dimension_numbers = #tpu.dot_dimension_numbers<[1], [0], [0], [1], [0, 0, 1, 1], [], []>} : vector<8x20xbf16>, vector<20x640xbf16>, vector<8x640xf32> -> vector<8x640xf32>
    %136 = arith.addf %130, %135 : vector<8x640xf32>
    %137 = vector.extract_strided_slice %27 {offsets = [144, 0], sizes = [8, 20], strides = [1, 1]} : vector<168x20xf32> to vector<8x20xf32>
    %138 = arith.truncf %137 : vector<8x20xf32> to vector<8x20xbf16>
    %c0_104 = arith.constant 0 : index
    %c18 = arith.constant 18 : index
    %c0_105 = arith.constant 0 : index
    %c0_106 = arith.constant 0 : index
    %139 = vector.load %arg3[%c0_104, %c18, %c0_105, %c0_106] : memref<2x21x20x640xbf16, #tpu.memory_space<vmem>>, vector<1x1x20x640xbf16>
    %140 = vector.shape_cast %139 : vector<1x1x20x640xbf16> to vector<20x640xbf16>
    %cst_107 = arith.constant dense<0.000000e+00> : vector<8x640xf32>
    %141 = tpu.matmul %138, %140, %cst_107 {dimension_numbers = #tpu.dot_dimension_numbers<[1], [0], [0], [1], [0, 0, 1, 1], [], []>} : vector<8x20xbf16>, vector<20x640xbf16>, vector<8x640xf32> -> vector<8x640xf32>
    %142 = arith.addf %136, %141 : vector<8x640xf32>
    %143 = vector.extract_strided_slice %27 {offsets = [152, 0], sizes = [8, 20], strides = [1, 1]} : vector<168x20xf32> to vector<8x20xf32>
    %144 = arith.truncf %143 : vector<8x20xf32> to vector<8x20xbf16>
    %c0_108 = arith.constant 0 : index
    %c19 = arith.constant 19 : index
    %c0_109 = arith.constant 0 : index
    %c0_110 = arith.constant 0 : index
    %145 = vector.load %arg3[%c0_108, %c19, %c0_109, %c0_110] : memref<2x21x20x640xbf16, #tpu.memory_space<vmem>>, vector<1x1x20x640xbf16>
    %146 = vector.shape_cast %145 : vector<1x1x20x640xbf16> to vector<20x640xbf16>
    %cst_111 = arith.constant dense<0.000000e+00> : vector<8x640xf32>
    %147 = tpu.matmul %144, %146, %cst_111 {dimension_numbers = #tpu.dot_dimension_numbers<[1], [0], [0], [1], [0, 0, 1, 1], [], []>} : vector<8x20xbf16>, vector<20x640xbf16>, vector<8x640xf32> -> vector<8x640xf32>
    %148 = arith.addf %142, %147 : vector<8x640xf32>
    %149 = vector.extract_strided_slice %27 {offsets = [160, 0], sizes = [8, 20], strides = [1, 1]} : vector<168x20xf32> to vector<8x20xf32>
    %150 = arith.truncf %149 : vector<8x20xf32> to vector<8x20xbf16>
    %c0_112 = arith.constant 0 : index
    %c20 = arith.constant 20 : index
    %c0_113 = arith.constant 0 : index
    %c0_114 = arith.constant 0 : index
    %151 = vector.load %arg3[%c0_112, %c20, %c0_113, %c0_114] : memref<2x21x20x640xbf16, #tpu.memory_space<vmem>>, vector<1x1x20x640xbf16>
    %152 = vector.shape_cast %151 : vector<1x1x20x640xbf16> to vector<20x640xbf16>
    %cst_115 = arith.constant dense<0.000000e+00> : vector<8x640xf32>
    %153 = tpu.matmul %150, %152, %cst_115 {dimension_numbers = #tpu.dot_dimension_numbers<[1], [0], [0], [1], [0, 0, 1, 1], [], []>} : vector<8x20xbf16>, vector<20x640xbf16>, vector<8x640xf32> -> vector<8x640xf32>
    %154 = arith.addf %148, %153 : vector<8x640xf32>
    %c0_116 = arith.constant 0 : index
    %c0_117 = arith.constant 0 : index
    %c0_118 = arith.constant 0 : index
    %155 = vector.load %arg5[%c0_116, %c0_117, %c0_118] : memref<2x1x768xf32, #tpu.memory_space<vmem>>, vector<1x1x640xf32>
    %156 = vector.shape_cast %155 : vector<1x1x640xf32> to vector<1x640xf32>
    %157 = vector.broadcast %156 : vector<1x640xf32> to vector<8x640xf32>
    %158 = arith.addf %154, %157 : vector<8x640xf32>
    %cst_119 = arith.constant 0.000000e+00 : f32
    %159 = vector.broadcast %cst_119 : f32 to vector<8x640xf32>
    %160 = arith.maximumf %158, %159 : vector<8x640xf32>
    %161 = arith.truncf %160 : vector<8x640xf32> to vector<8x640xbf16>
    %c0_120 = arith.constant 0 : index
    %c0_121 = arith.constant 0 : index
    %c0_122 = arith.constant 0 : index
    %162 = vector.load %arg4[%c0_120, %c0_121, %c0_122] : memref<2x640x128xbf16, #tpu.memory_space<vmem>>, vector<1x640x128xbf16>
    %163 = vector.shape_cast %162 : vector<1x640x128xbf16> to vector<640x128xbf16>
    %cst_123 = arith.constant dense<0.000000e+00> : vector<8x128xf32>
    %164 = tpu.matmul %161, %163, %cst_123 {dimension_numbers = #tpu.dot_dimension_numbers<[1], [0], [0], [1], [0, 0, 1, 1], [], []>} : vector<8x640xbf16>, vector<640x128xbf16>, vector<8x128xf32> -> vector<8x128xf32>
    %c0_124 = arith.constant 0 : index
    %c0_125 = arith.constant 0 : index
    %c640 = arith.constant 640 : index
    %165 = vector.load %arg5[%c0_124, %c0_125, %c640] : memref<2x1x768xf32, #tpu.memory_space<vmem>>, vector<1x1x128xf32>
    %166 = vector.shape_cast %165 : vector<1x1x128xf32> to vector<1x128xf32>
    %167 = vector.broadcast %166 : vector<1x128xf32> to vector<8x128xf32>
    %168 = arith.addf %164, %167 : vector<8x128xf32>
    %c0_126 = arith.constant 0 : index
    %c0_127 = arith.constant 0 : index
    %c0_128 = arith.constant 0 : index
    %169 = vector.load %arg6[%c0_126, %c0_127, %c0_128] : memref<2x8x128xf32, #tpu.memory_space<vmem>>, vector<1x8x128xf32>
    %170 = vector.shape_cast %169 : vector<1x8x128xf32> to vector<8x128xf32>
    %171 = vector.shape_cast %168 : vector<8x128xf32> to vector<1x8x128xf32>
    tpu.vector_store %arg6[%c0_126, %c0_127, %c0_128], %171 {strides = array<i32>} : memref<2x8x128xf32, #tpu.memory_space<vmem>>, vector<1x8x128xf32>,
    %c1_129 = arith.constant 1 : index
    %c0_130 = arith.constant 0 : index
    %c0_131 = arith.constant 0 : index
    %c0_132 = arith.constant 0 : index
    %172 = vector.load %arg2[%c1_129, %c0_130, %c0_131, %c0_132] : memref<2x4x20x20xf32, #tpu.memory_space<vmem>>, vector<1x1x20x20xf32>
    %173 = vector.shape_cast %172 : vector<1x1x20x20xf32> to vector<20x20xf32>
    %c1_133 = arith.constant 1 : index
    %c3_134 = arith.constant 3 : index
    %c0_135 = arith.constant 0 : index
    %c0_136 = arith.constant 0 : index
    %174 = vector.load %arg2[%c1_133, %c3_134, %c0_135, %c0_136] : memref<2x4x20x20xf32, #tpu.memory_space<vmem>>, vector<1x1x1x20xf32>
    %175 = vector.shape_cast %174 : vector<1x1x1x20xf32> to vector<1x20xf32>
    %cst_137 = arith.constant dense<0.000000e+00> : vector<168x20xf32>
    %176 = tpu.matmul %0, %173, %cst_137 {dimension_numbers = #tpu.dot_dimension_numbers<[1], [0], [0], [1], [0, 0, 1, 1], [], []>} : vector<168x20xf32>, vector<20x20xf32>, vector<168x20xf32> -> vector<168x20xf32>
    %177 = vector.broadcast %175 : vector<1x20xf32> to vector<168x20xf32>
    %178 = arith.addf %176, %177 : vector<168x20xf32>
    %cst_138 = arith.constant 0.000000e+00 : f32
    %179 = vector.broadcast %cst_138 : f32 to vector<168x20xf32>
    %180 = arith.maximumf %178, %179 : vector<168x20xf32>
    %c1_139 = arith.constant 1 : index
    %c1_140 = arith.constant 1 : index
    %c0_141 = arith.constant 0 : index
    %c0_142 = arith.constant 0 : index
    %181 = vector.load %arg2[%c1_139, %c1_140, %c0_141, %c0_142] : memref<2x4x20x20xf32, #tpu.memory_space<vmem>>, vector<1x1x20x20xf32>
    %182 = vector.shape_cast %181 : vector<1x1x20x20xf32> to vector<20x20xf32>
    %c1_143 = arith.constant 1 : index
    %c3_144 = arith.constant 3 : index
    %c1_145 = arith.constant 1 : index
    %c0_146 = arith.constant 0 : index
    %183 = vector.load %arg2[%c1_143, %c3_144, %c1_145, %c0_146] : memref<2x4x20x20xf32, #tpu.memory_space<vmem>>, vector<1x1x1x20xf32>
    %184 = vector.shape_cast %183 : vector<1x1x1x20xf32> to vector<1x20xf32>
    %cst_147 = arith.constant dense<0.000000e+00> : vector<168x20xf32>
    %185 = tpu.matmul %180, %182, %cst_147 {dimension_numbers = #tpu.dot_dimension_numbers<[1], [0], [0], [1], [0, 0, 1, 1], [], []>} : vector<168x20xf32>, vector<20x20xf32>, vector<168x20xf32> -> vector<168x20xf32>
    %186 = vector.broadcast %184 : vector<1x20xf32> to vector<168x20xf32>
    %187 = arith.addf %185, %186 : vector<168x20xf32>
    %cst_148 = arith.constant 0.000000e+00 : f32
    %188 = vector.broadcast %cst_148 : f32 to vector<168x20xf32>
    %189 = arith.maximumf %187, %188 : vector<168x20xf32>
    %c1_149 = arith.constant 1 : index
    %c2_150 = arith.constant 2 : index
    %c0_151 = arith.constant 0 : index
    %c0_152 = arith.constant 0 : index
    %190 = vector.load %arg2[%c1_149, %c2_150, %c0_151, %c0_152] : memref<2x4x20x20xf32, #tpu.memory_space<vmem>>, vector<1x1x20x20xf32>
    %191 = vector.shape_cast %190 : vector<1x1x20x20xf32> to vector<20x20xf32>
    %c1_153 = arith.constant 1 : index
    %c3_154 = arith.constant 3 : index
    %c2_155 = arith.constant 2 : index
    %c0_156 = arith.constant 0 : index
    %192 = vector.load %arg2[%c1_153, %c3_154, %c2_155, %c0_156] : memref<2x4x20x20xf32, #tpu.memory_space<vmem>>, vector<1x1x1x20xf32>
    %193 = vector.shape_cast %192 : vector<1x1x1x20xf32> to vector<1x20xf32>
    %cst_157 = arith.constant dense<0.000000e+00> : vector<168x20xf32>
    %194 = tpu.matmul %189, %191, %cst_157 {dimension_numbers = #tpu.dot_dimension_numbers<[1], [0], [0], [1], [0, 0, 1, 1], [], []>} : vector<168x20xf32>, vector<20x20xf32>, vector<168x20xf32> -> vector<168x20xf32>
    %195 = vector.broadcast %193 : vector<1x20xf32> to vector<168x20xf32>
    %196 = arith.addf %194, %195 : vector<168x20xf32>
    %cst_158 = arith.constant 0.000000e+00 : f32
    %197 = vector.broadcast %cst_158 : f32 to vector<168x20xf32>
    %198 = arith.maximumf %196, %197 : vector<168x20xf32>
    %cst_159 = arith.constant 0.000000e+00 : f32
    %199 = vector.broadcast %cst_159 : f32 to vector<8x640xf32>
    %200 = vector.extract_strided_slice %198 {offsets = [0, 0], sizes = [8, 20], strides = [1, 1]} : vector<168x20xf32> to vector<8x20xf32>
    %201 = arith.truncf %200 : vector<8x20xf32> to vector<8x20xbf16>
    %c1_160 = arith.constant 1 : index
    %c0_161 = arith.constant 0 : index
    %c0_162 = arith.constant 0 : index
    %c0_163 = arith.constant 0 : index
    %202 = vector.load %arg3[%c1_160, %c0_161, %c0_162, %c0_163] : memref<2x21x20x640xbf16, #tpu.memory_space<vmem>>, vector<1x1x20x640xbf16>
    %203 = vector.shape_cast %202 : vector<1x1x20x640xbf16> to vector<20x640xbf16>
    %cst_164 = arith.constant dense<0.000000e+00> : vector<8x640xf32>
    %204 = tpu.matmul %201, %203, %cst_164 {dimension_numbers = #tpu.dot_dimension_numbers<[1], [0], [0], [1], [0, 0, 1, 1], [], []>} : vector<8x20xbf16>, vector<20x640xbf16>, vector<8x640xf32> -> vector<8x640xf32>
    %205 = arith.addf %199, %204 : vector<8x640xf32>
    %206 = vector.extract_strided_slice %198 {offsets = [8, 0], sizes = [8, 20], strides = [1, 1]} : vector<168x20xf32> to vector<8x20xf32>
    %207 = arith.truncf %206 : vector<8x20xf32> to vector<8x20xbf16>
    %c1_165 = arith.constant 1 : index
    %c1_166 = arith.constant 1 : index
    %c0_167 = arith.constant 0 : index
    %c0_168 = arith.constant 0 : index
    %208 = vector.load %arg3[%c1_165, %c1_166, %c0_167, %c0_168] : memref<2x21x20x640xbf16, #tpu.memory_space<vmem>>, vector<1x1x20x640xbf16>
    %209 = vector.shape_cast %208 : vector<1x1x20x640xbf16> to vector<20x640xbf16>
    %cst_169 = arith.constant dense<0.000000e+00> : vector<8x640xf32>
    %210 = tpu.matmul %207, %209, %cst_169 {dimension_numbers = #tpu.dot_dimension_numbers<[1], [0], [0], [1], [0, 0, 1, 1], [], []>} : vector<8x20xbf16>, vector<20x640xbf16>, vector<8x640xf32> -> vector<8x640xf32>
    %211 = arith.addf %205, %210 : vector<8x640xf32>
    %212 = vector.extract_strided_slice %198 {offsets = [16, 0], sizes = [8, 20], strides = [1, 1]} : vector<168x20xf32> to vector<8x20xf32>
    %213 = arith.truncf %212 : vector<8x20xf32> to vector<8x20xbf16>
    %c1_170 = arith.constant 1 : index
    %c2_171 = arith.constant 2 : index
    %c0_172 = arith.constant 0 : index
    %c0_173 = arith.constant 0 : index
    %214 = vector.load %arg3[%c1_170, %c2_171, %c0_172, %c0_173] : memref<2x21x20x640xbf16, #tpu.memory_space<vmem>>, vector<1x1x20x640xbf16>
    %215 = vector.shape_cast %214 : vector<1x1x20x640xbf16> to vector<20x640xbf16>
    %cst_174 = arith.constant dense<0.000000e+00> : vector<8x640xf32>
    %216 = tpu.matmul %213, %215, %cst_174 {dimension_numbers = #tpu.dot_dimension_numbers<[1], [0], [0], [1], [0, 0, 1, 1], [], []>} : vector<8x20xbf16>, vector<20x640xbf16>, vector<8x640xf32> -> vector<8x640xf32>
    %217 = arith.addf %211, %216 : vector<8x640xf32>
    %218 = vector.extract_strided_slice %198 {offsets = [24, 0], sizes = [8, 20], strides = [1, 1]} : vector<168x20xf32> to vector<8x20xf32>
    %219 = arith.truncf %218 : vector<8x20xf32> to vector<8x20xbf16>
    %c1_175 = arith.constant 1 : index
    %c3_176 = arith.constant 3 : index
    %c0_177 = arith.constant 0 : index
    %c0_178 = arith.constant 0 : index
    %220 = vector.load %arg3[%c1_175, %c3_176, %c0_177, %c0_178] : memref<2x21x20x640xbf16, #tpu.memory_space<vmem>>, vector<1x1x20x640xbf16>
    %221 = vector.shape_cast %220 : vector<1x1x20x640xbf16> to vector<20x640xbf16>
    %cst_179 = arith.constant dense<0.000000e+00> : vector<8x640xf32>
    %222 = tpu.matmul %219, %221, %cst_179 {dimension_numbers = #tpu.dot_dimension_numbers<[1], [0], [0], [1], [0, 0, 1, 1], [], []>} : vector<8x20xbf16>, vector<20x640xbf16>, vector<8x640xf32> -> vector<8x640xf32>
    %223 = arith.addf %217, %222 : vector<8x640xf32>
    %224 = vector.extract_strided_slice %198 {offsets = [32, 0], sizes = [8, 20], strides = [1, 1]} : vector<168x20xf32> to vector<8x20xf32>
    %225 = arith.truncf %224 : vector<8x20xf32> to vector<8x20xbf16>
    %c1_180 = arith.constant 1 : index
    %c4_181 = arith.constant 4 : index
    %c0_182 = arith.constant 0 : index
    %c0_183 = arith.constant 0 : index
    %226 = vector.load %arg3[%c1_180, %c4_181, %c0_182, %c0_183] : memref<2x21x20x640xbf16, #tpu.memory_space<vmem>>, vector<1x1x20x640xbf16>
    %227 = vector.shape_cast %226 : vector<1x1x20x640xbf16> to vector<20x640xbf16>
    %cst_184 = arith.constant dense<0.000000e+00> : vector<8x640xf32>
    %228 = tpu.matmul %225, %227, %cst_184 {dimension_numbers = #tpu.dot_dimension_numbers<[1], [0], [0], [1], [0, 0, 1, 1], [], []>} : vector<8x20xbf16>, vector<20x640xbf16>, vector<8x640xf32> -> vector<8x640xf32>
    %229 = arith.addf %223, %228 : vector<8x640xf32>
    %230 = vector.extract_strided_slice %198 {offsets = [40, 0], sizes = [8, 20], strides = [1, 1]} : vector<168x20xf32> to vector<8x20xf32>
    %231 = arith.truncf %230 : vector<8x20xf32> to vector<8x20xbf16>
    %c1_185 = arith.constant 1 : index
    %c5_186 = arith.constant 5 : index
    %c0_187 = arith.constant 0 : index
    %c0_188 = arith.constant 0 : index
    %232 = vector.load %arg3[%c1_185, %c5_186, %c0_187, %c0_188] : memref<2x21x20x640xbf16, #tpu.memory_space<vmem>>, vector<1x1x20x640xbf16>
    %233 = vector.shape_cast %232 : vector<1x1x20x640xbf16> to vector<20x640xbf16>
    %cst_189 = arith.constant dense<0.000000e+00> : vector<8x640xf32>
    %234 = tpu.matmul %231, %233, %cst_189 {dimension_numbers = #tpu.dot_dimension_numbers<[1], [0], [0], [1], [0, 0, 1, 1], [], []>} : vector<8x20xbf16>, vector<20x640xbf16>, vector<8x640xf32> -> vector<8x640xf32>
    %235 = arith.addf %229, %234 : vector<8x640xf32>
    %236 = vector.extract_strided_slice %198 {offsets = [48, 0], sizes = [8, 20], strides = [1, 1]} : vector<168x20xf32> to vector<8x20xf32>
    %237 = arith.truncf %236 : vector<8x20xf32> to vector<8x20xbf16>
    %c1_190 = arith.constant 1 : index
    %c6_191 = arith.constant 6 : index
    %c0_192 = arith.constant 0 : index
    %c0_193 = arith.constant 0 : index
    %238 = vector.load %arg3[%c1_190, %c6_191, %c0_192, %c0_193] : memref<2x21x20x640xbf16, #tpu.memory_space<vmem>>, vector<1x1x20x640xbf16>
    %239 = vector.shape_cast %238 : vector<1x1x20x640xbf16> to vector<20x640xbf16>
    %cst_194 = arith.constant dense<0.000000e+00> : vector<8x640xf32>
    %240 = tpu.matmul %237, %239, %cst_194 {dimension_numbers = #tpu.dot_dimension_numbers<[1], [0], [0], [1], [0, 0, 1, 1], [], []>} : vector<8x20xbf16>, vector<20x640xbf16>, vector<8x640xf32> -> vector<8x640xf32>
    %241 = arith.addf %235, %240 : vector<8x640xf32>
    %242 = vector.extract_strided_slice %198 {offsets = [56, 0], sizes = [8, 20], strides = [1, 1]} : vector<168x20xf32> to vector<8x20xf32>
    %243 = arith.truncf %242 : vector<8x20xf32> to vector<8x20xbf16>
    %c1_195 = arith.constant 1 : index
    %c7_196 = arith.constant 7 : index
    %c0_197 = arith.constant 0 : index
    %c0_198 = arith.constant 0 : index
    %244 = vector.load %arg3[%c1_195, %c7_196, %c0_197, %c0_198] : memref<2x21x20x640xbf16, #tpu.memory_space<vmem>>, vector<1x1x20x640xbf16>
    %245 = vector.shape_cast %244 : vector<1x1x20x640xbf16> to vector<20x640xbf16>
    %cst_199 = arith.constant dense<0.000000e+00> : vector<8x640xf32>
    %246 = tpu.matmul %243, %245, %cst_199 {dimension_numbers = #tpu.dot_dimension_numbers<[1], [0], [0], [1], [0, 0, 1, 1], [], []>} : vector<8x20xbf16>, vector<20x640xbf16>, vector<8x640xf32> -> vector<8x640xf32>
    %247 = arith.addf %241, %246 : vector<8x640xf32>
    %248 = vector.extract_strided_slice %198 {offsets = [64, 0], sizes = [8, 20], strides = [1, 1]} : vector<168x20xf32> to vector<8x20xf32>
    %249 = arith.truncf %248 : vector<8x20xf32> to vector<8x20xbf16>
    %c1_200 = arith.constant 1 : index
    %c8_201 = arith.constant 8 : index
    %c0_202 = arith.constant 0 : index
    %c0_203 = arith.constant 0 : index
    %250 = vector.load %arg3[%c1_200, %c8_201, %c0_202, %c0_203] : memref<2x21x20x640xbf16, #tpu.memory_space<vmem>>, vector<1x1x20x640xbf16>
    %251 = vector.shape_cast %250 : vector<1x1x20x640xbf16> to vector<20x640xbf16>
    %cst_204 = arith.constant dense<0.000000e+00> : vector<8x640xf32>
    %252 = tpu.matmul %249, %251, %cst_204 {dimension_numbers = #tpu.dot_dimension_numbers<[1], [0], [0], [1], [0, 0, 1, 1], [], []>} : vector<8x20xbf16>, vector<20x640xbf16>, vector<8x640xf32> -> vector<8x640xf32>
    %253 = arith.addf %247, %252 : vector<8x640xf32>
    %254 = vector.extract_strided_slice %198 {offsets = [72, 0], sizes = [8, 20], strides = [1, 1]} : vector<168x20xf32> to vector<8x20xf32>
    %255 = arith.truncf %254 : vector<8x20xf32> to vector<8x20xbf16>
    %c1_205 = arith.constant 1 : index
    %c9_206 = arith.constant 9 : index
    %c0_207 = arith.constant 0 : index
    %c0_208 = arith.constant 0 : index
    %256 = vector.load %arg3[%c1_205, %c9_206, %c0_207, %c0_208] : memref<2x21x20x640xbf16, #tpu.memory_space<vmem>>, vector<1x1x20x640xbf16>
    %257 = vector.shape_cast %256 : vector<1x1x20x640xbf16> to vector<20x640xbf16>
    %cst_209 = arith.constant dense<0.000000e+00> : vector<8x640xf32>
    %258 = tpu.matmul %255, %257, %cst_209 {dimension_numbers = #tpu.dot_dimension_numbers<[1], [0], [0], [1], [0, 0, 1, 1], [], []>} : vector<8x20xbf16>, vector<20x640xbf16>, vector<8x640xf32> -> vector<8x640xf32>
    %259 = arith.addf %253, %258 : vector<8x640xf32>
    %260 = vector.extract_strided_slice %198 {offsets = [80, 0], sizes = [8, 20], strides = [1, 1]} : vector<168x20xf32> to vector<8x20xf32>
    %261 = arith.truncf %260 : vector<8x20xf32> to vector<8x20xbf16>
    %c1_210 = arith.constant 1 : index
    %c10_211 = arith.constant 10 : index
    %c0_212 = arith.constant 0 : index
    %c0_213 = arith.constant 0 : index
    %262 = vector.load %arg3[%c1_210, %c10_211, %c0_212, %c0_213] : memref<2x21x20x640xbf16, #tpu.memory_space<vmem>>, vector<1x1x20x640xbf16>
    %263 = vector.shape_cast %262 : vector<1x1x20x640xbf16> to vector<20x640xbf16>
    %cst_214 = arith.constant dense<0.000000e+00> : vector<8x640xf32>
    %264 = tpu.matmul %261, %263, %cst_214 {dimension_numbers = #tpu.dot_dimension_numbers<[1], [0], [0], [1], [0, 0, 1, 1], [], []>} : vector<8x20xbf16>, vector<20x640xbf16>, vector<8x640xf32> -> vector<8x640xf32>
    %265 = arith.addf %259, %264 : vector<8x640xf32>
    %266 = vector.extract_strided_slice %198 {offsets = [88, 0], sizes = [8, 20], strides = [1, 1]} : vector<168x20xf32> to vector<8x20xf32>
    %267 = arith.truncf %266 : vector<8x20xf32> to vector<8x20xbf16>
    %c1_215 = arith.constant 1 : index
    %c11_216 = arith.constant 11 : index
    %c0_217 = arith.constant 0 : index
    %c0_218 = arith.constant 0 : index
    %268 = vector.load %arg3[%c1_215, %c11_216, %c0_217, %c0_218] : memref<2x21x20x640xbf16, #tpu.memory_space<vmem>>, vector<1x1x20x640xbf16>
    %269 = vector.shape_cast %268 : vector<1x1x20x640xbf16> to vector<20x640xbf16>
    %cst_219 = arith.constant dense<0.000000e+00> : vector<8x640xf32>
    %270 = tpu.matmul %267, %269, %cst_219 {dimension_numbers = #tpu.dot_dimension_numbers<[1], [0], [0], [1], [0, 0, 1, 1], [], []>} : vector<8x20xbf16>, vector<20x640xbf16>, vector<8x640xf32> -> vector<8x640xf32>
    %271 = arith.addf %265, %270 : vector<8x640xf32>
    %272 = vector.extract_strided_slice %198 {offsets = [96, 0], sizes = [8, 20], strides = [1, 1]} : vector<168x20xf32> to vector<8x20xf32>
    %273 = arith.truncf %272 : vector<8x20xf32> to vector<8x20xbf16>
    %c1_220 = arith.constant 1 : index
    %c12_221 = arith.constant 12 : index
    %c0_222 = arith.constant 0 : index
    %c0_223 = arith.constant 0 : index
    %274 = vector.load %arg3[%c1_220, %c12_221, %c0_222, %c0_223] : memref<2x21x20x640xbf16, #tpu.memory_space<vmem>>, vector<1x1x20x640xbf16>
    %275 = vector.shape_cast %274 : vector<1x1x20x640xbf16> to vector<20x640xbf16>
    %cst_224 = arith.constant dense<0.000000e+00> : vector<8x640xf32>
    %276 = tpu.matmul %273, %275, %cst_224 {dimension_numbers = #tpu.dot_dimension_numbers<[1], [0], [0], [1], [0, 0, 1, 1], [], []>} : vector<8x20xbf16>, vector<20x640xbf16>, vector<8x640xf32> -> vector<8x640xf32>
    %277 = arith.addf %271, %276 : vector<8x640xf32>
    %278 = vector.extract_strided_slice %198 {offsets = [104, 0], sizes = [8, 20], strides = [1, 1]} : vector<168x20xf32> to vector<8x20xf32>
    %279 = arith.truncf %278 : vector<8x20xf32> to vector<8x20xbf16>
    %c1_225 = arith.constant 1 : index
    %c13_226 = arith.constant 13 : index
    %c0_227 = arith.constant 0 : index
    %c0_228 = arith.constant 0 : index
    %280 = vector.load %arg3[%c1_225, %c13_226, %c0_227, %c0_228] : memref<2x21x20x640xbf16, #tpu.memory_space<vmem>>, vector<1x1x20x640xbf16>
    %281 = vector.shape_cast %280 : vector<1x1x20x640xbf16> to vector<20x640xbf16>
    %cst_229 = arith.constant dense<0.000000e+00> : vector<8x640xf32>
    %282 = tpu.matmul %279, %281, %cst_229 {dimension_numbers = #tpu.dot_dimension_numbers<[1], [0], [0], [1], [0, 0, 1, 1], [], []>} : vector<8x20xbf16>, vector<20x640xbf16>, vector<8x640xf32> -> vector<8x640xf32>
    %283 = arith.addf %277, %282 : vector<8x640xf32>
    %284 = vector.extract_strided_slice %198 {offsets = [112, 0], sizes = [8, 20], strides = [1, 1]} : vector<168x20xf32> to vector<8x20xf32>
    %285 = arith.truncf %284 : vector<8x20xf32> to vector<8x20xbf16>
    %c1_230 = arith.constant 1 : index
    %c14_231 = arith.constant 14 : index
    %c0_232 = arith.constant 0 : index
    %c0_233 = arith.constant 0 : index
    %286 = vector.load %arg3[%c1_230, %c14_231, %c0_232, %c0_233] : memref<2x21x20x640xbf16, #tpu.memory_space<vmem>>, vector<1x1x20x640xbf16>
    %287 = vector.shape_cast %286 : vector<1x1x20x640xbf16> to vector<20x640xbf16>
    %cst_234 = arith.constant dense<0.000000e+00> : vector<8x640xf32>
    %288 = tpu.matmul %285, %287, %cst_234 {dimension_numbers = #tpu.dot_dimension_numbers<[1], [0], [0], [1], [0, 0, 1, 1], [], []>} : vector<8x20xbf16>, vector<20x640xbf16>, vector<8x640xf32> -> vector<8x640xf32>
    %289 = arith.addf %283, %288 : vector<8x640xf32>
    %290 = vector.extract_strided_slice %198 {offsets = [120, 0], sizes = [8, 20], strides = [1, 1]} : vector<168x20xf32> to vector<8x20xf32>
    %291 = arith.truncf %290 : vector<8x20xf32> to vector<8x20xbf16>
    %c1_235 = arith.constant 1 : index
    %c15_236 = arith.constant 15 : index
    %c0_237 = arith.constant 0 : index
    %c0_238 = arith.constant 0 : index
    %292 = vector.load %arg3[%c1_235, %c15_236, %c0_237, %c0_238] : memref<2x21x20x640xbf16, #tpu.memory_space<vmem>>, vector<1x1x20x640xbf16>
    %293 = vector.shape_cast %292 : vector<1x1x20x640xbf16> to vector<20x640xbf16>
    %cst_239 = arith.constant dense<0.000000e+00> : vector<8x640xf32>
    %294 = tpu.matmul %291, %293, %cst_239 {dimension_numbers = #tpu.dot_dimension_numbers<[1], [0], [0], [1], [0, 0, 1, 1], [], []>} : vector<8x20xbf16>, vector<20x640xbf16>, vector<8x640xf32> -> vector<8x640xf32>
    %295 = arith.addf %289, %294 : vector<8x640xf32>
    %296 = vector.extract_strided_slice %198 {offsets = [128, 0], sizes = [8, 20], strides = [1, 1]} : vector<168x20xf32> to vector<8x20xf32>
    %297 = arith.truncf %296 : vector<8x20xf32> to vector<8x20xbf16>
    %c1_240 = arith.constant 1 : index
    %c16_241 = arith.constant 16 : index
    %c0_242 = arith.constant 0 : index
    %c0_243 = arith.constant 0 : index
    %298 = vector.load %arg3[%c1_240, %c16_241, %c0_242, %c0_243] : memref<2x21x20x640xbf16, #tpu.memory_space<vmem>>, vector<1x1x20x640xbf16>
    %299 = vector.shape_cast %298 : vector<1x1x20x640xbf16> to vector<20x640xbf16>
    %cst_244 = arith.constant dense<0.000000e+00> : vector<8x640xf32>
    %300 = tpu.matmul %297, %299, %cst_244 {dimension_numbers = #tpu.dot_dimension_numbers<[1], [0], [0], [1], [0, 0, 1, 1], [], []>} : vector<8x20xbf16>, vector<20x640xbf16>, vector<8x640xf32> -> vector<8x640xf32>
    %301 = arith.addf %295, %300 : vector<8x640xf32>
    %302 = vector.extract_strided_slice %198 {offsets = [136, 0], sizes = [8, 20], strides = [1, 1]} : vector<168x20xf32> to vector<8x20xf32>
    %303 = arith.truncf %302 : vector<8x20xf32> to vector<8x20xbf16>
    %c1_245 = arith.constant 1 : index
    %c17_246 = arith.constant 17 : index
    %c0_247 = arith.constant 0 : index
    %c0_248 = arith.constant 0 : index
    %304 = vector.load %arg3[%c1_245, %c17_246, %c0_247, %c0_248] : memref<2x21x20x640xbf16, #tpu.memory_space<vmem>>, vector<1x1x20x640xbf16>
    %305 = vector.shape_cast %304 : vector<1x1x20x640xbf16> to vector<20x640xbf16>
    %cst_249 = arith.constant dense<0.000000e+00> : vector<8x640xf32>
    %306 = tpu.matmul %303, %305, %cst_249 {dimension_numbers = #tpu.dot_dimension_numbers<[1], [0], [0], [1], [0, 0, 1, 1], [], []>} : vector<8x20xbf16>, vector<20x640xbf16>, vector<8x640xf32> -> vector<8x640xf32>
    %307 = arith.addf %301, %306 : vector<8x640xf32>
    %308 = vector.extract_strided_slice %198 {offsets = [144, 0], sizes = [8, 20], strides = [1, 1]} : vector<168x20xf32> to vector<8x20xf32>
    %309 = arith.truncf %308 : vector<8x20xf32> to vector<8x20xbf16>
    %c1_250 = arith.constant 1 : index
    %c18_251 = arith.constant 18 : index
    %c0_252 = arith.constant 0 : index
    %c0_253 = arith.constant 0 : index
    %310 = vector.load %arg3[%c1_250, %c18_251, %c0_252, %c0_253] : memref<2x21x20x640xbf16, #tpu.memory_space<vmem>>, vector<1x1x20x640xbf16>
    %311 = vector.shape_cast %310 : vector<1x1x20x640xbf16> to vector<20x640xbf16>
    %cst_254 = arith.constant dense<0.000000e+00> : vector<8x640xf32>
    %312 = tpu.matmul %309, %311, %cst_254 {dimension_numbers = #tpu.dot_dimension_numbers<[1], [0], [0], [1], [0, 0, 1, 1], [], []>} : vector<8x20xbf16>, vector<20x640xbf16>, vector<8x640xf32> -> vector<8x640xf32>
    %313 = arith.addf %307, %312 : vector<8x640xf32>
    %314 = vector.extract_strided_slice %198 {offsets = [152, 0], sizes = [8, 20], strides = [1, 1]} : vector<168x20xf32> to vector<8x20xf32>
    %315 = arith.truncf %314 : vector<8x20xf32> to vector<8x20xbf16>
    %c1_255 = arith.constant 1 : index
    %c19_256 = arith.constant 19 : index
    %c0_257 = arith.constant 0 : index
    %c0_258 = arith.constant 0 : index
    %316 = vector.load %arg3[%c1_255, %c19_256, %c0_257, %c0_258] : memref<2x21x20x640xbf16, #tpu.memory_space<vmem>>, vector<1x1x20x640xbf16>
    %317 = vector.shape_cast %316 : vector<1x1x20x640xbf16> to vector<20x640xbf16>
    %cst_259 = arith.constant dense<0.000000e+00> : vector<8x640xf32>
    %318 = tpu.matmul %315, %317, %cst_259 {dimension_numbers = #tpu.dot_dimension_numbers<[1], [0], [0], [1], [0, 0, 1, 1], [], []>} : vector<8x20xbf16>, vector<20x640xbf16>, vector<8x640xf32> -> vector<8x640xf32>
    %319 = arith.addf %313, %318 : vector<8x640xf32>
    %320 = vector.extract_strided_slice %198 {offsets = [160, 0], sizes = [8, 20], strides = [1, 1]} : vector<168x20xf32> to vector<8x20xf32>
    %321 = arith.truncf %320 : vector<8x20xf32> to vector<8x20xbf16>
    %c1_260 = arith.constant 1 : index
    %c20_261 = arith.constant 20 : index
    %c0_262 = arith.constant 0 : index
    %c0_263 = arith.constant 0 : index
    %322 = vector.load %arg3[%c1_260, %c20_261, %c0_262, %c0_263] : memref<2x21x20x640xbf16, #tpu.memory_space<vmem>>, vector<1x1x20x640xbf16>
    %323 = vector.shape_cast %322 : vector<1x1x20x640xbf16> to vector<20x640xbf16>
    %cst_264 = arith.constant dense<0.000000e+00> : vector<8x640xf32>
    %324 = tpu.matmul %321, %323, %cst_264 {dimension_numbers = #tpu.dot_dimension_numbers<[1], [0], [0], [1], [0, 0, 1, 1], [], []>} : vector<8x20xbf16>, vector<20x640xbf16>, vector<8x640xf32> -> vector<8x640xf32>
    %325 = arith.addf %319, %324 : vector<8x640xf32>
    %c1_265 = arith.constant 1 : index
    %c0_266 = arith.constant 0 : index
    %c0_267 = arith.constant 0 : index
    %326 = vector.load %arg5[%c1_265, %c0_266, %c0_267] : memref<2x1x768xf32, #tpu.memory_space<vmem>>, vector<1x1x640xf32>
    %327 = vector.shape_cast %326 : vector<1x1x640xf32> to vector<1x640xf32>
    %328 = vector.broadcast %327 : vector<1x640xf32> to vector<8x640xf32>
    %329 = arith.addf %325, %328 : vector<8x640xf32>
    %cst_268 = arith.constant 0.000000e+00 : f32
    %330 = vector.broadcast %cst_268 : f32 to vector<8x640xf32>
    %331 = arith.maximumf %329, %330 : vector<8x640xf32>
    %332 = arith.truncf %331 : vector<8x640xf32> to vector<8x640xbf16>
    %c1_269 = arith.constant 1 : index
    %c0_270 = arith.constant 0 : index
    %c0_271 = arith.constant 0 : index
    %333 = vector.load %arg4[%c1_269, %c0_270, %c0_271] : memref<2x640x128xbf16, #tpu.memory_space<vmem>>, vector<1x640x128xbf16>
    %334 = vector.shape_cast %333 : vector<1x640x128xbf16> to vector<640x128xbf16>
    %cst_272 = arith.constant dense<0.000000e+00> : vector<8x128xf32>
    %335 = tpu.matmul %332, %334, %cst_272 {dimension_numbers = #tpu.dot_dimension_numbers<[1], [0], [0], [1], [0, 0, 1, 1], [], []>} : vector<8x640xbf16>, vector<640x128xbf16>, vector<8x128xf32> -> vector<8x128xf32>
    %c1_273 = arith.constant 1 : index
    %c0_274 = arith.constant 0 : index
    %c640_275 = arith.constant 640 : index
    %336 = vector.load %arg5[%c1_273, %c0_274, %c640_275] : memref<2x1x768xf32, #tpu.memory_space<vmem>>, vector<1x1x128xf32>
    %337 = vector.shape_cast %336 : vector<1x1x128xf32> to vector<1x128xf32>
    %338 = vector.broadcast %337 : vector<1x128xf32> to vector<8x128xf32>
    %339 = arith.addf %335, %338 : vector<8x128xf32>
    %c1_276 = arith.constant 1 : index
    %c0_277 = arith.constant 0 : index
    %c0_278 = arith.constant 0 : index
    %340 = vector.load %arg6[%c1_276, %c0_277, %c0_278] : memref<2x8x128xf32, #tpu.memory_space<vmem>>, vector<1x8x128xf32>
    %341 = vector.shape_cast %340 : vector<1x8x128xf32> to vector<8x128xf32>
    %342 = vector.shape_cast %339 : vector<8x128xf32> to vector<1x8x128xf32>
    tpu.vector_store %arg6[%c1_276, %c0_277, %c0_278], %342 {strides = array<i32>} : memref<2x8x128xf32, #tpu.memory_space<vmem>>, vector<1x8x128xf32>,
    return
  }
  func.func @transform_0(%arg0: i32) -> (i32, i32) {
    %c0_i32 = arith.constant 0 : i32
    %c0_i32_0 = arith.constant 0 : i32
    %c0_i32_1 = arith.constant 0 : i32
    return %c0_i32, %c0_i32_0 : i32, i32
  }
  func.func @transform_1(%arg0: i32) -> (i32, i32, i32, i32) {
    %c0_i32 = arith.constant 0 : i32
    %c0_i32_0 = arith.constant 0 : i32
    %c0_i32_1 = arith.constant 0 : i32
    %c0_i32_2 = arith.constant 0 : i32
    return %arg0, %c0_i32, %c0_i32_0, %c0_i32_1 : i32, i32, i32, i32
  }
  func.func @transform_2(%arg0: i32) -> (i32, i32, i32, i32) {
    %c0_i32 = arith.constant 0 : i32
    %c0_i32_0 = arith.constant 0 : i32
    %c0_i32_1 = arith.constant 0 : i32
    %c0_i32_2 = arith.constant 0 : i32
    return %arg0, %c0_i32, %c0_i32_0, %c0_i32_1 : i32, i32, i32, i32
  }
  func.func @transform_3(%arg0: i32) -> (i32, i32, i32) {
    %c0_i32 = arith.constant 0 : i32
    %c0_i32_0 = arith.constant 0 : i32
    %c0_i32_1 = arith.constant 0 : i32
    return %arg0, %c0_i32, %c0_i32_0 : i32, i32, i32
  }
  func.func @transform_4(%arg0: i32) -> (i32, i32, i32) {
    %c0_i32 = arith.constant 0 : i32
    %c0_i32_0 = arith.constant 0 : i32
    %c0_i32_1 = arith.constant 0 : i32
    return %arg0, %c0_i32, %c0_i32_0 : i32, i32, i32
  }
  func.func @transform_5(%arg0: i32) -> (i32, i32, i32) {
    %c0_i32 = arith.constant 0 : i32
    %c0_i32_0 = arith.constant 0 : i32
    %c0_i32_1 = arith.constant 0 : i32
    return %arg0, %c0_i32, %c0_i32_0 : i32, i32, i32
  }
}

</mosaic_0001>

<llo_original>
// kernel: network_forward.1
$region0: #{network_forward.1}
  #allocation0 [shape = 'u32[]', space=smem, size = 0x4, offset = 0x4, fixed_abs, tag = 'smem constant byte address 0x4 - core index']
  #allocation1 [shape = 'u32[144,128]{1,0:T(1,128)}', space=vmem, size = 0x12000, scoped, tag = 'internal scratch']
  %s0 = inlined_call_operand.vmem [shape: f32[168,20], index: 0, kind: input, shape index: {}]
  %s1 = inlined_call_operand.vmem [shape: f32[4,4,20,20], index: 1, kind: input, shape index: {}]
  %s2 = inlined_call_operand.vmem [shape: bf16[4,21,20,640], index: 2, kind: input, shape index: {}]
  %s3 = inlined_call_operand.vmem [shape: bf16[4,640,128], index: 3, kind: input, shape index: {}]
  %s4 = inlined_call_operand.vmem [shape: f32[4,1,768], index: 4, kind: input, shape index: {}]
  %s5 = inlined_call_operand.vmem [shape: f32[4,8,128], index: 5, kind: output, shape index: {}]
  %s6 = sld [smem:[#allocation0]]
  $region53: #{network_forward.1} parent=0
    _
  %s8 = ssub.s32 1, %s6
  %s9 = scalar_select 0, %s8, %s6
  loop: start=0, step=1, limit=4
  $region2: #{network_forward.1} parent=0 // loop_pre_header
    _
  $region3: #{network_forward.1} parent=0 // loop_header
    %s11 = sphi 0, %s15
    %p12 = scmp.ge.s32.totalorder %s11, 4
    %s19 = sphi 0, %s19
    %s21 = sphi 0, %s19
    %s22 = sphi 0, %s21
    %s36 = sphi 0, %s22
    %s42 = sphi 0, %s44
    %s45 = sphi 0, %s42
    %s46 = sphi 0, %s45
    %s62 = sphi 0, %s46
    %s68 = sphi 0, %s70
    %s71 = sphi 0, %s68
    %s72 = sphi 0, %s71
    %s88 = sphi 0, %s72
    %s94 = sphi 0, %s96
    %s97 = sphi 0, %s94
    %s98 = sphi 0, %s97
    %s114 = sphi 0, %s98
    %s120 = sphi 0, %s122
    %s123 = sphi 0, %s120
    %s124 = sphi 0, %s123
    %s140 = sphi 0, %s124
    %s146 = sphi 0, %s148
    %s149 = sphi 0, %s146
    %s150 = sphi 0, %s149
    %s166 = sphi 0, %s150
  $region4: #{network_forward.1} parent=0 // loop_header_branch
    %14 = sbr.rel (%p12) target = $region8
  $region5: #{network_forward.1} parent=0 // loop_body
    %s16 = ssub.s32 %s11, 1
    %s17 = ssub.s32 %s11, 2
    %s18 = sadd.s32 %s11, 1
    %s20 = sadd.s32 %s19, 1
    %p23 = scmp.eq.s32.totalorder %s11, 1
    %p24 = scmp.ne.s32.totalorder %s19, %s21
    %p25 = scmp.eq.s32.totalorder %s11, 0
    %p26 = por %p24, %p25
    %p27 = scmp.ne.s32.totalorder %s19, %s21
    %p28 = scmp.eq.s32.totalorder %s16, 1
    %p29 = por %p27, %p28
    %p30 = scmp.ne.s32.totalorder %s21, %s22
    %p31 = scmp.eq.s32.totalorder %s16, 0
    %p32 = por %p30, %p31
    %p33 = scmp.ne.s32.totalorder %s21, %s22
    %p34 = scmp.eq.s32.totalorder %s17, 1
    %p35 = por %p33, %p34
    %p37 = scmp.ne.s32.totalorder %s22, %s36
    %p38 = scmp.eq.s32.totalorder %s17, 0
    %p39 = por %p37, %p38
    %s40 = ssub.s32 %s11, %s18
    %p41 = scmp.eq.s32.totalorder %s40, 0
    %s43 = sadd.s32 %s42, 1
    %s44 = scalar_select %p41, %s42, %s43
    %p47 = pneg %p41
    %p48 = scmp.eq.s32.totalorder %s11, 1
    %p49 = por %p47, %p48
    %p50 = scmp.ne.s32.totalorder %s42, %s45
    %p51 = scmp.eq.s32.totalorder %s11, 0
    %p52 = por %p50, %p51
    %p53 = scmp.ne.s32.totalorder %s42, %s45
    %p54 = scmp.eq.s32.totalorder %s16, 1
    %p55 = por %p53, %p54
    %p56 = scmp.ne.s32.totalorder %s45, %s46
    %p57 = scmp.eq.s32.totalorder %s16, 0
    %p58 = por %p56, %p57
    %p59 = scmp.ne.s32.totalorder %s45, %s46
    %p60 = scmp.eq.s32.totalorder %s17, 1
    %p61 = por %p59, %p60
    %p63 = scmp.ne.s32.totalorder %s46, %s62
    %p64 = scmp.eq.s32.totalorder %s17, 0
    %p65 = por %p63, %p64
    %s66 = ssub.s32 %s11, %s18
    %p67 = scmp.eq.s32.totalorder %s66, 0
    %s69 = sadd.s32 %s68, 1
    %s70 = scalar_select %p67, %s68, %s69
    %p73 = pneg %p67
    %p74 = scmp.eq.s32.totalorder %s11, 1
    %p75 = por %p73, %p74
    %p76 = scmp.ne.s32.totalorder %s68, %s71
    %p77 = scmp.eq.s32.totalorder %s11, 0
    %p78 = por %p76, %p77
    %p79 = scmp.ne.s32.totalorder %s68, %s71
    %p80 = scmp.eq.s32.totalorder %s16, 1
    %p81 = por %p79, %p80
    %p82 = scmp.ne.s32.totalorder %s71, %s72
    %p83 = scmp.eq.s32.totalorder %s16, 0
    %p84 = por %p82, %p83
    %p85 = scmp.ne.s32.totalorder %s71, %s72
    %p86 = scmp.eq.s32.totalorder %s17, 1
    %p87 = por %p85, %p86
    %p89 = scmp.ne.s32.totalorder %s72, %s88
    %p90 = scmp.eq.s32.totalorder %s17, 0
    %p91 = por %p89, %p90
    %s92 = ssub.s32 %s11, %s18
    %p93 = scmp.eq.s32.totalorder %s92, 0
    %s95 = sadd.s32 %s94, 1
    %s96 = scalar_select %p93, %s94, %s95
    %p99 = pneg %p93
    %p100 = scmp.eq.s32.totalorder %s11, 1
    %p101 = por %p99, %p100
    %p102 = scmp.ne.s32.totalorder %s94, %s97
    %p103 = scmp.eq.s32.totalorder %s11, 0
    %p104 = por %p102, %p103
    %p105 = scmp.ne.s32.totalorder %s94, %s97
    %p106 = scmp.eq.s32.totalorder %s16, 1
    %p107 = por %p105, %p106
    %p108 = scmp.ne.s32.totalorder %s97, %s98
    %p109 = scmp.eq.s32.totalorder %s16, 0
    %p110 = por %p108, %p109
    %p111 = scmp.ne.s32.totalorder %s97, %s98
    %p112 = scmp.eq.s32.totalorder %s17, 1
    %p113 = por %p111, %p112
    %p115 = scmp.ne.s32.totalorder %s98, %s114
    %p116 = scmp.eq.s32.totalorder %s17, 0
    %p117 = por %p115, %p116
    %s118 = ssub.s32 %s11, %s18
    %p119 = scmp.eq.s32.totalorder %s118, 0
    %s121 = sadd.s32 %s120, 1
    %s122 = scalar_select %p119, %s120, %s121
    %p125 = pneg %p119
    %p126 = scmp.eq.s32.totalorder %s11, 1
    %p127 = por %p125, %p126
    %p128 = scmp.ne.s32.totalorder %s120, %s123
    %p129 = scmp.eq.s32.totalorder %s11, 0
    %p130 = por %p128, %p129
    %p131 = scmp.ne.s32.totalorder %s120, %s123
    %p132 = scmp.eq.s32.totalorder %s16, 1
    %p133 = por %p131, %p132
    %p134 = scmp.ne.s32.totalorder %s123, %s124
    %p135 = scmp.eq.s32.totalorder %s16, 0
    %p136 = por %p134, %p135
    %p137 = scmp.ne.s32.totalorder %s123, %s124
    %p138 = scmp.eq.s32.totalorder %s17, 1
    %p139 = por %p137, %p138
    %p141 = scmp.ne.s32.totalorder %s124, %s140
    %p142 = scmp.eq.s32.totalorder %s17, 0
    %p143 = por %p141, %p142
    %s144 = ssub.s32 %s11, %s18
    %p145 = scmp.eq.s32.totalorder %s144, 0
    %s147 = sadd.s32 %s146, 1
    %s148 = scalar_select %p145, %s146, %s147
    %p151 = pneg %p145
    %p152 = scmp.eq.s32.totalorder %s11, 1
    %p153 = por %p151, %p152
    %p154 = scmp.ne.s32.totalorder %s146, %s149
    %p155 = scmp.eq.s32.totalorder %s11, 0
    %p156 = por %p154, %p155
    %p157 = scmp.ne.s32.totalorder %s146, %s149
    %p158 = scmp.eq.s32.totalorder %s16, 1
    %p159 = por %p157, %p158
    %p160 = scmp.ne.s32.totalorder %s149, %s150
    %p161 = scmp.eq.s32.totalorder %s16, 0
    %p162 = por %p160, %p161
    %p163 = scmp.ne.s32.totalorder %s149, %s150
    %p164 = scmp.eq.s32.totalorder %s17, 1
    %p165 = por %p163, %p164
    %p167 = scmp.ne.s32.totalorder %s150, %s166
    %p168 = scmp.eq.s32.totalorder %s17, 0
    %p169 = por %p167, %p168
    %p170 = scmp.le.s32.totalorder 1, %s11
    %p171 = scmp.lt.s32.totalorder %s11, 3
    %p172 = pnand %p170, %p171
    %p173 = pneg %p172
    // Predicated region
    $region9: #{network_forward.1} parent=5 // pred_check
      _
    $region10: #{network_forward.1} parent=5 // pred_check_branch
      %175 = sbr.rel (%p172) target = $region12
    $region11: #{network_forward.1} parent=5 // pred_region
      %s176 = ssub.s32 %s11, 1
      // Predicated region
      $region13: #{network_forward.1} parent=11 // pred_check
        %p177 = pneg %p32
      $region14: #{network_forward.1} parent=11 // pred_check_branch
        %179 = sbr.rel (%p177) target = $region16
      $region15: #{network_forward.1} parent=11 // pred_region
        _
      $region16: #{network_forward.1} parent=11 // pred_fallthru
        _
    $region12: #{network_forward.1} parent=5 // pred_fallthru
      _
    %p180 = scmp.lt.s32.totalorder %s11, 2
    // Predicated region
    $region17: #{network_forward.1} parent=5 // pred_check
      %p181 = pneg %p180
    $region18: #{network_forward.1} parent=5 // pred_check_branch
      %183 = sbr.rel (%p181) target = $region20
    $region19: #{network_forward.1} parent=5 // pred_region
      // Predicated region
      $region21: #{network_forward.1} parent=19 // pred_check
        %p184 = pneg %p52
      $region22: #{network_forward.1} parent=19 // pred_check_branch
        %186 = sbr.rel (%p184) target = $region24
      $region23: #{network_forward.1} parent=19 // pred_region
        %s187 = smul.u32 2, %s11
        %p188 = scmp.lt.s32.totalorder %s187, 3
        %s189 = scalar_select %p188, %s187, 3
        %s190 = smul.addr %s189, 12
        %s191 = smul.addr %s190, 8
        %s192 = scalar_lea.vmem %s1, %s191
        %s193 = smul.u32 2, %s11
      $region24: #{network_forward.1} parent=19 // pred_fallthru
        _
      // Predicated region
      $region25: #{network_forward.1} parent=19 // pred_check
        %p194 = pneg %p78
      $region26: #{network_forward.1} parent=19 // pred_check_branch
        %196 = sbr.rel (%p194) target = $region28
      $region27: #{network_forward.1} parent=19 // pred_region
        %s197 = smul.u32 2, %s11
        %p198 = scmp.lt.s32.totalorder %s197, 3
        %s199 = scalar_select %p198, %s197, 3
        %s200 = smul.addr %s199, 315
        %s201 = smul.addr %s200, 4
        %s202 = scalar_lea.vmem %s2, %s201
        %s203 = smul.u32 2, %s11
      $region28: #{network_forward.1} parent=19 // pred_fallthru
        _
      // Predicated region
      $region29: #{network_forward.1} parent=19 // pred_check
        %p204 = pneg %p104
      $region30: #{network_forward.1} parent=19 // pred_check_branch
        %206 = sbr.rel (%p204) target = $region32
      $region31: #{network_forward.1} parent=19 // pred_region
        %s207 = smul.u32 2, %s11
        %p208 = scmp.lt.s32.totalorder %s207, 3
        %s209 = scalar_select %p208, %s207, 3
        %s210 = smul.addr %s209, 80
        %s211 = smul.addr %s210, 4
        %s212 = scalar_lea.vmem %s3, %s211
        %s213 = smul.u32 2, %s11
      $region32: #{network_forward.1} parent=19 // pred_fallthru
        _
      // Predicated region
      $region33: #{network_forward.1} parent=19 // pred_check
        %p214 = pneg %p130
      $region34: #{network_forward.1} parent=19 // pred_check_branch
        %216 = sbr.rel (%p214) target = $region36
      $region35: #{network_forward.1} parent=19 // pred_region
        %s217 = smul.u32 2, %s11
        %p218 = scmp.lt.s32.totalorder %s217, 3
        %s219 = scalar_select %p218, %s217, 3
        %s220 = smul.addr %s219, 6
        %s221 = scalar_lea.vmem %s4, %s220
        %s222 = smul.u32 2, %s11
      $region36: #{network_forward.1} parent=19 // pred_fallthru
        _
    $region20: #{network_forward.1} parent=5 // pred_fallthru
      _
    %p223 = scmp.le.s32.totalorder 1, %s11
    %p224 = scmp.lt.s32.totalorder %s11, 3
    %p225 = pnand %p223, %p224
    %p226 = pneg %p225
    // Predicated region
    $region37: #{network_forward.1} parent=5 // pred_check
      _
    $region38: #{network_forward.1} parent=5 // pred_check_branch
      %228 = sbr.rel (%p225) target = $region40
    $region39: #{network_forward.1} parent=5 // pred_region
      %s229 = ssub.s32 %s11, 1
      %p230 = pneg %p32
      %p231 = pneg %p29
      %s232 = smul.u32 2, %s16
      %p233 = scmp.lt.s32.totalorder %s232, 3
      %s234 = scalar_select %p233, %s232, 3
      %s235 = smul.addr %s234, 12
      %s236 = smul.addr %s235, 8
      %s237 = scalar_lea.vmem %s1, %s236
      %p238 = pneg %p58
      %p239 = pneg %p55
      %s240 = smul.u32 2, %s16
      %p241 = scmp.lt.s32.totalorder %s240, 3
      %s242 = scalar_select %p241, %s240, 3
      %s243 = smul.addr %s242, 315
      %s244 = smul.addr %s243, 4
      %s245 = scalar_lea.vmem %s2, %s244
      %p246 = pneg %p84
      %p247 = pneg %p81
      %s248 = smul.u32 2, %s16
      %p249 = scmp.lt.s32.totalorder %s248, 3
      %s250 = scalar_select %p249, %s248, 3
      %s251 = smul.addr %s250, 80
      %s252 = smul.addr %s251, 4
      %s253 = scalar_lea.vmem %s3, %s252
      %p254 = pneg %p110
      %p255 = pneg %p107
      %s256 = smul.u32 2, %s16
      %p257 = scmp.lt.s32.totalorder %s256, 3
      %s258 = scalar_select %p257, %s256, 3
      %s259 = smul.addr %s258, 6
      %s260 = scalar_lea.vmem %s4, %s259
      %p261 = pneg %p136
      %p262 = pneg %p133
      %p263 = pneg %p162
      %p264 = pneg %p159
      %s265 = smul.u32 2, %s16
      %p266 = scmp.lt.s32.totalorder %s265, 3
      %s267 = scalar_select %p266, %s265, 3
      %s268 = smul.addr %s267, 8
      %s269 = scalar_lea.vmem %s5, %s268
      %s270 = smul.u32 2, %s16
      %p271 = scmp.lt.s32.totalorder %s270, 3
      %s272 = scalar_select %p271, %s270, 3
      %s273 = smul.addr %s272, 12
      %s274 = smul.addr %s273, 8
      %s275 = scalar_lea.vmem %s1, %s274
      %s276 = smul.u32 2, %s16
      %s277 = smul.u32 2, %s16
      %p278 = scmp.lt.s32.totalorder %s277, 3
      %s279 = scalar_select %p278, %s277, 3
      %s280 = smul.addr %s279, 315
      %s281 = smul.addr %s280, 4
      %s282 = scalar_lea.vmem %s2, %s281
      %s283 = smul.u32 2, %s16
      %s284 = smul.u32 2, %s16
      %p285 = scmp.lt.s32.totalorder %s284, 3
      %s286 = scalar_select %p285, %s284, 3
      %s287 = smul.addr %s286, 80
      %s288 = smul.addr %s287, 4
      %s289 = scalar_lea.vmem %s3, %s288
      %s290 = smul.u32 2, %s16
      %s291 = smul.u32 2, %s16
      %p292 = scmp.lt.s32.totalorder %s291, 3
      %s293 = scalar_select %p292, %s291, 3
      %s294 = smul.addr %s293, 6
      %s295 = scalar_lea.vmem %s4, %s294
      %s296 = smul.u32 2, %s16
      %s297 = smul.u32 2, %s16
      %p298 = scmp.lt.s32.totalorder %s297, 3
      %s299 = scalar_select %p298, %s297, 3
      %s300 = smul.addr %s299, 8
      %s301 = scalar_lea.vmem %s5, %s300
      %s302 = smul.u32 2, %s16
      %v304 = vld [vmem:[%s0] sm:$0xff]
      %v305 = vld [vmem:[%s0 + $0x8] sm:$0xff]
      %v306 = vld [vmem:[%s0 + $0x10] sm:$0xff]
      %v307 = vld [vmem:[%s0 + $0x18] sm:$0xff]
      %v308 = vld [vmem:[%s0 + $0x20] sm:$0xff]
      %v309 = vld [vmem:[%s0 + $0x28] sm:$0xff]
      %v310 = vld [vmem:[%s0 + $0x30] sm:$0xff]
      %v311 = vld [vmem:[%s0 + $0x38] sm:$0xff]
      %v312 = vld [vmem:[%s0 + $0x40] sm:$0xff]
      %v313 = vld [vmem:[%s0 + $0x48] sm:$0xff]
      %v314 = vld [vmem:[%s0 + $0x50] sm:$0xff]
      %v315 = vld [vmem:[%s0 + $0x58] sm:$0xff]
      %v316 = vld [vmem:[%s0 + $0x60] sm:$0xff]
      %v317 = vld [vmem:[%s0 + $0x68] sm:$0xff]
      %v318 = vld [vmem:[%s0 + $0x70] sm:$0xff]
      %v319 = vld [vmem:[%s0 + $0x78] sm:$0xff]
      %v320 = vld [vmem:[%s0 + $0x80] sm:$0xff]
      %v321 = vld [vmem:[%s0 + $0x88] sm:$0xff]
      %v322 = vld [vmem:[%s0 + $0x90] sm:$0xff]
      %v323 = vld [vmem:[%s0 + $0x98] sm:$0xff]
      %v324 = vld [vmem:[%s0 + $0xa0] sm:$0xff]
      %v325 = vld [vmem:[%s275] sm:$0xff]
      %v326 = vld [vmem:[%s275 + $0x8] sm:$0xff]
      %v327 = vld [vmem:[%s275 + $0x10] sm:$0xf]
      %s328 = scalar_lea.vmem %s275, 72
      %v329 = vld [vmem:[%s328] sm:$0x1]
      %v330 = vlaneseq
      %v331 = vshrl.u32 %v330, 7
      %v332 = vsub.s32 0, %v331
      %v333 = vrot.slane %v329, %v332
      %vm334 = vcmask 162816
      %v336 = vsel %vm334, %v304, 0
      %v339 = vsel %vm334, %v305, 0
      %v342 = vsel %vm334, %v306, 0
      %v345 = vsel %vm334, %v307, 0
      %v348 = vsel %vm334, %v308, 0
      %v351 = vsel %vm334, %v309, 0
      %v354 = vsel %vm334, %v310, 0
      %v357 = vsel %vm334, %v311, 0
      %v360 = vsel %vm334, %v312, 0
      %v363 = vsel %vm334, %v313, 0
      %v366 = vsel %vm334, %v314, 0
      %v369 = vsel %vm334, %v315, 0
      %v372 = vsel %vm334, %v316, 0
      %v375 = vsel %vm334, %v317, 0
      %v378 = vsel %vm334, %v318, 0
      %v381 = vsel %vm334, %v319, 0
      %v384 = vsel %vm334, %v320, 0
      %v387 = vsel %vm334, %v321, 0
      %v390 = vsel %vm334, %v322, 0
      %v393 = vsel %vm334, %v323, 0
      %v396 = vsel %vm334, %v324, 0
      %vm398 = vcmask 1043456
      %v400 = vsel %vm398, %v327, 0
      %402 = vmatprep.subr.mxu0 0.0
      %403 = vmatpush1.msra.mxu0 0.0
      %404 = vmatprep.subr.mxu0 0.0
      %405 = vmatpush1.msra.mxu0 0.0
      %406 = vmatprep.subr.mxu0 0.0
      %407 = vmatpush1.msra.mxu0 0.0
      %408 = vmatprep.subr.mxu0 0.0
      %409 = vmatpush1.msra.mxu0 0.0
      %410 = vmatprep.subr.mxu0 0.0
      %411 = vmatpush1.msra.mxu0 0.0
      %412 = vmatprep.subr.mxu0 0.0
      %413 = vmatpush1.msra.mxu0 0.0
      %414 = vmatprep.subr.mxu0 0.0
      %415 = vmatpush1.msra.mxu0 0.0
      %416 = vmatprep.subr.mxu0 0.0
      %417 = vmatpush1.msra.mxu0 0.0
      %418 = vmatprep.subr.mxu0 0.0
      %419 = vmatpush1.msra.mxu0 0.0
      %420 = vmatprep.subr.mxu0 0.0
      %421 = vmatpush1.msra.mxu0 0.0
      %422 = vmatprep.subr.mxu0 0.0
      %423 = vmatpush1.msra.mxu0 0.0
      %424 = vmatprep.subr.mxu0 0.0
      %425 = vmatpush1.msra.mxu0 0.0
      %426 = vmatprep.subr.mxu0 0.0
      %427 = vmatpush1.msra.mxu0 0.0
      %428 = vmatprep.subr.mxu0 0.0
      %429 = vmatpush1.msra.mxu0 %v400
      %430 = vmatprep.subr.mxu0 0.0
      %431 = vmatpush1.msra.mxu0 %v326
      %432 = vmatprep.subr.mxu0 0.0
      %433 = vmatpush1.msra.mxu0 %v325
      %434 = vmatprep.subr.mxu0 0.0
      %435 = vmatpush2.msra.mxu0 0.0
      %436 = vmatprep.subr.mxu0 0.0
      %437 = vmatpush2.msra.mxu0 0.0
      %438 = vmatprep.subr.mxu0 0.0
      %439 = vmatpush2.msra.mxu0 0.0
      %440 = vmatprep.subr.mxu0 0.0
      %441 = vmatpush2.msra.mxu0 0.0
      %442 = vmatprep.subr.mxu0 0.0
      %443 = vmatpush2.msra.mxu0 0.0
      %444 = vmatprep.subr.mxu0 0.0
      %445 = vmatpush2.msra.mxu0 0.0
      %446 = vmatprep.subr.mxu0 0.0
      %447 = vmatpush2.msra.mxu0 0.0
      %448 = vmatprep.subr.mxu0 0.0
      %449 = vmatpush2.msra.mxu0 0.0
      %450 = vmatprep.subr.mxu0 0.0
      %451 = vmatpush2.msra.mxu0 0.0
      %452 = vmatprep.subr.mxu0 0.0
      %453 = vmatpush2.msra.mxu0 0.0
      %454 = vmatprep.subr.mxu0 0.0
      %455 = vmatpush2.msra.mxu0 0.0
      %456 = vmatprep.subr.mxu0 0.0
      %457 = vmatpush2.msra.mxu0 0.0
      %458 = vmatprep.subr.mxu0 0.0
      %459 = vmatpush2.msra.mxu0 0.0
      %460 = vmatprep.subr.mxu0 0.0
      %461 = vmatpush2.msra.mxu0 0.0
      %462 = vmatprep.subr.mxu0 0.0
      %463 = vmatpush2.msra.mxu0 0.0
      %464 = vmatprep.subr.mxu0 0.0
      %465 = vmatpush2.msra.mxu0 0.0
      %466 = vmatprep.mubr.f32.mxu0 0.0
      %467 = vmatmul.mubr.f32.gmra.mxu0 %v336
      %v468 = vpop.f32.mrf.mxu0
      %v469 = vadd.f32 %v333, %v468
      %v470 = vpop.f32.mrf.mxu0
      %471 = vmatprep.mubr.f32.mxu0 0.0
      %472 = vmatmul.mubr.f32.gmra.mxu0 %v339
      %v473 = vpop.f32.mrf.mxu0
      %v474 = vadd.f32 %v333, %v473
      %v475 = vpop.f32.mrf.mxu0
      %476 = vmatprep.mubr.f32.mxu0 0.0
      %477 = vmatmul.mubr.f32.gmra.mxu0 %v342
      %v478 = vpop.f32.mrf.mxu0
      %v479 = vadd.f32 %v333, %v478
      %v480 = vpop.f32.mrf.mxu0
      %481 = vmatprep.mubr.f32.mxu0 0.0
      %482 = vmatmul.mubr.f32.gmra.mxu0 %v345
      %v483 = vpop.f32.mrf.mxu0
      %v484 = vadd.f32 %v333, %v483
      %v485 = vpop.f32.mrf.mxu0
      %486 = vmatprep.mubr.f32.mxu0 0.0
      %487 = vmatmul.mubr.f32.gmra.mxu0 %v348
      %v488 = vpop.f32.mrf.mxu0
      %v489 = vadd.f32 %v333, %v488
      %v490 = vpop.f32.mrf.mxu0
      %491 = vmatprep.mubr.f32.mxu0 0.0
      %492 = vmatmul.mubr.f32.gmra.mxu0 %v351
      %v493 = vpop.f32.mrf.mxu0
      %v494 = vadd.f32 %v333, %v493
      %v495 = vpop.f32.mrf.mxu0
      %496 = vmatprep.mubr.f32.mxu0 0.0
      %497 = vmatmul.mubr.f32.gmra.mxu0 %v354
      %v498 = vpop.f32.mrf.mxu0
      %v499 = vadd.f32 %v333, %v498
      %v500 = vpop.f32.mrf.mxu0
      %501 = vmatprep.mubr.f32.mxu0 0.0
      %502 = vmatmul.mubr.f32.gmra.mxu0 %v357
      %v503 = vpop.f32.mrf.mxu0
      %v504 = vadd.f32 %v333, %v503
      %v505 = vpop.f32.mrf.mxu0
      %506 = vmatprep.mubr.f32.mxu0 0.0
      %507 = vmatmul.mubr.f32.gmra.mxu0 %v360
      %v508 = vpop.f32.mrf.mxu0
      %v509 = vadd.f32 %v333, %v508
      %v510 = vpop.f32.mrf.mxu0
      %511 = vmatprep.mubr.f32.mxu0 0.0
      %512 = vmatmul.mubr.f32.gmra.mxu0 %v363
      %v513 = vpop.f32.mrf.mxu0
      %v514 = vadd.f32 %v333, %v513
      %v515 = vpop.f32.mrf.mxu0
      %516 = vmatprep.mubr.f32.mxu0 0.0
      %517 = vmatmul.mubr.f32.gmra.mxu0 %v366
      %v518 = vpop.f32.mrf.mxu0
      %v519 = vadd.f32 %v333, %v518
      %v520 = vpop.f32.mrf.mxu0
      %521 = vmatprep.mubr.f32.mxu0 0.0
      %522 = vmatmul.mubr.f32.gmra.mxu0 %v369
      %v523 = vpop.f32.mrf.mxu0
      %v524 = vadd.f32 %v333, %v523
      %v525 = vpop.f32.mrf.mxu0
      %526 = vmatprep.mubr.f32.mxu0 0.0
      %527 = vmatmul.mubr.f32.gmra.mxu0 %v372
      %v528 = vpop.f32.mrf.mxu0
      %v529 = vadd.f32 %v333, %v528
      %v530 = vpop.f32.mrf.mxu0
      %531 = vmatprep.mubr.f32.mxu0 0.0
      %532 = vmatmul.mubr.f32.gmra.mxu0 %v375
      %v533 = vpop.f32.mrf.mxu0
      %v534 = vadd.f32 %v333, %v533
      %v535 = vpop.f32.mrf.mxu0
      %536 = vmatprep.mubr.f32.mxu0 0.0
      %537 = vmatmul.mubr.f32.gmra.mxu0 %v378
      %v538 = vpop.f32.mrf.mxu0
      %v539 = vadd.f32 %v333, %v538
      %v540 = vpop.f32.mrf.mxu0
      %541 = vmatprep.mubr.f32.mxu0 0.0
      %542 = vmatmul.mubr.f32.gmra.mxu0 %v381
      %v543 = vpop.f32.mrf.mxu0
      %v544 = vadd.f32 %v333, %v543
      %v545 = vpop.f32.mrf.mxu0
      %546 = vmatprep.mubr.f32.mxu0 0.0
      %547 = vmatmul.mubr.f32.gmra.mxu0 %v384
      %v548 = vpop.f32.mrf.mxu0
      %v549 = vadd.f32 %v333, %v548
      %v550 = vpop.f32.mrf.mxu0
      %551 = vmatprep.mubr.f32.mxu0 0.0
      %552 = vmatmul.mubr.f32.gmra.mxu0 %v387
      %v553 = vpop.f32.mrf.mxu0
      %v554 = vadd.f32 %v333, %v553
      %v555 = vpop.f32.mrf.mxu0
      %556 = vmatprep.mubr.f32.mxu0 0.0
      %557 = vmatmul.mubr.f32.gmra.mxu0 %v390
      %v558 = vpop.f32.mrf.mxu0
      %v559 = vadd.f32 %v333, %v558
      %v560 = vpop.f32.mrf.mxu0
      %561 = vmatprep.mubr.f32.mxu0 0.0
      %562 = vmatmul.mubr.f32.gmra.mxu0 %v393
      %v563 = vpop.f32.mrf.mxu0
      %v564 = vadd.f32 %v333, %v563
      %v565 = vpop.f32.mrf.mxu0
      %566 = vmatprep.mubr.f32.mxu0 0.0
      %567 = vmatmul.mubr.f32.gmra.mxu0 %v396
      %v568 = vpop.f32.mrf.mxu0
      %v569 = vadd.f32 %v333, %v568
      %v570 = vpop.f32.mrf.mxu0
      %571 = vdwg.mxu0
      %v572 = vmax.f32 %v469, 0.0
      %v573 = vmax.f32 %v474, 0.0
      %v574 = vmax.f32 %v479, 0.0
      %v575 = vmax.f32 %v484, 0.0
      %v576 = vmax.f32 %v489, 0.0
      %v577 = vmax.f32 %v494, 0.0
      %v578 = vmax.f32 %v499, 0.0
      %v579 = vmax.f32 %v504, 0.0
      %v580 = vmax.f32 %v509, 0.0
      %v581 = vmax.f32 %v514, 0.0
      %v582 = vmax.f32 %v519, 0.0
      %v583 = vmax.f32 %v524, 0.0
      %v584 = vmax.f32 %v529, 0.0
      %v585 = vmax.f32 %v534, 0.0
      %v586 = vmax.f32 %v539, 0.0
      %v587 = vmax.f32 %v544, 0.0
      %v588 = vmax.f32 %v549, 0.0
      %v589 = vmax.f32 %v554, 0.0
      %v590 = vmax.f32 %v559, 0.0
      %v591 = vmax.f32 %v564, 0.0
      %v592 = vmax.f32 %v569, 0.0
      %s593 = scalar_lea.vmem %s275, 24
      %v594 = vld [vmem:[%s593] sm:$0xff]
      %v595 = vld [vmem:[%s593 + $0x8] sm:$0xff]
      %v596 = vld [vmem:[%s593 + $0x10] sm:$0xf]
      %v597 = vld [vmem:[%s328 + $0x1] sm:$0x1]
      %v598 = vlaneseq
      %v599 = vshrl.u32 %v598, 7
      %v600 = vsub.s32 0, %v599
      %v601 = vrot.slane %v597, %v600
      %v603 = vsel %vm334, %v572, 0
      %v606 = vsel %vm334, %v573, 0
      %v609 = vsel %vm334, %v574, 0
      %v612 = vsel %vm334, %v575, 0
      %v615 = vsel %vm334, %v576, 0
      %v618 = vsel %vm334, %v577, 0
      %v621 = vsel %vm334, %v578, 0
      %v624 = vsel %vm334, %v579, 0
      %v627 = vsel %vm334, %v580, 0
      %v630 = vsel %vm334, %v581, 0
      %v633 = vsel %vm334, %v582, 0
      %v636 = vsel %vm334, %v583, 0
      %v639 = vsel %vm334, %v584, 0
      %v642 = vsel %vm334, %v585, 0
      %v645 = vsel %vm334, %v586, 0
      %v648 = vsel %vm334, %v587, 0
      %v651 = vsel %vm334, %v588, 0
      %v654 = vsel %vm334, %v589, 0
      %v657 = vsel %vm334, %v590, 0
      %v660 = vsel %vm334, %v591, 0
      %v663 = vsel %vm334, %v592, 0
      %v666 = vsel %vm398, %v596, 0
      %668 = vmatprep.subr.mxu0 0.0
      %669 = vmatpush1.msra.mxu0 0.0
      %670 = vmatprep.subr.mxu0 0.0
      %671 = vmatpush1.msra.mxu0 0.0
      %672 = vmatprep.subr.mxu0 0.0
      %673 = vmatpush1.msra.mxu0 0.0
      %674 = vmatprep.subr.mxu0 0.0
      %675 = vmatpush1.msra.mxu0 0.0
      %676 = vmatprep.subr.mxu0 0.0
      %677 = vmatpush1.msra.mxu0 0.0
      %678 = vmatprep.subr.mxu0 0.0
      %679 = vmatpush1.msra.mxu0 0.0
      %680 = vmatprep.subr.mxu0 0.0
      %681 = vmatpush1.msra.mxu0 0.0
      %682 = vmatprep.subr.mxu0 0.0
      %683 = vmatpush1.msra.mxu0 0.0
      %684 = vmatprep.subr.mxu0 0.0
      %685 = vmatpush1.msra.mxu0 0.0
      %686 = vmatprep.subr.mxu0 0.0
      %687 = vmatpush1.msra.mxu0 0.0
      %688 = vmatprep.subr.mxu0 0.0
      %689 = vmatpush1.msra.mxu0 0.0
      %690 = vmatprep.subr.mxu0 0.0
      %691 = vmatpush1.msra.mxu0 0.0
      %692 = vmatprep.subr.mxu0 0.0
      %693 = vmatpush1.msra.mxu0 0.0
      %694 = vmatprep.subr.mxu0 0.0
      %695 = vmatpush1.msra.mxu0 %v666
      %696 = vmatprep.subr.mxu0 0.0
      %697 = vmatpush1.msra.mxu0 %v595
      %698 = vmatprep.subr.mxu0 0.0
      %699 = vmatpush1.msra.mxu0 %v594
      %700 = vmatprep.subr.mxu0 0.0
      %701 = vmatpush2.msra.mxu0 0.0
      %702 = vmatprep.subr.mxu0 0.0
      %703 = vmatpush2.msra.mxu0 0.0
      %704 = vmatprep.subr.mxu0 0.0
      %705 = vmatpush2.msra.mxu0 0.0
      %706 = vmatprep.subr.mxu0 0.0
      %707 = vmatpush2.msra.mxu0 0.0
      %708 = vmatprep.subr.mxu0 0.0
      %709 = vmatpush2.msra.mxu0 0.0
      %710 = vmatprep.subr.mxu0 0.0
      %711 = vmatpush2.msra.mxu0 0.0
      %712 = vmatprep.subr.mxu0 0.0
      %713 = vmatpush2.msra.mxu0 0.0
      %714 = vmatprep.subr.mxu0 0.0
      %715 = vmatpush2.msra.mxu0 0.0
      %716 = vmatprep.subr.mxu0 0.0
      %717 = vmatpush2.msra.mxu0 0.0
      %718 = vmatprep.subr.mxu0 0.0
      %719 = vmatpush2.msra.mxu0 0.0
      %720 = vmatprep.subr.mxu0 0.0
      %721 = vmatpush2.msra.mxu0 0.0
      %722 = vmatprep.subr.mxu0 0.0
      %723 = vmatpush2.msra.mxu0 0.0
      %724 = vmatprep.subr.mxu0 0.0
      %725 = vmatpush2.msra.mxu0 0.0
      %726 = vmatprep.subr.mxu0 0.0
      %727 = vmatpush2.msra.mxu0 0.0
      %728 = vmatprep.subr.mxu0 0.0
      %729 = vmatpush2.msra.mxu0 0.0
      %730 = vmatprep.subr.mxu0 0.0
      %731 = vmatpush2.msra.mxu0 0.0
      %732 = vmatprep.mubr.f32.mxu0 0.0
      %733 = vmatmul.mubr.f32.gmra.mxu0 %v603
      %v734 = vpop.f32.mrf.mxu0
      %v735 = vadd.f32 %v601, %v734
      %v736 = vpop.f32.mrf.mxu0
      %737 = vmatprep.mubr.f32.mxu0 0.0
      %738 = vmatmul.mubr.f32.gmra.mxu0 %v606
      %v739 = vpop.f32.mrf.mxu0
      %v740 = vadd.f32 %v601, %v739
      %v741 = vpop.f32.mrf.mxu0
      %742 = vmatprep.mubr.f32.mxu0 0.0
      %743 = vmatmul.mubr.f32.gmra.mxu0 %v609
      %v744 = vpop.f32.mrf.mxu0
      %v745 = vadd.f32 %v601, %v744
      %v746 = vpop.f32.mrf.mxu0
      %747 = vmatprep.mubr.f32.mxu0 0.0
      %748 = vmatmul.mubr.f32.gmra.mxu0 %v612
      %v749 = vpop.f32.mrf.mxu0
      %v750 = vadd.f32 %v601, %v749
      %v751 = vpop.f32.mrf.mxu0
      %752 = vmatprep.mubr.f32.mxu0 0.0
      %753 = vmatmul.mubr.f32.gmra.mxu0 %v615
      %v754 = vpop.f32.mrf.mxu0
      %v755 = vadd.f32 %v601, %v754
      %v756 = vpop.f32.mrf.mxu0
      %757 = vmatprep.mubr.f32.mxu0 0.0
      %758 = vmatmul.mubr.f32.gmra.mxu0 %v618
      %v759 = vpop.f32.mrf.mxu0
      %v760 = vadd.f32 %v601, %v759
      %v761 = vpop.f32.mrf.mxu0
      %762 = vmatprep.mubr.f32.mxu0 0.0
      %763 = vmatmul.mubr.f32.gmra.mxu0 %v621
      %v764 = vpop.f32.mrf.mxu0
      %v765 = vadd.f32 %v601, %v764
      %v766 = vpop.f32.mrf.mxu0
      %767 = vmatprep.mubr.f32.mxu0 0.0
      %768 = vmatmul.mubr.f32.gmra.mxu0 %v624
      %v769 = vpop.f32.mrf.mxu0
      %v770 = vadd.f32 %v601, %v769
      %v771 = vpop.f32.mrf.mxu0
      %772 = vmatprep.mubr.f32.mxu0 0.0
      %773 = vmatmul.mubr.f32.gmra.mxu0 %v627
      %v774 = vpop.f32.mrf.mxu0
      %v775 = vadd.f32 %v601, %v774
      %v776 = vpop.f32.mrf.mxu0
      %777 = vmatprep.mubr.f32.mxu0 0.0
      %778 = vmatmul.mubr.f32.gmra.mxu0 %v630
      %v779 = vpop.f32.mrf.mxu0
      %v780 = vadd.f32 %v601, %v779
      %v781 = vpop.f32.mrf.mxu0
      %782 = vmatprep.mubr.f32.mxu0 0.0
      %783 = vmatmul.mubr.f32.gmra.mxu0 %v633
      %v784 = vpop.f32.mrf.mxu0
      %v785 = vadd.f32 %v601, %v784
      %v786 = vpop.f32.mrf.mxu0
      %787 = vmatprep.mubr.f32.mxu0 0.0
      %788 = vmatmul.mubr.f32.gmra.mxu0 %v636
      %v789 = vpop.f32.mrf.mxu0
      %v790 = vadd.f32 %v601, %v789
      %v791 = vpop.f32.mrf.mxu0
      %792 = vmatprep.mubr.f32.mxu0 0.0
      %793 = vmatmul.mubr.f32.gmra.mxu0 %v639
      %v794 = vpop.f32.mrf.mxu0
      %v795 = vadd.f32 %v601, %v794
      %v796 = vpop.f32.mrf.mxu0
      %797 = vmatprep.mubr.f32.mxu0 0.0
      %798 = vmatmul.mubr.f32.gmra.mxu0 %v642
      %v799 = vpop.f32.mrf.mxu0
      %v800 = vadd.f32 %v601, %v799
      %v801 = vpop.f32.mrf.mxu0
      %802 = vmatprep.mubr.f32.mxu0 0.0
      %803 = vmatmul.mubr.f32.gmra.mxu0 %v645
      %v804 = vpop.f32.mrf.mxu0
      %v805 = vadd.f32 %v601, %v804
      %v806 = vpop.f32.mrf.mxu0
      %807 = vmatprep.mubr.f32.mxu0 0.0
      %808 = vmatmul.mubr.f32.gmra.mxu0 %v648
      %v809 = vpop.f32.mrf.mxu0
      %v810 = vadd.f32 %v601, %v809
      %v811 = vpop.f32.mrf.mxu0
      %812 = vmatprep.mubr.f32.mxu0 0.0
      %813 = vmatmul.mubr.f32.gmra.mxu0 %v651
      %v814 = vpop.f32.mrf.mxu0
      %v815 = vadd.f32 %v601, %v814
      %v816 = vpop.f32.mrf.mxu0
      %817 = vmatprep.mubr.f32.mxu0 0.0
      %818 = vmatmul.mubr.f32.gmra.mxu0 %v654
      %v819 = vpop.f32.mrf.mxu0
      %v820 = vadd.f32 %v601, %v819
      %v821 = vpop.f32.mrf.mxu0
      %822 = vmatprep.mubr.f32.mxu0 0.0
      %823 = vmatmul.mubr.f32.gmra.mxu0 %v657
      %v824 = vpop.f32.mrf.mxu0
      %v825 = vadd.f32 %v601, %v824
      %v826 = vpop.f32.mrf.mxu0
      %827 = vmatprep.mubr.f32.mxu0 0.0
      %828 = vmatmul.mubr.f32.gmra.mxu0 %v660
      %v829 = vpop.f32.mrf.mxu0
      %v830 = vadd.f32 %v601, %v829
      %v831 = vpop.f32.mrf.mxu0
      %832 = vmatprep.mubr.f32.mxu0 0.0
      %833 = vmatmul.mubr.f32.gmra.mxu0 %v663
      %v834 = vpop.f32.mrf.mxu0
      %v835 = vadd.f32 %v601, %v834
      %v836 = vpop.f32.mrf.mxu0
      %837 = vdwg.mxu0
      %v838 = vmax.f32 %v735, 0.0
      %v839 = vmax.f32 %v740, 0.0
      %v840 = vmax.f32 %v745, 0.0
      %v841 = vmax.f32 %v750, 0.0
      %v842 = vmax.f32 %v755, 0.0
      %v843 = vmax.f32 %v760, 0.0
      %v844 = vmax.f32 %v765, 0.0
      %v845 = vmax.f32 %v770, 0.0
      %v846 = vmax.f32 %v775, 0.0
      %v847 = vmax.f32 %v780, 0.0
      %v848 = vmax.f32 %v785, 0.0
      %v849 = vmax.f32 %v790, 0.0
      %v850 = vmax.f32 %v795, 0.0
      %v851 = vmax.f32 %v800, 0.0
      %v852 = vmax.f32 %v805, 0.0
      %v853 = vmax.f32 %v810, 0.0
      %v854 = vmax.f32 %v815, 0.0
      %v855 = vmax.f32 %v820, 0.0
      %v856 = vmax.f32 %v825, 0.0
      %v857 = vmax.f32 %v830, 0.0
      %v858 = vmax.f32 %v835, 0.0
      %s859 = scalar_lea.vmem %s275, 48
      %v860 = vld [vmem:[%s859] sm:$0xff]
      %v861 = vld [vmem:[%s859 + $0x8] sm:$0xff]
      %v862 = vld [vmem:[%s859 + $0x10] sm:$0xf]
      %v863 = vld [vmem:[%s328 + $0x2] sm:$0x1]
      %v864 = vlaneseq
      %v865 = vshrl.u32 %v864, 7
      %v866 = vsub.s32 0, %v865
      %v867 = vrot.slane %v863, %v866
      %v869 = vsel %vm334, %v838, 0
      %v872 = vsel %vm334, %v839, 0
      %v875 = vsel %vm334, %v840, 0
      %v878 = vsel %vm334, %v841, 0
      %v881 = vsel %vm334, %v842, 0
      %v884 = vsel %vm334, %v843, 0
      %v887 = vsel %vm334, %v844, 0
      %v890 = vsel %vm334, %v845, 0
      %v893 = vsel %vm334, %v846, 0
      %v896 = vsel %vm334, %v847, 0
      %v899 = vsel %vm334, %v848, 0
      %v902 = vsel %vm334, %v849, 0
      %v905 = vsel %vm334, %v850, 0
      %v908 = vsel %vm334, %v851, 0
      %v911 = vsel %vm334, %v852, 0
      %v914 = vsel %vm334, %v853, 0
      %v917 = vsel %vm334, %v854, 0
      %v920 = vsel %vm334, %v855, 0
      %v923 = vsel %vm334, %v856, 0
      %v926 = vsel %vm334, %v857, 0
      %v929 = vsel %vm334, %v858, 0
      %v932 = vsel %vm398, %v862, 0
      %934 = vmatprep.subr.mxu0 0.0
      %935 = vmatpush1.msra.mxu0 0.0
      %936 = vmatprep.subr.mxu0 0.0
      %937 = vmatpush1.msra.mxu0 0.0
      %938 = vmatprep.subr.mxu0 0.0
      %939 = vmatpush1.msra.mxu0 0.0
      %940 = vmatprep.subr.mxu0 0.0
      %941 = vmatpush1.msra.mxu0 0.0
      %942 = vmatprep.subr.mxu0 0.0
      %943 = vmatpush1.msra.mxu0 0.0
      %944 = vmatprep.subr.mxu0 0.0
      %945 = vmatpush1.msra.mxu0 0.0
      %946 = vmatprep.subr.mxu0 0.0
      %947 = vmatpush1.msra.mxu0 0.0
      %948 = vmatprep.subr.mxu0 0.0
      %949 = vmatpush1.msra.mxu0 0.0
      %950 = vmatprep.subr.mxu0 0.0
      %951 = vmatpush1.msra.mxu0 0.0
      %952 = vmatprep.subr.mxu0 0.0
      %953 = vmatpush1.msra.mxu0 0.0
      %954 = vmatprep.subr.mxu0 0.0
      %955 = vmatpush1.msra.mxu0 0.0
      %956 = vmatprep.subr.mxu0 0.0
      %957 = vmatpush1.msra.mxu0 0.0
      %958 = vmatprep.subr.mxu0 0.0
      %959 = vmatpush1.msra.mxu0 0.0
      %960 = vmatprep.subr.mxu0 0.0
      %961 = vmatpush1.msra.mxu0 %v932
      %962 = vmatprep.subr.mxu0 0.0
      %963 = vmatpush1.msra.mxu0 %v861
      %964 = vmatprep.subr.mxu0 0.0
      %965 = vmatpush1.msra.mxu0 %v860
      %966 = vmatprep.subr.mxu0 0.0
      %967 = vmatpush2.msra.mxu0 0.0
      %968 = vmatprep.subr.mxu0 0.0
      %969 = vmatpush2.msra.mxu0 0.0
      %970 = vmatprep.subr.mxu0 0.0
      %971 = vmatpush2.msra.mxu0 0.0
      %972 = vmatprep.subr.mxu0 0.0
      %973 = vmatpush2.msra.mxu0 0.0
      %974 = vmatprep.subr.mxu0 0.0
      %975 = vmatpush2.msra.mxu0 0.0
      %976 = vmatprep.subr.mxu0 0.0
      %977 = vmatpush2.msra.mxu0 0.0
      %978 = vmatprep.subr.mxu0 0.0
      %979 = vmatpush2.msra.mxu0 0.0
      %980 = vmatprep.subr.mxu0 0.0
      %981 = vmatpush2.msra.mxu0 0.0
      %982 = vmatprep.subr.mxu0 0.0
      %983 = vmatpush2.msra.mxu0 0.0
      %984 = vmatprep.subr.mxu0 0.0
      %985 = vmatpush2.msra.mxu0 0.0
      %986 = vmatprep.subr.mxu0 0.0
      %987 = vmatpush2.msra.mxu0 0.0
      %988 = vmatprep.subr.mxu0 0.0
      %989 = vmatpush2.msra.mxu0 0.0
      %990 = vmatprep.subr.mxu0 0.0
      %991 = vmatpush2.msra.mxu0 0.0
      %992 = vmatprep.subr.mxu0 0.0
      %993 = vmatpush2.msra.mxu0 0.0
      %994 = vmatprep.subr.mxu0 0.0
      %995 = vmatpush2.msra.mxu0 0.0
      %996 = vmatprep.subr.mxu0 0.0
      %997 = vmatpush2.msra.mxu0 0.0
      %998 = vmatprep.mubr.f32.mxu0 0.0
      %999 = vmatmul.mubr.f32.gmra.mxu0 %v869
      %v1000 = vpop.f32.mrf.mxu0
      %v1001 = vadd.f32 %v867, %v1000
      %v1002 = vpop.f32.mrf.mxu0
      %1003 = vmatprep.mubr.f32.mxu0 0.0
      %1004 = vmatmul.mubr.f32.gmra.mxu0 %v872
      %v1005 = vpop.f32.mrf.mxu0
      %v1006 = vadd.f32 %v867, %v1005
      %v1007 = vpop.f32.mrf.mxu0
      %1008 = vmatprep.mubr.f32.mxu0 0.0
      %1009 = vmatmul.mubr.f32.gmra.mxu0 %v875
      %v1010 = vpop.f32.mrf.mxu0
      %v1011 = vadd.f32 %v867, %v1010
      %v1012 = vpop.f32.mrf.mxu0
      %1013 = vmatprep.mubr.f32.mxu0 0.0
      %1014 = vmatmul.mubr.f32.gmra.mxu0 %v878
      %v1015 = vpop.f32.mrf.mxu0
      %v1016 = vadd.f32 %v867, %v1015
      %v1017 = vpop.f32.mrf.mxu0
      %1018 = vmatprep.mubr.f32.mxu0 0.0
      %1019 = vmatmul.mubr.f32.gmra.mxu0 %v881
      %v1020 = vpop.f32.mrf.mxu0
      %v1021 = vadd.f32 %v867, %v1020
      %v1022 = vpop.f32.mrf.mxu0
      %1023 = vmatprep.mubr.f32.mxu0 0.0
      %1024 = vmatmul.mubr.f32.gmra.mxu0 %v884
      %v1025 = vpop.f32.mrf.mxu0
      %v1026 = vadd.f32 %v867, %v1025
      %v1027 = vpop.f32.mrf.mxu0
      %1028 = vmatprep.mubr.f32.mxu0 0.0
      %1029 = vmatmul.mubr.f32.gmra.mxu0 %v887
      %v1030 = vpop.f32.mrf.mxu0
      %v1031 = vadd.f32 %v867, %v1030
      %v1032 = vpop.f32.mrf.mxu0
      %1033 = vmatprep.mubr.f32.mxu0 0.0
      %1034 = vmatmul.mubr.f32.gmra.mxu0 %v890
      %v1035 = vpop.f32.mrf.mxu0
      %v1036 = vadd.f32 %v867, %v1035
      %v1037 = vpop.f32.mrf.mxu0
      %1038 = vmatprep.mubr.f32.mxu0 0.0
      %1039 = vmatmul.mubr.f32.gmra.mxu0 %v893
      %v1040 = vpop.f32.mrf.mxu0
      %v1041 = vadd.f32 %v867, %v1040
      %v1042 = vpop.f32.mrf.mxu0
      %1043 = vmatprep.mubr.f32.mxu0 0.0
      %1044 = vmatmul.mubr.f32.gmra.mxu0 %v896
      %v1045 = vpop.f32.mrf.mxu0
      %v1046 = vadd.f32 %v867, %v1045
      %v1047 = vpop.f32.mrf.mxu0
      %1048 = vmatprep.mubr.f32.mxu0 0.0
      %1049 = vmatmul.mubr.f32.gmra.mxu0 %v899
      %v1050 = vpop.f32.mrf.mxu0
      %v1051 = vadd.f32 %v867, %v1050
      %v1052 = vpop.f32.mrf.mxu0
      %1053 = vmatprep.mubr.f32.mxu0 0.0
      %1054 = vmatmul.mubr.f32.gmra.mxu0 %v902
      %v1055 = vpop.f32.mrf.mxu0
      %v1056 = vadd.f32 %v867, %v1055
      %v1057 = vpop.f32.mrf.mxu0
      %1058 = vmatprep.mubr.f32.mxu0 0.0
      %1059 = vmatmul.mubr.f32.gmra.mxu0 %v905
      %v1060 = vpop.f32.mrf.mxu0
      %v1061 = vadd.f32 %v867, %v1060
      %v1062 = vpop.f32.mrf.mxu0
      %1063 = vmatprep.mubr.f32.mxu0 0.0
      %1064 = vmatmul.mubr.f32.gmra.mxu0 %v908
      %v1065 = vpop.f32.mrf.mxu0
      %v1066 = vadd.f32 %v867, %v1065
      %v1067 = vpop.f32.mrf.mxu0
      %1068 = vmatprep.mubr.f32.mxu0 0.0
      %1069 = vmatmul.mubr.f32.gmra.mxu0 %v911
      %v1070 = vpop.f32.mrf.mxu0
      %v1071 = vadd.f32 %v867, %v1070
      %v1072 = vpop.f32.mrf.mxu0
      %1073 = vmatprep.mubr.f32.mxu0 0.0
      %1074 = vmatmul.mubr.f32.gmra.mxu0 %v914
      %v1075 = vpop.f32.mrf.mxu0
      %v1076 = vadd.f32 %v867, %v1075
      %v1077 = vpop.f32.mrf.mxu0
      %1078 = vmatprep.mubr.f32.mxu0 0.0
      %1079 = vmatmul.mubr.f32.gmra.mxu0 %v917
      %v1080 = vpop.f32.mrf.mxu0
      %v1081 = vadd.f32 %v867, %v1080
      %v1082 = vpop.f32.mrf.mxu0
      %1083 = vmatprep.mubr.f32.mxu0 0.0
      %1084 = vmatmul.mubr.f32.gmra.mxu0 %v920
      %v1085 = vpop.f32.mrf.mxu0
      %v1086 = vadd.f32 %v867, %v1085
      %v1087 = vpop.f32.mrf.mxu0
      %1088 = vmatprep.mubr.f32.mxu0 0.0
      %1089 = vmatmul.mubr.f32.gmra.mxu0 %v923
      %v1090 = vpop.f32.mrf.mxu0
      %v1091 = vadd.f32 %v867, %v1090
      %v1092 = vpop.f32.mrf.mxu0
      %1093 = vmatprep.mubr.f32.mxu0 0.0
      %1094 = vmatmul.mubr.f32.gmra.mxu0 %v926
      %v1095 = vpop.f32.mrf.mxu0
      %v1096 = vadd.f32 %v867, %v1095
      %v1097 = vpop.f32.mrf.mxu0
      %1098 = vmatprep.mubr.f32.mxu0 0.0
      %1099 = vmatmul.mubr.f32.gmra.mxu0 %v929
      %v1100 = vpop.f32.mrf.mxu0
      %v1101 = vadd.f32 %v867, %v1100
      %v1102 = vpop.f32.mrf.mxu0
      %1103 = vdwg.mxu0
      %v1104 = vmax.f32 %v1001, 0.0
      %v1105 = vmax.f32 %v1006, 0.0
      %v1106 = vmax.f32 %v1011, 0.0
      %v1107 = vmax.f32 %v1016, 0.0
      %v1108 = vmax.f32 %v1021, 0.0
      %v1109 = vmax.f32 %v1026, 0.0
      %v1110 = vmax.f32 %v1031, 0.0
      %v1111 = vmax.f32 %v1036, 0.0
      %v1112 = vmax.f32 %v1041, 0.0
      %v1113 = vmax.f32 %v1046, 0.0
      %v1114 = vmax.f32 %v1051, 0.0
      %v1115 = vmax.f32 %v1056, 0.0
      %v1116 = vmax.f32 %v1061, 0.0
      %v1117 = vmax.f32 %v1066, 0.0
      %v1118 = vmax.f32 %v1071, 0.0
      %v1119 = vmax.f32 %v1076, 0.0
      %v1120 = vmax.f32 %v1081, 0.0
      %v1121 = vmax.f32 %v1086, 0.0
      %v1122 = vmax.f32 %v1091, 0.0
      %v1123 = vmax.f32 %v1096, 0.0
      %v1124 = vmax.f32 %v1101, 0.0
      %v1125 = vpack.c.bf16 %v1104, %v1104
      %v1126 = vld [vmem:[%s282] sm:$0xff]
      %v1127 = vld [vmem:[%s282 + $0x8] sm:$0xff]
      %v1128 = vld [vmem:[%s282 + $0x10] sm:$0xf]
      %v1129 = vld [vmem:[%s282 + $0x14] sm:$0xff]
      %v1130 = vld [vmem:[%s282 + $0x1c] sm:$0xff]
      %v1131 = vld [vmem:[%s282 + $0x24] sm:$0xf]
      %v1132 = vld [vmem:[%s282 + $0x28] sm:$0x33]
      %v1133 = vld [vmem:[%s282 + $0x30] sm:$0x33]
      %v1134 = vld [vmem:[%s282 + $0x38] sm:$0x3]
      %v1135 = vpack.c.bf16 %v1105, %v1105
      %s1136 = scalar_lea.vmem %s282, 60
      %v1137 = vld [vmem:[%s1136] sm:$0xff]
      %v1138 = vld [vmem:[%s1136 + $0x8] sm:$0xff]
      %v1139 = vld [vmem:[%s1136 + $0x10] sm:$0xf]
      %v1140 = vld [vmem:[%s1136 + $0x14] sm:$0xff]
      %v1141 = vld [vmem:[%s1136 + $0x1c] sm:$0xff]
      %v1142 = vld [vmem:[%s1136 + $0x24] sm:$0xf]
      %v1143 = vld [vmem:[%s1136 + $0x28] sm:$0x33]
      %v1144 = vld [vmem:[%s1136 + $0x30] sm:$0x33]
      %v1145 = vld [vmem:[%s1136 + $0x38] sm:$0x3]
      %v1155 = vunpack.c.l.b16 %v1137
      %v1156 = vunpack.c.h.b16 %v1137
      %v1157 = vunpack.c.l.b16 %v1138
      %v1158 = vunpack.c.h.b16 %v1138
      %v1159 = vunpack.c.l.b16 %v1139
      %v1160 = vunpack.c.l.b16 %v1140
      %v1161 = vunpack.c.h.b16 %v1140
      %v1162 = vunpack.c.l.b16 %v1141
      %v1163 = vunpack.c.h.b16 %v1141
      %v1164 = vunpack.c.l.b16 %v1142
      %v1165 = vunpack.c.l.b16 %v1143
      %v1166 = vunpack.c.h.b16 %v1143
      %v1167 = vunpack.c.l.b16 %v1144
      %v1168 = vunpack.c.h.b16 %v1144
      %v1169 = vunpack.c.l.b16 %v1145
      %v1170 = vpack.c.b16 %v1160, %v1155
      %v1171 = vpack.c.b16 %v1161, %v1156
      %v1172 = vpack.c.b16 %v1162, %v1157
      %v1173 = vpack.c.b16 %v1163, %v1158
      %v1174 = vpack.c.b16 %v1164, %v1159
      %v1175 = vpack.c.b16 %v1165, %v1165
      %v1176 = vpack.c.b16 %v1166, %v1166
      %v1177 = vpack.c.b16 %v1167, %v1167
      %v1178 = vpack.c.b16 %v1168, %v1168
      %v1179 = vpack.c.b16 %v1169, %v1169
      %v1186 = vsel %vm334, %v1135, 0
      %vm1188 = vcmask 1041408
      %v1190 = vsel %vm1188, %v1175, 0
      %v1193 = vsel %vm1188, %v1176, 0
      %v1196 = vsel %vm1188, %v1177, 0
      %v1199 = vsel %vm1188, %v1178, 0
      %v1202 = vsel %vm1188, %v1179, 0
      %1204 = vmatprep.subr.bf16.mxu0 0
      %1205 = vmatpush1.bf16.msra.mxu0 0
      %1206 = vmatprep.subr.bf16.mxu0 0
      %1207 = vmatpush1.bf16.msra.mxu0 0
      %1208 = vmatprep.subr.bf16.mxu0 0
      %1209 = vmatpush1.bf16.msra.mxu0 0
      %1210 = vmatprep.subr.bf16.mxu0 0
      %1211 = vmatpush1.bf16.msra.mxu0 0
      %1212 = vmatprep.subr.bf16.mxu0 0
      %1213 = vmatpush1.bf16.msra.mxu0 0
      %1214 = vmatprep.subr.bf16.mxu0 0
      %1215 = vmatpush1.bf16.msra.mxu0 0
      %1216 = vmatprep.subr.bf16.mxu0 %v1193
      %1217 = vmatpush1.bf16.msra.mxu0 %v1190
      %1218 = vmatprep.subr.bf16.mxu0 %v1171
      %1219 = vmatpush1.bf16.msra.mxu0 %v1170
      %1220 = vmatprep.subr.bf16.mxu0 0
      %1221 = vmatpush2.bf16.msra.mxu0 0
      %1222 = vmatprep.subr.bf16.mxu0 0
      %1223 = vmatpush2.bf16.msra.mxu0 0
      %1224 = vmatprep.subr.bf16.mxu0 0
      %1225 = vmatpush2.bf16.msra.mxu0 0
      %1226 = vmatprep.subr.bf16.mxu0 0
      %1227 = vmatpush2.bf16.msra.mxu0 0
      %1228 = vmatprep.subr.bf16.mxu0 0
      %1229 = vmatpush2.bf16.msra.mxu0 0
      %1230 = vmatprep.subr.bf16.mxu0 0
      %1231 = vmatpush2.bf16.msra.mxu0 0
      %1232 = vmatprep.subr.bf16.mxu0 0
      %1233 = vmatpush2.bf16.msra.mxu0 0
      %1234 = vmatprep.subr.bf16.mxu0 0
      %1235 = vmatpush2.bf16.msra.mxu0 0
      %1236 = vmatprep.mubr.bf16.mxu0 0
      %1237 = vmatmul.mubr.bf16.gmra.mxu0 %v1186
      %v1238 = vpop.f32.mrf.mxu0
      %v1239 = vadd.f32 0.0, %v1238
      %v1240 = vpop.f32.mrf.mxu0
      %v1241 = vadd.f32 0.0, %v1240
      %v1242 = vpop.f32.mrf.mxu0
      %v1243 = vpop.f32.mrf.mxu0
      %1244 = vdwg.mxu0
      %1245 = vmatprep.subr.bf16.mxu0 0
      %1246 = vmatpush1.bf16.msra.mxu0 0
      %1247 = vmatprep.subr.bf16.mxu0 0
      %1248 = vmatpush1.bf16.msra.mxu0 0
      %1249 = vmatprep.subr.bf16.mxu0 0
      %1250 = vmatpush1.bf16.msra.mxu0 0
      %1251 = vmatprep.subr.bf16.mxu0 0
      %1252 = vmatpush1.bf16.msra.mxu0 0
      %1253 = vmatprep.subr.bf16.mxu0 0
      %1254 = vmatpush1.bf16.msra.mxu0 0
      %1255 = vmatprep.subr.bf16.mxu0 0
      %1256 = vmatpush1.bf16.msra.mxu0 0
      %1257 = vmatprep.subr.bf16.mxu0 %v1199
      %1258 = vmatpush1.bf16.msra.mxu0 %v1196
      %1259 = vmatprep.subr.bf16.mxu0 %v1173
      %1260 = vmatpush1.bf16.msra.mxu0 %v1172
      %1261 = vmatprep.subr.bf16.mxu0 0
      %1262 = vmatpush2.bf16.msra.mxu0 0
      %1263 = vmatprep.subr.bf16.mxu0 0
      %1264 = vmatpush2.bf16.msra.mxu0 0
      %1265 = vmatprep.subr.bf16.mxu0 0
      %1266 = vmatpush2.bf16.msra.mxu0 0
      %1267 = vmatprep.subr.bf16.mxu0 0
      %1268 = vmatpush2.bf16.msra.mxu0 0
      %1269 = vmatprep.subr.bf16.mxu0 0
      %1270 = vmatpush2.bf16.msra.mxu0 0
      %1271 = vmatprep.subr.bf16.mxu0 0
      %1272 = vmatpush2.bf16.msra.mxu0 0
      %1273 = vmatprep.subr.bf16.mxu0 0
      %1274 = vmatpush2.bf16.msra.mxu0 0
      %1275 = vmatprep.subr.bf16.mxu0 0
      %1276 = vmatpush2.bf16.msra.mxu0 0
      %1277 = vmatprep.mubr.bf16.mxu0 0
      %1278 = vmatmul.mubr.bf16.gmra.mxu0 %v1186
      %v1279 = vpop.f32.mrf.mxu0
      %v1280 = vadd.f32 0.0, %v1279
      %v1281 = vpop.f32.mrf.mxu0
      %v1282 = vadd.f32 0.0, %v1281
      %v1283 = vpop.f32.mrf.mxu0
      %v1284 = vpop.f32.mrf.mxu0
      %1285 = vdwg.mxu0
      %1286 = vmatprep.subr.bf16.mxu0 0
      %1287 = vmatpush1.bf16.msra.mxu0 0
      %1288 = vmatprep.subr.bf16.mxu0 0
      %1289 = vmatpush1.bf16.msra.mxu0 0
      %1290 = vmatprep.subr.bf16.mxu0 0
      %1291 = vmatpush1.bf16.msra.mxu0 0
      %1292 = vmatprep.subr.bf16.mxu0 0
      %1293 = vmatpush1.bf16.msra.mxu0 0
      %1294 = vmatprep.subr.bf16.mxu0 0
      %1295 = vmatpush1.bf16.msra.mxu0 0
      %1296 = vmatprep.subr.bf16.mxu0 0
      %1297 = vmatpush1.bf16.msra.mxu0 0
      %1298 = vmatprep.subr.bf16.mxu0 0
      %1299 = vmatpush1.bf16.msra.mxu0 %v1202
      %1300 = vmatprep.subr.bf16.mxu0 0
      %1301 = vmatpush1.bf16.msra.mxu0 %v1174
      %1302 = vmatprep.subr.bf16.mxu0 0
      %1303 = vmatpush2.bf16.msra.mxu0 0
      %1304 = vmatprep.subr.bf16.mxu0 0
      %1305 = vmatpush2.bf16.msra.mxu0 0
      %1306 = vmatprep.subr.bf16.mxu0 0
      %1307 = vmatpush2.bf16.msra.mxu0 0
      %1308 = vmatprep.subr.bf16.mxu0 0
      %1309 = vmatpush2.bf16.msra.mxu0 0
      %1310 = vmatprep.subr.bf16.mxu0 0
      %1311 = vmatpush2.bf16.msra.mxu0 0
      %1312 = vmatprep.subr.bf16.mxu0 0
      %1313 = vmatpush2.bf16.msra.mxu0 0
      %1314 = vmatprep.subr.bf16.mxu0 0
      %1315 = vmatpush2.bf16.msra.mxu0 0
      %1316 = vmatprep.subr.bf16.mxu0 0
      %1317 = vmatpush2.bf16.msra.mxu0 0
      %1318 = vmatprep.mubr.bf16.mxu0 0
      %1319 = vmatmul.mubr.bf16.gmra.mxu0 %v1186
      %v1320 = vpop.f32.mrf.mxu0
      %v1321 = vadd.f32 0.0, %v1320
      %v1322 = vpop.f32.mrf.mxu0
      %v1323 = vpop.f32.mrf.mxu0
      %v1324 = vpop.f32.mrf.mxu0
      %1325 = vdwg.mxu0
      %v1335 = vunpack.c.l.b16 %v1126
      %v1336 = vunpack.c.h.b16 %v1126
      %v1337 = vunpack.c.l.b16 %v1127
      %v1338 = vunpack.c.h.b16 %v1127
      %v1339 = vunpack.c.l.b16 %v1128
      %v1340 = vunpack.c.l.b16 %v1129
      %v1341 = vunpack.c.h.b16 %v1129
      %v1342 = vunpack.c.l.b16 %v1130
      %v1343 = vunpack.c.h.b16 %v1130
      %v1344 = vunpack.c.l.b16 %v1131
      %v1345 = vunpack.c.l.b16 %v1132
      %v1346 = vunpack.c.h.b16 %v1132
      %v1347 = vunpack.c.l.b16 %v1133
      %v1348 = vunpack.c.h.b16 %v1133
      %v1349 = vunpack.c.l.b16 %v1134
      %v1350 = vpack.c.b16 %v1340, %v1335
      %v1351 = vpack.c.b16 %v1341, %v1336
      %v1352 = vpack.c.b16 %v1342, %v1337
      %v1353 = vpack.c.b16 %v1343, %v1338
      %v1354 = vpack.c.b16 %v1344, %v1339
      %v1355 = vpack.c.b16 %v1345, %v1345
      %v1356 = vpack.c.b16 %v1346, %v1346
      %v1357 = vpack.c.b16 %v1347, %v1347
      %v1358 = vpack.c.b16 %v1348, %v1348
      %v1359 = vpack.c.b16 %v1349, %v1349
      %v1366 = vsel %vm334, %v1125, 0
      %v1369 = vsel %vm1188, %v1355, 0
      %v1372 = vsel %vm1188, %v1356, 0
      %v1375 = vsel %vm1188, %v1357, 0
      %v1378 = vsel %vm1188, %v1358, 0
      %v1381 = vsel %vm1188, %v1359, 0
      %1383 = vmatprep.subr.bf16.mxu0 0
      %1384 = vmatpush1.bf16.msra.mxu0 0
      %1385 = vmatprep.subr.bf16.mxu0 0
      %1386 = vmatpush1.bf16.msra.mxu0 0
      %1387 = vmatprep.subr.bf16.mxu0 0
      %1388 = vmatpush1.bf16.msra.mxu0 0
      %1389 = vmatprep.subr.bf16.mxu0 0
      %1390 = vmatpush1.bf16.msra.mxu0 0
      %1391 = vmatprep.subr.bf16.mxu0 0
      %1392 = vmatpush1.bf16.msra.mxu0 0
      %1393 = vmatprep.subr.bf16.mxu0 0
      %1394 = vmatpush1.bf16.msra.mxu0 0
      %1395 = vmatprep.subr.bf16.mxu0 %v1372
      %1396 = vmatpush1.bf16.msra.mxu0 %v1369
      %1397 = vmatprep.subr.bf16.mxu0 %v1351
      %1398 = vmatpush1.bf16.msra.mxu0 %v1350
      %1399 = vmatprep.subr.bf16.mxu0 0
      %1400 = vmatpush2.bf16.msra.mxu0 0
      %1401 = vmatprep.subr.bf16.mxu0 0
      %1402 = vmatpush2.bf16.msra.mxu0 0
      %1403 = vmatprep.subr.bf16.mxu0 0
      %1404 = vmatpush2.bf16.msra.mxu0 0
      %1405 = vmatprep.subr.bf16.mxu0 0
      %1406 = vmatpush2.bf16.msra.mxu0 0
      %1407 = vmatprep.subr.bf16.mxu0 0
      %1408 = vmatpush2.bf16.msra.mxu0 0
      %1409 = vmatprep.subr.bf16.mxu0 0
      %1410 = vmatpush2.bf16.msra.mxu0 0
      %1411 = vmatprep.subr.bf16.mxu0 0
      %1412 = vmatpush2.bf16.msra.mxu0 0
      %1413 = vmatprep.subr.bf16.mxu0 0
      %1414 = vmatpush2.bf16.msra.mxu0 0
      %1415 = vmatprep.mubr.bf16.mxu0 0
      %1416 = vmatmul.mubr.bf16.gmra.mxu0 %v1366
      %v1417 = vpop.f32.mrf.mxu0
      %v1418 = vadd.f32 %v1239, %v1417
      %v1419 = vpop.f32.mrf.mxu0
      %v1420 = vadd.f32 %v1241, %v1419
      %v1421 = vpop.f32.mrf.mxu0
      %v1422 = vpop.f32.mrf.mxu0
      %1423 = vdwg.mxu0
      %1424 = vmatprep.subr.bf16.mxu0 0
      %1425 = vmatpush1.bf16.msra.mxu0 0
      %1426 = vmatprep.subr.bf16.mxu0 0
      %1427 = vmatpush1.bf16.msra.mxu0 0
      %1428 = vmatprep.subr.bf16.mxu0 0
      %1429 = vmatpush1.bf16.msra.mxu0 0
      %1430 = vmatprep.subr.bf16.mxu0 0
      %1431 = vmatpush1.bf16.msra.mxu0 0
      %1432 = vmatprep.subr.bf16.mxu0 0
      %1433 = vmatpush1.bf16.msra.mxu0 0
      %1434 = vmatprep.subr.bf16.mxu0 0
      %1435 = vmatpush1.bf16.msra.mxu0 0
      %1436 = vmatprep.subr.bf16.mxu0 %v1378
      %1437 = vmatpush1.bf16.msra.mxu0 %v1375
      %1438 = vmatprep.subr.bf16.mxu0 %v1353
      %1439 = vmatpush1.bf16.msra.mxu0 %v1352
      %1440 = vmatprep.subr.bf16.mxu0 0
      %1441 = vmatpush2.bf16.msra.mxu0 0
      %1442 = vmatprep.subr.bf16.mxu0 0
      %1443 = vmatpush2.bf16.msra.mxu0 0
      %1444 = vmatprep.subr.bf16.mxu0 0
      %1445 = vmatpush2.bf16.msra.mxu0 0
      %1446 = vmatprep.subr.bf16.mxu0 0
      %1447 = vmatpush2.bf16.msra.mxu0 0
      %1448 = vmatprep.subr.bf16.mxu0 0
      %1449 = vmatpush2.bf16.msra.mxu0 0
      %1450 = vmatprep.subr.bf16.mxu0 0
      %1451 = vmatpush2.bf16.msra.mxu0 0
      %1452 = vmatprep.subr.bf16.mxu0 0
      %1453 = vmatpush2.bf16.msra.mxu0 0
      %1454 = vmatprep.subr.bf16.mxu0 0
      %1455 = vmatpush2.bf16.msra.mxu0 0
      %1456 = vmatprep.mubr.bf16.mxu0 0
      %1457 = vmatmul.mubr.bf16.gmra.mxu0 %v1366
      %v1458 = vpop.f32.mrf.mxu0
      %v1459 = vadd.f32 %v1280, %v1458
      %v1460 = vpop.f32.mrf.mxu0
      %v1461 = vadd.f32 %v1282, %v1460
      %v1462 = vpop.f32.mrf.mxu0
      %v1463 = vpop.f32.mrf.mxu0
      %1464 = vdwg.mxu0
      %1465 = vmatprep.subr.bf16.mxu0 0
      %1466 = vmatpush1.bf16.msra.mxu0 0
      %1467 = vmatprep.subr.bf16.mxu0 0
      %1468 = vmatpush1.bf16.msra.mxu0 0
      %1469 = vmatprep.subr.bf16.mxu0 0
      %1470 = vmatpush1.bf16.msra.mxu0 0
      %1471 = vmatprep.subr.bf16.mxu0 0
      %1472 = vmatpush1.bf16.msra.mxu0 0
      %1473 = vmatprep.subr.bf16.mxu0 0
      %1474 = vmatpush1.bf16.msra.mxu0 0
      %1475 = vmatprep.subr.bf16.mxu0 0
      %1476 = vmatpush1.bf16.msra.mxu0 0
      %1477 = vmatprep.subr.bf16.mxu0 0
      %1478 = vmatpush1.bf16.msra.mxu0 %v1381
      %1479 = vmatprep.subr.bf16.mxu0 0
      %1480 = vmatpush1.bf16.msra.mxu0 %v1354
      %1481 = vmatprep.subr.bf16.mxu0 0
      %1482 = vmatpush2.bf16.msra.mxu0 0
      %1483 = vmatprep.subr.bf16.mxu0 0
      %1484 = vmatpush2.bf16.msra.mxu0 0
      %1485 = vmatprep.subr.bf16.mxu0 0
      %1486 = vmatpush2.bf16.msra.mxu0 0
      %1487 = vmatprep.subr.bf16.mxu0 0
      %1488 = vmatpush2.bf16.msra.mxu0 0
      %1489 = vmatprep.subr.bf16.mxu0 0
      %1490 = vmatpush2.bf16.msra.mxu0 0
      %1491 = vmatprep.subr.bf16.mxu0 0
      %1492 = vmatpush2.bf16.msra.mxu0 0
      %1493 = vmatprep.subr.bf16.mxu0 0
      %1494 = vmatpush2.bf16.msra.mxu0 0
      %1495 = vmatprep.subr.bf16.mxu0 0
      %1496 = vmatpush2.bf16.msra.mxu0 0
      %1497 = vmatprep.mubr.bf16.mxu0 0
      %1498 = vmatmul.mubr.bf16.gmra.mxu0 %v1366
      %v1499 = vpop.f32.mrf.mxu0
      %v1500 = vadd.f32 %v1321, %v1499
      %v1501 = vpop.f32.mrf.mxu0
      %v1502 = vpop.f32.mrf.mxu0
      %v1503 = vpop.f32.mrf.mxu0
      %1504 = vdwg.mxu0
      %v1505 = vpack.c.bf16 %v1106, %v1106
      %s1506 = scalar_lea.vmem %s282, 120
      %v1507 = vld [vmem:[%s1506] sm:$0xff]
      %v1508 = vld [vmem:[%s1506 + $0x8] sm:$0xff]
      %v1509 = vld [vmem:[%s1506 + $0x10] sm:$0xf]
      %v1510 = vld [vmem:[%s1506 + $0x14] sm:$0xff]
      %v1511 = vld [vmem:[%s1506 + $0x1c] sm:$0xff]
      %v1512 = vld [vmem:[%s1506 + $0x24] sm:$0xf]
      %v1513 = vld [vmem:[%s1506 + $0x28] sm:$0x33]
      %v1514 = vld [vmem:[%s1506 + $0x30] sm:$0x33]
      %v1515 = vld [vmem:[%s1506 + $0x38] sm:$0x3]
      %v1525 = vunpack.c.l.b16 %v1507
      %v1526 = vunpack.c.h.b16 %v1507
      %v1527 = vunpack.c.l.b16 %v1508
      %v1528 = vunpack.c.h.b16 %v1508
      %v1529 = vunpack.c.l.b16 %v1509
      %v1530 = vunpack.c.l.b16 %v1510
      %v1531 = vunpack.c.h.b16 %v1510
      %v1532 = vunpack.c.l.b16 %v1511
      %v1533 = vunpack.c.h.b16 %v1511
      %v1534 = vunpack.c.l.b16 %v1512
      %v1535 = vunpack.c.l.b16 %v1513
      %v1536 = vunpack.c.h.b16 %v1513
      %v1537 = vunpack.c.l.b16 %v1514
      %v1538 = vunpack.c.h.b16 %v1514
      %v1539 = vunpack.c.l.b16 %v1515
      %v1540 = vpack.c.b16 %v1530, %v1525
      %v1541 = vpack.c.b16 %v1531, %v1526
      %v1542 = vpack.c.b16 %v1532, %v1527
      %v1543 = vpack.c.b16 %v1533, %v1528
      %v1544 = vpack.c.b16 %v1534, %v1529
      %v1545 = vpack.c.b16 %v1535, %v1535
      %v1546 = vpack.c.b16 %v1536, %v1536
      %v1547 = vpack.c.b16 %v1537, %v1537
      %v1548 = vpack.c.b16 %v1538, %v1538
      %v1549 = vpack.c.b16 %v1539, %v1539
      %v1556 = vsel %vm334, %v1505, 0
      %v1559 = vsel %vm1188, %v1545, 0
      %v1562 = vsel %vm1188, %v1546, 0
      %v1565 = vsel %vm1188, %v1547, 0
      %v1568 = vsel %vm1188, %v1548, 0
      %v1571 = vsel %vm1188, %v1549, 0
      %1573 = vmatprep.subr.bf16.mxu0 0
      %1574 = vmatpush1.bf16.msra.mxu0 0
      %1575 = vmatprep.subr.bf16.mxu0 0
      %1576 = vmatpush1.bf16.msra.mxu0 0
      %1577 = vmatprep.subr.bf16.mxu0 0
      %1578 = vmatpush1.bf16.msra.mxu0 0
      %1579 = vmatprep.subr.bf16.mxu0 0
      %1580 = vmatpush1.bf16.msra.mxu0 0
      %1581 = vmatprep.subr.bf16.mxu0 0
      %1582 = vmatpush1.bf16.msra.mxu0 0
      %1583 = vmatprep.subr.bf16.mxu0 0
      %1584 = vmatpush1.bf16.msra.mxu0 0
      %1585 = vmatprep.subr.bf16.mxu0 %v1562
      %1586 = vmatpush1.bf16.msra.mxu0 %v1559
      %1587 = vmatprep.subr.bf16.mxu0 %v1541
      %1588 = vmatpush1.bf16.msra.mxu0 %v1540
      %1589 = vmatprep.subr.bf16.mxu0 0
      %1590 = vmatpush2.bf16.msra.mxu0 0
      %1591 = vmatprep.subr.bf16.mxu0 0
      %1592 = vmatpush2.bf16.msra.mxu0 0
      %1593 = vmatprep.subr.bf16.mxu0 0
      %1594 = vmatpush2.bf16.msra.mxu0 0
      %1595 = vmatprep.subr.bf16.mxu0 0
      %1596 = vmatpush2.bf16.msra.mxu0 0
      %1597 = vmatprep.subr.bf16.mxu0 0
      %1598 = vmatpush2.bf16.msra.mxu0 0
      %1599 = vmatprep.subr.bf16.mxu0 0
      %1600 = vmatpush2.bf16.msra.mxu0 0
      %1601 = vmatprep.subr.bf16.mxu0 0
      %1602 = vmatpush2.bf16.msra.mxu0 0
      %1603 = vmatprep.subr.bf16.mxu0 0
      %1604 = vmatpush2.bf16.msra.mxu0 0
      %1605 = vmatprep.mubr.bf16.mxu0 0
      %1606 = vmatmul.mubr.bf16.gmra.mxu0 %v1556
      %v1607 = vpop.f32.mrf.mxu0
      %v1608 = vadd.f32 0.0, %v1607
      %v1609 = vpop.f32.mrf.mxu0
      %v1610 = vadd.f32 0.0, %v1609
      %v1611 = vpop.f32.mrf.mxu0
      %v1612 = vpop.f32.mrf.mxu0
      %1613 = vdwg.mxu0
      %1614 = vmatprep.subr.bf16.mxu0 0
      %1615 = vmatpush1.bf16.msra.mxu0 0
      %1616 = vmatprep.subr.bf16.mxu0 0
      %1617 = vmatpush1.bf16.msra.mxu0 0
      %1618 = vmatprep.subr.bf16.mxu0 0
      %1619 = vmatpush1.bf16.msra.mxu0 0
      %1620 = vmatprep.subr.bf16.mxu0 0
      %1621 = vmatpush1.bf16.msra.mxu0 0
      %1622 = vmatprep.subr.bf16.mxu0 0
      %1623 = vmatpush1.bf16.msra.mxu0 0
      %1624 = vmatprep.subr.bf16.mxu0 0
      %1625 = vmatpush1.bf16.msra.mxu0 0
      %1626 = vmatprep.subr.bf16.mxu0 %v1568
      %1627 = vmatpush1.bf16.msra.mxu0 %v1565
      %1628 = vmatprep.subr.bf16.mxu0 %v1543
      %1629 = vmatpush1.bf16.msra.mxu0 %v1542
      %1630 = vmatprep.subr.bf16.mxu0 0
      %1631 = vmatpush2.bf16.msra.mxu0 0
      %1632 = vmatprep.subr.bf16.mxu0 0
      %1633 = vmatpush2.bf16.msra.mxu0 0
      %1634 = vmatprep.subr.bf16.mxu0 0
      %1635 = vmatpush2.bf16.msra.mxu0 0
      %1636 = vmatprep.subr.bf16.mxu0 0
      %1637 = vmatpush2.bf16.msra.mxu0 0
      %1638 = vmatprep.subr.bf16.mxu0 0
      %1639 = vmatpush2.bf16.msra.mxu0 0
      %1640 = vmatprep.subr.bf16.mxu0 0
      %1641 = vmatpush2.bf16.msra.mxu0 0
      %1642 = vmatprep.subr.bf16.mxu0 0
      %1643 = vmatpush2.bf16.msra.mxu0 0
      %1644 = vmatprep.subr.bf16.mxu0 0
      %1645 = vmatpush2.bf16.msra.mxu0 0
      %1646 = vmatprep.mubr.bf16.mxu0 0
      %1647 = vmatmul.mubr.bf16.gmra.mxu0 %v1556
      %v1648 = vpop.f32.mrf.mxu0
      %v1649 = vadd.f32 0.0, %v1648
      %v1650 = vpop.f32.mrf.mxu0
      %v1651 = vadd.f32 0.0, %v1650
      %v1652 = vpop.f32.mrf.mxu0
      %v1653 = vpop.f32.mrf.mxu0
      %1654 = vdwg.mxu0
      %1655 = vmatprep.subr.bf16.mxu0 0
      %1656 = vmatpush1.bf16.msra.mxu0 0
      %1657 = vmatprep.subr.bf16.mxu0 0
      %1658 = vmatpush1.bf16.msra.mxu0 0
      %1659 = vmatprep.subr.bf16.mxu0 0
      %1660 = vmatpush1.bf16.msra.mxu0 0
      %1661 = vmatprep.subr.bf16.mxu0 0
      %1662 = vmatpush1.bf16.msra.mxu0 0
      %1663 = vmatprep.subr.bf16.mxu0 0
      %1664 = vmatpush1.bf16.msra.mxu0 0
      %1665 = vmatprep.subr.bf16.mxu0 0
      %1666 = vmatpush1.bf16.msra.mxu0 0
      %1667 = vmatprep.subr.bf16.mxu0 0
      %1668 = vmatpush1.bf16.msra.mxu0 %v1571
      %1669 = vmatprep.subr.bf16.mxu0 0
      %1670 = vmatpush1.bf16.msra.mxu0 %v1544
      %1671 = vmatprep.subr.bf16.mxu0 0
      %1672 = vmatpush2.bf16.msra.mxu0 0
      %1673 = vmatprep.subr.bf16.mxu0 0
      %1674 = vmatpush2.bf16.msra.mxu0 0
      %1675 = vmatprep.subr.bf16.mxu0 0
      %1676 = vmatpush2.bf16.msra.mxu0 0
      %1677 = vmatprep.subr.bf16.mxu0 0
      %1678 = vmatpush2.bf16.msra.mxu0 0
      %1679 = vmatprep.subr.bf16.mxu0 0
      %1680 = vmatpush2.bf16.msra.mxu0 0
      %1681 = vmatprep.subr.bf16.mxu0 0
      %1682 = vmatpush2.bf16.msra.mxu0 0
      %1683 = vmatprep.subr.bf16.mxu0 0
      %1684 = vmatpush2.bf16.msra.mxu0 0
      %1685 = vmatprep.subr.bf16.mxu0 0
      %1686 = vmatpush2.bf16.msra.mxu0 0
      %1687 = vmatprep.mubr.bf16.mxu0 0
      %1688 = vmatmul.mubr.bf16.gmra.mxu0 %v1556
      %v1689 = vpop.f32.mrf.mxu0
      %v1690 = vadd.f32 0.0, %v1689
      %v1691 = vpop.f32.mrf.mxu0
      %v1692 = vpop.f32.mrf.mxu0
      %v1693 = vpop.f32.mrf.mxu0
      %1694 = vdwg.mxu0
      %v1695 = vadd.f32 %v1418, %v1608
      %v1696 = vadd.f32 %v1420, %v1610
      %v1697 = vadd.f32 %v1459, %v1649
      %v1698 = vadd.f32 %v1461, %v1651
      %v1699 = vadd.f32 %v1500, %v1690
      %v1700 = vpack.c.bf16 %v1107, %v1107
      %s1701 = scalar_lea.vmem %s282, 180
      %v1702 = vld [vmem:[%s1701] sm:$0xff]
      %v1703 = vld [vmem:[%s1701 + $0x8] sm:$0xff]
      %v1704 = vld [vmem:[%s1701 + $0x10] sm:$0xf]
      %v1705 = vld [vmem:[%s1701 + $0x14] sm:$0xff]
      %v1706 = vld [vmem:[%s1701 + $0x1c] sm:$0xff]
      %v1707 = vld [vmem:[%s1701 + $0x24] sm:$0xf]
      %v1708 = vld [vmem:[%s1701 + $0x28] sm:$0x33]
      %v1709 = vld [vmem:[%s1701 + $0x30] sm:$0x33]
      %v1710 = vld [vmem:[%s1701 + $0x38] sm:$0x3]
      %v1720 = vunpack.c.l.b16 %v1702
      %v1721 = vunpack.c.h.b16 %v1702
      %v1722 = vunpack.c.l.b16 %v1703
      %v1723 = vunpack.c.h.b16 %v1703
      %v1724 = vunpack.c.l.b16 %v1704
      %v1725 = vunpack.c.l.b16 %v1705
      %v1726 = vunpack.c.h.b16 %v1705
      %v1727 = vunpack.c.l.b16 %v1706
      %v1728 = vunpack.c.h.b16 %v1706
      %v1729 = vunpack.c.l.b16 %v1707
      %v1730 = vunpack.c.l.b16 %v1708
      %v1731 = vunpack.c.h.b16 %v1708
      %v1732 = vunpack.c.l.b16 %v1709
      %v1733 = vunpack.c.h.b16 %v1709
      %v1734 = vunpack.c.l.b16 %v1710
      %v1735 = vpack.c.b16 %v1725, %v1720
      %v1736 = vpack.c.b16 %v1726, %v1721
      %v1737 = vpack.c.b16 %v1727, %v1722
      %v1738 = vpack.c.b16 %v1728, %v1723
      %v1739 = vpack.c.b16 %v1729, %v1724
      %v1740 = vpack.c.b16 %v1730, %v1730
      %v1741 = vpack.c.b16 %v1731, %v1731
      %v1742 = vpack.c.b16 %v1732, %v1732
      %v1743 = vpack.c.b16 %v1733, %v1733
      %v1744 = vpack.c.b16 %v1734, %v1734
      %v1751 = vsel %vm334, %v1700, 0
      %v1754 = vsel %vm1188, %v1740, 0
      %v1757 = vsel %vm1188, %v1741, 0
      %v1760 = vsel %vm1188, %v1742, 0
      %v1763 = vsel %vm1188, %v1743, 0
      %v1766 = vsel %vm1188, %v1744, 0
      %1768 = vmatprep.subr.bf16.mxu0 0
      %1769 = vmatpush1.bf16.msra.mxu0 0
      %1770 = vmatprep.subr.bf16.mxu0 0
      %1771 = vmatpush1.bf16.msra.mxu0 0
      %1772 = vmatprep.subr.bf16.mxu0 0
      %1773 = vmatpush1.bf16.msra.mxu0 0
      %1774 = vmatprep.subr.bf16.mxu0 0
      %1775 = vmatpush1.bf16.msra.mxu0 0
      %1776 = vmatprep.subr.bf16.mxu0 0
      %1777 = vmatpush1.bf16.msra.mxu0 0
      %1778 = vmatprep.subr.bf16.mxu0 0
      %1779 = vmatpush1.bf16.msra.mxu0 0
      %1780 = vmatprep.subr.bf16.mxu0 %v1757
      %1781 = vmatpush1.bf16.msra.mxu0 %v1754
      %1782 = vmatprep.subr.bf16.mxu0 %v1736
      %1783 = vmatpush1.bf16.msra.mxu0 %v1735
      %1784 = vmatprep.subr.bf16.mxu0 0
      %1785 = vmatpush2.bf16.msra.mxu0 0
      %1786 = vmatprep.subr.bf16.mxu0 0
      %1787 = vmatpush2.bf16.msra.mxu0 0
      %1788 = vmatprep.subr.bf16.mxu0 0
      %1789 = vmatpush2.bf16.msra.mxu0 0
      %1790 = vmatprep.subr.bf16.mxu0 0
      %1791 = vmatpush2.bf16.msra.mxu0 0
      %1792 = vmatprep.subr.bf16.mxu0 0
      %1793 = vmatpush2.bf16.msra.mxu0 0
      %1794 = vmatprep.subr.bf16.mxu0 0
      %1795 = vmatpush2.bf16.msra.mxu0 0
      %1796 = vmatprep.subr.bf16.mxu0 0
      %1797 = vmatpush2.bf16.msra.mxu0 0
      %1798 = vmatprep.subr.bf16.mxu0 0
      %1799 = vmatpush2.bf16.msra.mxu0 0
      %1800 = vmatprep.mubr.bf16.mxu0 0
      %1801 = vmatmul.mubr.bf16.gmra.mxu0 %v1751
      %v1802 = vpop.f32.mrf.mxu0
      %v1803 = vadd.f32 0.0, %v1802
      %v1804 = vpop.f32.mrf.mxu0
      %v1805 = vadd.f32 0.0, %v1804
      %v1806 = vpop.f32.mrf.mxu0
      %v1807 = vpop.f32.mrf.mxu0
      %1808 = vdwg.mxu0
      %1809 = vmatprep.subr.bf16.mxu0 0
      %1810 = vmatpush1.bf16.msra.mxu0 0
      %1811 = vmatprep.subr.bf16.mxu0 0
      %1812 = vmatpush1.bf16.msra.mxu0 0
      %1813 = vmatprep.subr.bf16.mxu0 0
      %1814 = vmatpush1.bf16.msra.mxu0 0
      %1815 = vmatprep.subr.bf16.mxu0 0
      %1816 = vmatpush1.bf16.msra.mxu0 0
      %1817 = vmatprep.subr.bf16.mxu0 0
      %1818 = vmatpush1.bf16.msra.mxu0 0
      %1819 = vmatprep.subr.bf16.mxu0 0
      %1820 = vmatpush1.bf16.msra.mxu0 0
      %1821 = vmatprep.subr.bf16.mxu0 %v1763
      %1822 = vmatpush1.bf16.msra.mxu0 %v1760
      %1823 = vmatprep.subr.bf16.mxu0 %v1738
      %1824 = vmatpush1.bf16.msra.mxu0 %v1737
      %1825 = vmatprep.subr.bf16.mxu0 0
      %1826 = vmatpush2.bf16.msra.mxu0 0
      %1827 = vmatprep.subr.bf16.mxu0 0
      %1828 = vmatpush2.bf16.msra.mxu0 0
      %1829 = vmatprep.subr.bf16.mxu0 0
      %1830 = vmatpush2.bf16.msra.mxu0 0
      %1831 = vmatprep.subr.bf16.mxu0 0
      %1832 = vmatpush2.bf16.msra.mxu0 0
      %1833 = vmatprep.subr.bf16.mxu0 0
      %1834 = vmatpush2.bf16.msra.mxu0 0
      %1835 = vmatprep.subr.bf16.mxu0 0
      %1836 = vmatpush2.bf16.msra.mxu0 0
      %1837 = vmatprep.subr.bf16.mxu0 0
      %1838 = vmatpush2.bf16.msra.mxu0 0
      %1839 = vmatprep.subr.bf16.mxu0 0
      %1840 = vmatpush2.bf16.msra.mxu0 0
      %1841 = vmatprep.mubr.bf16.mxu0 0
      %1842 = vmatmul.mubr.bf16.gmra.mxu0 %v1751
      %v1843 = vpop.f32.mrf.mxu0
      %v1844 = vadd.f32 0.0, %v1843
      %v1845 = vpop.f32.mrf.mxu0
      %v1846 = vadd.f32 0.0, %v1845
      %v1847 = vpop.f32.mrf.mxu0
      %v1848 = vpop.f32.mrf.mxu0
      %1849 = vdwg.mxu0
      %1850 = vmatprep.subr.bf16.mxu0 0
      %1851 = vmatpush1.bf16.msra.mxu0 0
      %1852 = vmatprep.subr.bf16.mxu0 0
      %1853 = vmatpush1.bf16.msra.mxu0 0
      %1854 = vmatprep.subr.bf16.mxu0 0
      %1855 = vmatpush1.bf16.msra.mxu0 0
      %1856 = vmatprep.subr.bf16.mxu0 0
      %1857 = vmatpush1.bf16.msra.mxu0 0
      %1858 = vmatprep.subr.bf16.mxu0 0
      %1859 = vmatpush1.bf16.msra.mxu0 0
      %1860 = vmatprep.subr.bf16.mxu0 0
      %1861 = vmatpush1.bf16.msra.mxu0 0
      %1862 = vmatprep.subr.bf16.mxu0 0
      %1863 = vmatpush1.bf16.msra.mxu0 %v1766
      %1864 = vmatprep.subr.bf16.mxu0 0
      %1865 = vmatpush1.bf16.msra.mxu0 %v1739
      %1866 = vmatprep.subr.bf16.mxu0 0
      %1867 = vmatpush2.bf16.msra.mxu0 0
      %1868 = vmatprep.subr.bf16.mxu0 0
      %1869 = vmatpush2.bf16.msra.mxu0 0
      %1870 = vmatprep.subr.bf16.mxu0 0
      %1871 = vmatpush2.bf16.msra.mxu0 0
      %1872 = vmatprep.subr.bf16.mxu0 0
      %1873 = vmatpush2.bf16.msra.mxu0 0
      %1874 = vmatprep.subr.bf16.mxu0 0
      %1875 = vmatpush2.bf16.msra.mxu0 0
      %1876 = vmatprep.subr.bf16.mxu0 0
      %1877 = vmatpush2.bf16.msra.mxu0 0
      %1878 = vmatprep.subr.bf16.mxu0 0
      %1879 = vmatpush2.bf16.msra.mxu0 0
      %1880 = vmatprep.subr.bf16.mxu0 0
      %1881 = vmatpush2.bf16.msra.mxu0 0
      %1882 = vmatprep.mubr.bf16.mxu0 0
      %1883 = vmatmul.mubr.bf16.gmra.mxu0 %v1751
      %v1884 = vpop.f32.mrf.mxu0
      %v1885 = vadd.f32 0.0, %v1884
      %v1886 = vpop.f32.mrf.mxu0
      %v1887 = vpop.f32.mrf.mxu0
      %v1888 = vpop.f32.mrf.mxu0
      %1889 = vdwg.mxu0
      %v1890 = vadd.f32 %v1695, %v1803
      %v1891 = vadd.f32 %v1696, %v1805
      %v1892 = vadd.f32 %v1697, %v1844
      %v1893 = vadd.f32 %v1698, %v1846
      %v1894 = vadd.f32 %v1699, %v1885
      %v1895 = vpack.c.bf16 %v1108, %v1108
      %s1896 = scalar_lea.vmem %s282, 240
      %v1897 = vld [vmem:[%s1896] sm:$0xff]
      %v1898 = vld [vmem:[%s1896 + $0x8] sm:$0xff]
      %v1899 = vld [vmem:[%s1896 + $0x10] sm:$0xf]
      %v1900 = vld [vmem:[%s1896 + $0x14] sm:$0xff]
      %v1901 = vld [vmem:[%s1896 + $0x1c] sm:$0xff]
      %v1902 = vld [vmem:[%s1896 + $0x24] sm:$0xf]
      %v1903 = vld [vmem:[%s1896 + $0x28] sm:$0x33]
      %v1904 = vld [vmem:[%s1896 + $0x30] sm:$0x33]
      %v1905 = vld [vmem:[%s1896 + $0x38] sm:$0x3]
      %v1915 = vunpack.c.l.b16 %v1897
      %v1916 = vunpack.c.h.b16 %v1897
      %v1917 = vunpack.c.l.b16 %v1898
      %v1918 = vunpack.c.h.b16 %v1898
      %v1919 = vunpack.c.l.b16 %v1899
      %v1920 = vunpack.c.l.b16 %v1900
      %v1921 = vunpack.c.h.b16 %v1900
      %v1922 = vunpack.c.l.b16 %v1901
      %v1923 = vunpack.c.h.b16 %v1901
      %v1924 = vunpack.c.l.b16 %v1902
      %v1925 = vunpack.c.l.b16 %v1903
      %v1926 = vunpack.c.h.b16 %v1903
      %v1927 = vunpack.c.l.b16 %v1904
      %v1928 = vunpack.c.h.b16 %v1904
      %v1929 = vunpack.c.l.b16 %v1905
      %v1930 = vpack.c.b16 %v1920, %v1915
      %v1931 = vpack.c.b16 %v1921, %v1916
      %v1932 = vpack.c.b16 %v1922, %v1917
      %v1933 = vpack.c.b16 %v1923, %v1918
      %v1934 = vpack.c.b16 %v1924, %v1919
      %v1935 = vpack.c.b16 %v1925, %v1925
      %v1936 = vpack.c.b16 %v1926, %v1926
      %v1937 = vpack.c.b16 %v1927, %v1927
      %v1938 = vpack.c.b16 %v1928, %v1928
      %v1939 = vpack.c.b16 %v1929, %v1929
      %v1946 = vsel %vm334, %v1895, 0
      %v1949 = vsel %vm1188, %v1935, 0
      %v1952 = vsel %vm1188, %v1936, 0
      %v1955 = vsel %vm1188, %v1937, 0
      %v1958 = vsel %vm1188, %v1938, 0
      %v1961 = vsel %vm1188, %v1939, 0
      %1963 = vmatprep.subr.bf16.mxu0 0
      %1964 = vmatpush1.bf16.msra.mxu0 0
      %1965 = vmatprep.subr.bf16.mxu0 0
      %1966 = vmatpush1.bf16.msra.mxu0 0
      %1967 = vmatprep.subr.bf16.mxu0 0
      %1968 = vmatpush1.bf16.msra.mxu0 0
      %1969 = vmatprep.subr.bf16.mxu0 0
      %1970 = vmatpush1.bf16.msra.mxu0 0
      %1971 = vmatprep.subr.bf16.mxu0 0
      %1972 = vmatpush1.bf16.msra.mxu0 0
      %1973 = vmatprep.subr.bf16.mxu0 0
      %1974 = vmatpush1.bf16.msra.mxu0 0
      %1975 = vmatprep.subr.bf16.mxu0 %v1952
      %1976 = vmatpush1.bf16.msra.mxu0 %v1949
      %1977 = vmatprep.subr.bf16.mxu0 %v1931
      %1978 = vmatpush1.bf16.msra.mxu0 %v1930
      %1979 = vmatprep.subr.bf16.mxu0 0
      %1980 = vmatpush2.bf16.msra.mxu0 0
      %1981 = vmatprep.subr.bf16.mxu0 0
      %1982 = vmatpush2.bf16.msra.mxu0 0
      %1983 = vmatprep.subr.bf16.mxu0 0
      %1984 = vmatpush2.bf16.msra.mxu0 0
      %1985 = vmatprep.subr.bf16.mxu0 0
      %1986 = vmatpush2.bf16.msra.mxu0 0
      %1987 = vmatprep.subr.bf16.mxu0 0
      %1988 = vmatpush2.bf16.msra.mxu0 0
      %1989 = vmatprep.subr.bf16.mxu0 0
      %1990 = vmatpush2.bf16.msra.mxu0 0
      %1991 = vmatprep.subr.bf16.mxu0 0
      %1992 = vmatpush2.bf16.msra.mxu0 0
      %1993 = vmatprep.subr.bf16.mxu0 0
      %1994 = vmatpush2.bf16.msra.mxu0 0
      %1995 = vmatprep.mubr.bf16.mxu0 0
      %1996 = vmatmul.mubr.bf16.gmra.mxu0 %v1946
      %v1997 = vpop.f32.mrf.mxu0
      %v1998 = vadd.f32 0.0, %v1997
      %v1999 = vpop.f32.mrf.mxu0
      %v2000 = vadd.f32 0.0, %v1999
      %v2001 = vpop.f32.mrf.mxu0
      %v2002 = vpop.f32.mrf.mxu0
      %2003 = vdwg.mxu0
      %2004 = vmatprep.subr.bf16.mxu0 0
      %2005 = vmatpush1.bf16.msra.mxu0 0
      %2006 = vmatprep.subr.bf16.mxu0 0
      %2007 = vmatpush1.bf16.msra.mxu0 0
      %2008 = vmatprep.subr.bf16.mxu0 0
      %2009 = vmatpush1.bf16.msra.mxu0 0
      %2010 = vmatprep.subr.bf16.mxu0 0
      %2011 = vmatpush1.bf16.msra.mxu0 0
      %2012 = vmatprep.subr.bf16.mxu0 0
      %2013 = vmatpush1.bf16.msra.mxu0 0
      %2014 = vmatprep.subr.bf16.mxu0 0
      %2015 = vmatpush1.bf16.msra.mxu0 0
      %2016 = vmatprep.subr.bf16.mxu0 %v1958
      %2017 = vmatpush1.bf16.msra.mxu0 %v1955
      %2018 = vmatprep.subr.bf16.mxu0 %v1933
      %2019 = vmatpush1.bf16.msra.mxu0 %v1932
      %2020 = vmatprep.subr.bf16.mxu0 0
      %2021 = vmatpush2.bf16.msra.mxu0 0
      %2022 = vmatprep.subr.bf16.mxu0 0
      %2023 = vmatpush2.bf16.msra.mxu0 0
      %2024 = vmatprep.subr.bf16.mxu0 0
      %2025 = vmatpush2.bf16.msra.mxu0 0
      %2026 = vmatprep.subr.bf16.mxu0 0
      %2027 = vmatpush2.bf16.msra.mxu0 0
      %2028 = vmatprep.subr.bf16.mxu0 0
      %2029 = vmatpush2.bf16.msra.mxu0 0
      %2030 = vmatprep.subr.bf16.mxu0 0
      %2031 = vmatpush2.bf16.msra.mxu0 0
      %2032 = vmatprep.subr.bf16.mxu0 0
      %2033 = vmatpush2.bf16.msra.mxu0 0
      %2034 = vmatprep.subr.bf16.mxu0 0
      %2035 = vmatpush2.bf16.msra.mxu0 0
      %2036 = vmatprep.mubr.bf16.mxu0 0
      %2037 = vmatmul.mubr.bf16.gmra.mxu0 %v1946
      %v2038 = vpop.f32.mrf.mxu0
      %v2039 = vadd.f32 0.0, %v2038
      %v2040 = vpop.f32.mrf.mxu0
      %v2041 = vadd.f32 0.0, %v2040
      %v2042 = vpop.f32.mrf.mxu0
      %v2043 = vpop.f32.mrf.mxu0
      %2044 = vdwg.mxu0
      %2045 = vmatprep.subr.bf16.mxu0 0
      %2046 = vmatpush1.bf16.msra.mxu0 0
      %2047 = vmatprep.subr.bf16.mxu0 0
      %2048 = vmatpush1.bf16.msra.mxu0 0
      %2049 = vmatprep.subr.bf16.mxu0 0
      %2050 = vmatpush1.bf16.msra.mxu0 0
      %2051 = vmatprep.subr.bf16.mxu0 0
      %2052 = vmatpush1.bf16.msra.mxu0 0
      %2053 = vmatprep.subr.bf16.mxu0 0
      %2054 = vmatpush1.bf16.msra.mxu0 0
      %2055 = vmatprep.subr.bf16.mxu0 0
      %2056 = vmatpush1.bf16.msra.mxu0 0
      %2057 = vmatprep.subr.bf16.mxu0 0
      %2058 = vmatpush1.bf16.msra.mxu0 %v1961
      %2059 = vmatprep.subr.bf16.mxu0 0
      %2060 = vmatpush1.bf16.msra.mxu0 %v1934
      %2061 = vmatprep.subr.bf16.mxu0 0
      %2062 = vmatpush2.bf16.msra.mxu0 0
      %2063 = vmatprep.subr.bf16.mxu0 0
      %2064 = vmatpush2.bf16.msra.mxu0 0
      %2065 = vmatprep.subr.bf16.mxu0 0
      %2066 = vmatpush2.bf16.msra.mxu0 0
      %2067 = vmatprep.subr.bf16.mxu0 0
      %2068 = vmatpush2.bf16.msra.mxu0 0
      %2069 = vmatprep.subr.bf16.mxu0 0
      %2070 = vmatpush2.bf16.msra.mxu0 0
      %2071 = vmatprep.subr.bf16.mxu0 0
      %2072 = vmatpush2.bf16.msra.mxu0 0
      %2073 = vmatprep.subr.bf16.mxu0 0
      %2074 = vmatpush2.bf16.msra.mxu0 0
      %2075 = vmatprep.subr.bf16.mxu0 0
      %2076 = vmatpush2.bf16.msra.mxu0 0
      %2077 = vmatprep.mubr.bf16.mxu0 0
      %2078 = vmatmul.mubr.bf16.gmra.mxu0 %v1946
      %v2079 = vpop.f32.mrf.mxu0
      %v2080 = vadd.f32 0.0, %v2079
      %v2081 = vpop.f32.mrf.mxu0
      %v2082 = vpop.f32.mrf.mxu0
      %v2083 = vpop.f32.mrf.mxu0
      %2084 = vdwg.mxu0
      %v2085 = vadd.f32 %v1890, %v1998
      %v2086 = vadd.f32 %v1891, %v2000
      %v2087 = vadd.f32 %v1892, %v2039
      %v2088 = vadd.f32 %v1893, %v2041
      %v2089 = vadd.f32 %v1894, %v2080
      %v2090 = vpack.c.bf16 %v1109, %v1109
      %s2091 = scalar_lea.vmem %s282, 300
      %v2092 = vld [vmem:[%s2091] sm:$0xff]
      %v2093 = vld [vmem:[%s2091 + $0x8] sm:$0xff]
      %v2094 = vld [vmem:[%s2091 + $0x10] sm:$0xf]
      %v2095 = vld [vmem:[%s2091 + $0x14] sm:$0xff]
      %v2096 = vld [vmem:[%s2091 + $0x1c] sm:$0xff]
      %v2097 = vld [vmem:[%s2091 + $0x24] sm:$0xf]
      %v2098 = vld [vmem:[%s2091 + $0x28] sm:$0x33]
      %v2099 = vld [vmem:[%s2091 + $0x30] sm:$0x33]
      %v2100 = vld [vmem:[%s2091 + $0x38] sm:$0x3]
      %v2110 = vunpack.c.l.b16 %v2092
      %v2111 = vunpack.c.h.b16 %v2092
      %v2112 = vunpack.c.l.b16 %v2093
      %v2113 = vunpack.c.h.b16 %v2093
      %v2114 = vunpack.c.l.b16 %v2094
      %v2115 = vunpack.c.l.b16 %v2095
      %v2116 = vunpack.c.h.b16 %v2095
      %v2117 = vunpack.c.l.b16 %v2096
      %v2118 = vunpack.c.h.b16 %v2096
      %v2119 = vunpack.c.l.b16 %v2097
      %v2120 = vunpack.c.l.b16 %v2098
      %v2121 = vunpack.c.h.b16 %v2098
      %v2122 = vunpack.c.l.b16 %v2099
      %v2123 = vunpack.c.h.b16 %v2099
      %v2124 = vunpack.c.l.b16 %v2100
      %v2125 = vpack.c.b16 %v2115, %v2110
      %v2126 = vpack.c.b16 %v2116, %v2111
      %v2127 = vpack.c.b16 %v2117, %v2112
      %v2128 = vpack.c.b16 %v2118, %v2113
      %v2129 = vpack.c.b16 %v2119, %v2114
      %v2130 = vpack.c.b16 %v2120, %v2120
      %v2131 = vpack.c.b16 %v2121, %v2121
      %v2132 = vpack.c.b16 %v2122, %v2122
      %v2133 = vpack.c.b16 %v2123, %v2123
      %v2134 = vpack.c.b16 %v2124, %v2124
      %v2141 = vsel %vm334, %v2090, 0
      %v2144 = vsel %vm1188, %v2130, 0
      %v2147 = vsel %vm1188, %v2131, 0
      %v2150 = vsel %vm1188, %v2132, 0
      %v2153 = vsel %vm1188, %v2133, 0
      %v2156 = vsel %vm1188, %v2134, 0
      %2158 = vmatprep.subr.bf16.mxu0 0
      %2159 = vmatpush1.bf16.msra.mxu0 0
      %2160 = vmatprep.subr.bf16.mxu0 0
      %2161 = vmatpush1.bf16.msra.mxu0 0
      %2162 = vmatprep.subr.bf16.mxu0 0
      %2163 = vmatpush1.bf16.msra.mxu0 0
      %2164 = vmatprep.subr.bf16.mxu0 0
      %2165 = vmatpush1.bf16.msra.mxu0 0
      %2166 = vmatprep.subr.bf16.mxu0 0
      %2167 = vmatpush1.bf16.msra.mxu0 0
      %2168 = vmatprep.subr.bf16.mxu0 0
      %2169 = vmatpush1.bf16.msra.mxu0 0
      %2170 = vmatprep.subr.bf16.mxu0 %v2147
      %2171 = vmatpush1.bf16.msra.mxu0 %v2144
      %2172 = vmatprep.subr.bf16.mxu0 %v2126
      %2173 = vmatpush1.bf16.msra.mxu0 %v2125
      %2174 = vmatprep.subr.bf16.mxu0 0
      %2175 = vmatpush2.bf16.msra.mxu0 0
      %2176 = vmatprep.subr.bf16.mxu0 0
      %2177 = vmatpush2.bf16.msra.mxu0 0
      %2178 = vmatprep.subr.bf16.mxu0 0
      %2179 = vmatpush2.bf16.msra.mxu0 0
      %2180 = vmatprep.subr.bf16.mxu0 0
      %2181 = vmatpush2.bf16.msra.mxu0 0
      %2182 = vmatprep.subr.bf16.mxu0 0
      %2183 = vmatpush2.bf16.msra.mxu0 0
      %2184 = vmatprep.subr.bf16.mxu0 0
      %2185 = vmatpush2.bf16.msra.mxu0 0
      %2186 = vmatprep.subr.bf16.mxu0 0
      %2187 = vmatpush2.bf16.msra.mxu0 0
      %2188 = vmatprep.subr.bf16.mxu0 0
      %2189 = vmatpush2.bf16.msra.mxu0 0
      %2190 = vmatprep.mubr.bf16.mxu0 0
      %2191 = vmatmul.mubr.bf16.gmra.mxu0 %v2141
      %v2192 = vpop.f32.mrf.mxu0
      %v2193 = vadd.f32 0.0, %v2192
      %v2194 = vpop.f32.mrf.mxu0
      %v2195 = vadd.f32 0.0, %v2194
      %v2196 = vpop.f32.mrf.mxu0
      %v2197 = vpop.f32.mrf.mxu0
      %2198 = vdwg.mxu0
      %2199 = vmatprep.subr.bf16.mxu0 0
      %2200 = vmatpush1.bf16.msra.mxu0 0
      %2201 = vmatprep.subr.bf16.mxu0 0
      %2202 = vmatpush1.bf16.msra.mxu0 0
      %2203 = vmatprep.subr.bf16.mxu0 0
      %2204 = vmatpush1.bf16.msra.mxu0 0
      %2205 = vmatprep.subr.bf16.mxu0 0
      %2206 = vmatpush1.bf16.msra.mxu0 0
      %2207 = vmatprep.subr.bf16.mxu0 0
      %2208 = vmatpush1.bf16.msra.mxu0 0
      %2209 = vmatprep.subr.bf16.mxu0 0
      %2210 = vmatpush1.bf16.msra.mxu0 0
      %2211 = vmatprep.subr.bf16.mxu0 %v2153
      %2212 = vmatpush1.bf16.msra.mxu0 %v2150
      %2213 = vmatprep.subr.bf16.mxu0 %v2128
      %2214 = vmatpush1.bf16.msra.mxu0 %v2127
      %2215 = vmatprep.subr.bf16.mxu0 0
      %2216 = vmatpush2.bf16.msra.mxu0 0
      %2217 = vmatprep.subr.bf16.mxu0 0
      %2218 = vmatpush2.bf16.msra.mxu0 0
      %2219 = vmatprep.subr.bf16.mxu0 0
      %2220 = vmatpush2.bf16.msra.mxu0 0
      %2221 = vmatprep.subr.bf16.mxu0 0
      %2222 = vmatpush2.bf16.msra.mxu0 0
      %2223 = vmatprep.subr.bf16.mxu0 0
      %2224 = vmatpush2.bf16.msra.mxu0 0
      %2225 = vmatprep.subr.bf16.mxu0 0
      %2226 = vmatpush2.bf16.msra.mxu0 0
      %2227 = vmatprep.subr.bf16.mxu0 0
      %2228 = vmatpush2.bf16.msra.mxu0 0
      %2229 = vmatprep.subr.bf16.mxu0 0
      %2230 = vmatpush2.bf16.msra.mxu0 0
      %2231 = vmatprep.mubr.bf16.mxu0 0
      %2232 = vmatmul.mubr.bf16.gmra.mxu0 %v2141
      %v2233 = vpop.f32.mrf.mxu0
      %v2234 = vadd.f32 0.0, %v2233
      %v2235 = vpop.f32.mrf.mxu0
      %v2236 = vadd.f32 0.0, %v2235
      %v2237 = vpop.f32.mrf.mxu0
      %v2238 = vpop.f32.mrf.mxu0
      %2239 = vdwg.mxu0
      %2240 = vmatprep.subr.bf16.mxu0 0
      %2241 = vmatpush1.bf16.msra.mxu0 0
      %2242 = vmatprep.subr.bf16.mxu0 0
      %2243 = vmatpush1.bf16.msra.mxu0 0
      %2244 = vmatprep.subr.bf16.mxu0 0
      %2245 = vmatpush1.bf16.msra.mxu0 0
      %2246 = vmatprep.subr.bf16.mxu0 0
      %2247 = vmatpush1.bf16.msra.mxu0 0
      %2248 = vmatprep.subr.bf16.mxu0 0
      %2249 = vmatpush1.bf16.msra.mxu0 0
      %2250 = vmatprep.subr.bf16.mxu0 0
      %2251 = vmatpush1.bf16.msra.mxu0 0
      %2252 = vmatprep.subr.bf16.mxu0 0
      %2253 = vmatpush1.bf16.msra.mxu0 %v2156
      %2254 = vmatprep.subr.bf16.mxu0 0
      %2255 = vmatpush1.bf16.msra.mxu0 %v2129
      %2256 = vmatprep.subr.bf16.mxu0 0
      %2257 = vmatpush2.bf16.msra.mxu0 0
      %2258 = vmatprep.subr.bf16.mxu0 0
      %2259 = vmatpush2.bf16.msra.mxu0 0
      %2260 = vmatprep.subr.bf16.mxu0 0
      %2261 = vmatpush2.bf16.msra.mxu0 0
      %2262 = vmatprep.subr.bf16.mxu0 0
      %2263 = vmatpush2.bf16.msra.mxu0 0
      %2264 = vmatprep.subr.bf16.mxu0 0
      %2265 = vmatpush2.bf16.msra.mxu0 0
      %2266 = vmatprep.subr.bf16.mxu0 0
      %2267 = vmatpush2.bf16.msra.mxu0 0
      %2268 = vmatprep.subr.bf16.mxu0 0
      %2269 = vmatpush2.bf16.msra.mxu0 0
      %2270 = vmatprep.subr.bf16.mxu0 0
      %2271 = vmatpush2.bf16.msra.mxu0 0
      %2272 = vmatprep.mubr.bf16.mxu0 0
      %2273 = vmatmul.mubr.bf16.gmra.mxu0 %v2141
      %v2274 = vpop.f32.mrf.mxu0
      %v2275 = vadd.f32 0.0, %v2274
      %v2276 = vpop.f32.mrf.mxu0
      %v2277 = vpop.f32.mrf.mxu0
      %v2278 = vpop.f32.mrf.mxu0
      %2279 = vdwg.mxu0
      %v2280 = vadd.f32 %v2085, %v2193
      %v2281 = vadd.f32 %v2086, %v2195
      %v2282 = vadd.f32 %v2087, %v2234
      %v2283 = vadd.f32 %v2088, %v2236
      %v2284 = vadd.f32 %v2089, %v2275
      %v2285 = vpack.c.bf16 %v1110, %v1110
      %s2286 = scalar_lea.vmem %s282, 360
      %v2287 = vld [vmem:[%s2286] sm:$0xff]
      %v2288 = vld [vmem:[%s2286 + $0x8] sm:$0xff]
      %v2289 = vld [vmem:[%s2286 + $0x10] sm:$0xf]
      %v2290 = vld [vmem:[%s2286 + $0x14] sm:$0xff]
      %v2291 = vld [vmem:[%s2286 + $0x1c] sm:$0xff]
      %v2292 = vld [vmem:[%s2286 + $0x24] sm:$0xf]
      %v2293 = vld [vmem:[%s2286 + $0x28] sm:$0x33]
      %v2294 = vld [vmem:[%s2286 + $0x30] sm:$0x33]
      %v2295 = vld [vmem:[%s2286 + $0x38] sm:$0x3]
      %v2305 = vunpack.c.l.b16 %v2287
      %v2306 = vunpack.c.h.b16 %v2287
      %v2307 = vunpack.c.l.b16 %v2288
      %v2308 = vunpack.c.h.b16 %v2288
      %v2309 = vunpack.c.l.b16 %v2289
      %v2310 = vunpack.c.l.b16 %v2290
      %v2311 = vunpack.c.h.b16 %v2290
      %v2312 = vunpack.c.l.b16 %v2291
      %v2313 = vunpack.c.h.b16 %v2291
      %v2314 = vunpack.c.l.b16 %v2292
      %v2315 = vunpack.c.l.b16 %v2293
      %v2316 = vunpack.c.h.b16 %v2293
      %v2317 = vunpack.c.l.b16 %v2294
      %v2318 = vunpack.c.h.b16 %v2294
      %v2319 = vunpack.c.l.b16 %v2295
      %v2320 = vpack.c.b16 %v2310, %v2305
      %v2321 = vpack.c.b16 %v2311, %v2306
      %v2322 = vpack.c.b16 %v2312, %v2307
      %v2323 = vpack.c.b16 %v2313, %v2308
      %v2324 = vpack.c.b16 %v2314, %v2309
      %v2325 = vpack.c.b16 %v2315, %v2315
      %v2326 = vpack.c.b16 %v2316, %v2316
      %v2327 = vpack.c.b16 %v2317, %v2317
      %v2328 = vpack.c.b16 %v2318, %v2318
      %v2329 = vpack.c.b16 %v2319, %v2319
      %v2336 = vsel %vm334, %v2285, 0
      %v2339 = vsel %vm1188, %v2325, 0
      %v2342 = vsel %vm1188, %v2326, 0
      %v2345 = vsel %vm1188, %v2327, 0
      %v2348 = vsel %vm1188, %v2328, 0
      %v2351 = vsel %vm1188, %v2329, 0
      %2353 = vmatprep.subr.bf16.mxu0 0
      %2354 = vmatpush1.bf16.msra.mxu0 0
      %2355 = vmatprep.subr.bf16.mxu0 0
      %2356 = vmatpush1.bf16.msra.mxu0 0
      %2357 = vmatprep.subr.bf16.mxu0 0
      %2358 = vmatpush1.bf16.msra.mxu0 0
      %2359 = vmatprep.subr.bf16.mxu0 0
      %2360 = vmatpush1.bf16.msra.mxu0 0
      %2361 = vmatprep.subr.bf16.mxu0 0
      %2362 = vmatpush1.bf16.msra.mxu0 0
      %2363 = vmatprep.subr.bf16.mxu0 0
      %2364 = vmatpush1.bf16.msra.mxu0 0
      %2365 = vmatprep.subr.bf16.mxu0 %v2342
      %2366 = vmatpush1.bf16.msra.mxu0 %v2339
      %2367 = vmatprep.subr.bf16.mxu0 %v2321
      %2368 = vmatpush1.bf16.msra.mxu0 %v2320
      %2369 = vmatprep.subr.bf16.mxu0 0
      %2370 = vmatpush2.bf16.msra.mxu0 0
      %2371 = vmatprep.subr.bf16.mxu0 0
      %2372 = vmatpush2.bf16.msra.mxu0 0
      %2373 = vmatprep.subr.bf16.mxu0 0
      %2374 = vmatpush2.bf16.msra.mxu0 0
      %2375 = vmatprep.subr.bf16.mxu0 0
      %2376 = vmatpush2.bf16.msra.mxu0 0
      %2377 = vmatprep.subr.bf16.mxu0 0
      %2378 = vmatpush2.bf16.msra.mxu0 0
      %2379 = vmatprep.subr.bf16.mxu0 0
      %2380 = vmatpush2.bf16.msra.mxu0 0
      %2381 = vmatprep.subr.bf16.mxu0 0
      %2382 = vmatpush2.bf16.msra.mxu0 0
      %2383 = vmatprep.subr.bf16.mxu0 0
      %2384 = vmatpush2.bf16.msra.mxu0 0
      %2385 = vmatprep.mubr.bf16.mxu0 0
      %2386 = vmatmul.mubr.bf16.gmra.mxu0 %v2336
      %v2387 = vpop.f32.mrf.mxu0
      %v2388 = vadd.f32 0.0, %v2387
      %v2389 = vpop.f32.mrf.mxu0
      %v2390 = vadd.f32 0.0, %v2389
      %v2391 = vpop.f32.mrf.mxu0
      %v2392 = vpop.f32.mrf.mxu0
      %2393 = vdwg.mxu0
      %2394 = vmatprep.subr.bf16.mxu0 0
      %2395 = vmatpush1.bf16.msra.mxu0 0
      %2396 = vmatprep.subr.bf16.mxu0 0
      %2397 = vmatpush1.bf16.msra.mxu0 0
      %2398 = vmatprep.subr.bf16.mxu0 0
      %2399 = vmatpush1.bf16.msra.mxu0 0
      %2400 = vmatprep.subr.bf16.mxu0 0
      %2401 = vmatpush1.bf16.msra.mxu0 0
      %2402 = vmatprep.subr.bf16.mxu0 0
      %2403 = vmatpush1.bf16.msra.mxu0 0
      %2404 = vmatprep.subr.bf16.mxu0 0
      %2405 = vmatpush1.bf16.msra.mxu0 0
      %2406 = vmatprep.subr.bf16.mxu0 %v2348
      %2407 = vmatpush1.bf16.msra.mxu0 %v2345
      %2408 = vmatprep.subr.bf16.mxu0 %v2323
      %2409 = vmatpush1.bf16.msra.mxu0 %v2322
      %2410 = vmatprep.subr.bf16.mxu0 0
      %2411 = vmatpush2.bf16.msra.mxu0 0
      %2412 = vmatprep.subr.bf16.mxu0 0
      %2413 = vmatpush2.bf16.msra.mxu0 0
      %2414 = vmatprep.subr.bf16.mxu0 0
      %2415 = vmatpush2.bf16.msra.mxu0 0
      %2416 = vmatprep.subr.bf16.mxu0 0
      %2417 = vmatpush2.bf16.msra.mxu0 0
      %2418 = vmatprep.subr.bf16.mxu0 0
      %2419 = vmatpush2.bf16.msra.mxu0 0
      %2420 = vmatprep.subr.bf16.mxu0 0
      %2421 = vmatpush2.bf16.msra.mxu0 0
      %2422 = vmatprep.subr.bf16.mxu0 0
      %2423 = vmatpush2.bf16.msra.mxu0 0
      %2424 = vmatprep.subr.bf16.mxu0 0
      %2425 = vmatpush2.bf16.msra.mxu0 0
      %2426 = vmatprep.mubr.bf16.mxu0 0
      %2427 = vmatmul.mubr.bf16.gmra.mxu0 %v2336
      %v2428 = vpop.f32.mrf.mxu0
      %v2429 = vadd.f32 0.0, %v2428
      %v2430 = vpop.f32.mrf.mxu0
      %v2431 = vadd.f32 0.0, %v2430
      %v2432 = vpop.f32.mrf.mxu0
      %v2433 = vpop.f32.mrf.mxu0
      %2434 = vdwg.mxu0
      %2435 = vmatprep.subr.bf16.mxu0 0
      %2436 = vmatpush1.bf16.msra.mxu0 0
      %2437 = vmatprep.subr.bf16.mxu0 0
      %2438 = vmatpush1.bf16.msra.mxu0 0
      %2439 = vmatprep.subr.bf16.mxu0 0
      %2440 = vmatpush1.bf16.msra.mxu0 0
      %2441 = vmatprep.subr.bf16.mxu0 0
      %2442 = vmatpush1.bf16.msra.mxu0 0
      %2443 = vmatprep.subr.bf16.mxu0 0
      %2444 = vmatpush1.bf16.msra.mxu0 0
      %2445 = vmatprep.subr.bf16.mxu0 0
      %2446 = vmatpush1.bf16.msra.mxu0 0
      %2447 = vmatprep.subr.bf16.mxu0 0
      %2448 = vmatpush1.bf16.msra.mxu0 %v2351
      %2449 = vmatprep.subr.bf16.mxu0 0
      %2450 = vmatpush1.bf16.msra.mxu0 %v2324
      %2451 = vmatprep.subr.bf16.mxu0 0
      %2452 = vmatpush2.bf16.msra.mxu0 0
      %2453 = vmatprep.subr.bf16.mxu0 0
      %2454 = vmatpush2.bf16.msra.mxu0 0
      %2455 = vmatprep.subr.bf16.mxu0 0
      %2456 = vmatpush2.bf16.msra.mxu0 0
      %2457 = vmatprep.subr.bf16.mxu0 0
      %2458 = vmatpush2.bf16.msra.mxu0 0
      %2459 = vmatprep.subr.bf16.mxu0 0
      %2460 = vmatpush2.bf16.msra.mxu0 0
      %2461 = vmatprep.subr.bf16.mxu0 0
      %2462 = vmatpush2.bf16.msra.mxu0 0
      %2463 = vmatprep.subr.bf16.mxu0 0
      %2464 = vmatpush2.bf16.msra.mxu0 0
      %2465 = vmatprep.subr.bf16.mxu0 0
      %2466 = vmatpush2.bf16.msra.mxu0 0
      %2467 = vmatprep.mubr.bf16.mxu0 0
      %2468 = vmatmul.mubr.bf16.gmra.mxu0 %v2336
      %v2469 = vpop.f32.mrf.mxu0
      %v2470 = vadd.f32 0.0, %v2469
      %v2471 = vpop.f32.mrf.mxu0
      %v2472 = vpop.f32.mrf.mxu0
      %v2473 = vpop.f32.mrf.mxu0
      %2474 = vdwg.mxu0
      %v2475 = vadd.f32 %v2280, %v2388
      %v2476 = vadd.f32 %v2281, %v2390
      %v2477 = vadd.f32 %v2282, %v2429
      %v2478 = vadd.f32 %v2283, %v2431
      %v2479 = vadd.f32 %v2284, %v2470
      %v2480 = vpack.c.bf16 %v1111, %v1111
      %s2481 = scalar_lea.vmem %s282, 420
      %v2482 = vld [vmem:[%s2481] sm:$0xff]
      %v2483 = vld [vmem:[%s2481 + $0x8] sm:$0xff]
      %v2484 = vld [vmem:[%s2481 + $0x10] sm:$0xf]
      %v2485 = vld [vmem:[%s2481 + $0x14] sm:$0xff]
      %v2486 = vld [vmem:[%s2481 + $0x1c] sm:$0xff]
      %v2487 = vld [vmem:[%s2481 + $0x24] sm:$0xf]
      %v2488 = vld [vmem:[%s2481 + $0x28] sm:$0x33]
      %v2489 = vld [vmem:[%s2481 + $0x30] sm:$0x33]
      %v2490 = vld [vmem:[%s2481 + $0x38] sm:$0x3]
      %v2500 = vunpack.c.l.b16 %v2482
      %v2501 = vunpack.c.h.b16 %v2482
      %v2502 = vunpack.c.l.b16 %v2483
      %v2503 = vunpack.c.h.b16 %v2483
      %v2504 = vunpack.c.l.b16 %v2484
      %v2505 = vunpack.c.l.b16 %v2485
      %v2506 = vunpack.c.h.b16 %v2485
      %v2507 = vunpack.c.l.b16 %v2486
      %v2508 = vunpack.c.h.b16 %v2486
      %v2509 = vunpack.c.l.b16 %v2487
      %v2510 = vunpack.c.l.b16 %v2488
      %v2511 = vunpack.c.h.b16 %v2488
      %v2512 = vunpack.c.l.b16 %v2489
      %v2513 = vunpack.c.h.b16 %v2489
      %v2514 = vunpack.c.l.b16 %v2490
      %v2515 = vpack.c.b16 %v2505, %v2500
      %v2516 = vpack.c.b16 %v2506, %v2501
      %v2517 = vpack.c.b16 %v2507, %v2502
      %v2518 = vpack.c.b16 %v2508, %v2503
      %v2519 = vpack.c.b16 %v2509, %v2504
      %v2520 = vpack.c.b16 %v2510, %v2510
      %v2521 = vpack.c.b16 %v2511, %v2511
      %v2522 = vpack.c.b16 %v2512, %v2512
      %v2523 = vpack.c.b16 %v2513, %v2513
      %v2524 = vpack.c.b16 %v2514, %v2514
      %v2531 = vsel %vm334, %v2480, 0
      %v2534 = vsel %vm1188, %v2520, 0
      %v2537 = vsel %vm1188, %v2521, 0
      %v2540 = vsel %vm1188, %v2522, 0
      %v2543 = vsel %vm1188, %v2523, 0
      %v2546 = vsel %vm1188, %v2524, 0
      %2548 = vmatprep.subr.bf16.mxu0 0
      %2549 = vmatpush1.bf16.msra.mxu0 0
      %2550 = vmatprep.subr.bf16.mxu0 0
      %2551 = vmatpush1.bf16.msra.mxu0 0
      %2552 = vmatprep.subr.bf16.mxu0 0
      %2553 = vmatpush1.bf16.msra.mxu0 0
      %2554 = vmatprep.subr.bf16.mxu0 0
      %2555 = vmatpush1.bf16.msra.mxu0 0
      %2556 = vmatprep.subr.bf16.mxu0 0
      %2557 = vmatpush1.bf16.msra.mxu0 0
      %2558 = vmatprep.subr.bf16.mxu0 0
      %2559 = vmatpush1.bf16.msra.mxu0 0
      %2560 = vmatprep.subr.bf16.mxu0 %v2537
      %2561 = vmatpush1.bf16.msra.mxu0 %v2534
      %2562 = vmatprep.subr.bf16.mxu0 %v2516
      %2563 = vmatpush1.bf16.msra.mxu0 %v2515
      %2564 = vmatprep.subr.bf16.mxu0 0
      %2565 = vmatpush2.bf16.msra.mxu0 0
      %2566 = vmatprep.subr.bf16.mxu0 0
      %2567 = vmatpush2.bf16.msra.mxu0 0
      %2568 = vmatprep.subr.bf16.mxu0 0
      %2569 = vmatpush2.bf16.msra.mxu0 0
      %2570 = vmatprep.subr.bf16.mxu0 0
      %2571 = vmatpush2.bf16.msra.mxu0 0
      %2572 = vmatprep.subr.bf16.mxu0 0
      %2573 = vmatpush2.bf16.msra.mxu0 0
      %2574 = vmatprep.subr.bf16.mxu0 0
      %2575 = vmatpush2.bf16.msra.mxu0 0
      %2576 = vmatprep.subr.bf16.mxu0 0
      %2577 = vmatpush2.bf16.msra.mxu0 0
      %2578 = vmatprep.subr.bf16.mxu0 0
      %2579 = vmatpush2.bf16.msra.mxu0 0
      %2580 = vmatprep.mubr.bf16.mxu0 0
      %2581 = vmatmul.mubr.bf16.gmra.mxu0 %v2531
      %v2582 = vpop.f32.mrf.mxu0
      %v2583 = vadd.f32 0.0, %v2582
      %v2584 = vpop.f32.mrf.mxu0
      %v2585 = vadd.f32 0.0, %v2584
      %v2586 = vpop.f32.mrf.mxu0
      %v2587 = vpop.f32.mrf.mxu0
      %2588 = vdwg.mxu0
      %2589 = vmatprep.subr.bf16.mxu0 0
      %2590 = vmatpush1.bf16.msra.mxu0 0
      %2591 = vmatprep.subr.bf16.mxu0 0
      %2592 = vmatpush1.bf16.msra.mxu0 0
      %2593 = vmatprep.subr.bf16.mxu0 0
      %2594 = vmatpush1.bf16.msra.mxu0 0
      %2595 = vmatprep.subr.bf16.mxu0 0
      %2596 = vmatpush1.bf16.msra.mxu0 0
      %2597 = vmatprep.subr.bf16.mxu0 0
      %2598 = vmatpush1.bf16.msra.mxu0 0
      %2599 = vmatprep.subr.bf16.mxu0 0
      %2600 = vmatpush1.bf16.msra.mxu0 0
      %2601 = vmatprep.subr.bf16.mxu0 %v2543
      %2602 = vmatpush1.bf16.msra.mxu0 %v2540
      %2603 = vmatprep.subr.bf16.mxu0 %v2518
      %2604 = vmatpush1.bf16.msra.mxu0 %v2517
      %2605 = vmatprep.subr.bf16.mxu0 0
      %2606 = vmatpush2.bf16.msra.mxu0 0
      %2607 = vmatprep.subr.bf16.mxu0 0
      %2608 = vmatpush2.bf16.msra.mxu0 0
      %2609 = vmatprep.subr.bf16.mxu0 0
      %2610 = vmatpush2.bf16.msra.mxu0 0
      %2611 = vmatprep.subr.bf16.mxu0 0
      %2612 = vmatpush2.bf16.msra.mxu0 0
      %2613 = vmatprep.subr.bf16.mxu0 0
      %2614 = vmatpush2.bf16.msra.mxu0 0
      %2615 = vmatprep.subr.bf16.mxu0 0
      %2616 = vmatpush2.bf16.msra.mxu0 0
      %2617 = vmatprep.subr.bf16.mxu0 0
      %2618 = vmatpush2.bf16.msra.mxu0 0
      %2619 = vmatprep.subr.bf16.mxu0 0
      %2620 = vmatpush2.bf16.msra.mxu0 0
      %2621 = vmatprep.mubr.bf16.mxu0 0
      %2622 = vmatmul.mubr.bf16.gmra.mxu0 %v2531
      %v2623 = vpop.f32.mrf.mxu0
      %v2624 = vadd.f32 0.0, %v2623
      %v2625 = vpop.f32.mrf.mxu0
      %v2626 = vadd.f32 0.0, %v2625
      %v2627 = vpop.f32.mrf.mxu0
      %v2628 = vpop.f32.mrf.mxu0
      %2629 = vdwg.mxu0
      %2630 = vmatprep.subr.bf16.mxu0 0
      %2631 = vmatpush1.bf16.msra.mxu0 0
      %2632 = vmatprep.subr.bf16.mxu0 0
      %2633 = vmatpush1.bf16.msra.mxu0 0
      %2634 = vmatprep.subr.bf16.mxu0 0
      %2635 = vmatpush1.bf16.msra.mxu0 0
      %2636 = vmatprep.subr.bf16.mxu0 0
      %2637 = vmatpush1.bf16.msra.mxu0 0
      %2638 = vmatprep.subr.bf16.mxu0 0
      %2639 = vmatpush1.bf16.msra.mxu0 0
      %2640 = vmatprep.subr.bf16.mxu0 0
      %2641 = vmatpush1.bf16.msra.mxu0 0
      %2642 = vmatprep.subr.bf16.mxu0 0
      %2643 = vmatpush1.bf16.msra.mxu0 %v2546
      %2644 = vmatprep.subr.bf16.mxu0 0
      %2645 = vmatpush1.bf16.msra.mxu0 %v2519
      %2646 = vmatprep.subr.bf16.mxu0 0
      %2647 = vmatpush2.bf16.msra.mxu0 0
      %2648 = vmatprep.subr.bf16.mxu0 0
      %2649 = vmatpush2.bf16.msra.mxu0 0
      %2650 = vmatprep.subr.bf16.mxu0 0
      %2651 = vmatpush2.bf16.msra.mxu0 0
      %2652 = vmatprep.subr.bf16.mxu0 0
      %2653 = vmatpush2.bf16.msra.mxu0 0
      %2654 = vmatprep.subr.bf16.mxu0 0
      %2655 = vmatpush2.bf16.msra.mxu0 0
      %2656 = vmatprep.subr.bf16.mxu0 0
      %2657 = vmatpush2.bf16.msra.mxu0 0
      %2658 = vmatprep.subr.bf16.mxu0 0
      %2659 = vmatpush2.bf16.msra.mxu0 0
      %2660 = vmatprep.subr.bf16.mxu0 0
      %2661 = vmatpush2.bf16.msra.mxu0 0
      %2662 = vmatprep.mubr.bf16.mxu0 0
      %2663 = vmatmul.mubr.bf16.gmra.mxu0 %v2531
      %v2664 = vpop.f32.mrf.mxu0
      %v2665 = vadd.f32 0.0, %v2664
      %v2666 = vpop.f32.mrf.mxu0
      %v2667 = vpop.f32.mrf.mxu0
      %v2668 = vpop.f32.mrf.mxu0
      %2669 = vdwg.mxu0
      %v2670 = vadd.f32 %v2475, %v2583
      %v2671 = vadd.f32 %v2476, %v2585
      %v2672 = vadd.f32 %v2477, %v2624
      %v2673 = vadd.f32 %v2478, %v2626
      %v2674 = vadd.f32 %v2479, %v2665
      %v2675 = vpack.c.bf16 %v1112, %v1112
      %s2676 = scalar_lea.vmem %s282, 480
      %v2677 = vld [vmem:[%s2676] sm:$0xff]
      %v2678 = vld [vmem:[%s2676 + $0x8] sm:$0xff]
      %v2679 = vld [vmem:[%s2676 + $0x10] sm:$0xf]
      %v2680 = vld [vmem:[%s2676 + $0x14] sm:$0xff]
      %v2681 = vld [vmem:[%s2676 + $0x1c] sm:$0xff]
      %v2682 = vld [vmem:[%s2676 + $0x24] sm:$0xf]
      %v2683 = vld [vmem:[%s2676 + $0x28] sm:$0x33]
      %v2684 = vld [vmem:[%s2676 + $0x30] sm:$0x33]
      %v2685 = vld [vmem:[%s2676 + $0x38] sm:$0x3]
      %v2695 = vunpack.c.l.b16 %v2677
      %v2696 = vunpack.c.h.b16 %v2677
      %v2697 = vunpack.c.l.b16 %v2678
      %v2698 = vunpack.c.h.b16 %v2678
      %v2699 = vunpack.c.l.b16 %v2679
      %v2700 = vunpack.c.l.b16 %v2680
      %v2701 = vunpack.c.h.b16 %v2680
      %v2702 = vunpack.c.l.b16 %v2681
      %v2703 = vunpack.c.h.b16 %v2681
      %v2704 = vunpack.c.l.b16 %v2682
      %v2705 = vunpack.c.l.b16 %v2683
      %v2706 = vunpack.c.h.b16 %v2683
      %v2707 = vunpack.c.l.b16 %v2684
      %v2708 = vunpack.c.h.b16 %v2684
      %v2709 = vunpack.c.l.b16 %v2685
      %v2710 = vpack.c.b16 %v2700, %v2695
      %v2711 = vpack.c.b16 %v2701, %v2696
      %v2712 = vpack.c.b16 %v2702, %v2697
      %v2713 = vpack.c.b16 %v2703, %v2698
      %v2714 = vpack.c.b16 %v2704, %v2699
      %v2715 = vpack.c.b16 %v2705, %v2705
      %v2716 = vpack.c.b16 %v2706, %v2706
      %v2717 = vpack.c.b16 %v2707, %v2707
      %v2718 = vpack.c.b16 %v2708, %v2708
      %v2719 = vpack.c.b16 %v2709, %v2709
      %v2726 = vsel %vm334, %v2675, 0
      %v2729 = vsel %vm1188, %v2715, 0
      %v2732 = vsel %vm1188, %v2716, 0
      %v2735 = vsel %vm1188, %v2717, 0
      %v2738 = vsel %vm1188, %v2718, 0
      %v2741 = vsel %vm1188, %v2719, 0
      %2743 = vmatprep.subr.bf16.mxu0 0
      %2744 = vmatpush1.bf16.msra.mxu0 0
      %2745 = vmatprep.subr.bf16.mxu0 0
      %2746 = vmatpush1.bf16.msra.mxu0 0
      %2747 = vmatprep.subr.bf16.mxu0 0
      %2748 = vmatpush1.bf16.msra.mxu0 0
      %2749 = vmatprep.subr.bf16.mxu0 0
      %2750 = vmatpush1.bf16.msra.mxu0 0
      %2751 = vmatprep.subr.bf16.mxu0 0
      %2752 = vmatpush1.bf16.msra.mxu0 0
      %2753 = vmatprep.subr.bf16.mxu0 0
      %2754 = vmatpush1.bf16.msra.mxu0 0
      %2755 = vmatprep.subr.bf16.mxu0 %v2732
      %2756 = vmatpush1.bf16.msra.mxu0 %v2729
      %2757 = vmatprep.subr.bf16.mxu0 %v2711
      %2758 = vmatpush1.bf16.msra.mxu0 %v2710
      %2759 = vmatprep.subr.bf16.mxu0 0
      %2760 = vmatpush2.bf16.msra.mxu0 0
      %2761 = vmatprep.subr.bf16.mxu0 0
      %2762 = vmatpush2.bf16.msra.mxu0 0
      %2763 = vmatprep.subr.bf16.mxu0 0
      %2764 = vmatpush2.bf16.msra.mxu0 0
      %2765 = vmatprep.subr.bf16.mxu0 0
      %2766 = vmatpush2.bf16.msra.mxu0 0
      %2767 = vmatprep.subr.bf16.mxu0 0
      %2768 = vmatpush2.bf16.msra.mxu0 0
      %2769 = vmatprep.subr.bf16.mxu0 0
      %2770 = vmatpush2.bf16.msra.mxu0 0
      %2771 = vmatprep.subr.bf16.mxu0 0
      %2772 = vmatpush2.bf16.msra.mxu0 0
      %2773 = vmatprep.subr.bf16.mxu0 0
      %2774 = vmatpush2.bf16.msra.mxu0 0
      %2775 = vmatprep.mubr.bf16.mxu0 0
      %2776 = vmatmul.mubr.bf16.gmra.mxu0 %v2726
      %v2777 = vpop.f32.mrf.mxu0
      %v2778 = vadd.f32 0.0, %v2777
      %v2779 = vpop.f32.mrf.mxu0
      %v2780 = vadd.f32 0.0, %v2779
      %v2781 = vpop.f32.mrf.mxu0
      %v2782 = vpop.f32.mrf.mxu0
      %2783 = vdwg.mxu0
      %2784 = vmatprep.subr.bf16.mxu0 0
      %2785 = vmatpush1.bf16.msra.mxu0 0
      %2786 = vmatprep.subr.bf16.mxu0 0
      %2787 = vmatpush1.bf16.msra.mxu0 0
      %2788 = vmatprep.subr.bf16.mxu0 0
      %2789 = vmatpush1.bf16.msra.mxu0 0
      %2790 = vmatprep.subr.bf16.mxu0 0
      %2791 = vmatpush1.bf16.msra.mxu0 0
      %2792 = vmatprep.subr.bf16.mxu0 0
      %2793 = vmatpush1.bf16.msra.mxu0 0
      %2794 = vmatprep.subr.bf16.mxu0 0
      %2795 = vmatpush1.bf16.msra.mxu0 0
      %2796 = vmatprep.subr.bf16.mxu0 %v2738
      %2797 = vmatpush1.bf16.msra.mxu0 %v2735
      %2798 = vmatprep.subr.bf16.mxu0 %v2713
      %2799 = vmatpush1.bf16.msra.mxu0 %v2712
      %2800 = vmatprep.subr.bf16.mxu0 0
      %2801 = vmatpush2.bf16.msra.mxu0 0
      %2802 = vmatprep.subr.bf16.mxu0 0
      %2803 = vmatpush2.bf16.msra.mxu0 0
      %2804 = vmatprep.subr.bf16.mxu0 0
      %2805 = vmatpush2.bf16.msra.mxu0 0
      %2806 = vmatprep.subr.bf16.mxu0 0
      %2807 = vmatpush2.bf16.msra.mxu0 0
      %2808 = vmatprep.subr.bf16.mxu0 0
      %2809 = vmatpush2.bf16.msra.mxu0 0
      %2810 = vmatprep.subr.bf16.mxu0 0
      %2811 = vmatpush2.bf16.msra.mxu0 0
      %2812 = vmatprep.subr.bf16.mxu0 0
      %2813 = vmatpush2.bf16.msra.mxu0 0
      %2814 = vmatprep.subr.bf16.mxu0 0
      %2815 = vmatpush2.bf16.msra.mxu0 0
      %2816 = vmatprep.mubr.bf16.mxu0 0
      %2817 = vmatmul.mubr.bf16.gmra.mxu0 %v2726
      %v2818 = vpop.f32.mrf.mxu0
      %v2819 = vadd.f32 0.0, %v2818
      %v2820 = vpop.f32.mrf.mxu0
      %v2821 = vadd.f32 0.0, %v2820
      %v2822 = vpop.f32.mrf.mxu0
      %v2823 = vpop.f32.mrf.mxu0
      %2824 = vdwg.mxu0
      %2825 = vmatprep.subr.bf16.mxu0 0
      %2826 = vmatpush1.bf16.msra.mxu0 0
      %2827 = vmatprep.subr.bf16.mxu0 0
      %2828 = vmatpush1.bf16.msra.mxu0 0
      %2829 = vmatprep.subr.bf16.mxu0 0
      %2830 = vmatpush1.bf16.msra.mxu0 0
      %2831 = vmatprep.subr.bf16.mxu0 0
      %2832 = vmatpush1.bf16.msra.mxu0 0
      %2833 = vmatprep.subr.bf16.mxu0 0
      %2834 = vmatpush1.bf16.msra.mxu0 0
      %2835 = vmatprep.subr.bf16.mxu0 0
      %2836 = vmatpush1.bf16.msra.mxu0 0
      %2837 = vmatprep.subr.bf16.mxu0 0
      %2838 = vmatpush1.bf16.msra.mxu0 %v2741
      %2839 = vmatprep.subr.bf16.mxu0 0
      %2840 = vmatpush1.bf16.msra.mxu0 %v2714
      %2841 = vmatprep.subr.bf16.mxu0 0
      %2842 = vmatpush2.bf16.msra.mxu0 0
      %2843 = vmatprep.subr.bf16.mxu0 0
      %2844 = vmatpush2.bf16.msra.mxu0 0
      %2845 = vmatprep.subr.bf16.mxu0 0
      %2846 = vmatpush2.bf16.msra.mxu0 0
      %2847 = vmatprep.subr.bf16.mxu0 0
      %2848 = vmatpush2.bf16.msra.mxu0 0
      %2849 = vmatprep.subr.bf16.mxu0 0
      %2850 = vmatpush2.bf16.msra.mxu0 0
      %2851 = vmatprep.subr.bf16.mxu0 0
      %2852 = vmatpush2.bf16.msra.mxu0 0
      %2853 = vmatprep.subr.bf16.mxu0 0
      %2854 = vmatpush2.bf16.msra.mxu0 0
      %2855 = vmatprep.subr.bf16.mxu0 0
      %2856 = vmatpush2.bf16.msra.mxu0 0
      %2857 = vmatprep.mubr.bf16.mxu0 0
      %2858 = vmatmul.mubr.bf16.gmra.mxu0 %v2726
      %v2859 = vpop.f32.mrf.mxu0
      %v2860 = vadd.f32 0.0, %v2859
      %v2861 = vpop.f32.mrf.mxu0
      %v2862 = vpop.f32.mrf.mxu0
      %v2863 = vpop.f32.mrf.mxu0
      %2864 = vdwg.mxu0
      %v2865 = vadd.f32 %v2670, %v2778
      %v2866 = vadd.f32 %v2671, %v2780
      %v2867 = vadd.f32 %v2672, %v2819
      %v2868 = vadd.f32 %v2673, %v2821
      %v2869 = vadd.f32 %v2674, %v2860
      %v2870 = vpack.c.bf16 %v1113, %v1113
      %s2871 = scalar_lea.vmem %s282, 540
      %v2872 = vld [vmem:[%s2871] sm:$0xff]
      %v2873 = vld [vmem:[%s2871 + $0x8] sm:$0xff]
      %v2874 = vld [vmem:[%s2871 + $0x10] sm:$0xf]
      %v2875 = vld [vmem:[%s2871 + $0x14] sm:$0xff]
      %v2876 = vld [vmem:[%s2871 + $0x1c] sm:$0xff]
      %v2877 = vld [vmem:[%s2871 + $0x24] sm:$0xf]
      %v2878 = vld [vmem:[%s2871 + $0x28] sm:$0x33]
      %v2879 = vld [vmem:[%s2871 + $0x30] sm:$0x33]
      %v2880 = vld [vmem:[%s2871 + $0x38] sm:$0x3]
      %v2890 = vunpack.c.l.b16 %v2872
      %v2891 = vunpack.c.h.b16 %v2872
      %v2892 = vunpack.c.l.b16 %v2873
      %v2893 = vunpack.c.h.b16 %v2873
      %v2894 = vunpack.c.l.b16 %v2874
      %v2895 = vunpack.c.l.b16 %v2875
      %v2896 = vunpack.c.h.b16 %v2875
      %v2897 = vunpack.c.l.b16 %v2876
      %v2898 = vunpack.c.h.b16 %v2876
      %v2899 = vunpack.c.l.b16 %v2877
      %v2900 = vunpack.c.l.b16 %v2878
      %v2901 = vunpack.c.h.b16 %v2878
      %v2902 = vunpack.c.l.b16 %v2879
      %v2903 = vunpack.c.h.b16 %v2879
      %v2904 = vunpack.c.l.b16 %v2880
      %v2905 = vpack.c.b16 %v2895, %v2890
      %v2906 = vpack.c.b16 %v2896, %v2891
      %v2907 = vpack.c.b16 %v2897, %v2892
      %v2908 = vpack.c.b16 %v2898, %v2893
      %v2909 = vpack.c.b16 %v2899, %v2894
      %v2910 = vpack.c.b16 %v2900, %v2900
      %v2911 = vpack.c.b16 %v2901, %v2901
      %v2912 = vpack.c.b16 %v2902, %v2902
      %v2913 = vpack.c.b16 %v2903, %v2903
      %v2914 = vpack.c.b16 %v2904, %v2904
      %v2921 = vsel %vm334, %v2870, 0
      %v2924 = vsel %vm1188, %v2910, 0
      %v2927 = vsel %vm1188, %v2911, 0
      %v2930 = vsel %vm1188, %v2912, 0
      %v2933 = vsel %vm1188, %v2913, 0
      %v2936 = vsel %vm1188, %v2914, 0
      %2938 = vmatprep.subr.bf16.mxu0 0
      %2939 = vmatpush1.bf16.msra.mxu0 0
      %2940 = vmatprep.subr.bf16.mxu0 0
      %2941 = vmatpush1.bf16.msra.mxu0 0
      %2942 = vmatprep.subr.bf16.mxu0 0
      %2943 = vmatpush1.bf16.msra.mxu0 0
      %2944 = vmatprep.subr.bf16.mxu0 0
      %2945 = vmatpush1.bf16.msra.mxu0 0
      %2946 = vmatprep.subr.bf16.mxu0 0
      %2947 = vmatpush1.bf16.msra.mxu0 0
      %2948 = vmatprep.subr.bf16.mxu0 0
      %2949 = vmatpush1.bf16.msra.mxu0 0
      %2950 = vmatprep.subr.bf16.mxu0 %v2927
      %2951 = vmatpush1.bf16.msra.mxu0 %v2924
      %2952 = vmatprep.subr.bf16.mxu0 %v2906
      %2953 = vmatpush1.bf16.msra.mxu0 %v2905
      %2954 = vmatprep.subr.bf16.mxu0 0
      %2955 = vmatpush2.bf16.msra.mxu0 0
      %2956 = vmatprep.subr.bf16.mxu0 0
      %2957 = vmatpush2.bf16.msra.mxu0 0
      %2958 = vmatprep.subr.bf16.mxu0 0
      %2959 = vmatpush2.bf16.msra.mxu0 0
      %2960 = vmatprep.subr.bf16.mxu0 0
      %2961 = vmatpush2.bf16.msra.mxu0 0
      %2962 = vmatprep.subr.bf16.mxu0 0
      %2963 = vmatpush2.bf16.msra.mxu0 0
      %2964 = vmatprep.subr.bf16.mxu0 0
      %2965 = vmatpush2.bf16.msra.mxu0 0
      %2966 = vmatprep.subr.bf16.mxu0 0
      %2967 = vmatpush2.bf16.msra.mxu0 0
      %2968 = vmatprep.subr.bf16.mxu0 0
      %2969 = vmatpush2.bf16.msra.mxu0 0
      %2970 = vmatprep.mubr.bf16.mxu0 0
      %2971 = vmatmul.mubr.bf16.gmra.mxu0 %v2921
      %v2972 = vpop.f32.mrf.mxu0
      %v2973 = vadd.f32 0.0, %v2972
      %v2974 = vpop.f32.mrf.mxu0
      %v2975 = vadd.f32 0.0, %v2974
      %v2976 = vpop.f32.mrf.mxu0
      %v2977 = vpop.f32.mrf.mxu0
      %2978 = vdwg.mxu0
      %2979 = vmatprep.subr.bf16.mxu0 0
      %2980 = vmatpush1.bf16.msra.mxu0 0
      %2981 = vmatprep.subr.bf16.mxu0 0
      %2982 = vmatpush1.bf16.msra.mxu0 0
      %2983 = vmatprep.subr.bf16.mxu0 0
      %2984 = vmatpush1.bf16.msra.mxu0 0
      %2985 = vmatprep.subr.bf16.mxu0 0
      %2986 = vmatpush1.bf16.msra.mxu0 0
      %2987 = vmatprep.subr.bf16.mxu0 0
      %2988 = vmatpush1.bf16.msra.mxu0 0
      %2989 = vmatprep.subr.bf16.mxu0 0
      %2990 = vmatpush1.bf16.msra.mxu0 0
      %2991 = vmatprep.subr.bf16.mxu0 %v2933
      %2992 = vmatpush1.bf16.msra.mxu0 %v2930
      %2993 = vmatprep.subr.bf16.mxu0 %v2908
      %2994 = vmatpush1.bf16.msra.mxu0 %v2907
      %2995 = vmatprep.subr.bf16.mxu0 0
      %2996 = vmatpush2.bf16.msra.mxu0 0
      %2997 = vmatprep.subr.bf16.mxu0 0
      %2998 = vmatpush2.bf16.msra.mxu0 0
      %2999 = vmatprep.subr.bf16.mxu0 0
      %3000 = vmatpush2.bf16.msra.mxu0 0
      %3001 = vmatprep.subr.bf16.mxu0 0
      %3002 = vmatpush2.bf16.msra.mxu0 0
      %3003 = vmatprep.subr.bf16.mxu0 0
      %3004 = vmatpush2.bf16.msra.mxu0 0
      %3005 = vmatprep.subr.bf16.mxu0 0
      %3006 = vmatpush2.bf16.msra.mxu0 0
      %3007 = vmatprep.subr.bf16.mxu0 0
      %3008 = vmatpush2.bf16.msra.mxu0 0
      %3009 = vmatprep.subr.bf16.mxu0 0
      %3010 = vmatpush2.bf16.msra.mxu0 0
      %3011 = vmatprep.mubr.bf16.mxu0 0
      %3012 = vmatmul.mubr.bf16.gmra.mxu0 %v2921
      %v3013 = vpop.f32.mrf.mxu0
      %v3014 = vadd.f32 0.0, %v3013
      %v3015 = vpop.f32.mrf.mxu0
      %v3016 = vadd.f32 0.0, %v3015
      %v3017 = vpop.f32.mrf.mxu0
      %v3018 = vpop.f32.mrf.mxu0
      %3019 = vdwg.mxu0
      %3020 = vmatprep.subr.bf16.mxu0 0
      %3021 = vmatpush1.bf16.msra.mxu0 0
      %3022 = vmatprep.subr.bf16.mxu0 0
      %3023 = vmatpush1.bf16.msra.mxu0 0
      %3024 = vmatprep.subr.bf16.mxu0 0
      %3025 = vmatpush1.bf16.msra.mxu0 0
      %3026 = vmatprep.subr.bf16.mxu0 0
      %3027 = vmatpush1.bf16.msra.mxu0 0
      %3028 = vmatprep.subr.bf16.mxu0 0
      %3029 = vmatpush1.bf16.msra.mxu0 0
      %3030 = vmatprep.subr.bf16.mxu0 0
      %3031 = vmatpush1.bf16.msra.mxu0 0
      %3032 = vmatprep.subr.bf16.mxu0 0
      %3033 = vmatpush1.bf16.msra.mxu0 %v2936
      %3034 = vmatprep.subr.bf16.mxu0 0
      %3035 = vmatpush1.bf16.msra.mxu0 %v2909
      %3036 = vmatprep.subr.bf16.mxu0 0
      %3037 = vmatpush2.bf16.msra.mxu0 0
      %3038 = vmatprep.subr.bf16.mxu0 0
      %3039 = vmatpush2.bf16.msra.mxu0 0
      %3040 = vmatprep.subr.bf16.mxu0 0
      %3041 = vmatpush2.bf16.msra.mxu0 0
      %3042 = vmatprep.subr.bf16.mxu0 0
      %3043 = vmatpush2.bf16.msra.mxu0 0
      %3044 = vmatprep.subr.bf16.mxu0 0
      %3045 = vmatpush2.bf16.msra.mxu0 0
      %3046 = vmatprep.subr.bf16.mxu0 0
      %3047 = vmatpush2.bf16.msra.mxu0 0
      %3048 = vmatprep.subr.bf16.mxu0 0
      %3049 = vmatpush2.bf16.msra.mxu0 0
      %3050 = vmatprep.subr.bf16.mxu0 0
      %3051 = vmatpush2.bf16.msra.mxu0 0
      %3052 = vmatprep.mubr.bf16.mxu0 0
      %3053 = vmatmul.mubr.bf16.gmra.mxu0 %v2921
      %v3054 = vpop.f32.mrf.mxu0
      %v3055 = vadd.f32 0.0, %v3054
      %v3056 = vpop.f32.mrf.mxu0
      %v3057 = vpop.f32.mrf.mxu0
      %v3058 = vpop.f32.mrf.mxu0
      %3059 = vdwg.mxu0
      %v3060 = vadd.f32 %v2865, %v2973
      %v3061 = vadd.f32 %v2866, %v2975
      %v3062 = vadd.f32 %v2867, %v3014
      %v3063 = vadd.f32 %v2868, %v3016
      %v3064 = vadd.f32 %v2869, %v3055
      %v3065 = vpack.c.bf16 %v1114, %v1114
      %s3066 = scalar_lea.vmem %s282, 600
      %v3067 = vld [vmem:[%s3066] sm:$0xff]
      %v3068 = vld [vmem:[%s3066 + $0x8] sm:$0xff]
      %v3069 = vld [vmem:[%s3066 + $0x10] sm:$0xf]
      %v3070 = vld [vmem:[%s3066 + $0x14] sm:$0xff]
      %v3071 = vld [vmem:[%s3066 + $0x1c] sm:$0xff]
      %v3072 = vld [vmem:[%s3066 + $0x24] sm:$0xf]
      %v3073 = vld [vmem:[%s3066 + $0x28] sm:$0x33]
      %v3074 = vld [vmem:[%s3066 + $0x30] sm:$0x33]
      %v3075 = vld [vmem:[%s3066 + $0x38] sm:$0x3]
      %v3085 = vunpack.c.l.b16 %v3067
      %v3086 = vunpack.c.h.b16 %v3067
      %v3087 = vunpack.c.l.b16 %v3068
      %v3088 = vunpack.c.h.b16 %v3068
      %v3089 = vunpack.c.l.b16 %v3069
      %v3090 = vunpack.c.l.b16 %v3070
      %v3091 = vunpack.c.h.b16 %v3070
      %v3092 = vunpack.c.l.b16 %v3071
      %v3093 = vunpack.c.h.b16 %v3071
      %v3094 = vunpack.c.l.b16 %v3072
      %v3095 = vunpack.c.l.b16 %v3073
      %v3096 = vunpack.c.h.b16 %v3073
      %v3097 = vunpack.c.l.b16 %v3074
      %v3098 = vunpack.c.h.b16 %v3074
      %v3099 = vunpack.c.l.b16 %v3075
      %v3100 = vpack.c.b16 %v3090, %v3085
      %v3101 = vpack.c.b16 %v3091, %v3086
      %v3102 = vpack.c.b16 %v3092, %v3087
      %v3103 = vpack.c.b16 %v3093, %v3088
      %v3104 = vpack.c.b16 %v3094, %v3089
      %v3105 = vpack.c.b16 %v3095, %v3095
      %v3106 = vpack.c.b16 %v3096, %v3096
      %v3107 = vpack.c.b16 %v3097, %v3097
      %v3108 = vpack.c.b16 %v3098, %v3098
      %v3109 = vpack.c.b16 %v3099, %v3099
      %v3116 = vsel %vm334, %v3065, 0
      %v3119 = vsel %vm1188, %v3105, 0
      %v3122 = vsel %vm1188, %v3106, 0
      %v3125 = vsel %vm1188, %v3107, 0
      %v3128 = vsel %vm1188, %v3108, 0
      %v3131 = vsel %vm1188, %v3109, 0
      %3133 = vmatprep.subr.bf16.mxu0 0
      %3134 = vmatpush1.bf16.msra.mxu0 0
      %3135 = vmatprep.subr.bf16.mxu0 0
      %3136 = vmatpush1.bf16.msra.mxu0 0
      %3137 = vmatprep.subr.bf16.mxu0 0
      %3138 = vmatpush1.bf16.msra.mxu0 0
      %3139 = vmatprep.subr.bf16.mxu0 0
      %3140 = vmatpush1.bf16.msra.mxu0 0
      %3141 = vmatprep.subr.bf16.mxu0 0
      %3142 = vmatpush1.bf16.msra.mxu0 0
      %3143 = vmatprep.subr.bf16.mxu0 0
      %3144 = vmatpush1.bf16.msra.mxu0 0
      %3145 = vmatprep.subr.bf16.mxu0 %v3122
      %3146 = vmatpush1.bf16.msra.mxu0 %v3119
      %3147 = vmatprep.subr.bf16.mxu0 %v3101
      %3148 = vmatpush1.bf16.msra.mxu0 %v3100
      %3149 = vmatprep.subr.bf16.mxu0 0
      %3150 = vmatpush2.bf16.msra.mxu0 0
      %3151 = vmatprep.subr.bf16.mxu0 0
      %3152 = vmatpush2.bf16.msra.mxu0 0
      %3153 = vmatprep.subr.bf16.mxu0 0
      %3154 = vmatpush2.bf16.msra.mxu0 0
      %3155 = vmatprep.subr.bf16.mxu0 0
      %3156 = vmatpush2.bf16.msra.mxu0 0
      %3157 = vmatprep.subr.bf16.mxu0 0
      %3158 = vmatpush2.bf16.msra.mxu0 0
      %3159 = vmatprep.subr.bf16.mxu0 0
      %3160 = vmatpush2.bf16.msra.mxu0 0
      %3161 = vmatprep.subr.bf16.mxu0 0
      %3162 = vmatpush2.bf16.msra.mxu0 0
      %3163 = vmatprep.subr.bf16.mxu0 0
      %3164 = vmatpush2.bf16.msra.mxu0 0
      %3165 = vmatprep.mubr.bf16.mxu0 0
      %3166 = vmatmul.mubr.bf16.gmra.mxu0 %v3116
      %v3167 = vpop.f32.mrf.mxu0
      %v3168 = vadd.f32 0.0, %v3167
      %v3169 = vpop.f32.mrf.mxu0
      %v3170 = vadd.f32 0.0, %v3169
      %v3171 = vpop.f32.mrf.mxu0
      %v3172 = vpop.f32.mrf.mxu0
      %3173 = vdwg.mxu0
      %3174 = vmatprep.subr.bf16.mxu0 0
      %3175 = vmatpush1.bf16.msra.mxu0 0
      %3176 = vmatprep.subr.bf16.mxu0 0
      %3177 = vmatpush1.bf16.msra.mxu0 0
      %3178 = vmatprep.subr.bf16.mxu0 0
      %3179 = vmatpush1.bf16.msra.mxu0 0
      %3180 = vmatprep.subr.bf16.mxu0 0
      %3181 = vmatpush1.bf16.msra.mxu0 0
      %3182 = vmatprep.subr.bf16.mxu0 0
      %3183 = vmatpush1.bf16.msra.mxu0 0
      %3184 = vmatprep.subr.bf16.mxu0 0
      %3185 = vmatpush1.bf16.msra.mxu0 0
      %3186 = vmatprep.subr.bf16.mxu0 %v3128
      %3187 = vmatpush1.bf16.msra.mxu0 %v3125
      %3188 = vmatprep.subr.bf16.mxu0 %v3103
      %3189 = vmatpush1.bf16.msra.mxu0 %v3102
      %3190 = vmatprep.subr.bf16.mxu0 0
      %3191 = vmatpush2.bf16.msra.mxu0 0
      %3192 = vmatprep.subr.bf16.mxu0 0
      %3193 = vmatpush2.bf16.msra.mxu0 0
      %3194 = vmatprep.subr.bf16.mxu0 0
      %3195 = vmatpush2.bf16.msra.mxu0 0
      %3196 = vmatprep.subr.bf16.mxu0 0
      %3197 = vmatpush2.bf16.msra.mxu0 0
      %3198 = vmatprep.subr.bf16.mxu0 0
      %3199 = vmatpush2.bf16.msra.mxu0 0
      %3200 = vmatprep.subr.bf16.mxu0 0
      %3201 = vmatpush2.bf16.msra.mxu0 0
      %3202 = vmatprep.subr.bf16.mxu0 0
      %3203 = vmatpush2.bf16.msra.mxu0 0
      %3204 = vmatprep.subr.bf16.mxu0 0
      %3205 = vmatpush2.bf16.msra.mxu0 0
      %3206 = vmatprep.mubr.bf16.mxu0 0
      %3207 = vmatmul.mubr.bf16.gmra.mxu0 %v3116
      %v3208 = vpop.f32.mrf.mxu0
      %v3209 = vadd.f32 0.0, %v3208
      %v3210 = vpop.f32.mrf.mxu0
      %v3211 = vadd.f32 0.0, %v3210
      %v3212 = vpop.f32.mrf.mxu0
      %v3213 = vpop.f32.mrf.mxu0
      %3214 = vdwg.mxu0
      %3215 = vmatprep.subr.bf16.mxu0 0
      %3216 = vmatpush1.bf16.msra.mxu0 0
      %3217 = vmatprep.subr.bf16.mxu0 0
      %3218 = vmatpush1.bf16.msra.mxu0 0
      %3219 = vmatprep.subr.bf16.mxu0 0
      %3220 = vmatpush1.bf16.msra.mxu0 0
      %3221 = vmatprep.subr.bf16.mxu0 0
      %3222 = vmatpush1.bf16.msra.mxu0 0
      %3223 = vmatprep.subr.bf16.mxu0 0
      %3224 = vmatpush1.bf16.msra.mxu0 0
      %3225 = vmatprep.subr.bf16.mxu0 0
      %3226 = vmatpush1.bf16.msra.mxu0 0
      %3227 = vmatprep.subr.bf16.mxu0 0
      %3228 = vmatpush1.bf16.msra.mxu0 %v3131
      %3229 = vmatprep.subr.bf16.mxu0 0
      %3230 = vmatpush1.bf16.msra.mxu0 %v3104
      %3231 = vmatprep.subr.bf16.mxu0 0
      %3232 = vmatpush2.bf16.msra.mxu0 0
      %3233 = vmatprep.subr.bf16.mxu0 0
      %3234 = vmatpush2.bf16.msra.mxu0 0
      %3235 = vmatprep.subr.bf16.mxu0 0
      %3236 = vmatpush2.bf16.msra.mxu0 0
      %3237 = vmatprep.subr.bf16.mxu0 0
      %3238 = vmatpush2.bf16.msra.mxu0 0
      %3239 = vmatprep.subr.bf16.mxu0 0
      %3240 = vmatpush2.bf16.msra.mxu0 0
      %3241 = vmatprep.subr.bf16.mxu0 0
      %3242 = vmatpush2.bf16.msra.mxu0 0
      %3243 = vmatprep.subr.bf16.mxu0 0
      %3244 = vmatpush2.bf16.msra.mxu0 0
      %3245 = vmatprep.subr.bf16.mxu0 0
      %3246 = vmatpush2.bf16.msra.mxu0 0
      %3247 = vmatprep.mubr.bf16.mxu0 0
      %3248 = vmatmul.mubr.bf16.gmra.mxu0 %v3116
      %v3249 = vpop.f32.mrf.mxu0
      %v3250 = vadd.f32 0.0, %v3249
      %v3251 = vpop.f32.mrf.mxu0
      %v3252 = vpop.f32.mrf.mxu0
      %v3253 = vpop.f32.mrf.mxu0
      %3254 = vdwg.mxu0
      %v3255 = vadd.f32 %v3060, %v3168
      %v3256 = vadd.f32 %v3061, %v3170
      %v3257 = vadd.f32 %v3062, %v3209
      %v3258 = vadd.f32 %v3063, %v3211
      %v3259 = vadd.f32 %v3064, %v3250
      %v3260 = vpack.c.bf16 %v1115, %v1115
      %s3261 = scalar_lea.vmem %s282, 660
      %v3262 = vld [vmem:[%s3261] sm:$0xff]
      %v3263 = vld [vmem:[%s3261 + $0x8] sm:$0xff]
      %v3264 = vld [vmem:[%s3261 + $0x10] sm:$0xf]
      %v3265 = vld [vmem:[%s3261 + $0x14] sm:$0xff]
      %v3266 = vld [vmem:[%s3261 + $0x1c] sm:$0xff]
      %v3267 = vld [vmem:[%s3261 + $0x24] sm:$0xf]
      %v3268 = vld [vmem:[%s3261 + $0x28] sm:$0x33]
      %v3269 = vld [vmem:[%s3261 + $0x30] sm:$0x33]
      %v3270 = vld [vmem:[%s3261 + $0x38] sm:$0x3]
      %v3280 = vunpack.c.l.b16 %v3262
      %v3281 = vunpack.c.h.b16 %v3262
      %v3282 = vunpack.c.l.b16 %v3263
      %v3283 = vunpack.c.h.b16 %v3263
      %v3284 = vunpack.c.l.b16 %v3264
      %v3285 = vunpack.c.l.b16 %v3265
      %v3286 = vunpack.c.h.b16 %v3265
      %v3287 = vunpack.c.l.b16 %v3266
      %v3288 = vunpack.c.h.b16 %v3266
      %v3289 = vunpack.c.l.b16 %v3267
      %v3290 = vunpack.c.l.b16 %v3268
      %v3291 = vunpack.c.h.b16 %v3268
      %v3292 = vunpack.c.l.b16 %v3269
      %v3293 = vunpack.c.h.b16 %v3269
      %v3294 = vunpack.c.l.b16 %v3270
      %v3295 = vpack.c.b16 %v3285, %v3280
      %v3296 = vpack.c.b16 %v3286, %v3281
      %v3297 = vpack.c.b16 %v3287, %v3282
      %v3298 = vpack.c.b16 %v3288, %v3283
      %v3299 = vpack.c.b16 %v3289, %v3284
      %v3300 = vpack.c.b16 %v3290, %v3290
      %v3301 = vpack.c.b16 %v3291, %v3291
      %v3302 = vpack.c.b16 %v3292, %v3292
      %v3303 = vpack.c.b16 %v3293, %v3293
      %v3304 = vpack.c.b16 %v3294, %v3294
      %v3311 = vsel %vm334, %v3260, 0
      %v3314 = vsel %vm1188, %v3300, 0
      %v3317 = vsel %vm1188, %v3301, 0
      %v3320 = vsel %vm1188, %v3302, 0
      %v3323 = vsel %vm1188, %v3303, 0
      %v3326 = vsel %vm1188, %v3304, 0
      %3328 = vmatprep.subr.bf16.mxu0 0
      %3329 = vmatpush1.bf16.msra.mxu0 0
      %3330 = vmatprep.subr.bf16.mxu0 0
      %3331 = vmatpush1.bf16.msra.mxu0 0
      %3332 = vmatprep.subr.bf16.mxu0 0
      %3333 = vmatpush1.bf16.msra.mxu0 0
      %3334 = vmatprep.subr.bf16.mxu0 0
      %3335 = vmatpush1.bf16.msra.mxu0 0
      %3336 = vmatprep.subr.bf16.mxu0 0
      %3337 = vmatpush1.bf16.msra.mxu0 0
      %3338 = vmatprep.subr.bf16.mxu0 0
      %3339 = vmatpush1.bf16.msra.mxu0 0
      %3340 = vmatprep.subr.bf16.mxu0 %v3317
      %3341 = vmatpush1.bf16.msra.mxu0 %v3314
      %3342 = vmatprep.subr.bf16.mxu0 %v3296
      %3343 = vmatpush1.bf16.msra.mxu0 %v3295
      %3344 = vmatprep.subr.bf16.mxu0 0
      %3345 = vmatpush2.bf16.msra.mxu0 0
      %3346 = vmatprep.subr.bf16.mxu0 0
      %3347 = vmatpush2.bf16.msra.mxu0 0
      %3348 = vmatprep.subr.bf16.mxu0 0
      %3349 = vmatpush2.bf16.msra.mxu0 0
      %3350 = vmatprep.subr.bf16.mxu0 0
      %3351 = vmatpush2.bf16.msra.mxu0 0
      %3352 = vmatprep.subr.bf16.mxu0 0
      %3353 = vmatpush2.bf16.msra.mxu0 0
      %3354 = vmatprep.subr.bf16.mxu0 0
      %3355 = vmatpush2.bf16.msra.mxu0 0
      %3356 = vmatprep.subr.bf16.mxu0 0
      %3357 = vmatpush2.bf16.msra.mxu0 0
      %3358 = vmatprep.subr.bf16.mxu0 0
      %3359 = vmatpush2.bf16.msra.mxu0 0
      %3360 = vmatprep.mubr.bf16.mxu0 0
      %3361 = vmatmul.mubr.bf16.gmra.mxu0 %v3311
      %v3362 = vpop.f32.mrf.mxu0
      %v3363 = vadd.f32 0.0, %v3362
      %v3364 = vpop.f32.mrf.mxu0
      %v3365 = vadd.f32 0.0, %v3364
      %v3366 = vpop.f32.mrf.mxu0
      %v3367 = vpop.f32.mrf.mxu0
      %3368 = vdwg.mxu0
      %3369 = vmatprep.subr.bf16.mxu0 0
      %3370 = vmatpush1.bf16.msra.mxu0 0
      %3371 = vmatprep.subr.bf16.mxu0 0
      %3372 = vmatpush1.bf16.msra.mxu0 0
      %3373 = vmatprep.subr.bf16.mxu0 0
      %3374 = vmatpush1.bf16.msra.mxu0 0
      %3375 = vmatprep.subr.bf16.mxu0 0
      %3376 = vmatpush1.bf16.msra.mxu0 0
      %3377 = vmatprep.subr.bf16.mxu0 0
      %3378 = vmatpush1.bf16.msra.mxu0 0
      %3379 = vmatprep.subr.bf16.mxu0 0
      %3380 = vmatpush1.bf16.msra.mxu0 0
      %3381 = vmatprep.subr.bf16.mxu0 %v3323
      %3382 = vmatpush1.bf16.msra.mxu0 %v3320
      %3383 = vmatprep.subr.bf16.mxu0 %v3298
      %3384 = vmatpush1.bf16.msra.mxu0 %v3297
      %3385 = vmatprep.subr.bf16.mxu0 0
      %3386 = vmatpush2.bf16.msra.mxu0 0
      %3387 = vmatprep.subr.bf16.mxu0 0
      %3388 = vmatpush2.bf16.msra.mxu0 0
      %3389 = vmatprep.subr.bf16.mxu0 0
      %3390 = vmatpush2.bf16.msra.mxu0 0
      %3391 = vmatprep.subr.bf16.mxu0 0
      %3392 = vmatpush2.bf16.msra.mxu0 0
      %3393 = vmatprep.subr.bf16.mxu0 0
      %3394 = vmatpush2.bf16.msra.mxu0 0
      %3395 = vmatprep.subr.bf16.mxu0 0
      %3396 = vmatpush2.bf16.msra.mxu0 0
      %3397 = vmatprep.subr.bf16.mxu0 0
      %3398 = vmatpush2.bf16.msra.mxu0 0
      %3399 = vmatprep.subr.bf16.mxu0 0
      %3400 = vmatpush2.bf16.msra.mxu0 0
      %3401 = vmatprep.mubr.bf16.mxu0 0
      %3402 = vmatmul.mubr.bf16.gmra.mxu0 %v3311
      %v3403 = vpop.f32.mrf.mxu0
      %v3404 = vadd.f32 0.0, %v3403
      %v3405 = vpop.f32.mrf.mxu0
      %v3406 = vadd.f32 0.0, %v3405
      %v3407 = vpop.f32.mrf.mxu0
      %v3408 = vpop.f32.mrf.mxu0
      %3409 = vdwg.mxu0
      %3410 = vmatprep.subr.bf16.mxu0 0
      %3411 = vmatpush1.bf16.msra.mxu0 0
      %3412 = vmatprep.subr.bf16.mxu0 0
      %3413 = vmatpush1.bf16.msra.mxu0 0
      %3414 = vmatprep.subr.bf16.mxu0 0
      %3415 = vmatpush1.bf16.msra.mxu0 0
      %3416 = vmatprep.subr.bf16.mxu0 0
      %3417 = vmatpush1.bf16.msra.mxu0 0
      %3418 = vmatprep.subr.bf16.mxu0 0
      %3419 = vmatpush1.bf16.msra.mxu0 0
      %3420 = vmatprep.subr.bf16.mxu0 0
      %3421 = vmatpush1.bf16.msra.mxu0 0
      %3422 = vmatprep.subr.bf16.mxu0 0
      %3423 = vmatpush1.bf16.msra.mxu0 %v3326
      %3424 = vmatprep.subr.bf16.mxu0 0
      %3425 = vmatpush1.bf16.msra.mxu0 %v3299
      %3426 = vmatprep.subr.bf16.mxu0 0
      %3427 = vmatpush2.bf16.msra.mxu0 0
      %3428 = vmatprep.subr.bf16.mxu0 0
      %3429 = vmatpush2.bf16.msra.mxu0 0
      %3430 = vmatprep.subr.bf16.mxu0 0
      %3431 = vmatpush2.bf16.msra.mxu0 0
      %3432 = vmatprep.subr.bf16.mxu0 0
      %3433 = vmatpush2.bf16.msra.mxu0 0
      %3434 = vmatprep.subr.bf16.mxu0 0
      %3435 = vmatpush2.bf16.msra.mxu0 0
      %3436 = vmatprep.subr.bf16.mxu0 0
      %3437 = vmatpush2.bf16.msra.mxu0 0
      %3438 = vmatprep.subr.bf16.mxu0 0
      %3439 = vmatpush2.bf16.msra.mxu0 0
      %3440 = vmatprep.subr.bf16.mxu0 0
      %3441 = vmatpush2.bf16.msra.mxu0 0
      %3442 = vmatprep.mubr.bf16.mxu0 0
      %3443 = vmatmul.mubr.bf16.gmra.mxu0 %v3311
      %v3444 = vpop.f32.mrf.mxu0
      %v3445 = vadd.f32 0.0, %v3444
      %v3446 = vpop.f32.mrf.mxu0
      %v3447 = vpop.f32.mrf.mxu0
      %v3448 = vpop.f32.mrf.mxu0
      %3449 = vdwg.mxu0
      %v3450 = vadd.f32 %v3255, %v3363
      %v3451 = vadd.f32 %v3256, %v3365
      %v3452 = vadd.f32 %v3257, %v3404
      %v3453 = vadd.f32 %v3258, %v3406
      %v3454 = vadd.f32 %v3259, %v3445
      %v3455 = vpack.c.bf16 %v1116, %v1116
      %s3456 = scalar_lea.vmem %s282, 720
      %v3457 = vld [vmem:[%s3456] sm:$0xff]
      %v3458 = vld [vmem:[%s3456 + $0x8] sm:$0xff]
      %v3459 = vld [vmem:[%s3456 + $0x10] sm:$0xf]
      %v3460 = vld [vmem:[%s3456 + $0x14] sm:$0xff]
      %v3461 = vld [vmem:[%s3456 + $0x1c] sm:$0xff]
      %v3462 = vld [vmem:[%s3456 + $0x24] sm:$0xf]
      %v3463 = vld [vmem:[%s3456 + $0x28] sm:$0x33]
      %v3464 = vld [vmem:[%s3456 + $0x30] sm:$0x33]
      %v3465 = vld [vmem:[%s3456 + $0x38] sm:$0x3]
      %v3475 = vunpack.c.l.b16 %v3457
      %v3476 = vunpack.c.h.b16 %v3457
      %v3477 = vunpack.c.l.b16 %v3458
      %v3478 = vunpack.c.h.b16 %v3458
      %v3479 = vunpack.c.l.b16 %v3459
      %v3480 = vunpack.c.l.b16 %v3460
      %v3481 = vunpack.c.h.b16 %v3460
      %v3482 = vunpack.c.l.b16 %v3461
      %v3483 = vunpack.c.h.b16 %v3461
      %v3484 = vunpack.c.l.b16 %v3462
      %v3485 = vunpack.c.l.b16 %v3463
      %v3486 = vunpack.c.h.b16 %v3463
      %v3487 = vunpack.c.l.b16 %v3464
      %v3488 = vunpack.c.h.b16 %v3464
      %v3489 = vunpack.c.l.b16 %v3465
      %v3490 = vpack.c.b16 %v3480, %v3475
      %v3491 = vpack.c.b16 %v3481, %v3476
      %v3492 = vpack.c.b16 %v3482, %v3477
      %v3493 = vpack.c.b16 %v3483, %v3478
      %v3494 = vpack.c.b16 %v3484, %v3479
      %v3495 = vpack.c.b16 %v3485, %v3485
      %v3496 = vpack.c.b16 %v3486, %v3486
      %v3497 = vpack.c.b16 %v3487, %v3487
      %v3498 = vpack.c.b16 %v3488, %v3488
      %v3499 = vpack.c.b16 %v3489, %v3489
      %v3506 = vsel %vm334, %v3455, 0
      %v3509 = vsel %vm1188, %v3495, 0
      %v3512 = vsel %vm1188, %v3496, 0
      %v3515 = vsel %vm1188, %v3497, 0
      %v3518 = vsel %vm1188, %v3498, 0
      %v3521 = vsel %vm1188, %v3499, 0
      %3523 = vmatprep.subr.bf16.mxu0 0
      %3524 = vmatpush1.bf16.msra.mxu0 0
      %3525 = vmatprep.subr.bf16.mxu0 0
      %3526 = vmatpush1.bf16.msra.mxu0 0
      %3527 = vmatprep.subr.bf16.mxu0 0
      %3528 = vmatpush1.bf16.msra.mxu0 0
      %3529 = vmatprep.subr.bf16.mxu0 0
      %3530 = vmatpush1.bf16.msra.mxu0 0
      %3531 = vmatprep.subr.bf16.mxu0 0
      %3532 = vmatpush1.bf16.msra.mxu0 0
      %3533 = vmatprep.subr.bf16.mxu0 0
      %3534 = vmatpush1.bf16.msra.mxu0 0
      %3535 = vmatprep.subr.bf16.mxu0 %v3512
      %3536 = vmatpush1.bf16.msra.mxu0 %v3509
      %3537 = vmatprep.subr.bf16.mxu0 %v3491
      %3538 = vmatpush1.bf16.msra.mxu0 %v3490
      %3539 = vmatprep.subr.bf16.mxu0 0
      %3540 = vmatpush2.bf16.msra.mxu0 0
      %3541 = vmatprep.subr.bf16.mxu0 0
      %3542 = vmatpush2.bf16.msra.mxu0 0
      %3543 = vmatprep.subr.bf16.mxu0 0
      %3544 = vmatpush2.bf16.msra.mxu0 0
      %3545 = vmatprep.subr.bf16.mxu0 0
      %3546 = vmatpush2.bf16.msra.mxu0 0
      %3547 = vmatprep.subr.bf16.mxu0 0
      %3548 = vmatpush2.bf16.msra.mxu0 0
      %3549 = vmatprep.subr.bf16.mxu0 0
      %3550 = vmatpush2.bf16.msra.mxu0 0
      %3551 = vmatprep.subr.bf16.mxu0 0
      %3552 = vmatpush2.bf16.msra.mxu0 0
      %3553 = vmatprep.subr.bf16.mxu0 0
      %3554 = vmatpush2.bf16.msra.mxu0 0
      %3555 = vmatprep.mubr.bf16.mxu0 0
      %3556 = vmatmul.mubr.bf16.gmra.mxu0 %v3506
      %v3557 = vpop.f32.mrf.mxu0
      %v3558 = vadd.f32 0.0, %v3557
      %v3559 = vpop.f32.mrf.mxu0
      %v3560 = vadd.f32 0.0, %v3559
      %v3561 = vpop.f32.mrf.mxu0
      %v3562 = vpop.f32.mrf.mxu0
      %3563 = vdwg.mxu0
      %3564 = vmatprep.subr.bf16.mxu0 0
      %3565 = vmatpush1.bf16.msra.mxu0 0
      %3566 = vmatprep.subr.bf16.mxu0 0
      %3567 = vmatpush1.bf16.msra.mxu0 0
      %3568 = vmatprep.subr.bf16.mxu0 0
      %3569 = vmatpush1.bf16.msra.mxu0 0
      %3570 = vmatprep.subr.bf16.mxu0 0
      %3571 = vmatpush1.bf16.msra.mxu0 0
      %3572 = vmatprep.subr.bf16.mxu0 0
      %3573 = vmatpush1.bf16.msra.mxu0 0
      %3574 = vmatprep.subr.bf16.mxu0 0
      %3575 = vmatpush1.bf16.msra.mxu0 0
      %3576 = vmatprep.subr.bf16.mxu0 %v3518
      %3577 = vmatpush1.bf16.msra.mxu0 %v3515
      %3578 = vmatprep.subr.bf16.mxu0 %v3493
      %3579 = vmatpush1.bf16.msra.mxu0 %v3492
      %3580 = vmatprep.subr.bf16.mxu0 0
      %3581 = vmatpush2.bf16.msra.mxu0 0
      %3582 = vmatprep.subr.bf16.mxu0 0
      %3583 = vmatpush2.bf16.msra.mxu0 0
      %3584 = vmatprep.subr.bf16.mxu0 0
      %3585 = vmatpush2.bf16.msra.mxu0 0
      %3586 = vmatprep.subr.bf16.mxu0 0
      %3587 = vmatpush2.bf16.msra.mxu0 0
      %3588 = vmatprep.subr.bf16.mxu0 0
      %3589 = vmatpush2.bf16.msra.mxu0 0
      %3590 = vmatprep.subr.bf16.mxu0 0
      %3591 = vmatpush2.bf16.msra.mxu0 0
      %3592 = vmatprep.subr.bf16.mxu0 0
      %3593 = vmatpush2.bf16.msra.mxu0 0
      %3594 = vmatprep.subr.bf16.mxu0 0
      %3595 = vmatpush2.bf16.msra.mxu0 0
      %3596 = vmatprep.mubr.bf16.mxu0 0
      %3597 = vmatmul.mubr.bf16.gmra.mxu0 %v3506
      %v3598 = vpop.f32.mrf.mxu0
      %v3599 = vadd.f32 0.0, %v3598
      %v3600 = vpop.f32.mrf.mxu0
      %v3601 = vadd.f32 0.0, %v3600
      %v3602 = vpop.f32.mrf.mxu0
      %v3603 = vpop.f32.mrf.mxu0
      %3604 = vdwg.mxu0
      %3605 = vmatprep.subr.bf16.mxu0 0
      %3606 = vmatpush1.bf16.msra.mxu0 0
      %3607 = vmatprep.subr.bf16.mxu0 0
      %3608 = vmatpush1.bf16.msra.mxu0 0
      %3609 = vmatprep.subr.bf16.mxu0 0
      %3610 = vmatpush1.bf16.msra.mxu0 0
      %3611 = vmatprep.subr.bf16.mxu0 0
      %3612 = vmatpush1.bf16.msra.mxu0 0
      %3613 = vmatprep.subr.bf16.mxu0 0
      %3614 = vmatpush1.bf16.msra.mxu0 0
      %3615 = vmatprep.subr.bf16.mxu0 0
      %3616 = vmatpush1.bf16.msra.mxu0 0
      %3617 = vmatprep.subr.bf16.mxu0 0
      %3618 = vmatpush1.bf16.msra.mxu0 %v3521
      %3619 = vmatprep.subr.bf16.mxu0 0
      %3620 = vmatpush1.bf16.msra.mxu0 %v3494
      %3621 = vmatprep.subr.bf16.mxu0 0
      %3622 = vmatpush2.bf16.msra.mxu0 0
      %3623 = vmatprep.subr.bf16.mxu0 0
      %3624 = vmatpush2.bf16.msra.mxu0 0
      %3625 = vmatprep.subr.bf16.mxu0 0
      %3626 = vmatpush2.bf16.msra.mxu0 0
      %3627 = vmatprep.subr.bf16.mxu0 0
      %3628 = vmatpush2.bf16.msra.mxu0 0
      %3629 = vmatprep.subr.bf16.mxu0 0
      %3630 = vmatpush2.bf16.msra.mxu0 0
      %3631 = vmatprep.subr.bf16.mxu0 0
      %3632 = vmatpush2.bf16.msra.mxu0 0
      %3633 = vmatprep.subr.bf16.mxu0 0
      %3634 = vmatpush2.bf16.msra.mxu0 0
      %3635 = vmatprep.subr.bf16.mxu0 0
      %3636 = vmatpush2.bf16.msra.mxu0 0
      %3637 = vmatprep.mubr.bf16.mxu0 0
      %3638 = vmatmul.mubr.bf16.gmra.mxu0 %v3506
      %v3639 = vpop.f32.mrf.mxu0
      %v3640 = vadd.f32 0.0, %v3639
      %v3641 = vpop.f32.mrf.mxu0
      %v3642 = vpop.f32.mrf.mxu0
      %v3643 = vpop.f32.mrf.mxu0
      %3644 = vdwg.mxu0
      %v3645 = vadd.f32 %v3450, %v3558
      %v3646 = vadd.f32 %v3451, %v3560
      %v3647 = vadd.f32 %v3452, %v3599
      %v3648 = vadd.f32 %v3453, %v3601
      %v3649 = vadd.f32 %v3454, %v3640
      %v3650 = vpack.c.bf16 %v1117, %v1117
      %s3651 = scalar_lea.vmem %s282, 780
      %v3652 = vld [vmem:[%s3651] sm:$0xff]
      %v3653 = vld [vmem:[%s3651 + $0x8] sm:$0xff]
      %v3654 = vld [vmem:[%s3651 + $0x10] sm:$0xf]
      %v3655 = vld [vmem:[%s3651 + $0x14] sm:$0xff]
      %v3656 = vld [vmem:[%s3651 + $0x1c] sm:$0xff]
      %v3657 = vld [vmem:[%s3651 + $0x24] sm:$0xf]
      %v3658 = vld [vmem:[%s3651 + $0x28] sm:$0x33]
      %v3659 = vld [vmem:[%s3651 + $0x30] sm:$0x33]
      %v3660 = vld [vmem:[%s3651 + $0x38] sm:$0x3]
      %v3670 = vunpack.c.l.b16 %v3652
      %v3671 = vunpack.c.h.b16 %v3652
      %v3672 = vunpack.c.l.b16 %v3653
      %v3673 = vunpack.c.h.b16 %v3653
      %v3674 = vunpack.c.l.b16 %v3654
      %v3675 = vunpack.c.l.b16 %v3655
      %v3676 = vunpack.c.h.b16 %v3655
      %v3677 = vunpack.c.l.b16 %v3656
      %v3678 = vunpack.c.h.b16 %v3656
      %v3679 = vunpack.c.l.b16 %v3657
      %v3680 = vunpack.c.l.b16 %v3658
      %v3681 = vunpack.c.h.b16 %v3658
      %v3682 = vunpack.c.l.b16 %v3659
      %v3683 = vunpack.c.h.b16 %v3659
      %v3684 = vunpack.c.l.b16 %v3660
      %v3685 = vpack.c.b16 %v3675, %v3670
      %v3686 = vpack.c.b16 %v3676, %v3671
      %v3687 = vpack.c.b16 %v3677, %v3672
      %v3688 = vpack.c.b16 %v3678, %v3673
      %v3689 = vpack.c.b16 %v3679, %v3674
      %v3690 = vpack.c.b16 %v3680, %v3680
      %v3691 = vpack.c.b16 %v3681, %v3681
      %v3692 = vpack.c.b16 %v3682, %v3682
      %v3693 = vpack.c.b16 %v3683, %v3683
      %v3694 = vpack.c.b16 %v3684, %v3684
      %v3701 = vsel %vm334, %v3650, 0
      %v3704 = vsel %vm1188, %v3690, 0
      %v3707 = vsel %vm1188, %v3691, 0
      %v3710 = vsel %vm1188, %v3692, 0
      %v3713 = vsel %vm1188, %v3693, 0
      %v3716 = vsel %vm1188, %v3694, 0
      %3718 = vmatprep.subr.bf16.mxu0 0
      %3719 = vmatpush1.bf16.msra.mxu0 0
      %3720 = vmatprep.subr.bf16.mxu0 0
      %3721 = vmatpush1.bf16.msra.mxu0 0
      %3722 = vmatprep.subr.bf16.mxu0 0
      %3723 = vmatpush1.bf16.msra.mxu0 0
      %3724 = vmatprep.subr.bf16.mxu0 0
      %3725 = vmatpush1.bf16.msra.mxu0 0
      %3726 = vmatprep.subr.bf16.mxu0 0
      %3727 = vmatpush1.bf16.msra.mxu0 0
      %3728 = vmatprep.subr.bf16.mxu0 0
      %3729 = vmatpush1.bf16.msra.mxu0 0
      %3730 = vmatprep.subr.bf16.mxu0 %v3707
      %3731 = vmatpush1.bf16.msra.mxu0 %v3704
      %3732 = vmatprep.subr.bf16.mxu0 %v3686
      %3733 = vmatpush1.bf16.msra.mxu0 %v3685
      %3734 = vmatprep.subr.bf16.mxu0 0
      %3735 = vmatpush2.bf16.msra.mxu0 0
      %3736 = vmatprep.subr.bf16.mxu0 0
      %3737 = vmatpush2.bf16.msra.mxu0 0
      %3738 = vmatprep.subr.bf16.mxu0 0
      %3739 = vmatpush2.bf16.msra.mxu0 0
      %3740 = vmatprep.subr.bf16.mxu0 0
      %3741 = vmatpush2.bf16.msra.mxu0 0
      %3742 = vmatprep.subr.bf16.mxu0 0
      %3743 = vmatpush2.bf16.msra.mxu0 0
      %3744 = vmatprep.subr.bf16.mxu0 0
      %3745 = vmatpush2.bf16.msra.mxu0 0
      %3746 = vmatprep.subr.bf16.mxu0 0
      %3747 = vmatpush2.bf16.msra.mxu0 0
      %3748 = vmatprep.subr.bf16.mxu0 0
      %3749 = vmatpush2.bf16.msra.mxu0 0
      %3750 = vmatprep.mubr.bf16.mxu0 0
      %3751 = vmatmul.mubr.bf16.gmra.mxu0 %v3701
      %v3752 = vpop.f32.mrf.mxu0
      %v3753 = vadd.f32 0.0, %v3752
      %v3754 = vpop.f32.mrf.mxu0
      %v3755 = vadd.f32 0.0, %v3754
      %v3756 = vpop.f32.mrf.mxu0
      %v3757 = vpop.f32.mrf.mxu0
      %3758 = vdwg.mxu0
      %3759 = vmatprep.subr.bf16.mxu0 0
      %3760 = vmatpush1.bf16.msra.mxu0 0
      %3761 = vmatprep.subr.bf16.mxu0 0
      %3762 = vmatpush1.bf16.msra.mxu0 0
      %3763 = vmatprep.subr.bf16.mxu0 0
      %3764 = vmatpush1.bf16.msra.mxu0 0
      %3765 = vmatprep.subr.bf16.mxu0 0
      %3766 = vmatpush1.bf16.msra.mxu0 0
      %3767 = vmatprep.subr.bf16.mxu0 0
      %3768 = vmatpush1.bf16.msra.mxu0 0
      %3769 = vmatprep.subr.bf16.mxu0 0
      %3770 = vmatpush1.bf16.msra.mxu0 0
      %3771 = vmatprep.subr.bf16.mxu0 %v3713
      %3772 = vmatpush1.bf16.msra.mxu0 %v3710
      %3773 = vmatprep.subr.bf16.mxu0 %v3688
      %3774 = vmatpush1.bf16.msra.mxu0 %v3687
      %3775 = vmatprep.subr.bf16.mxu0 0
      %3776 = vmatpush2.bf16.msra.mxu0 0
      %3777 = vmatprep.subr.bf16.mxu0 0
      %3778 = vmatpush2.bf16.msra.mxu0 0
      %3779 = vmatprep.subr.bf16.mxu0 0
      %3780 = vmatpush2.bf16.msra.mxu0 0
      %3781 = vmatprep.subr.bf16.mxu0 0
      %3782 = vmatpush2.bf16.msra.mxu0 0
      %3783 = vmatprep.subr.bf16.mxu0 0
      %3784 = vmatpush2.bf16.msra.mxu0 0
      %3785 = vmatprep.subr.bf16.mxu0 0
      %3786 = vmatpush2.bf16.msra.mxu0 0
      %3787 = vmatprep.subr.bf16.mxu0 0
      %3788 = vmatpush2.bf16.msra.mxu0 0
      %3789 = vmatprep.subr.bf16.mxu0 0
      %3790 = vmatpush2.bf16.msra.mxu0 0
      %3791 = vmatprep.mubr.bf16.mxu0 0
      %3792 = vmatmul.mubr.bf16.gmra.mxu0 %v3701
      %v3793 = vpop.f32.mrf.mxu0
      %v3794 = vadd.f32 0.0, %v3793
      %v3795 = vpop.f32.mrf.mxu0
      %v3796 = vadd.f32 0.0, %v3795
      %v3797 = vpop.f32.mrf.mxu0
      %v3798 = vpop.f32.mrf.mxu0
      %3799 = vdwg.mxu0
      %3800 = vmatprep.subr.bf16.mxu0 0
      %3801 = vmatpush1.bf16.msra.mxu0 0
      %3802 = vmatprep.subr.bf16.mxu0 0
      %3803 = vmatpush1.bf16.msra.mxu0 0
      %3804 = vmatprep.subr.bf16.mxu0 0
      %3805 = vmatpush1.bf16.msra.mxu0 0
      %3806 = vmatprep.subr.bf16.mxu0 0
      %3807 = vmatpush1.bf16.msra.mxu0 0
      %3808 = vmatprep.subr.bf16.mxu0 0
      %3809 = vmatpush1.bf16.msra.mxu0 0
      %3810 = vmatprep.subr.bf16.mxu0 0
      %3811 = vmatpush1.bf16.msra.mxu0 0
      %3812 = vmatprep.subr.bf16.mxu0 0
      %3813 = vmatpush1.bf16.msra.mxu0 %v3716
      %3814 = vmatprep.subr.bf16.mxu0 0
      %3815 = vmatpush1.bf16.msra.mxu0 %v3689
      %3816 = vmatprep.subr.bf16.mxu0 0
      %3817 = vmatpush2.bf16.msra.mxu0 0
      %3818 = vmatprep.subr.bf16.mxu0 0
      %3819 = vmatpush2.bf16.msra.mxu0 0
      %3820 = vmatprep.subr.bf16.mxu0 0
      %3821 = vmatpush2.bf16.msra.mxu0 0
      %3822 = vmatprep.subr.bf16.mxu0 0
      %3823 = vmatpush2.bf16.msra.mxu0 0
      %3824 = vmatprep.subr.bf16.mxu0 0
      %3825 = vmatpush2.bf16.msra.mxu0 0
      %3826 = vmatprep.subr.bf16.mxu0 0
      %3827 = vmatpush2.bf16.msra.mxu0 0
      %3828 = vmatprep.subr.bf16.mxu0 0
      %3829 = vmatpush2.bf16.msra.mxu0 0
      %3830 = vmatprep.subr.bf16.mxu0 0
      %3831 = vmatpush2.bf16.msra.mxu0 0
      %3832 = vmatprep.mubr.bf16.mxu0 0
      %3833 = vmatmul.mubr.bf16.gmra.mxu0 %v3701
      %v3834 = vpop.f32.mrf.mxu0
      %v3835 = vadd.f32 0.0, %v3834
      %v3836 = vpop.f32.mrf.mxu0
      %v3837 = vpop.f32.mrf.mxu0
      %v3838 = vpop.f32.mrf.mxu0
      %3839 = vdwg.mxu0
      %v3840 = vadd.f32 %v3645, %v3753
      %v3841 = vadd.f32 %v3646, %v3755
      %v3842 = vadd.f32 %v3647, %v3794
      %v3843 = vadd.f32 %v3648, %v3796
      %v3844 = vadd.f32 %v3649, %v3835
      %v3845 = vpack.c.bf16 %v1118, %v1118
      %s3846 = scalar_lea.vmem %s282, 840
      %v3847 = vld [vmem:[%s3846] sm:$0xff]
      %v3848 = vld [vmem:[%s3846 + $0x8] sm:$0xff]
      %v3849 = vld [vmem:[%s3846 + $0x10] sm:$0xf]
      %v3850 = vld [vmem:[%s3846 + $0x14] sm:$0xff]
      %v3851 = vld [vmem:[%s3846 + $0x1c] sm:$0xff]
      %v3852 = vld [vmem:[%s3846 + $0x24] sm:$0xf]
      %v3853 = vld [vmem:[%s3846 + $0x28] sm:$0x33]
      %v3854 = vld [vmem:[%s3846 + $0x30] sm:$0x33]
      %v3855 = vld [vmem:[%s3846 + $0x38] sm:$0x3]
      %v3865 = vunpack.c.l.b16 %v3847
      %v3866 = vunpack.c.h.b16 %v3847
      %v3867 = vunpack.c.l.b16 %v3848
      %v3868 = vunpack.c.h.b16 %v3848
      %v3869 = vunpack.c.l.b16 %v3849
      %v3870 = vunpack.c.l.b16 %v3850
      %v3871 = vunpack.c.h.b16 %v3850
      %v3872 = vunpack.c.l.b16 %v3851
      %v3873 = vunpack.c.h.b16 %v3851
      %v3874 = vunpack.c.l.b16 %v3852
      %v3875 = vunpack.c.l.b16 %v3853
      %v3876 = vunpack.c.h.b16 %v3853
      %v3877 = vunpack.c.l.b16 %v3854
      %v3878 = vunpack.c.h.b16 %v3854
      %v3879 = vunpack.c.l.b16 %v3855
      %v3880 = vpack.c.b16 %v3870, %v3865
      %v3881 = vpack.c.b16 %v3871, %v3866
      %v3882 = vpack.c.b16 %v3872, %v3867
      %v3883 = vpack.c.b16 %v3873, %v3868
      %v3884 = vpack.c.b16 %v3874, %v3869
      %v3885 = vpack.c.b16 %v3875, %v3875
      %v3886 = vpack.c.b16 %v3876, %v3876
      %v3887 = vpack.c.b16 %v3877, %v3877
      %v3888 = vpack.c.b16 %v3878, %v3878
      %v3889 = vpack.c.b16 %v3879, %v3879
      %v3896 = vsel %vm334, %v3845, 0
      %v3899 = vsel %vm1188, %v3885, 0
      %v3902 = vsel %vm1188, %v3886, 0
      %v3905 = vsel %vm1188, %v3887, 0
      %v3908 = vsel %vm1188, %v3888, 0
      %v3911 = vsel %vm1188, %v3889, 0
      %3913 = vmatprep.subr.bf16.mxu0 0
      %3914 = vmatpush1.bf16.msra.mxu0 0
      %3915 = vmatprep.subr.bf16.mxu0 0
      %3916 = vmatpush1.bf16.msra.mxu0 0
      %3917 = vmatprep.subr.bf16.mxu0 0
      %3918 = vmatpush1.bf16.msra.mxu0 0
      %3919 = vmatprep.subr.bf16.mxu0 0
      %3920 = vmatpush1.bf16.msra.mxu0 0
      %3921 = vmatprep.subr.bf16.mxu0 0
      %3922 = vmatpush1.bf16.msra.mxu0 0
      %3923 = vmatprep.subr.bf16.mxu0 0
      %3924 = vmatpush1.bf16.msra.mxu0 0
      %3925 = vmatprep.subr.bf16.mxu0 %v3902
      %3926 = vmatpush1.bf16.msra.mxu0 %v3899
      %3927 = vmatprep.subr.bf16.mxu0 %v3881
      %3928 = vmatpush1.bf16.msra.mxu0 %v3880
      %3929 = vmatprep.subr.bf16.mxu0 0
      %3930 = vmatpush2.bf16.msra.mxu0 0
      %3931 = vmatprep.subr.bf16.mxu0 0
      %3932 = vmatpush2.bf16.msra.mxu0 0
      %3933 = vmatprep.subr.bf16.mxu0 0
      %3934 = vmatpush2.bf16.msra.mxu0 0
      %3935 = vmatprep.subr.bf16.mxu0 0
      %3936 = vmatpush2.bf16.msra.mxu0 0
      %3937 = vmatprep.subr.bf16.mxu0 0
      %3938 = vmatpush2.bf16.msra.mxu0 0
      %3939 = vmatprep.subr.bf16.mxu0 0
      %3940 = vmatpush2.bf16.msra.mxu0 0
      %3941 = vmatprep.subr.bf16.mxu0 0
      %3942 = vmatpush2.bf16.msra.mxu0 0
      %3943 = vmatprep.subr.bf16.mxu0 0
      %3944 = vmatpush2.bf16.msra.mxu0 0
      %3945 = vmatprep.mubr.bf16.mxu0 0
      %3946 = vmatmul.mubr.bf16.gmra.mxu0 %v3896
      %v3947 = vpop.f32.mrf.mxu0
      %v3948 = vadd.f32 0.0, %v3947
      %v3949 = vpop.f32.mrf.mxu0
      %v3950 = vadd.f32 0.0, %v3949
      %v3951 = vpop.f32.mrf.mxu0
      %v3952 = vpop.f32.mrf.mxu0
      %3953 = vdwg.mxu0
      %3954 = vmatprep.subr.bf16.mxu0 0
      %3955 = vmatpush1.bf16.msra.mxu0 0
      %3956 = vmatprep.subr.bf16.mxu0 0
      %3957 = vmatpush1.bf16.msra.mxu0 0
      %3958 = vmatprep.subr.bf16.mxu0 0
      %3959 = vmatpush1.bf16.msra.mxu0 0
      %3960 = vmatprep.subr.bf16.mxu0 0
      %3961 = vmatpush1.bf16.msra.mxu0 0
      %3962 = vmatprep.subr.bf16.mxu0 0
      %3963 = vmatpush1.bf16.msra.mxu0 0
      %3964 = vmatprep.subr.bf16.mxu0 0
      %3965 = vmatpush1.bf16.msra.mxu0 0
      %3966 = vmatprep.subr.bf16.mxu0 %v3908
      %3967 = vmatpush1.bf16.msra.mxu0 %v3905
      %3968 = vmatprep.subr.bf16.mxu0 %v3883
      %3969 = vmatpush1.bf16.msra.mxu0 %v3882
      %3970 = vmatprep.subr.bf16.mxu0 0
      %3971 = vmatpush2.bf16.msra.mxu0 0
      %3972 = vmatprep.subr.bf16.mxu0 0
      %3973 = vmatpush2.bf16.msra.mxu0 0
      %3974 = vmatprep.subr.bf16.mxu0 0
      %3975 = vmatpush2.bf16.msra.mxu0 0
      %3976 = vmatprep.subr.bf16.mxu0 0
      %3977 = vmatpush2.bf16.msra.mxu0 0
      %3978 = vmatprep.subr.bf16.mxu0 0
      %3979 = vmatpush2.bf16.msra.mxu0 0
      %3980 = vmatprep.subr.bf16.mxu0 0
      %3981 = vmatpush2.bf16.msra.mxu0 0
      %3982 = vmatprep.subr.bf16.mxu0 0
      %3983 = vmatpush2.bf16.msra.mxu0 0
      %3984 = vmatprep.subr.bf16.mxu0 0
      %3985 = vmatpush2.bf16.msra.mxu0 0
      %3986 = vmatprep.mubr.bf16.mxu0 0
      %3987 = vmatmul.mubr.bf16.gmra.mxu0 %v3896
      %v3988 = vpop.f32.mrf.mxu0
      %v3989 = vadd.f32 0.0, %v3988
      %v3990 = vpop.f32.mrf.mxu0
      %v3991 = vadd.f32 0.0, %v3990
      %v3992 = vpop.f32.mrf.mxu0
      %v3993 = vpop.f32.mrf.mxu0
      %3994 = vdwg.mxu0
      %3995 = vmatprep.subr.bf16.mxu0 0
      %3996 = vmatpush1.bf16.msra.mxu0 0
      %3997 = vmatprep.subr.bf16.mxu0 0
      %3998 = vmatpush1.bf16.msra.mxu0 0
      %3999 = vmatprep.subr.bf16.mxu0 0
      %4000 = vmatpush1.bf16.msra.mxu0 0
      %4001 = vmatprep.subr.bf16.mxu0 0
      %4002 = vmatpush1.bf16.msra.mxu0 0
      %4003 = vmatprep.subr.bf16.mxu0 0
      %4004 = vmatpush1.bf16.msra.mxu0 0
      %4005 = vmatprep.subr.bf16.mxu0 0
      %4006 = vmatpush1.bf16.msra.mxu0 0
      %4007 = vmatprep.subr.bf16.mxu0 0
      %4008 = vmatpush1.bf16.msra.mxu0 %v3911
      %4009 = vmatprep.subr.bf16.mxu0 0
      %4010 = vmatpush1.bf16.msra.mxu0 %v3884
      %4011 = vmatprep.subr.bf16.mxu0 0
      %4012 = vmatpush2.bf16.msra.mxu0 0
      %4013 = vmatprep.subr.bf16.mxu0 0
      %4014 = vmatpush2.bf16.msra.mxu0 0
      %4015 = vmatprep.subr.bf16.mxu0 0
      %4016 = vmatpush2.bf16.msra.mxu0 0
      %4017 = vmatprep.subr.bf16.mxu0 0
      %4018 = vmatpush2.bf16.msra.mxu0 0
      %4019 = vmatprep.subr.bf16.mxu0 0
      %4020 = vmatpush2.bf16.msra.mxu0 0
      %4021 = vmatprep.subr.bf16.mxu0 0
      %4022 = vmatpush2.bf16.msra.mxu0 0
      %4023 = vmatprep.subr.bf16.mxu0 0
      %4024 = vmatpush2.bf16.msra.mxu0 0
      %4025 = vmatprep.subr.bf16.mxu0 0
      %4026 = vmatpush2.bf16.msra.mxu0 0
      %4027 = vmatprep.mubr.bf16.mxu0 0
      %4028 = vmatmul.mubr.bf16.gmra.mxu0 %v3896
      %v4029 = vpop.f32.mrf.mxu0
      %v4030 = vadd.f32 0.0, %v4029
      %v4031 = vpop.f32.mrf.mxu0
      %v4032 = vpop.f32.mrf.mxu0
      %v4033 = vpop.f32.mrf.mxu0
      %4034 = vdwg.mxu0
      %v4035 = vadd.f32 %v3840, %v3948
      %v4036 = vadd.f32 %v3841, %v3950
      %v4037 = vadd.f32 %v3842, %v3989
      %v4038 = vadd.f32 %v3843, %v3991
      %v4039 = vadd.f32 %v3844, %v4030
      %v4040 = vpack.c.bf16 %v1119, %v1119
      %s4041 = scalar_lea.vmem %s282, 900
      %v4042 = vld [vmem:[%s4041] sm:$0xff]
      %v4043 = vld [vmem:[%s4041 + $0x8] sm:$0xff]
      %v4044 = vld [vmem:[%s4041 + $0x10] sm:$0xf]
      %v4045 = vld [vmem:[%s4041 + $0x14] sm:$0xff]
      %v4046 = vld [vmem:[%s4041 + $0x1c] sm:$0xff]
      %v4047 = vld [vmem:[%s4041 + $0x24] sm:$0xf]
      %v4048 = vld [vmem:[%s4041 + $0x28] sm:$0x33]
      %v4049 = vld [vmem:[%s4041 + $0x30] sm:$0x33]
      %v4050 = vld [vmem:[%s4041 + $0x38] sm:$0x3]
      %v4060 = vunpack.c.l.b16 %v4042
      %v4061 = vunpack.c.h.b16 %v4042
      %v4062 = vunpack.c.l.b16 %v4043
      %v4063 = vunpack.c.h.b16 %v4043
      %v4064 = vunpack.c.l.b16 %v4044
      %v4065 = vunpack.c.l.b16 %v4045
      %v4066 = vunpack.c.h.b16 %v4045
      %v4067 = vunpack.c.l.b16 %v4046
      %v4068 = vunpack.c.h.b16 %v4046
      %v4069 = vunpack.c.l.b16 %v4047
      %v4070 = vunpack.c.l.b16 %v4048
      %v4071 = vunpack.c.h.b16 %v4048
      %v4072 = vunpack.c.l.b16 %v4049
      %v4073 = vunpack.c.h.b16 %v4049
      %v4074 = vunpack.c.l.b16 %v4050
      %v4075 = vpack.c.b16 %v4065, %v4060
      %v4076 = vpack.c.b16 %v4066, %v4061
      %v4077 = vpack.c.b16 %v4067, %v4062
      %v4078 = vpack.c.b16 %v4068, %v4063
      %v4079 = vpack.c.b16 %v4069, %v4064
      %v4080 = vpack.c.b16 %v4070, %v4070
      %v4081 = vpack.c.b16 %v4071, %v4071
      %v4082 = vpack.c.b16 %v4072, %v4072
      %v4083 = vpack.c.b16 %v4073, %v4073
      %v4084 = vpack.c.b16 %v4074, %v4074
      %v4091 = vsel %vm334, %v4040, 0
      %v4094 = vsel %vm1188, %v4080, 0
      %v4097 = vsel %vm1188, %v4081, 0
      %v4100 = vsel %vm1188, %v4082, 0
      %v4103 = vsel %vm1188, %v4083, 0
      %v4106 = vsel %vm1188, %v4084, 0
      %4108 = vmatprep.subr.bf16.mxu0 0
      %4109 = vmatpush1.bf16.msra.mxu0 0
      %4110 = vmatprep.subr.bf16.mxu0 0
      %4111 = vmatpush1.bf16.msra.mxu0 0
      %4112 = vmatprep.subr.bf16.mxu0 0
      %4113 = vmatpush1.bf16.msra.mxu0 0
      %4114 = vmatprep.subr.bf16.mxu0 0
      %4115 = vmatpush1.bf16.msra.mxu0 0
      %4116 = vmatprep.subr.bf16.mxu0 0
      %4117 = vmatpush1.bf16.msra.mxu0 0
      %4118 = vmatprep.subr.bf16.mxu0 0
      %4119 = vmatpush1.bf16.msra.mxu0 0
      %4120 = vmatprep.subr.bf16.mxu0 %v4097
      %4121 = vmatpush1.bf16.msra.mxu0 %v4094
      %4122 = vmatprep.subr.bf16.mxu0 %v4076
      %4123 = vmatpush1.bf16.msra.mxu0 %v4075
      %4124 = vmatprep.subr.bf16.mxu0 0
      %4125 = vmatpush2.bf16.msra.mxu0 0
      %4126 = vmatprep.subr.bf16.mxu0 0
      %4127 = vmatpush2.bf16.msra.mxu0 0
      %4128 = vmatprep.subr.bf16.mxu0 0
      %4129 = vmatpush2.bf16.msra.mxu0 0
      %4130 = vmatprep.subr.bf16.mxu0 0
      %4131 = vmatpush2.bf16.msra.mxu0 0
      %4132 = vmatprep.subr.bf16.mxu0 0
      %4133 = vmatpush2.bf16.msra.mxu0 0
      %4134 = vmatprep.subr.bf16.mxu0 0
      %4135 = vmatpush2.bf16.msra.mxu0 0
      %4136 = vmatprep.subr.bf16.mxu0 0
      %4137 = vmatpush2.bf16.msra.mxu0 0
      %4138 = vmatprep.subr.bf16.mxu0 0
      %4139 = vmatpush2.bf16.msra.mxu0 0
      %4140 = vmatprep.mubr.bf16.mxu0 0
      %4141 = vmatmul.mubr.bf16.gmra.mxu0 %v4091
      %v4142 = vpop.f32.mrf.mxu0
      %v4143 = vadd.f32 0.0, %v4142
      %v4144 = vpop.f32.mrf.mxu0
      %v4145 = vadd.f32 0.0, %v4144
      %v4146 = vpop.f32.mrf.mxu0
      %v4147 = vpop.f32.mrf.mxu0
      %4148 = vdwg.mxu0
      %4149 = vmatprep.subr.bf16.mxu0 0
      %4150 = vmatpush1.bf16.msra.mxu0 0
      %4151 = vmatprep.subr.bf16.mxu0 0
      %4152 = vmatpush1.bf16.msra.mxu0 0
      %4153 = vmatprep.subr.bf16.mxu0 0
      %4154 = vmatpush1.bf16.msra.mxu0 0
      %4155 = vmatprep.subr.bf16.mxu0 0
      %4156 = vmatpush1.bf16.msra.mxu0 0
      %4157 = vmatprep.subr.bf16.mxu0 0
      %4158 = vmatpush1.bf16.msra.mxu0 0
      %4159 = vmatprep.subr.bf16.mxu0 0
      %4160 = vmatpush1.bf16.msra.mxu0 0
      %4161 = vmatprep.subr.bf16.mxu0 %v4103
      %4162 = vmatpush1.bf16.msra.mxu0 %v4100
      %4163 = vmatprep.subr.bf16.mxu0 %v4078
      %4164 = vmatpush1.bf16.msra.mxu0 %v4077
      %4165 = vmatprep.subr.bf16.mxu0 0
      %4166 = vmatpush2.bf16.msra.mxu0 0
      %4167 = vmatprep.subr.bf16.mxu0 0
      %4168 = vmatpush2.bf16.msra.mxu0 0
      %4169 = vmatprep.subr.bf16.mxu0 0
      %4170 = vmatpush2.bf16.msra.mxu0 0
      %4171 = vmatprep.subr.bf16.mxu0 0
      %4172 = vmatpush2.bf16.msra.mxu0 0
      %4173 = vmatprep.subr.bf16.mxu0 0
      %4174 = vmatpush2.bf16.msra.mxu0 0
      %4175 = vmatprep.subr.bf16.mxu0 0
      %4176 = vmatpush2.bf16.msra.mxu0 0
      %4177 = vmatprep.subr.bf16.mxu0 0
      %4178 = vmatpush2.bf16.msra.mxu0 0
      %4179 = vmatprep.subr.bf16.mxu0 0
      %4180 = vmatpush2.bf16.msra.mxu0 0
      %4181 = vmatprep.mubr.bf16.mxu0 0
      %4182 = vmatmul.mubr.bf16.gmra.mxu0 %v4091
      %v4183 = vpop.f32.mrf.mxu0
      %v4184 = vadd.f32 0.0, %v4183
      %v4185 = vpop.f32.mrf.mxu0
      %v4186 = vadd.f32 0.0, %v4185
      %v4187 = vpop.f32.mrf.mxu0
      %v4188 = vpop.f32.mrf.mxu0
      %4189 = vdwg.mxu0
      %4190 = vmatprep.subr.bf16.mxu0 0
      %4191 = vmatpush1.bf16.msra.mxu0 0
      %4192 = vmatprep.subr.bf16.mxu0 0
      %4193 = vmatpush1.bf16.msra.mxu0 0
      %4194 = vmatprep.subr.bf16.mxu0 0
      %4195 = vmatpush1.bf16.msra.mxu0 0
      %4196 = vmatprep.subr.bf16.mxu0 0
      %4197 = vmatpush1.bf16.msra.mxu0 0
      %4198 = vmatprep.subr.bf16.mxu0 0
      %4199 = vmatpush1.bf16.msra.mxu0 0
      %4200 = vmatprep.subr.bf16.mxu0 0
      %4201 = vmatpush1.bf16.msra.mxu0 0
      %4202 = vmatprep.subr.bf16.mxu0 0
      %4203 = vmatpush1.bf16.msra.mxu0 %v4106
      %4204 = vmatprep.subr.bf16.mxu0 0
      %4205 = vmatpush1.bf16.msra.mxu0 %v4079
      %4206 = vmatprep.subr.bf16.mxu0 0
      %4207 = vmatpush2.bf16.msra.mxu0 0
      %4208 = vmatprep.subr.bf16.mxu0 0
      %4209 = vmatpush2.bf16.msra.mxu0 0
      %4210 = vmatprep.subr.bf16.mxu0 0
      %4211 = vmatpush2.bf16.msra.mxu0 0
      %4212 = vmatprep.subr.bf16.mxu0 0
      %4213 = vmatpush2.bf16.msra.mxu0 0
      %4214 = vmatprep.subr.bf16.mxu0 0
      %4215 = vmatpush2.bf16.msra.mxu0 0
      %4216 = vmatprep.subr.bf16.mxu0 0
      %4217 = vmatpush2.bf16.msra.mxu0 0
      %4218 = vmatprep.subr.bf16.mxu0 0
      %4219 = vmatpush2.bf16.msra.mxu0 0
      %4220 = vmatprep.subr.bf16.mxu0 0
      %4221 = vmatpush2.bf16.msra.mxu0 0
      %4222 = vmatprep.mubr.bf16.mxu0 0
      %4223 = vmatmul.mubr.bf16.gmra.mxu0 %v4091
      %v4224 = vpop.f32.mrf.mxu0
      %v4225 = vadd.f32 0.0, %v4224
      %v4226 = vpop.f32.mrf.mxu0
      %v4227 = vpop.f32.mrf.mxu0
      %v4228 = vpop.f32.mrf.mxu0
      %4229 = vdwg.mxu0
      %v4230 = vadd.f32 %v4035, %v4143
      %v4231 = vadd.f32 %v4036, %v4145
      %v4232 = vadd.f32 %v4037, %v4184
      %v4233 = vadd.f32 %v4038, %v4186
      %v4234 = vadd.f32 %v4039, %v4225
      %v4235 = vpack.c.bf16 %v1120, %v1120
      %s4236 = scalar_lea.vmem %s282, 960
      %v4237 = vld [vmem:[%s4236] sm:$0xff]
      %v4238 = vld [vmem:[%s4236 + $0x8] sm:$0xff]
      %v4239 = vld [vmem:[%s4236 + $0x10] sm:$0xf]
      %v4240 = vld [vmem:[%s4236 + $0x14] sm:$0xff]
      %v4241 = vld [vmem:[%s4236 + $0x1c] sm:$0xff]
      %v4242 = vld [vmem:[%s4236 + $0x24] sm:$0xf]
      %v4243 = vld [vmem:[%s4236 + $0x28] sm:$0x33]
      %v4244 = vld [vmem:[%s4236 + $0x30] sm:$0x33]
      %v4245 = vld [vmem:[%s4236 + $0x38] sm:$0x3]
      %v4255 = vunpack.c.l.b16 %v4237
      %v4256 = vunpack.c.h.b16 %v4237
      %v4257 = vunpack.c.l.b16 %v4238
      %v4258 = vunpack.c.h.b16 %v4238
      %v4259 = vunpack.c.l.b16 %v4239
      %v4260 = vunpack.c.l.b16 %v4240
      %v4261 = vunpack.c.h.b16 %v4240
      %v4262 = vunpack.c.l.b16 %v4241
      %v4263 = vunpack.c.h.b16 %v4241
      %v4264 = vunpack.c.l.b16 %v4242
      %v4265 = vunpack.c.l.b16 %v4243
      %v4266 = vunpack.c.h.b16 %v4243
      %v4267 = vunpack.c.l.b16 %v4244
      %v4268 = vunpack.c.h.b16 %v4244
      %v4269 = vunpack.c.l.b16 %v4245
      %v4270 = vpack.c.b16 %v4260, %v4255
      %v4271 = vpack.c.b16 %v4261, %v4256
      %v4272 = vpack.c.b16 %v4262, %v4257
      %v4273 = vpack.c.b16 %v4263, %v4258
      %v4274 = vpack.c.b16 %v4264, %v4259
      %v4275 = vpack.c.b16 %v4265, %v4265
      %v4276 = vpack.c.b16 %v4266, %v4266
      %v4277 = vpack.c.b16 %v4267, %v4267
      %v4278 = vpack.c.b16 %v4268, %v4268
      %v4279 = vpack.c.b16 %v4269, %v4269
      %v4286 = vsel %vm334, %v4235, 0
      %v4289 = vsel %vm1188, %v4275, 0
      %v4292 = vsel %vm1188, %v4276, 0
      %v4295 = vsel %vm1188, %v4277, 0
      %v4298 = vsel %vm1188, %v4278, 0
      %v4301 = vsel %vm1188, %v4279, 0
      %4303 = vmatprep.subr.bf16.mxu0 0
      %4304 = vmatpush1.bf16.msra.mxu0 0
      %4305 = vmatprep.subr.bf16.mxu0 0
      %4306 = vmatpush1.bf16.msra.mxu0 0
      %4307 = vmatprep.subr.bf16.mxu0 0
      %4308 = vmatpush1.bf16.msra.mxu0 0
      %4309 = vmatprep.subr.bf16.mxu0 0
      %4310 = vmatpush1.bf16.msra.mxu0 0
      %4311 = vmatprep.subr.bf16.mxu0 0
      %4312 = vmatpush1.bf16.msra.mxu0 0
      %4313 = vmatprep.subr.bf16.mxu0 0
      %4314 = vmatpush1.bf16.msra.mxu0 0
      %4315 = vmatprep.subr.bf16.mxu0 %v4292
      %4316 = vmatpush1.bf16.msra.mxu0 %v4289
      %4317 = vmatprep.subr.bf16.mxu0 %v4271
      %4318 = vmatpush1.bf16.msra.mxu0 %v4270
      %4319 = vmatprep.subr.bf16.mxu0 0
      %4320 = vmatpush2.bf16.msra.mxu0 0
      %4321 = vmatprep.subr.bf16.mxu0 0
      %4322 = vmatpush2.bf16.msra.mxu0 0
      %4323 = vmatprep.subr.bf16.mxu0 0
      %4324 = vmatpush2.bf16.msra.mxu0 0
      %4325 = vmatprep.subr.bf16.mxu0 0
      %4326 = vmatpush2.bf16.msra.mxu0 0
      %4327 = vmatprep.subr.bf16.mxu0 0
      %4328 = vmatpush2.bf16.msra.mxu0 0
      %4329 = vmatprep.subr.bf16.mxu0 0
      %4330 = vmatpush2.bf16.msra.mxu0 0
      %4331 = vmatprep.subr.bf16.mxu0 0
      %4332 = vmatpush2.bf16.msra.mxu0 0
      %4333 = vmatprep.subr.bf16.mxu0 0
      %4334 = vmatpush2.bf16.msra.mxu0 0
      %4335 = vmatprep.mubr.bf16.mxu0 0
      %4336 = vmatmul.mubr.bf16.gmra.mxu0 %v4286
      %v4337 = vpop.f32.mrf.mxu0
      %v4338 = vadd.f32 0.0, %v4337
      %v4339 = vpop.f32.mrf.mxu0
      %v4340 = vadd.f32 0.0, %v4339
      %v4341 = vpop.f32.mrf.mxu0
      %v4342 = vpop.f32.mrf.mxu0
      %4343 = vdwg.mxu0
      %4344 = vmatprep.subr.bf16.mxu0 0
      %4345 = vmatpush1.bf16.msra.mxu0 0
      %4346 = vmatprep.subr.bf16.mxu0 0
      %4347 = vmatpush1.bf16.msra.mxu0 0
      %4348 = vmatprep.subr.bf16.mxu0 0
      %4349 = vmatpush1.bf16.msra.mxu0 0
      %4350 = vmatprep.subr.bf16.mxu0 0
      %4351 = vmatpush1.bf16.msra.mxu0 0
      %4352 = vmatprep.subr.bf16.mxu0 0
      %4353 = vmatpush1.bf16.msra.mxu0 0
      %4354 = vmatprep.subr.bf16.mxu0 0
      %4355 = vmatpush1.bf16.msra.mxu0 0
      %4356 = vmatprep.subr.bf16.mxu0 %v4298
      %4357 = vmatpush1.bf16.msra.mxu0 %v4295
      %4358 = vmatprep.subr.bf16.mxu0 %v4273
      %4359 = vmatpush1.bf16.msra.mxu0 %v4272
      %4360 = vmatprep.subr.bf16.mxu0 0
      %4361 = vmatpush2.bf16.msra.mxu0 0
      %4362 = vmatprep.subr.bf16.mxu0 0
      %4363 = vmatpush2.bf16.msra.mxu0 0
      %4364 = vmatprep.subr.bf16.mxu0 0
      %4365 = vmatpush2.bf16.msra.mxu0 0
      %4366 = vmatprep.subr.bf16.mxu0 0
      %4367 = vmatpush2.bf16.msra.mxu0 0
      %4368 = vmatprep.subr.bf16.mxu0 0
      %4369 = vmatpush2.bf16.msra.mxu0 0
      %4370 = vmatprep.subr.bf16.mxu0 0
      %4371 = vmatpush2.bf16.msra.mxu0 0
      %4372 = vmatprep.subr.bf16.mxu0 0
      %4373 = vmatpush2.bf16.msra.mxu0 0
      %4374 = vmatprep.subr.bf16.mxu0 0
      %4375 = vmatpush2.bf16.msra.mxu0 0
      %4376 = vmatprep.mubr.bf16.mxu0 0
      %4377 = vmatmul.mubr.bf16.gmra.mxu0 %v4286
      %v4378 = vpop.f32.mrf.mxu0
      %v4379 = vadd.f32 0.0, %v4378
      %v4380 = vpop.f32.mrf.mxu0
      %v4381 = vadd.f32 0.0, %v4380
      %v4382 = vpop.f32.mrf.mxu0
      %v4383 = vpop.f32.mrf.mxu0
      %4384 = vdwg.mxu0
      %4385 = vmatprep.subr.bf16.mxu0 0
      %4386 = vmatpush1.bf16.msra.mxu0 0
      %4387 = vmatprep.subr.bf16.mxu0 0
      %4388 = vmatpush1.bf16.msra.mxu0 0
      %4389 = vmatprep.subr.bf16.mxu0 0
      %4390 = vmatpush1.bf16.msra.mxu0 0
      %4391 = vmatprep.subr.bf16.mxu0 0
      %4392 = vmatpush1.bf16.msra.mxu0 0
      %4393 = vmatprep.subr.bf16.mxu0 0
      %4394 = vmatpush1.bf16.msra.mxu0 0
      %4395 = vmatprep.subr.bf16.mxu0 0
      %4396 = vmatpush1.bf16.msra.mxu0 0
      %4397 = vmatprep.subr.bf16.mxu0 0
      %4398 = vmatpush1.bf16.msra.mxu0 %v4301
      %4399 = vmatprep.subr.bf16.mxu0 0
      %4400 = vmatpush1.bf16.msra.mxu0 %v4274
      %4401 = vmatprep.subr.bf16.mxu0 0
      %4402 = vmatpush2.bf16.msra.mxu0 0
      %4403 = vmatprep.subr.bf16.mxu0 0
      %4404 = vmatpush2.bf16.msra.mxu0 0
      %4405 = vmatprep.subr.bf16.mxu0 0
      %4406 = vmatpush2.bf16.msra.mxu0 0
      %4407 = vmatprep.subr.bf16.mxu0 0
      %4408 = vmatpush2.bf16.msra.mxu0 0
      %4409 = vmatprep.subr.bf16.mxu0 0
      %4410 = vmatpush2.bf16.msra.mxu0 0
      %4411 = vmatprep.subr.bf16.mxu0 0
      %4412 = vmatpush2.bf16.msra.mxu0 0
      %4413 = vmatprep.subr.bf16.mxu0 0
      %4414 = vmatpush2.bf16.msra.mxu0 0
      %4415 = vmatprep.subr.bf16.mxu0 0
      %4416 = vmatpush2.bf16.msra.mxu0 0
      %4417 = vmatprep.mubr.bf16.mxu0 0
      %4418 = vmatmul.mubr.bf16.gmra.mxu0 %v4286
      %v4419 = vpop.f32.mrf.mxu0
      %v4420 = vadd.f32 0.0, %v4419
      %v4421 = vpop.f32.mrf.mxu0
      %v4422 = vpop.f32.mrf.mxu0
      %v4423 = vpop.f32.mrf.mxu0
      %4424 = vdwg.mxu0
      %v4425 = vadd.f32 %v4230, %v4338
      %v4426 = vadd.f32 %v4231, %v4340
      %v4427 = vadd.f32 %v4232, %v4379
      %v4428 = vadd.f32 %v4233, %v4381
      %v4429 = vadd.f32 %v4234, %v4420
      %v4430 = vpack.c.bf16 %v1121, %v1121
      %s4431 = scalar_lea.vmem %s282, 1020
      %v4432 = vld [vmem:[%s4431] sm:$0xff]
      %v4433 = vld [vmem:[%s4431 + $0x8] sm:$0xff]
      %v4434 = vld [vmem:[%s4431 + $0x10] sm:$0xf]
      %v4435 = vld [vmem:[%s4431 + $0x14] sm:$0xff]
      %v4436 = vld [vmem:[%s4431 + $0x1c] sm:$0xff]
      %v4437 = vld [vmem:[%s4431 + $0x24] sm:$0xf]
      %v4438 = vld [vmem:[%s4431 + $0x28] sm:$0x33]
      %v4439 = vld [vmem:[%s4431 + $0x30] sm:$0x33]
      %v4440 = vld [vmem:[%s4431 + $0x38] sm:$0x3]
      %v4450 = vunpack.c.l.b16 %v4432
      %v4451 = vunpack.c.h.b16 %v4432
      %v4452 = vunpack.c.l.b16 %v4433
      %v4453 = vunpack.c.h.b16 %v4433
      %v4454 = vunpack.c.l.b16 %v4434
      %v4455 = vunpack.c.l.b16 %v4435
      %v4456 = vunpack.c.h.b16 %v4435
      %v4457 = vunpack.c.l.b16 %v4436
      %v4458 = vunpack.c.h.b16 %v4436
      %v4459 = vunpack.c.l.b16 %v4437
      %v4460 = vunpack.c.l.b16 %v4438
      %v4461 = vunpack.c.h.b16 %v4438
      %v4462 = vunpack.c.l.b16 %v4439
      %v4463 = vunpack.c.h.b16 %v4439
      %v4464 = vunpack.c.l.b16 %v4440
      %v4465 = vpack.c.b16 %v4455, %v4450
      %v4466 = vpack.c.b16 %v4456, %v4451
      %v4467 = vpack.c.b16 %v4457, %v4452
      %v4468 = vpack.c.b16 %v4458, %v4453
      %v4469 = vpack.c.b16 %v4459, %v4454
      %v4470 = vpack.c.b16 %v4460, %v4460
      %v4471 = vpack.c.b16 %v4461, %v4461
      %v4472 = vpack.c.b16 %v4462, %v4462
      %v4473 = vpack.c.b16 %v4463, %v4463
      %v4474 = vpack.c.b16 %v4464, %v4464
      %v4481 = vsel %vm334, %v4430, 0
      %v4484 = vsel %vm1188, %v4470, 0
      %v4487 = vsel %vm1188, %v4471, 0
      %v4490 = vsel %vm1188, %v4472, 0
      %v4493 = vsel %vm1188, %v4473, 0
      %v4496 = vsel %vm1188, %v4474, 0
      %4498 = vmatprep.subr.bf16.mxu0 0
      %4499 = vmatpush1.bf16.msra.mxu0 0
      %4500 = vmatprep.subr.bf16.mxu0 0
      %4501 = vmatpush1.bf16.msra.mxu0 0
      %4502 = vmatprep.subr.bf16.mxu0 0
      %4503 = vmatpush1.bf16.msra.mxu0 0
      %4504 = vmatprep.subr.bf16.mxu0 0
      %4505 = vmatpush1.bf16.msra.mxu0 0
      %4506 = vmatprep.subr.bf16.mxu0 0
      %4507 = vmatpush1.bf16.msra.mxu0 0
      %4508 = vmatprep.subr.bf16.mxu0 0
      %4509 = vmatpush1.bf16.msra.mxu0 0
      %4510 = vmatprep.subr.bf16.mxu0 %v4487
      %4511 = vmatpush1.bf16.msra.mxu0 %v4484
      %4512 = vmatprep.subr.bf16.mxu0 %v4466
      %4513 = vmatpush1.bf16.msra.mxu0 %v4465
      %4514 = vmatprep.subr.bf16.mxu0 0
      %4515 = vmatpush2.bf16.msra.mxu0 0
      %4516 = vmatprep.subr.bf16.mxu0 0
      %4517 = vmatpush2.bf16.msra.mxu0 0
      %4518 = vmatprep.subr.bf16.mxu0 0
      %4519 = vmatpush2.bf16.msra.mxu0 0
      %4520 = vmatprep.subr.bf16.mxu0 0
      %4521 = vmatpush2.bf16.msra.mxu0 0
      %4522 = vmatprep.subr.bf16.mxu0 0
      %4523 = vmatpush2.bf16.msra.mxu0 0
      %4524 = vmatprep.subr.bf16.mxu0 0
      %4525 = vmatpush2.bf16.msra.mxu0 0
      %4526 = vmatprep.subr.bf16.mxu0 0
      %4527 = vmatpush2.bf16.msra.mxu0 0
      %4528 = vmatprep.subr.bf16.mxu0 0
      %4529 = vmatpush2.bf16.msra.mxu0 0
      %4530 = vmatprep.mubr.bf16.mxu0 0
      %4531 = vmatmul.mubr.bf16.gmra.mxu0 %v4481
      %v4532 = vpop.f32.mrf.mxu0
      %v4533 = vadd.f32 0.0, %v4532
      %v4534 = vpop.f32.mrf.mxu0
      %v4535 = vadd.f32 0.0, %v4534
      %v4536 = vpop.f32.mrf.mxu0
      %v4537 = vpop.f32.mrf.mxu0
      %4538 = vdwg.mxu0
      %4539 = vmatprep.subr.bf16.mxu0 0
      %4540 = vmatpush1.bf16.msra.mxu0 0
      %4541 = vmatprep.subr.bf16.mxu0 0
      %4542 = vmatpush1.bf16.msra.mxu0 0
      %4543 = vmatprep.subr.bf16.mxu0 0
      %4544 = vmatpush1.bf16.msra.mxu0 0
      %4545 = vmatprep.subr.bf16.mxu0 0
      %4546 = vmatpush1.bf16.msra.mxu0 0
      %4547 = vmatprep.subr.bf16.mxu0 0
      %4548 = vmatpush1.bf16.msra.mxu0 0
      %4549 = vmatprep.subr.bf16.mxu0 0
      %4550 = vmatpush1.bf16.msra.mxu0 0
      %4551 = vmatprep.subr.bf16.mxu0 %v4493
      %4552 = vmatpush1.bf16.msra.mxu0 %v4490
      %4553 = vmatprep.subr.bf16.mxu0 %v4468
      %4554 = vmatpush1.bf16.msra.mxu0 %v4467
      %4555 = vmatprep.subr.bf16.mxu0 0
      %4556 = vmatpush2.bf16.msra.mxu0 0
      %4557 = vmatprep.subr.bf16.mxu0 0
      %4558 = vmatpush2.bf16.msra.mxu0 0
      %4559 = vmatprep.subr.bf16.mxu0 0
      %4560 = vmatpush2.bf16.msra.mxu0 0
      %4561 = vmatprep.subr.bf16.mxu0 0
      %4562 = vmatpush2.bf16.msra.mxu0 0
      %4563 = vmatprep.subr.bf16.mxu0 0
      %4564 = vmatpush2.bf16.msra.mxu0 0
      %4565 = vmatprep.subr.bf16.mxu0 0
      %4566 = vmatpush2.bf16.msra.mxu0 0
      %4567 = vmatprep.subr.bf16.mxu0 0
      %4568 = vmatpush2.bf16.msra.mxu0 0
      %4569 = vmatprep.subr.bf16.mxu0 0
      %4570 = vmatpush2.bf16.msra.mxu0 0
      %4571 = vmatprep.mubr.bf16.mxu0 0
      %4572 = vmatmul.mubr.bf16.gmra.mxu0 %v4481
      %v4573 = vpop.f32.mrf.mxu0
      %v4574 = vadd.f32 0.0, %v4573
      %v4575 = vpop.f32.mrf.mxu0
      %v4576 = vadd.f32 0.0, %v4575
      %v4577 = vpop.f32.mrf.mxu0
      %v4578 = vpop.f32.mrf.mxu0
      %4579 = vdwg.mxu0
      %4580 = vmatprep.subr.bf16.mxu0 0
      %4581 = vmatpush1.bf16.msra.mxu0 0
      %4582 = vmatprep.subr.bf16.mxu0 0
      %4583 = vmatpush1.bf16.msra.mxu0 0
      %4584 = vmatprep.subr.bf16.mxu0 0
      %4585 = vmatpush1.bf16.msra.mxu0 0
      %4586 = vmatprep.subr.bf16.mxu0 0
      %4587 = vmatpush1.bf16.msra.mxu0 0
      %4588 = vmatprep.subr.bf16.mxu0 0
      %4589 = vmatpush1.bf16.msra.mxu0 0
      %4590 = vmatprep.subr.bf16.mxu0 0
      %4591 = vmatpush1.bf16.msra.mxu0 0
      %4592 = vmatprep.subr.bf16.mxu0 0
      %4593 = vmatpush1.bf16.msra.mxu0 %v4496
      %4594 = vmatprep.subr.bf16.mxu0 0
      %4595 = vmatpush1.bf16.msra.mxu0 %v4469
      %4596 = vmatprep.subr.bf16.mxu0 0
      %4597 = vmatpush2.bf16.msra.mxu0 0
      %4598 = vmatprep.subr.bf16.mxu0 0
      %4599 = vmatpush2.bf16.msra.mxu0 0
      %4600 = vmatprep.subr.bf16.mxu0 0
      %4601 = vmatpush2.bf16.msra.mxu0 0
      %4602 = vmatprep.subr.bf16.mxu0 0
      %4603 = vmatpush2.bf16.msra.mxu0 0
      %4604 = vmatprep.subr.bf16.mxu0 0
      %4605 = vmatpush2.bf16.msra.mxu0 0
      %4606 = vmatprep.subr.bf16.mxu0 0
      %4607 = vmatpush2.bf16.msra.mxu0 0
      %4608 = vmatprep.subr.bf16.mxu0 0
      %4609 = vmatpush2.bf16.msra.mxu0 0
      %4610 = vmatprep.subr.bf16.mxu0 0
      %4611 = vmatpush2.bf16.msra.mxu0 0
      %4612 = vmatprep.mubr.bf16.mxu0 0
      %4613 = vmatmul.mubr.bf16.gmra.mxu0 %v4481
      %v4614 = vpop.f32.mrf.mxu0
      %v4615 = vadd.f32 0.0, %v4614
      %v4616 = vpop.f32.mrf.mxu0
      %v4617 = vpop.f32.mrf.mxu0
      %v4618 = vpop.f32.mrf.mxu0
      %4619 = vdwg.mxu0
      %v4620 = vadd.f32 %v4425, %v4533
      %v4621 = vadd.f32 %v4426, %v4535
      %v4622 = vadd.f32 %v4427, %v4574
      %v4623 = vadd.f32 %v4428, %v4576
      %v4624 = vadd.f32 %v4429, %v4615
      %v4625 = vpack.c.bf16 %v1122, %v1122
      %s4626 = scalar_lea.vmem %s282, 1080
      %v4627 = vld [vmem:[%s4626] sm:$0xff]
      %v4628 = vld [vmem:[%s4626 + $0x8] sm:$0xff]
      %v4629 = vld [vmem:[%s4626 + $0x10] sm:$0xf]
      %v4630 = vld [vmem:[%s4626 + $0x14] sm:$0xff]
      %v4631 = vld [vmem:[%s4626 + $0x1c] sm:$0xff]
      %v4632 = vld [vmem:[%s4626 + $0x24] sm:$0xf]
      %v4633 = vld [vmem:[%s4626 + $0x28] sm:$0x33]
      %v4634 = vld [vmem:[%s4626 + $0x30] sm:$0x33]
      %v4635 = vld [vmem:[%s4626 + $0x38] sm:$0x3]
      %v4645 = vunpack.c.l.b16 %v4627
      %v4646 = vunpack.c.h.b16 %v4627
      %v4647 = vunpack.c.l.b16 %v4628
      %v4648 = vunpack.c.h.b16 %v4628
      %v4649 = vunpack.c.l.b16 %v4629
      %v4650 = vunpack.c.l.b16 %v4630
      %v4651 = vunpack.c.h.b16 %v4630
      %v4652 = vunpack.c.l.b16 %v4631
      %v4653 = vunpack.c.h.b16 %v4631
      %v4654 = vunpack.c.l.b16 %v4632
      %v4655 = vunpack.c.l.b16 %v4633
      %v4656 = vunpack.c.h.b16 %v4633
      %v4657 = vunpack.c.l.b16 %v4634
      %v4658 = vunpack.c.h.b16 %v4634
      %v4659 = vunpack.c.l.b16 %v4635
      %v4660 = vpack.c.b16 %v4650, %v4645
      %v4661 = vpack.c.b16 %v4651, %v4646
      %v4662 = vpack.c.b16 %v4652, %v4647
      %v4663 = vpack.c.b16 %v4653, %v4648
      %v4664 = vpack.c.b16 %v4654, %v4649
      %v4665 = vpack.c.b16 %v4655, %v4655
      %v4666 = vpack.c.b16 %v4656, %v4656
      %v4667 = vpack.c.b16 %v4657, %v4657
      %v4668 = vpack.c.b16 %v4658, %v4658
      %v4669 = vpack.c.b16 %v4659, %v4659
      %v4676 = vsel %vm334, %v4625, 0
      %v4679 = vsel %vm1188, %v4665, 0
      %v4682 = vsel %vm1188, %v4666, 0
      %v4685 = vsel %vm1188, %v4667, 0
      %v4688 = vsel %vm1188, %v4668, 0
      %v4691 = vsel %vm1188, %v4669, 0
      %4693 = vmatprep.subr.bf16.mxu0 0
      %4694 = vmatpush1.bf16.msra.mxu0 0
      %4695 = vmatprep.subr.bf16.mxu0 0
      %4696 = vmatpush1.bf16.msra.mxu0 0
      %4697 = vmatprep.subr.bf16.mxu0 0
      %4698 = vmatpush1.bf16.msra.mxu0 0
      %4699 = vmatprep.subr.bf16.mxu0 0
      %4700 = vmatpush1.bf16.msra.mxu0 0
      %4701 = vmatprep.subr.bf16.mxu0 0
      %4702 = vmatpush1.bf16.msra.mxu0 0
      %4703 = vmatprep.subr.bf16.mxu0 0
      %4704 = vmatpush1.bf16.msra.mxu0 0
      %4705 = vmatprep.subr.bf16.mxu0 %v4682
      %4706 = vmatpush1.bf16.msra.mxu0 %v4679
      %4707 = vmatprep.subr.bf16.mxu0 %v4661
      %4708 = vmatpush1.bf16.msra.mxu0 %v4660
      %4709 = vmatprep.subr.bf16.mxu0 0
      %4710 = vmatpush2.bf16.msra.mxu0 0
      %4711 = vmatprep.subr.bf16.mxu0 0
      %4712 = vmatpush2.bf16.msra.mxu0 0
      %4713 = vmatprep.subr.bf16.mxu0 0
      %4714 = vmatpush2.bf16.msra.mxu0 0
      %4715 = vmatprep.subr.bf16.mxu0 0
      %4716 = vmatpush2.bf16.msra.mxu0 0
      %4717 = vmatprep.subr.bf16.mxu0 0
      %4718 = vmatpush2.bf16.msra.mxu0 0
      %4719 = vmatprep.subr.bf16.mxu0 0
      %4720 = vmatpush2.bf16.msra.mxu0 0
      %4721 = vmatprep.subr.bf16.mxu0 0
      %4722 = vmatpush2.bf16.msra.mxu0 0
      %4723 = vmatprep.subr.bf16.mxu0 0
      %4724 = vmatpush2.bf16.msra.mxu0 0
      %4725 = vmatprep.mubr.bf16.mxu0 0
      %4726 = vmatmul.mubr.bf16.gmra.mxu0 %v4676
      %v4727 = vpop.f32.mrf.mxu0
      %v4728 = vadd.f32 0.0, %v4727
      %v4729 = vpop.f32.mrf.mxu0
      %v4730 = vadd.f32 0.0, %v4729
      %v4731 = vpop.f32.mrf.mxu0
      %v4732 = vpop.f32.mrf.mxu0
      %4733 = vdwg.mxu0
      %4734 = vmatprep.subr.bf16.mxu0 0
      %4735 = vmatpush1.bf16.msra.mxu0 0
      %4736 = vmatprep.subr.bf16.mxu0 0
      %4737 = vmatpush1.bf16.msra.mxu0 0
      %4738 = vmatprep.subr.bf16.mxu0 0
      %4739 = vmatpush1.bf16.msra.mxu0 0
      %4740 = vmatprep.subr.bf16.mxu0 0
      %4741 = vmatpush1.bf16.msra.mxu0 0
      %4742 = vmatprep.subr.bf16.mxu0 0
      %4743 = vmatpush1.bf16.msra.mxu0 0
      %4744 = vmatprep.subr.bf16.mxu0 0
      %4745 = vmatpush1.bf16.msra.mxu0 0
      %4746 = vmatprep.subr.bf16.mxu0 %v4688
      %4747 = vmatpush1.bf16.msra.mxu0 %v4685
      %4748 = vmatprep.subr.bf16.mxu0 %v4663
      %4749 = vmatpush1.bf16.msra.mxu0 %v4662
      %4750 = vmatprep.subr.bf16.mxu0 0
      %4751 = vmatpush2.bf16.msra.mxu0 0
      %4752 = vmatprep.subr.bf16.mxu0 0
      %4753 = vmatpush2.bf16.msra.mxu0 0
      %4754 = vmatprep.subr.bf16.mxu0 0
      %4755 = vmatpush2.bf16.msra.mxu0 0
      %4756 = vmatprep.subr.bf16.mxu0 0
      %4757 = vmatpush2.bf16.msra.mxu0 0
      %4758 = vmatprep.subr.bf16.mxu0 0
      %4759 = vmatpush2.bf16.msra.mxu0 0
      %4760 = vmatprep.subr.bf16.mxu0 0
      %4761 = vmatpush2.bf16.msra.mxu0 0
      %4762 = vmatprep.subr.bf16.mxu0 0
      %4763 = vmatpush2.bf16.msra.mxu0 0
      %4764 = vmatprep.subr.bf16.mxu0 0
      %4765 = vmatpush2.bf16.msra.mxu0 0
      %4766 = vmatprep.mubr.bf16.mxu0 0
      %4767 = vmatmul.mubr.bf16.gmra.mxu0 %v4676
      %v4768 = vpop.f32.mrf.mxu0
      %v4769 = vadd.f32 0.0, %v4768
      %v4770 = vpop.f32.mrf.mxu0
      %v4771 = vadd.f32 0.0, %v4770
      %v4772 = vpop.f32.mrf.mxu0
      %v4773 = vpop.f32.mrf.mxu0
      %4774 = vdwg.mxu0
      %4775 = vmatprep.subr.bf16.mxu0 0
      %4776 = vmatpush1.bf16.msra.mxu0 0
      %4777 = vmatprep.subr.bf16.mxu0 0
      %4778 = vmatpush1.bf16.msra.mxu0 0
      %4779 = vmatprep.subr.bf16.mxu0 0
      %4780 = vmatpush1.bf16.msra.mxu0 0
      %4781 = vmatprep.subr.bf16.mxu0 0
      %4782 = vmatpush1.bf16.msra.mxu0 0
      %4783 = vmatprep.subr.bf16.mxu0 0
      %4784 = vmatpush1.bf16.msra.mxu0 0
      %4785 = vmatprep.subr.bf16.mxu0 0
      %4786 = vmatpush1.bf16.msra.mxu0 0
      %4787 = vmatprep.subr.bf16.mxu0 0
      %4788 = vmatpush1.bf16.msra.mxu0 %v4691
      %4789 = vmatprep.subr.bf16.mxu0 0
      %4790 = vmatpush1.bf16.msra.mxu0 %v4664
      %4791 = vmatprep.subr.bf16.mxu0 0
      %4792 = vmatpush2.bf16.msra.mxu0 0
      %4793 = vmatprep.subr.bf16.mxu0 0
      %4794 = vmatpush2.bf16.msra.mxu0 0
      %4795 = vmatprep.subr.bf16.mxu0 0
      %4796 = vmatpush2.bf16.msra.mxu0 0
      %4797 = vmatprep.subr.bf16.mxu0 0
      %4798 = vmatpush2.bf16.msra.mxu0 0
      %4799 = vmatprep.subr.bf16.mxu0 0
      %4800 = vmatpush2.bf16.msra.mxu0 0
      %4801 = vmatprep.subr.bf16.mxu0 0
      %4802 = vmatpush2.bf16.msra.mxu0 0
      %4803 = vmatprep.subr.bf16.mxu0 0
      %4804 = vmatpush2.bf16.msra.mxu0 0
      %4805 = vmatprep.subr.bf16.mxu0 0
      %4806 = vmatpush2.bf16.msra.mxu0 0
      %4807 = vmatprep.mubr.bf16.mxu0 0
      %4808 = vmatmul.mubr.bf16.gmra.mxu0 %v4676
      %v4809 = vpop.f32.mrf.mxu0
      %v4810 = vadd.f32 0.0, %v4809
      %v4811 = vpop.f32.mrf.mxu0
      %v4812 = vpop.f32.mrf.mxu0
      %v4813 = vpop.f32.mrf.mxu0
      %4814 = vdwg.mxu0
      %v4815 = vadd.f32 %v4620, %v4728
      %v4816 = vadd.f32 %v4621, %v4730
      %v4817 = vadd.f32 %v4622, %v4769
      %v4818 = vadd.f32 %v4623, %v4771
      %v4819 = vadd.f32 %v4624, %v4810
      %v4820 = vpack.c.bf16 %v1123, %v1123
      %s4821 = scalar_lea.vmem %s282, 1140
      %v4822 = vld [vmem:[%s4821] sm:$0xff]
      %v4823 = vld [vmem:[%s4821 + $0x8] sm:$0xff]
      %v4824 = vld [vmem:[%s4821 + $0x10] sm:$0xf]
      %v4825 = vld [vmem:[%s4821 + $0x14] sm:$0xff]
      %v4826 = vld [vmem:[%s4821 + $0x1c] sm:$0xff]
      %v4827 = vld [vmem:[%s4821 + $0x24] sm:$0xf]
      %v4828 = vld [vmem:[%s4821 + $0x28] sm:$0x33]
      %v4829 = vld [vmem:[%s4821 + $0x30] sm:$0x33]
      %v4830 = vld [vmem:[%s4821 + $0x38] sm:$0x3]
      %v4840 = vunpack.c.l.b16 %v4822
      %v4841 = vunpack.c.h.b16 %v4822
      %v4842 = vunpack.c.l.b16 %v4823
      %v4843 = vunpack.c.h.b16 %v4823
      %v4844 = vunpack.c.l.b16 %v4824
      %v4845 = vunpack.c.l.b16 %v4825
      %v4846 = vunpack.c.h.b16 %v4825
      %v4847 = vunpack.c.l.b16 %v4826
      %v4848 = vunpack.c.h.b16 %v4826
      %v4849 = vunpack.c.l.b16 %v4827
      %v4850 = vunpack.c.l.b16 %v4828
      %v4851 = vunpack.c.h.b16 %v4828
      %v4852 = vunpack.c.l.b16 %v4829
      %v4853 = vunpack.c.h.b16 %v4829
      %v4854 = vunpack.c.l.b16 %v4830
      %v4855 = vpack.c.b16 %v4845, %v4840
      %v4856 = vpack.c.b16 %v4846, %v4841
      %v4857 = vpack.c.b16 %v4847, %v4842
      %v4858 = vpack.c.b16 %v4848, %v4843
      %v4859 = vpack.c.b16 %v4849, %v4844
      %v4860 = vpack.c.b16 %v4850, %v4850
      %v4861 = vpack.c.b16 %v4851, %v4851
      %v4862 = vpack.c.b16 %v4852, %v4852
      %v4863 = vpack.c.b16 %v4853, %v4853
      %v4864 = vpack.c.b16 %v4854, %v4854
      %v4871 = vsel %vm334, %v4820, 0
      %v4874 = vsel %vm1188, %v4860, 0
      %v4877 = vsel %vm1188, %v4861, 0
      %v4880 = vsel %vm1188, %v4862, 0
      %v4883 = vsel %vm1188, %v4863, 0
      %v4886 = vsel %vm1188, %v4864, 0
      %4888 = vmatprep.subr.bf16.mxu0 0
      %4889 = vmatpush1.bf16.msra.mxu0 0
      %4890 = vmatprep.subr.bf16.mxu0 0
      %4891 = vmatpush1.bf16.msra.mxu0 0
      %4892 = vmatprep.subr.bf16.mxu0 0
      %4893 = vmatpush1.bf16.msra.mxu0 0
      %4894 = vmatprep.subr.bf16.mxu0 0
      %4895 = vmatpush1.bf16.msra.mxu0 0
      %4896 = vmatprep.subr.bf16.mxu0 0
      %4897 = vmatpush1.bf16.msra.mxu0 0
      %4898 = vmatprep.subr.bf16.mxu0 0
      %4899 = vmatpush1.bf16.msra.mxu0 0
      %4900 = vmatprep.subr.bf16.mxu0 %v4877
      %4901 = vmatpush1.bf16.msra.mxu0 %v4874
      %4902 = vmatprep.subr.bf16.mxu0 %v4856
      %4903 = vmatpush1.bf16.msra.mxu0 %v4855
      %4904 = vmatprep.subr.bf16.mxu0 0
      %4905 = vmatpush2.bf16.msra.mxu0 0
      %4906 = vmatprep.subr.bf16.mxu0 0
      %4907 = vmatpush2.bf16.msra.mxu0 0
      %4908 = vmatprep.subr.bf16.mxu0 0
      %4909 = vmatpush2.bf16.msra.mxu0 0
      %4910 = vmatprep.subr.bf16.mxu0 0
      %4911 = vmatpush2.bf16.msra.mxu0 0
      %4912 = vmatprep.subr.bf16.mxu0 0
      %4913 = vmatpush2.bf16.msra.mxu0 0
      %4914 = vmatprep.subr.bf16.mxu0 0
      %4915 = vmatpush2.bf16.msra.mxu0 0
      %4916 = vmatprep.subr.bf16.mxu0 0
      %4917 = vmatpush2.bf16.msra.mxu0 0
      %4918 = vmatprep.subr.bf16.mxu0 0
      %4919 = vmatpush2.bf16.msra.mxu0 0
      %4920 = vmatprep.mubr.bf16.mxu0 0
      %4921 = vmatmul.mubr.bf16.gmra.mxu0 %v4871
      %v4922 = vpop.f32.mrf.mxu0
      %v4923 = vadd.f32 0.0, %v4922
      %v4924 = vpop.f32.mrf.mxu0
      %v4925 = vadd.f32 0.0, %v4924
      %v4926 = vpop.f32.mrf.mxu0
      %v4927 = vpop.f32.mrf.mxu0
      %4928 = vdwg.mxu0
      %4929 = vmatprep.subr.bf16.mxu0 0
      %4930 = vmatpush1.bf16.msra.mxu0 0
      %4931 = vmatprep.subr.bf16.mxu0 0
      %4932 = vmatpush1.bf16.msra.mxu0 0
      %4933 = vmatprep.subr.bf16.mxu0 0
      %4934 = vmatpush1.bf16.msra.mxu0 0
      %4935 = vmatprep.subr.bf16.mxu0 0
      %4936 = vmatpush1.bf16.msra.mxu0 0
      %4937 = vmatprep.subr.bf16.mxu0 0
      %4938 = vmatpush1.bf16.msra.mxu0 0
      %4939 = vmatprep.subr.bf16.mxu0 0
      %4940 = vmatpush1.bf16.msra.mxu0 0
      %4941 = vmatprep.subr.bf16.mxu0 %v4883
      %4942 = vmatpush1.bf16.msra.mxu0 %v4880
      %4943 = vmatprep.subr.bf16.mxu0 %v4858
      %4944 = vmatpush1.bf16.msra.mxu0 %v4857
      %4945 = vmatprep.subr.bf16.mxu0 0
      %4946 = vmatpush2.bf16.msra.mxu0 0
      %4947 = vmatprep.subr.bf16.mxu0 0
      %4948 = vmatpush2.bf16.msra.mxu0 0
      %4949 = vmatprep.subr.bf16.mxu0 0
      %4950 = vmatpush2.bf16.msra.mxu0 0
      %4951 = vmatprep.subr.bf16.mxu0 0
      %4952 = vmatpush2.bf16.msra.mxu0 0
      %4953 = vmatprep.subr.bf16.mxu0 0
      %4954 = vmatpush2.bf16.msra.mxu0 0
      %4955 = vmatprep.subr.bf16.mxu0 0
      %4956 = vmatpush2.bf16.msra.mxu0 0
      %4957 = vmatprep.subr.bf16.mxu0 0
      %4958 = vmatpush2.bf16.msra.mxu0 0
      %4959 = vmatprep.subr.bf16.mxu0 0
      %4960 = vmatpush2.bf16.msra.mxu0 0
      %4961 = vmatprep.mubr.bf16.mxu0 0
      %4962 = vmatmul.mubr.bf16.gmra.mxu0 %v4871
      %v4963 = vpop.f32.mrf.mxu0
      %v4964 = vadd.f32 0.0, %v4963
      %v4965 = vpop.f32.mrf.mxu0
      %v4966 = vadd.f32 0.0, %v4965
      %v4967 = vpop.f32.mrf.mxu0
      %v4968 = vpop.f32.mrf.mxu0
      %4969 = vdwg.mxu0
      %4970 = vmatprep.subr.bf16.mxu0 0
      %4971 = vmatpush1.bf16.msra.mxu0 0
      %4972 = vmatprep.subr.bf16.mxu0 0
      %4973 = vmatpush1.bf16.msra.mxu0 0
      %4974 = vmatprep.subr.bf16.mxu0 0
      %4975 = vmatpush1.bf16.msra.mxu0 0
      %4976 = vmatprep.subr.bf16.mxu0 0
      %4977 = vmatpush1.bf16.msra.mxu0 0
      %4978 = vmatprep.subr.bf16.mxu0 0
      %4979 = vmatpush1.bf16.msra.mxu0 0
      %4980 = vmatprep.subr.bf16.mxu0 0
      %4981 = vmatpush1.bf16.msra.mxu0 0
      %4982 = vmatprep.subr.bf16.mxu0 0
      %4983 = vmatpush1.bf16.msra.mxu0 %v4886
      %4984 = vmatprep.subr.bf16.mxu0 0
      %4985 = vmatpush1.bf16.msra.mxu0 %v4859
      %4986 = vmatprep.subr.bf16.mxu0 0
      %4987 = vmatpush2.bf16.msra.mxu0 0
      %4988 = vmatprep.subr.bf16.mxu0 0
      %4989 = vmatpush2.bf16.msra.mxu0 0
      %4990 = vmatprep.subr.bf16.mxu0 0
      %4991 = vmatpush2.bf16.msra.mxu0 0
      %4992 = vmatprep.subr.bf16.mxu0 0
      %4993 = vmatpush2.bf16.msra.mxu0 0
      %4994 = vmatprep.subr.bf16.mxu0 0
      %4995 = vmatpush2.bf16.msra.mxu0 0
      %4996 = vmatprep.subr.bf16.mxu0 0
      %4997 = vmatpush2.bf16.msra.mxu0 0
      %4998 = vmatprep.subr.bf16.mxu0 0
      %4999 = vmatpush2.bf16.msra.mxu0 0
      %5000 = vmatprep.subr.bf16.mxu0 0
      %5001 = vmatpush2.bf16.msra.mxu0 0
      %5002 = vmatprep.mubr.bf16.mxu0 0
      %5003 = vmatmul.mubr.bf16.gmra.mxu0 %v4871
      %v5004 = vpop.f32.mrf.mxu0
      %v5005 = vadd.f32 0.0, %v5004
      %v5006 = vpop.f32.mrf.mxu0
      %v5007 = vpop.f32.mrf.mxu0
      %v5008 = vpop.f32.mrf.mxu0
      %5009 = vdwg.mxu0
      %v5010 = vadd.f32 %v4815, %v4923
      %v5011 = vadd.f32 %v4816, %v4925
      %v5012 = vadd.f32 %v4817, %v4964
      %v5013 = vadd.f32 %v4818, %v4966
      %v5014 = vadd.f32 %v4819, %v5005
      %v5015 = vpack.c.bf16 %v1124, %v1124
      %s5016 = scalar_lea.vmem %s282, 1200
      %v5017 = vld [vmem:[%s5016] sm:$0xff]
      %v5018 = vld [vmem:[%s5016 + $0x8] sm:$0xff]
      %v5019 = vld [vmem:[%s5016 + $0x10] sm:$0xf]
      %v5020 = vld [vmem:[%s5016 + $0x14] sm:$0xff]
      %v5021 = vld [vmem:[%s5016 + $0x1c] sm:$0xff]
      %v5022 = vld [vmem:[%s5016 + $0x24] sm:$0xf]
      %v5023 = vld [vmem:[%s5016 + $0x28] sm:$0x33]
      %v5024 = vld [vmem:[%s5016 + $0x30] sm:$0x33]
      %v5025 = vld [vmem:[%s5016 + $0x38] sm:$0x3]
      %v5035 = vunpack.c.l.b16 %v5017
      %v5036 = vunpack.c.h.b16 %v5017
      %v5037 = vunpack.c.l.b16 %v5018
      %v5038 = vunpack.c.h.b16 %v5018
      %v5039 = vunpack.c.l.b16 %v5019
      %v5040 = vunpack.c.l.b16 %v5020
      %v5041 = vunpack.c.h.b16 %v5020
      %v5042 = vunpack.c.l.b16 %v5021
      %v5043 = vunpack.c.h.b16 %v5021
      %v5044 = vunpack.c.l.b16 %v5022
      %v5045 = vunpack.c.l.b16 %v5023
      %v5046 = vunpack.c.h.b16 %v5023
      %v5047 = vunpack.c.l.b16 %v5024
      %v5048 = vunpack.c.h.b16 %v5024
      %v5049 = vunpack.c.l.b16 %v5025
      %v5050 = vpack.c.b16 %v5040, %v5035
      %v5051 = vpack.c.b16 %v5041, %v5036
      %v5052 = vpack.c.b16 %v5042, %v5037
      %v5053 = vpack.c.b16 %v5043, %v5038
      %v5054 = vpack.c.b16 %v5044, %v5039
      %v5055 = vpack.c.b16 %v5045, %v5045
      %v5056 = vpack.c.b16 %v5046, %v5046
      %v5057 = vpack.c.b16 %v5047, %v5047
      %v5058 = vpack.c.b16 %v5048, %v5048
      %v5059 = vpack.c.b16 %v5049, %v5049
      %v5066 = vsel %vm334, %v5015, 0
      %v5069 = vsel %vm1188, %v5055, 0
      %v5072 = vsel %vm1188, %v5056, 0
      %v5075 = vsel %vm1188, %v5057, 0
      %v5078 = vsel %vm1188, %v5058, 0
      %v5081 = vsel %vm1188, %v5059, 0
      %5083 = vmatprep.subr.bf16.mxu0 0
      %5084 = vmatpush1.bf16.msra.mxu0 0
      %5085 = vmatprep.subr.bf16.mxu0 0
      %5086 = vmatpush1.bf16.msra.mxu0 0
      %5087 = vmatprep.subr.bf16.mxu0 0
      %5088 = vmatpush1.bf16.msra.mxu0 0
      %5089 = vmatprep.subr.bf16.mxu0 0
      %5090 = vmatpush1.bf16.msra.mxu0 0
      %5091 = vmatprep.subr.bf16.mxu0 0
      %5092 = vmatpush1.bf16.msra.mxu0 0
      %5093 = vmatprep.subr.bf16.mxu0 0
      %5094 = vmatpush1.bf16.msra.mxu0 0
      %5095 = vmatprep.subr.bf16.mxu0 %v5072
      %5096 = vmatpush1.bf16.msra.mxu0 %v5069
      %5097 = vmatprep.subr.bf16.mxu0 %v5051
      %5098 = vmatpush1.bf16.msra.mxu0 %v5050
      %5099 = vmatprep.subr.bf16.mxu0 0
      %5100 = vmatpush2.bf16.msra.mxu0 0
      %5101 = vmatprep.subr.bf16.mxu0 0
      %5102 = vmatpush2.bf16.msra.mxu0 0
      %5103 = vmatprep.subr.bf16.mxu0 0
      %5104 = vmatpush2.bf16.msra.mxu0 0
      %5105 = vmatprep.subr.bf16.mxu0 0
      %5106 = vmatpush2.bf16.msra.mxu0 0
      %5107 = vmatprep.subr.bf16.mxu0 0
      %5108 = vmatpush2.bf16.msra.mxu0 0
      %5109 = vmatprep.subr.bf16.mxu0 0
      %5110 = vmatpush2.bf16.msra.mxu0 0
      %5111 = vmatprep.subr.bf16.mxu0 0
      %5112 = vmatpush2.bf16.msra.mxu0 0
      %5113 = vmatprep.subr.bf16.mxu0 0
      %5114 = vmatpush2.bf16.msra.mxu0 0
      %5115 = vmatprep.mubr.bf16.mxu0 0
      %5116 = vmatmul.mubr.bf16.gmra.mxu0 %v5066
      %v5117 = vpop.f32.mrf.mxu0
      %v5118 = vadd.f32 0.0, %v5117
      %v5119 = vpop.f32.mrf.mxu0
      %v5120 = vadd.f32 0.0, %v5119
      %v5121 = vpop.f32.mrf.mxu0
      %v5122 = vpop.f32.mrf.mxu0
      %5123 = vdwg.mxu0
      %5124 = vmatprep.subr.bf16.mxu0 0
      %5125 = vmatpush1.bf16.msra.mxu0 0
      %5126 = vmatprep.subr.bf16.mxu0 0
      %5127 = vmatpush1.bf16.msra.mxu0 0
      %5128 = vmatprep.subr.bf16.mxu0 0
      %5129 = vmatpush1.bf16.msra.mxu0 0
      %5130 = vmatprep.subr.bf16.mxu0 0
      %5131 = vmatpush1.bf16.msra.mxu0 0
      %5132 = vmatprep.subr.bf16.mxu0 0
      %5133 = vmatpush1.bf16.msra.mxu0 0
      %5134 = vmatprep.subr.bf16.mxu0 0
      %5135 = vmatpush1.bf16.msra.mxu0 0
      %5136 = vmatprep.subr.bf16.mxu0 %v5078
      %5137 = vmatpush1.bf16.msra.mxu0 %v5075
      %5138 = vmatprep.subr.bf16.mxu0 %v5053
      %5139 = vmatpush1.bf16.msra.mxu0 %v5052
      %5140 = vmatprep.subr.bf16.mxu0 0
      %5141 = vmatpush2.bf16.msra.mxu0 0
      %5142 = vmatprep.subr.bf16.mxu0 0
      %5143 = vmatpush2.bf16.msra.mxu0 0
      %5144 = vmatprep.subr.bf16.mxu0 0
      %5145 = vmatpush2.bf16.msra.mxu0 0
      %5146 = vmatprep.subr.bf16.mxu0 0
      %5147 = vmatpush2.bf16.msra.mxu0 0
      %5148 = vmatprep.subr.bf16.mxu0 0
      %5149 = vmatpush2.bf16.msra.mxu0 0
      %5150 = vmatprep.subr.bf16.mxu0 0
      %5151 = vmatpush2.bf16.msra.mxu0 0
      %5152 = vmatprep.subr.bf16.mxu0 0
      %5153 = vmatpush2.bf16.msra.mxu0 0
      %5154 = vmatprep.subr.bf16.mxu0 0
      %5155 = vmatpush2.bf16.msra.mxu0 0
      %5156 = vmatprep.mubr.bf16.mxu0 0
      %5157 = vmatmul.mubr.bf16.gmra.mxu0 %v5066
      %v5158 = vpop.f32.mrf.mxu0
      %v5159 = vadd.f32 0.0, %v5158
      %v5160 = vpop.f32.mrf.mxu0
      %v5161 = vadd.f32 0.0, %v5160
      %v5162 = vpop.f32.mrf.mxu0
      %v5163 = vpop.f32.mrf.mxu0
      %5164 = vdwg.mxu0
      %5165 = vmatprep.subr.bf16.mxu0 0
      %5166 = vmatpush1.bf16.msra.mxu0 0
      %5167 = vmatprep.subr.bf16.mxu0 0
      %5168 = vmatpush1.bf16.msra.mxu0 0
      %5169 = vmatprep.subr.bf16.mxu0 0
      %5170 = vmatpush1.bf16.msra.mxu0 0
      %5171 = vmatprep.subr.bf16.mxu0 0
      %5172 = vmatpush1.bf16.msra.mxu0 0
      %5173 = vmatprep.subr.bf16.mxu0 0
      %5174 = vmatpush1.bf16.msra.mxu0 0
      %5175 = vmatprep.subr.bf16.mxu0 0
      %5176 = vmatpush1.bf16.msra.mxu0 0
      %5177 = vmatprep.subr.bf16.mxu0 0
      %5178 = vmatpush1.bf16.msra.mxu0 %v5081
      %5179 = vmatprep.subr.bf16.mxu0 0
      %5180 = vmatpush1.bf16.msra.mxu0 %v5054
      %5181 = vmatprep.subr.bf16.mxu0 0
      %5182 = vmatpush2.bf16.msra.mxu0 0
      %5183 = vmatprep.subr.bf16.mxu0 0
      %5184 = vmatpush2.bf16.msra.mxu0 0
      %5185 = vmatprep.subr.bf16.mxu0 0
      %5186 = vmatpush2.bf16.msra.mxu0 0
      %5187 = vmatprep.subr.bf16.mxu0 0
      %5188 = vmatpush2.bf16.msra.mxu0 0
      %5189 = vmatprep.subr.bf16.mxu0 0
      %5190 = vmatpush2.bf16.msra.mxu0 0
      %5191 = vmatprep.subr.bf16.mxu0 0
      %5192 = vmatpush2.bf16.msra.mxu0 0
      %5193 = vmatprep.subr.bf16.mxu0 0
      %5194 = vmatpush2.bf16.msra.mxu0 0
      %5195 = vmatprep.subr.bf16.mxu0 0
      %5196 = vmatpush2.bf16.msra.mxu0 0
      %5197 = vmatprep.mubr.bf16.mxu0 0
      %5198 = vmatmul.mubr.bf16.gmra.mxu0 %v5066
      %v5199 = vpop.f32.mrf.mxu0
      %v5200 = vadd.f32 0.0, %v5199
      %v5201 = vpop.f32.mrf.mxu0
      %v5202 = vpop.f32.mrf.mxu0
      %v5203 = vpop.f32.mrf.mxu0
      %5204 = vdwg.mxu0
      %v5205 = vadd.f32 %v5010, %v5118
      %v5206 = vadd.f32 %v5011, %v5120
      %v5207 = vadd.f32 %v5012, %v5159
      %v5208 = vadd.f32 %v5013, %v5161
      %v5209 = vadd.f32 %v5014, %v5200
      %v5210 = vld [vmem:[%s295] sm:$0x1f]
      %v5212 = vlaneseq
      %v5213 = vshrl.u32 %v5212, 7
      %v5214 = vsub.s32 0, %v5213
      %v5215 = vrot.slane %v5210, %v5214
      %v5216 = vlaneseq
      %v5217 = vshrl.u32 %v5216, 7
      %v5218 = vsub.s32 1, %v5217
      %v5219 = vrot.slane %v5210, %v5218
      %v5220 = vlaneseq
      %v5221 = vshrl.u32 %v5220, 7
      %v5222 = vsub.s32 2, %v5221
      %v5223 = vrot.slane %v5210, %v5222
      %v5224 = vlaneseq
      %v5225 = vshrl.u32 %v5224, 7
      %v5226 = vsub.s32 3, %v5225
      %v5227 = vrot.slane %v5210, %v5226
      %v5228 = vlaneseq
      %v5229 = vshrl.u32 %v5228, 7
      %v5230 = vsub.s32 4, %v5229
      %v5231 = vrot.slane %v5210, %v5230
      %v5237 = vadd.f32 %v5205, %v5215
      %v5238 = vadd.f32 %v5206, %v5219
      %v5239 = vadd.f32 %v5207, %v5223
      %v5240 = vadd.f32 %v5208, %v5227
      %v5241 = vadd.f32 %v5209, %v5231
      %v5242 = vmax.f32 %v5237, 0.0
      %v5243 = vmax.f32 %v5238, 0.0
      %v5244 = vmax.f32 %v5239, 0.0
      %v5245 = vmax.f32 %v5240, 0.0
      %v5246 = vmax.f32 %v5241, 0.0
      %v5247 = vpack.c.bf16 %v5242, %v5242
      %v5248 = vpack.c.bf16 %v5243, %v5243
      %v5249 = vpack.c.bf16 %v5244, %v5244
      %v5250 = vpack.c.bf16 %v5245, %v5245
      %v5251 = vpack.c.bf16 %v5246, %v5246
      %v5252 = vld [vmem:[%s289] sm:$0xf]
      %v5253 = vld [vmem:[%s289 + $0x4] sm:$0xf]
      %v5254 = vld [vmem:[%s289 + $0x8] sm:$0xf]
      %v5255 = vld [vmem:[%s289 + $0xc] sm:$0xf]
      %v5256 = vld [vmem:[%s289 + $0x10] sm:$0xf]
      %v5257 = vld [vmem:[%s289 + $0x14] sm:$0xf]
      %v5258 = vld [vmem:[%s289 + $0x18] sm:$0xf]
      %v5259 = vld [vmem:[%s289 + $0x1c] sm:$0xf]
      %v5260 = vld [vmem:[%s289 + $0x20] sm:$0xf]
      %v5261 = vld [vmem:[%s289 + $0x24] sm:$0xf]
      %v5262 = vld [vmem:[%s289 + $0x28] sm:$0xf]
      %v5263 = vld [vmem:[%s289 + $0x2c] sm:$0xf]
      %v5264 = vld [vmem:[%s289 + $0x30] sm:$0xf]
      %v5265 = vld [vmem:[%s289 + $0x34] sm:$0xf]
      %v5266 = vld [vmem:[%s289 + $0x38] sm:$0xf]
      %v5267 = vld [vmem:[%s289 + $0x3c] sm:$0xf]
      %v5268 = vld [vmem:[%s289 + $0x40] sm:$0xf]
      %v5269 = vld [vmem:[%s289 + $0x44] sm:$0xf]
      %v5270 = vld [vmem:[%s289 + $0x48] sm:$0xf]
      %v5271 = vld [vmem:[%s289 + $0x4c] sm:$0xf]
      %v5272 = vld [vmem:[%s289 + $0x50] sm:$0xf]
      %v5273 = vld [vmem:[%s289 + $0x54] sm:$0xf]
      %v5274 = vld [vmem:[%s289 + $0x58] sm:$0xf]
      %v5275 = vld [vmem:[%s289 + $0x5c] sm:$0xf]
      %v5276 = vld [vmem:[%s289 + $0x60] sm:$0xf]
      %v5277 = vld [vmem:[%s289 + $0x64] sm:$0xf]
      %v5278 = vld [vmem:[%s289 + $0x68] sm:$0xf]
      %v5279 = vld [vmem:[%s289 + $0x6c] sm:$0xf]
      %v5280 = vld [vmem:[%s289 + $0x70] sm:$0xf]
      %v5281 = vld [vmem:[%s289 + $0x74] sm:$0xf]
      %v5282 = vld [vmem:[%s289 + $0x78] sm:$0xf]
      %v5283 = vld [vmem:[%s289 + $0x7c] sm:$0xf]
      %v5284 = vld [vmem:[%s289 + $0x80] sm:$0xf]
      %v5285 = vld [vmem:[%s289 + $0x84] sm:$0xf]
      %v5286 = vld [vmem:[%s289 + $0x88] sm:$0xf]
      %v5287 = vld [vmem:[%s289 + $0x8c] sm:$0xf]
      %v5288 = vld [vmem:[%s289 + $0x90] sm:$0xf]
      %v5289 = vld [vmem:[%s289 + $0x94] sm:$0xf]
      %v5290 = vld [vmem:[%s289 + $0x98] sm:$0xf]
      %v5291 = vld [vmem:[%s289 + $0x9c] sm:$0xf]
      %v5292 = vld [vmem:[%s289 + $0xa0] sm:$0xf]
      %v5293 = vld [vmem:[%s289 + $0xa4] sm:$0xf]
      %v5294 = vld [vmem:[%s289 + $0xa8] sm:$0xf]
      %v5295 = vld [vmem:[%s289 + $0xac] sm:$0xf]
      %v5296 = vld [vmem:[%s289 + $0xb0] sm:$0xf]
      %v5297 = vld [vmem:[%s289 + $0xb4] sm:$0xf]
      %v5298 = vld [vmem:[%s289 + $0xb8] sm:$0xf]
      %v5299 = vld [vmem:[%s289 + $0xbc] sm:$0xf]
      %v5300 = vld [vmem:[%s289 + $0xc0] sm:$0xf]
      %v5301 = vld [vmem:[%s289 + $0xc4] sm:$0xf]
      %v5302 = vld [vmem:[%s289 + $0xc8] sm:$0xf]
      %v5303 = vld [vmem:[%s289 + $0xcc] sm:$0xf]
      %v5304 = vld [vmem:[%s289 + $0xd0] sm:$0xf]
      %v5305 = vld [vmem:[%s289 + $0xd4] sm:$0xf]
      %v5306 = vld [vmem:[%s289 + $0xd8] sm:$0xf]
      %v5307 = vld [vmem:[%s289 + $0xdc] sm:$0xf]
      %v5308 = vld [vmem:[%s289 + $0xe0] sm:$0xf]
      %v5309 = vld [vmem:[%s289 + $0xe4] sm:$0xf]
      %v5310 = vld [vmem:[%s289 + $0xe8] sm:$0xf]
      %v5311 = vld [vmem:[%s289 + $0xec] sm:$0xf]
      %v5312 = vld [vmem:[%s289 + $0xf0] sm:$0xf]
      %v5313 = vld [vmem:[%s289 + $0xf4] sm:$0xf]
      %v5314 = vld [vmem:[%s289 + $0xf8] sm:$0xf]
      %v5315 = vld [vmem:[%s289 + $0xfc] sm:$0xf]
      %v5316 = vld [vmem:[%s289 + $0x100] sm:$0xf]
      %v5317 = vld [vmem:[%s289 + $0x104] sm:$0xf]
      %v5318 = vld [vmem:[%s289 + $0x108] sm:$0xf]
      %v5319 = vld [vmem:[%s289 + $0x10c] sm:$0xf]
      %v5320 = vld [vmem:[%s289 + $0x110] sm:$0xf]
      %v5321 = vld [vmem:[%s289 + $0x114] sm:$0xf]
      %v5322 = vld [vmem:[%s289 + $0x118] sm:$0xf]
      %v5323 = vld [vmem:[%s289 + $0x11c] sm:$0xf]
      %v5324 = vld [vmem:[%s289 + $0x120] sm:$0xf]
      %v5325 = vld [vmem:[%s289 + $0x124] sm:$0xf]
      %v5326 = vld [vmem:[%s289 + $0x128] sm:$0xf]
      %v5327 = vld [vmem:[%s289 + $0x12c] sm:$0xf]
      %v5328 = vld [vmem:[%s289 + $0x130] sm:$0xf]
      %v5329 = vld [vmem:[%s289 + $0x134] sm:$0xf]
      %v5330 = vld [vmem:[%s289 + $0x138] sm:$0xf]
      %v5331 = vld [vmem:[%s289 + $0x13c] sm:$0xf]
      %v5332 = vld [vmem:[%s295 + $0x5] sm:$0x1]
      %v5334 = vlaneseq
      %v5335 = vshrl.u32 %v5334, 7
      %v5336 = vsub.s32 0, %v5335
      %v5337 = vrot.slane %v5332, %v5336
      %v5419 = vunpack.c.l.b16 %v5252
      %v5420 = vunpack.c.l.b16 %v5253
      %v5421 = vunpack.c.l.b16 %v5254
      %v5422 = vunpack.c.l.b16 %v5255
      %v5423 = vunpack.c.l.b16 %v5256
      %v5424 = vunpack.c.l.b16 %v5257
      %v5425 = vunpack.c.l.b16 %v5258
      %v5426 = vunpack.c.l.b16 %v5259
      %v5427 = vunpack.c.l.b16 %v5260
      %v5428 = vunpack.c.l.b16 %v5261
      %v5429 = vunpack.c.l.b16 %v5262
      %v5430 = vunpack.c.l.b16 %v5263
      %v5431 = vunpack.c.l.b16 %v5264
      %v5432 = vunpack.c.l.b16 %v5265
      %v5433 = vunpack.c.l.b16 %v5266
      %v5434 = vunpack.c.l.b16 %v5267
      %v5435 = vunpack.c.l.b16 %v5268
      %v5436 = vunpack.c.l.b16 %v5269
      %v5437 = vunpack.c.l.b16 %v5270
      %v5438 = vunpack.c.l.b16 %v5271
      %v5439 = vunpack.c.l.b16 %v5272
      %v5440 = vunpack.c.l.b16 %v5273
      %v5441 = vunpack.c.l.b16 %v5274
      %v5442 = vunpack.c.l.b16 %v5275
      %v5443 = vunpack.c.l.b16 %v5276
      %v5444 = vunpack.c.l.b16 %v5277
      %v5445 = vunpack.c.l.b16 %v5278
      %v5446 = vunpack.c.l.b16 %v5279
      %v5447 = vunpack.c.l.b16 %v5280
      %v5448 = vunpack.c.l.b16 %v5281
      %v5449 = vunpack.c.l.b16 %v5282
      %v5450 = vunpack.c.l.b16 %v5283
      %v5451 = vunpack.c.l.b16 %v5284
      %v5452 = vunpack.c.l.b16 %v5285
      %v5453 = vunpack.c.l.b16 %v5286
      %v5454 = vunpack.c.l.b16 %v5287
      %v5455 = vunpack.c.l.b16 %v5288
      %v5456 = vunpack.c.l.b16 %v5289
      %v5457 = vunpack.c.l.b16 %v5290
      %v5458 = vunpack.c.l.b16 %v5291
      %v5459 = vunpack.c.l.b16 %v5292
      %v5460 = vunpack.c.l.b16 %v5293
      %v5461 = vunpack.c.l.b16 %v5294
      %v5462 = vunpack.c.l.b16 %v5295
      %v5463 = vunpack.c.l.b16 %v5296
      %v5464 = vunpack.c.l.b16 %v5297
      %v5465 = vunpack.c.l.b16 %v5298
      %v5466 = vunpack.c.l.b16 %v5299
      %v5467 = vunpack.c.l.b16 %v5300
      %v5468 = vunpack.c.l.b16 %v5301
      %v5469 = vunpack.c.l.b16 %v5302
      %v5470 = vunpack.c.l.b16 %v5303
      %v5471 = vunpack.c.l.b16 %v5304
      %v5472 = vunpack.c.l.b16 %v5305
      %v5473 = vunpack.c.l.b16 %v5306
      %v5474 = vunpack.c.l.b16 %v5307
      %v5475 = vunpack.c.l.b16 %v5308
      %v5476 = vunpack.c.l.b16 %v5309
      %v5477 = vunpack.c.l.b16 %v5310
      %v5478 = vunpack.c.l.b16 %v5311
      %v5479 = vunpack.c.l.b16 %v5312
      %v5480 = vunpack.c.l.b16 %v5313
      %v5481 = vunpack.c.l.b16 %v5314
      %v5482 = vunpack.c.l.b16 %v5315
      %v5483 = vunpack.c.l.b16 %v5316
      %v5484 = vunpack.c.l.b16 %v5317
      %v5485 = vunpack.c.l.b16 %v5318
      %v5486 = vunpack.c.l.b16 %v5319
      %v5487 = vunpack.c.l.b16 %v5320
      %v5488 = vunpack.c.l.b16 %v5321
      %v5489 = vunpack.c.l.b16 %v5322
      %v5490 = vunpack.c.l.b16 %v5323
      %v5491 = vunpack.c.l.b16 %v5324
      %v5492 = vunpack.c.l.b16 %v5325
      %v5493 = vunpack.c.l.b16 %v5326
      %v5494 = vunpack.c.l.b16 %v5327
      %v5495 = vunpack.c.l.b16 %v5328
      %v5496 = vunpack.c.l.b16 %v5329
      %v5497 = vunpack.c.l.b16 %v5330
      %v5498 = vunpack.c.l.b16 %v5331
      %v5499 = vpack.c.b16 %v5420, %v5419
      %v5500 = vpack.c.b16 %v5422, %v5421
      %v5501 = vpack.c.b16 %v5424, %v5423
      %v5502 = vpack.c.b16 %v5426, %v5425
      %v5503 = vpack.c.b16 %v5428, %v5427
      %v5504 = vpack.c.b16 %v5430, %v5429
      %v5505 = vpack.c.b16 %v5432, %v5431
      %v5506 = vpack.c.b16 %v5434, %v5433
      %v5507 = vpack.c.b16 %v5436, %v5435
      %v5508 = vpack.c.b16 %v5438, %v5437
      %v5509 = vpack.c.b16 %v5440, %v5439
      %v5510 = vpack.c.b16 %v5442, %v5441
      %v5511 = vpack.c.b16 %v5444, %v5443
      %v5512 = vpack.c.b16 %v5446, %v5445
      %v5513 = vpack.c.b16 %v5448, %v5447
      %v5514 = vpack.c.b16 %v5450, %v5449
      %v5515 = vpack.c.b16 %v5452, %v5451
      %v5516 = vpack.c.b16 %v5454, %v5453
      %v5517 = vpack.c.b16 %v5456, %v5455
      %v5518 = vpack.c.b16 %v5458, %v5457
      %v5519 = vpack.c.b16 %v5460, %v5459
      %v5520 = vpack.c.b16 %v5462, %v5461
      %v5521 = vpack.c.b16 %v5464, %v5463
      %v5522 = vpack.c.b16 %v5466, %v5465
      %v5523 = vpack.c.b16 %v5468, %v5467
      %v5524 = vpack.c.b16 %v5470, %v5469
      %v5525 = vpack.c.b16 %v5472, %v5471
      %v5526 = vpack.c.b16 %v5474, %v5473
      %v5527 = vpack.c.b16 %v5476, %v5475
      %v5528 = vpack.c.b16 %v5478, %v5477
      %v5529 = vpack.c.b16 %v5480, %v5479
      %v5530 = vpack.c.b16 %v5482, %v5481
      %v5531 = vpack.c.b16 %v5484, %v5483
      %v5532 = vpack.c.b16 %v5486, %v5485
      %v5533 = vpack.c.b16 %v5488, %v5487
      %v5534 = vpack.c.b16 %v5490, %v5489
      %v5535 = vpack.c.b16 %v5492, %v5491
      %v5536 = vpack.c.b16 %v5494, %v5493
      %v5537 = vpack.c.b16 %v5496, %v5495
      %v5538 = vpack.c.b16 %v5498, %v5497
      %5579 = vmatprep.subr.bf16.mxu0 0
      %5580 = vmatpush1.bf16.msra.mxu0 %v5506
      %5581 = vmatprep.subr.bf16.mxu0 0
      %5582 = vmatpush1.bf16.msra.mxu0 %v5505
      %5583 = vmatprep.subr.bf16.mxu0 0
      %5584 = vmatpush1.bf16.msra.mxu0 %v5504
      %5585 = vmatprep.subr.bf16.mxu0 0
      %5586 = vmatpush1.bf16.msra.mxu0 %v5503
      %5587 = vmatprep.subr.bf16.mxu0 0
      %5588 = vmatpush1.bf16.msra.mxu0 %v5502
      %5589 = vmatprep.subr.bf16.mxu0 0
      %5590 = vmatpush1.bf16.msra.mxu0 %v5501
      %5591 = vmatprep.subr.bf16.mxu0 0
      %5592 = vmatpush1.bf16.msra.mxu0 %v5500
      %5593 = vmatprep.subr.bf16.mxu0 0
      %5594 = vmatpush1.bf16.msra.mxu0 %v5499
      %5595 = vmatprep.subr.bf16.mxu0 0
      %5596 = vmatpush2.bf16.msra.mxu0 %v5514
      %5597 = vmatprep.subr.bf16.mxu0 0
      %5598 = vmatpush2.bf16.msra.mxu0 %v5513
      %5599 = vmatprep.subr.bf16.mxu0 0
      %5600 = vmatpush2.bf16.msra.mxu0 %v5512
      %5601 = vmatprep.subr.bf16.mxu0 0
      %5602 = vmatpush2.bf16.msra.mxu0 %v5511
      %5603 = vmatprep.subr.bf16.mxu0 0
      %5604 = vmatpush2.bf16.msra.mxu0 %v5510
      %5605 = vmatprep.subr.bf16.mxu0 0
      %5606 = vmatpush2.bf16.msra.mxu0 %v5509
      %5607 = vmatprep.subr.bf16.mxu0 0
      %5608 = vmatpush2.bf16.msra.mxu0 %v5508
      %5609 = vmatprep.subr.bf16.mxu0 0
      %5610 = vmatpush2.bf16.msra.mxu0 %v5507
      %5611 = vmatprep.mubr.bf16.mxu0 %v5248
      %5612 = vmatmul.mubr.bf16.gmra.mxu0 %v5247
      %v5613 = vpop.f32.mrf.mxu0
      %v5614 = vadd.f32 %v5337, %v5613
      %v5615 = vpop.f32.mrf.mxu0
      %v5616 = vpop.f32.mrf.mxu0
      %v5617 = vpop.f32.mrf.mxu0
      %5618 = vdwg.mxu0
      %5619 = vmatprep.subr.bf16.mxu0 0
      %5620 = vmatpush1.bf16.msra.mxu0 %v5522
      %5621 = vmatprep.subr.bf16.mxu0 0
      %5622 = vmatpush1.bf16.msra.mxu0 %v5521
      %5623 = vmatprep.subr.bf16.mxu0 0
      %5624 = vmatpush1.bf16.msra.mxu0 %v5520
      %5625 = vmatprep.subr.bf16.mxu0 0
      %5626 = vmatpush1.bf16.msra.mxu0 %v5519
      %5627 = vmatprep.subr.bf16.mxu0 0
      %5628 = vmatpush1.bf16.msra.mxu0 %v5518
      %5629 = vmatprep.subr.bf16.mxu0 0
      %5630 = vmatpush1.bf16.msra.mxu0 %v5517
      %5631 = vmatprep.subr.bf16.mxu0 0
      %5632 = vmatpush1.bf16.msra.mxu0 %v5516
      %5633 = vmatprep.subr.bf16.mxu0 0
      %5634 = vmatpush1.bf16.msra.mxu0 %v5515
      %5635 = vmatprep.subr.bf16.mxu0 0
      %5636 = vmatpush2.bf16.msra.mxu0 %v5530
      %5637 = vmatprep.subr.bf16.mxu0 0
      %5638 = vmatpush2.bf16.msra.mxu0 %v5529
      %5639 = vmatprep.subr.bf16.mxu0 0
      %5640 = vmatpush2.bf16.msra.mxu0 %v5528
      %5641 = vmatprep.subr.bf16.mxu0 0
      %5642 = vmatpush2.bf16.msra.mxu0 %v5527
      %5643 = vmatprep.subr.bf16.mxu0 0
      %5644 = vmatpush2.bf16.msra.mxu0 %v5526
      %5645 = vmatprep.subr.bf16.mxu0 0
      %5646 = vmatpush2.bf16.msra.mxu0 %v5525
      %5647 = vmatprep.subr.bf16.mxu0 0
      %5648 = vmatpush2.bf16.msra.mxu0 %v5524
      %5649 = vmatprep.subr.bf16.mxu0 0
      %5650 = vmatpush2.bf16.msra.mxu0 %v5523
      %5651 = vmatprep.mubr.bf16.mxu0 %v5250
      %5652 = vmatmul.mubr.bf16.gmra.mxu0 %v5249
      %v5653 = vpop.f32.mrf.mxu0
      %v5654 = vadd.f32 %v5614, %v5653
      %v5655 = vpop.f32.mrf.mxu0
      %v5656 = vpop.f32.mrf.mxu0
      %v5657 = vpop.f32.mrf.mxu0
      %5658 = vdwg.mxu0
      %5659 = vmatprep.subr.bf16.mxu0 0
      %5660 = vmatpush1.bf16.msra.mxu0 %v5538
      %5661 = vmatprep.subr.bf16.mxu0 0
      %5662 = vmatpush1.bf16.msra.mxu0 %v5537
      %5663 = vmatprep.subr.bf16.mxu0 0
      %5664 = vmatpush1.bf16.msra.mxu0 %v5536
      %5665 = vmatprep.subr.bf16.mxu0 0
      %5666 = vmatpush1.bf16.msra.mxu0 %v5535
      %5667 = vmatprep.subr.bf16.mxu0 0
      %5668 = vmatpush1.bf16.msra.mxu0 %v5534
      %5669 = vmatprep.subr.bf16.mxu0 0
      %5670 = vmatpush1.bf16.msra.mxu0 %v5533
      %5671 = vmatprep.subr.bf16.mxu0 0
      %5672 = vmatpush1.bf16.msra.mxu0 %v5532
      %5673 = vmatprep.subr.bf16.mxu0 0
      %5674 = vmatpush1.bf16.msra.mxu0 %v5531
      %5675 = vmatprep.subr.bf16.mxu0 0
      %5676 = vmatpush2.bf16.msra.mxu0 0
      %5677 = vmatprep.subr.bf16.mxu0 0
      %5678 = vmatpush2.bf16.msra.mxu0 0
      %5679 = vmatprep.subr.bf16.mxu0 0
      %5680 = vmatpush2.bf16.msra.mxu0 0
      %5681 = vmatprep.subr.bf16.mxu0 0
      %5682 = vmatpush2.bf16.msra.mxu0 0
      %5683 = vmatprep.subr.bf16.mxu0 0
      %5684 = vmatpush2.bf16.msra.mxu0 0
      %5685 = vmatprep.subr.bf16.mxu0 0
      %5686 = vmatpush2.bf16.msra.mxu0 0
      %5687 = vmatprep.subr.bf16.mxu0 0
      %5688 = vmatpush2.bf16.msra.mxu0 0
      %5689 = vmatprep.subr.bf16.mxu0 0
      %5690 = vmatpush2.bf16.msra.mxu0 0
      %5691 = vmatprep.mubr.bf16.mxu0 0
      %5692 = vmatmul.mubr.bf16.gmra.mxu0 %v5251
      %v5693 = vpop.f32.mrf.mxu0
      %v5694 = vadd.f32 %v5654, %v5693
      %v5695 = vpop.f32.mrf.mxu0
      %v5696 = vpop.f32.mrf.mxu0
      %v5697 = vpop.f32.mrf.mxu0
      %5698 = vdwg.mxu0
      %5699 = vst [vmem:[%s301] sm:$0xff] %v5694
      %s5700 = scalar_lea.vmem %s275, 96
      %v5701 = vld [vmem:[%s5700] sm:$0xff]
      %v5702 = vld [vmem:[%s5700 + $0x8] sm:$0xff]
      %v5703 = vld [vmem:[%s5700 + $0x10] sm:$0xf]
      %s5704 = scalar_lea.vmem %s275, 168
      %v5705 = vld [vmem:[%s5704] sm:$0x1]
      %v5706 = vlaneseq
      %v5707 = vshrl.u32 %v5706, 7
      %v5708 = vsub.s32 0, %v5707
      %v5709 = vrot.slane %v5705, %v5708
      %v5711 = vsel %vm398, %v5703, 0
      %5713 = vmatprep.subr.mxu0 0.0
      %5714 = vmatpush1.msra.mxu0 0.0
      %5715 = vmatprep.subr.mxu0 0.0
      %5716 = vmatpush1.msra.mxu0 0.0
      %5717 = vmatprep.subr.mxu0 0.0
      %5718 = vmatpush1.msra.mxu0 0.0
      %5719 = vmatprep.subr.mxu0 0.0
      %5720 = vmatpush1.msra.mxu0 0.0
      %5721 = vmatprep.subr.mxu0 0.0
      %5722 = vmatpush1.msra.mxu0 0.0
      %5723 = vmatprep.subr.mxu0 0.0
      %5724 = vmatpush1.msra.mxu0 0.0
      %5725 = vmatprep.subr.mxu0 0.0
      %5726 = vmatpush1.msra.mxu0 0.0
      %5727 = vmatprep.subr.mxu0 0.0
      %5728 = vmatpush1.msra.mxu0 0.0
      %5729 = vmatprep.subr.mxu0 0.0
      %5730 = vmatpush1.msra.mxu0 0.0
      %5731 = vmatprep.subr.mxu0 0.0
      %5732 = vmatpush1.msra.mxu0 0.0
      %5733 = vmatprep.subr.mxu0 0.0
      %5734 = vmatpush1.msra.mxu0 0.0
      %5735 = vmatprep.subr.mxu0 0.0
      %5736 = vmatpush1.msra.mxu0 0.0
      %5737 = vmatprep.subr.mxu0 0.0
      %5738 = vmatpush1.msra.mxu0 0.0
      %5739 = vmatprep.subr.mxu0 0.0
      %5740 = vmatpush1.msra.mxu0 %v5711
      %5741 = vmatprep.subr.mxu0 0.0
      %5742 = vmatpush1.msra.mxu0 %v5702
      %5743 = vmatprep.subr.mxu0 0.0
      %5744 = vmatpush1.msra.mxu0 %v5701
      %5745 = vmatprep.subr.mxu0 0.0
      %5746 = vmatpush2.msra.mxu0 0.0
      %5747 = vmatprep.subr.mxu0 0.0
      %5748 = vmatpush2.msra.mxu0 0.0
      %5749 = vmatprep.subr.mxu0 0.0
      %5750 = vmatpush2.msra.mxu0 0.0
      %5751 = vmatprep.subr.mxu0 0.0
      %5752 = vmatpush2.msra.mxu0 0.0
      %5753 = vmatprep.subr.mxu0 0.0
      %5754 = vmatpush2.msra.mxu0 0.0
      %5755 = vmatprep.subr.mxu0 0.0
      %5756 = vmatpush2.msra.mxu0 0.0
      %5757 = vmatprep.subr.mxu0 0.0
      %5758 = vmatpush2.msra.mxu0 0.0
      %5759 = vmatprep.subr.mxu0 0.0
      %5760 = vmatpush2.msra.mxu0 0.0
      %5761 = vmatprep.subr.mxu0 0.0
      %5762 = vmatpush2.msra.mxu0 0.0
      %5763 = vmatprep.subr.mxu0 0.0
      %5764 = vmatpush2.msra.mxu0 0.0
      %5765 = vmatprep.subr.mxu0 0.0
      %5766 = vmatpush2.msra.mxu0 0.0
      %5767 = vmatprep.subr.mxu0 0.0
      %5768 = vmatpush2.msra.mxu0 0.0
      %5769 = vmatprep.subr.mxu0 0.0
      %5770 = vmatpush2.msra.mxu0 0.0
      %5771 = vmatprep.subr.mxu0 0.0
      %5772 = vmatpush2.msra.mxu0 0.0
      %5773 = vmatprep.subr.mxu0 0.0
      %5774 = vmatpush2.msra.mxu0 0.0
      %5775 = vmatprep.subr.mxu0 0.0
      %5776 = vmatpush2.msra.mxu0 0.0
      %5777 = vmatprep.mubr.f32.mxu0 0.0
      %5778 = vmatmul.mubr.f32.gmra.mxu0 %v336
      %v5779 = vpop.f32.mrf.mxu0
      %v5780 = vadd.f32 %v5709, %v5779
      %v5781 = vpop.f32.mrf.mxu0
      %5782 = vmatprep.mubr.f32.mxu0 0.0
      %5783 = vmatmul.mubr.f32.gmra.mxu0 %v339
      %v5784 = vpop.f32.mrf.mxu0
      %v5785 = vadd.f32 %v5709, %v5784
      %v5786 = vpop.f32.mrf.mxu0
      %5787 = vmatprep.mubr.f32.mxu0 0.0
      %5788 = vmatmul.mubr.f32.gmra.mxu0 %v342
      %v5789 = vpop.f32.mrf.mxu0
      %v5790 = vadd.f32 %v5709, %v5789
      %v5791 = vpop.f32.mrf.mxu0
      %5792 = vmatprep.mubr.f32.mxu0 0.0
      %5793 = vmatmul.mubr.f32.gmra.mxu0 %v345
      %v5794 = vpop.f32.mrf.mxu0
      %v5795 = vadd.f32 %v5709, %v5794
      %v5796 = vpop.f32.mrf.mxu0
      %5797 = vmatprep.mubr.f32.mxu0 0.0
      %5798 = vmatmul.mubr.f32.gmra.mxu0 %v348
      %v5799 = vpop.f32.mrf.mxu0
      %v5800 = vadd.f32 %v5709, %v5799
      %v5801 = vpop.f32.mrf.mxu0
      %5802 = vmatprep.mubr.f32.mxu0 0.0
      %5803 = vmatmul.mubr.f32.gmra.mxu0 %v351
      %v5804 = vpop.f32.mrf.mxu0
      %v5805 = vadd.f32 %v5709, %v5804
      %v5806 = vpop.f32.mrf.mxu0
      %5807 = vmatprep.mubr.f32.mxu0 0.0
      %5808 = vmatmul.mubr.f32.gmra.mxu0 %v354
      %v5809 = vpop.f32.mrf.mxu0
      %v5810 = vadd.f32 %v5709, %v5809
      %v5811 = vpop.f32.mrf.mxu0
      %5812 = vmatprep.mubr.f32.mxu0 0.0
      %5813 = vmatmul.mubr.f32.gmra.mxu0 %v357
      %v5814 = vpop.f32.mrf.mxu0
      %v5815 = vadd.f32 %v5709, %v5814
      %v5816 = vpop.f32.mrf.mxu0
      %5817 = vmatprep.mubr.f32.mxu0 0.0
      %5818 = vmatmul.mubr.f32.gmra.mxu0 %v360
      %v5819 = vpop.f32.mrf.mxu0
      %v5820 = vadd.f32 %v5709, %v5819
      %v5821 = vpop.f32.mrf.mxu0
      %5822 = vmatprep.mubr.f32.mxu0 0.0
      %5823 = vmatmul.mubr.f32.gmra.mxu0 %v363
      %v5824 = vpop.f32.mrf.mxu0
      %v5825 = vadd.f32 %v5709, %v5824
      %v5826 = vpop.f32.mrf.mxu0
      %5827 = vmatprep.mubr.f32.mxu0 0.0
      %5828 = vmatmul.mubr.f32.gmra.mxu0 %v366
      %v5829 = vpop.f32.mrf.mxu0
      %v5830 = vadd.f32 %v5709, %v5829
      %v5831 = vpop.f32.mrf.mxu0
      %5832 = vmatprep.mubr.f32.mxu0 0.0
      %5833 = vmatmul.mubr.f32.gmra.mxu0 %v369
      %v5834 = vpop.f32.mrf.mxu0
      %v5835 = vadd.f32 %v5709, %v5834
      %v5836 = vpop.f32.mrf.mxu0
      %5837 = vmatprep.mubr.f32.mxu0 0.0
      %5838 = vmatmul.mubr.f32.gmra.mxu0 %v372
      %v5839 = vpop.f32.mrf.mxu0
      %v5840 = vadd.f32 %v5709, %v5839
      %v5841 = vpop.f32.mrf.mxu0
      %5842 = vmatprep.mubr.f32.mxu0 0.0
      %5843 = vmatmul.mubr.f32.gmra.mxu0 %v375
      %v5844 = vpop.f32.mrf.mxu0
      %v5845 = vadd.f32 %v5709, %v5844
      %v5846 = vpop.f32.mrf.mxu0
      %5847 = vmatprep.mubr.f32.mxu0 0.0
      %5848 = vmatmul.mubr.f32.gmra.mxu0 %v378
      %v5849 = vpop.f32.mrf.mxu0
      %v5850 = vadd.f32 %v5709, %v5849
      %v5851 = vpop.f32.mrf.mxu0
      %5852 = vmatprep.mubr.f32.mxu0 0.0
      %5853 = vmatmul.mubr.f32.gmra.mxu0 %v381
      %v5854 = vpop.f32.mrf.mxu0
      %v5855 = vadd.f32 %v5709, %v5854
      %v5856 = vpop.f32.mrf.mxu0
      %5857 = vmatprep.mubr.f32.mxu0 0.0
      %5858 = vmatmul.mubr.f32.gmra.mxu0 %v384
      %v5859 = vpop.f32.mrf.mxu0
      %v5860 = vadd.f32 %v5709, %v5859
      %v5861 = vpop.f32.mrf.mxu0
      %5862 = vmatprep.mubr.f32.mxu0 0.0
      %5863 = vmatmul.mubr.f32.gmra.mxu0 %v387
      %v5864 = vpop.f32.mrf.mxu0
      %v5865 = vadd.f32 %v5709, %v5864
      %v5866 = vpop.f32.mrf.mxu0
      %5867 = vmatprep.mubr.f32.mxu0 0.0
      %5868 = vmatmul.mubr.f32.gmra.mxu0 %v390
      %v5869 = vpop.f32.mrf.mxu0
      %v5870 = vadd.f32 %v5709, %v5869
      %v5871 = vpop.f32.mrf.mxu0
      %5872 = vmatprep.mubr.f32.mxu0 0.0
      %5873 = vmatmul.mubr.f32.gmra.mxu0 %v393
      %v5874 = vpop.f32.mrf.mxu0
      %v5875 = vadd.f32 %v5709, %v5874
      %v5876 = vpop.f32.mrf.mxu0
      %5877 = vmatprep.mubr.f32.mxu0 0.0
      %5878 = vmatmul.mubr.f32.gmra.mxu0 %v396
      %v5879 = vpop.f32.mrf.mxu0
      %v5880 = vadd.f32 %v5709, %v5879
      %v5881 = vpop.f32.mrf.mxu0
      %5882 = vdwg.mxu0
      %v5883 = vmax.f32 %v5780, 0.0
      %v5884 = vmax.f32 %v5785, 0.0
      %v5885 = vmax.f32 %v5790, 0.0
      %v5886 = vmax.f32 %v5795, 0.0
      %v5887 = vmax.f32 %v5800, 0.0
      %v5888 = vmax.f32 %v5805, 0.0
      %v5889 = vmax.f32 %v5810, 0.0
      %v5890 = vmax.f32 %v5815, 0.0
      %v5891 = vmax.f32 %v5820, 0.0
      %v5892 = vmax.f32 %v5825, 0.0
      %v5893 = vmax.f32 %v5830, 0.0
      %v5894 = vmax.f32 %v5835, 0.0
      %v5895 = vmax.f32 %v5840, 0.0
      %v5896 = vmax.f32 %v5845, 0.0
      %v5897 = vmax.f32 %v5850, 0.0
      %v5898 = vmax.f32 %v5855, 0.0
      %v5899 = vmax.f32 %v5860, 0.0
      %v5900 = vmax.f32 %v5865, 0.0
      %v5901 = vmax.f32 %v5870, 0.0
      %v5902 = vmax.f32 %v5875, 0.0
      %v5903 = vmax.f32 %v5880, 0.0
      %s5904 = scalar_lea.vmem %s275, 120
      %v5905 = vld [vmem:[%s5904] sm:$0xff]
      %v5906 = vld [vmem:[%s5904 + $0x8] sm:$0xff]
      %v5907 = vld [vmem:[%s5904 + $0x10] sm:$0xf]
      %v5908 = vld [vmem:[%s5704 + $0x1] sm:$0x1]
      %v5909 = vlaneseq
      %v5910 = vshrl.u32 %v5909, 7
      %v5911 = vsub.s32 0, %v5910
      %v5912 = vrot.slane %v5908, %v5911
      %v5914 = vsel %vm334, %v5883, 0
      %v5917 = vsel %vm334, %v5884, 0
      %v5920 = vsel %vm334, %v5885, 0
      %v5923 = vsel %vm334, %v5886, 0
      %v5926 = vsel %vm334, %v5887, 0
      %v5929 = vsel %vm334, %v5888, 0
      %v5932 = vsel %vm334, %v5889, 0
      %v5935 = vsel %vm334, %v5890, 0
      %v5938 = vsel %vm334, %v5891, 0
      %v5941 = vsel %vm334, %v5892, 0
      %v5944 = vsel %vm334, %v5893, 0
      %v5947 = vsel %vm334, %v5894, 0
      %v5950 = vsel %vm334, %v5895, 0
      %v5953 = vsel %vm334, %v5896, 0
      %v5956 = vsel %vm334, %v5897, 0
      %v5959 = vsel %vm334, %v5898, 0
      %v5962 = vsel %vm334, %v5899, 0
      %v5965 = vsel %vm334, %v5900, 0
      %v5968 = vsel %vm334, %v5901, 0
      %v5971 = vsel %vm334, %v5902, 0
      %v5974 = vsel %vm334, %v5903, 0
      %v5977 = vsel %vm398, %v5907, 0
      %5979 = vmatprep.subr.mxu0 0.0
      %5980 = vmatpush1.msra.mxu0 0.0
      %5981 = vmatprep.subr.mxu0 0.0
      %5982 = vmatpush1.msra.mxu0 0.0
      %5983 = vmatprep.subr.mxu0 0.0
      %5984 = vmatpush1.msra.mxu0 0.0
      %5985 = vmatprep.subr.mxu0 0.0
      %5986 = vmatpush1.msra.mxu0 0.0
      %5987 = vmatprep.subr.mxu0 0.0
      %5988 = vmatpush1.msra.mxu0 0.0
      %5989 = vmatprep.subr.mxu0 0.0
      %5990 = vmatpush1.msra.mxu0 0.0
      %5991 = vmatprep.subr.mxu0 0.0
      %5992 = vmatpush1.msra.mxu0 0.0
      %5993 = vmatprep.subr.mxu0 0.0
      %5994 = vmatpush1.msra.mxu0 0.0
      %5995 = vmatprep.subr.mxu0 0.0
      %5996 = vmatpush1.msra.mxu0 0.0
      %5997 = vmatprep.subr.mxu0 0.0
      %5998 = vmatpush1.msra.mxu0 0.0
      %5999 = vmatprep.subr.mxu0 0.0
      %6000 = vmatpush1.msra.mxu0 0.0
      %6001 = vmatprep.subr.mxu0 0.0
      %6002 = vmatpush1.msra.mxu0 0.0
      %6003 = vmatprep.subr.mxu0 0.0
      %6004 = vmatpush1.msra.mxu0 0.0
      %6005 = vmatprep.subr.mxu0 0.0
      %6006 = vmatpush1.msra.mxu0 %v5977
      %6007 = vmatprep.subr.mxu0 0.0
      %6008 = vmatpush1.msra.mxu0 %v5906
      %6009 = vmatprep.subr.mxu0 0.0
      %6010 = vmatpush1.msra.mxu0 %v5905
      %6011 = vmatprep.subr.mxu0 0.0
      %6012 = vmatpush2.msra.mxu0 0.0
      %6013 = vmatprep.subr.mxu0 0.0
      %6014 = vmatpush2.msra.mxu0 0.0
      %6015 = vmatprep.subr.mxu0 0.0
      %6016 = vmatpush2.msra.mxu0 0.0
      %6017 = vmatprep.subr.mxu0 0.0
      %6018 = vmatpush2.msra.mxu0 0.0
      %6019 = vmatprep.subr.mxu0 0.0
      %6020 = vmatpush2.msra.mxu0 0.0
      %6021 = vmatprep.subr.mxu0 0.0
      %6022 = vmatpush2.msra.mxu0 0.0
      %6023 = vmatprep.subr.mxu0 0.0
      %6024 = vmatpush2.msra.mxu0 0.0
      %6025 = vmatprep.subr.mxu0 0.0
      %6026 = vmatpush2.msra.mxu0 0.0
      %6027 = vmatprep.subr.mxu0 0.0
      %6028 = vmatpush2.msra.mxu0 0.0
      %6029 = vmatprep.subr.mxu0 0.0
      %6030 = vmatpush2.msra.mxu0 0.0
      %6031 = vmatprep.subr.mxu0 0.0
      %6032 = vmatpush2.msra.mxu0 0.0
      %6033 = vmatprep.subr.mxu0 0.0
      %6034 = vmatpush2.msra.mxu0 0.0
      %6035 = vmatprep.subr.mxu0 0.0
      %6036 = vmatpush2.msra.mxu0 0.0
      %6037 = vmatprep.subr.mxu0 0.0
      %6038 = vmatpush2.msra.mxu0 0.0
      %6039 = vmatprep.subr.mxu0 0.0
      %6040 = vmatpush2.msra.mxu0 0.0
      %6041 = vmatprep.subr.mxu0 0.0
      %6042 = vmatpush2.msra.mxu0 0.0
      %6043 = vmatprep.mubr.f32.mxu0 0.0
      %6044 = vmatmul.mubr.f32.gmra.mxu0 %v5914
      %v6045 = vpop.f32.mrf.mxu0
      %v6046 = vadd.f32 %v5912, %v6045
      %v6047 = vpop.f32.mrf.mxu0
      %6048 = vmatprep.mubr.f32.mxu0 0.0
      %6049 = vmatmul.mubr.f32.gmra.mxu0 %v5917
      %v6050 = vpop.f32.mrf.mxu0
      %v6051 = vadd.f32 %v5912, %v6050
      %v6052 = vpop.f32.mrf.mxu0
      %6053 = vmatprep.mubr.f32.mxu0 0.0
      %6054 = vmatmul.mubr.f32.gmra.mxu0 %v5920
      %v6055 = vpop.f32.mrf.mxu0
      %v6056 = vadd.f32 %v5912, %v6055
      %v6057 = vpop.f32.mrf.mxu0
      %6058 = vmatprep.mubr.f32.mxu0 0.0
      %6059 = vmatmul.mubr.f32.gmra.mxu0 %v5923
      %v6060 = vpop.f32.mrf.mxu0
      %v6061 = vadd.f32 %v5912, %v6060
      %v6062 = vpop.f32.mrf.mxu0
      %6063 = vmatprep.mubr.f32.mxu0 0.0
      %6064 = vmatmul.mubr.f32.gmra.mxu0 %v5926
      %v6065 = vpop.f32.mrf.mxu0
      %v6066 = vadd.f32 %v5912, %v6065
      %v6067 = vpop.f32.mrf.mxu0
      %6068 = vmatprep.mubr.f32.mxu0 0.0
      %6069 = vmatmul.mubr.f32.gmra.mxu0 %v5929
      %v6070 = vpop.f32.mrf.mxu0
      %v6071 = vadd.f32 %v5912, %v6070
      %v6072 = vpop.f32.mrf.mxu0
      %6073 = vmatprep.mubr.f32.mxu0 0.0
      %6074 = vmatmul.mubr.f32.gmra.mxu0 %v5932
      %v6075 = vpop.f32.mrf.mxu0
      %v6076 = vadd.f32 %v5912, %v6075
      %v6077 = vpop.f32.mrf.mxu0
      %6078 = vmatprep.mubr.f32.mxu0 0.0
      %6079 = vmatmul.mubr.f32.gmra.mxu0 %v5935
      %v6080 = vpop.f32.mrf.mxu0
      %v6081 = vadd.f32 %v5912, %v6080
      %v6082 = vpop.f32.mrf.mxu0
      %6083 = vmatprep.mubr.f32.mxu0 0.0
      %6084 = vmatmul.mubr.f32.gmra.mxu0 %v5938
      %v6085 = vpop.f32.mrf.mxu0
      %v6086 = vadd.f32 %v5912, %v6085
      %v6087 = vpop.f32.mrf.mxu0
      %6088 = vmatprep.mubr.f32.mxu0 0.0
      %6089 = vmatmul.mubr.f32.gmra.mxu0 %v5941
      %v6090 = vpop.f32.mrf.mxu0
      %v6091 = vadd.f32 %v5912, %v6090
      %v6092 = vpop.f32.mrf.mxu0
      %6093 = vmatprep.mubr.f32.mxu0 0.0
      %6094 = vmatmul.mubr.f32.gmra.mxu0 %v5944
      %v6095 = vpop.f32.mrf.mxu0
      %v6096 = vadd.f32 %v5912, %v6095
      %v6097 = vpop.f32.mrf.mxu0
      %6098 = vmatprep.mubr.f32.mxu0 0.0
      %6099 = vmatmul.mubr.f32.gmra.mxu0 %v5947
      %v6100 = vpop.f32.mrf.mxu0
      %v6101 = vadd.f32 %v5912, %v6100
      %v6102 = vpop.f32.mrf.mxu0
      %6103 = vmatprep.mubr.f32.mxu0 0.0
      %6104 = vmatmul.mubr.f32.gmra.mxu0 %v5950
      %v6105 = vpop.f32.mrf.mxu0
      %v6106 = vadd.f32 %v5912, %v6105
      %v6107 = vpop.f32.mrf.mxu0
      %6108 = vmatprep.mubr.f32.mxu0 0.0
      %6109 = vmatmul.mubr.f32.gmra.mxu0 %v5953
      %v6110 = vpop.f32.mrf.mxu0
      %v6111 = vadd.f32 %v5912, %v6110
      %v6112 = vpop.f32.mrf.mxu0
      %6113 = vmatprep.mubr.f32.mxu0 0.0
      %6114 = vmatmul.mubr.f32.gmra.mxu0 %v5956
      %v6115 = vpop.f32.mrf.mxu0
      %v6116 = vadd.f32 %v5912, %v6115
      %v6117 = vpop.f32.mrf.mxu0
      %6118 = vmatprep.mubr.f32.mxu0 0.0
      %6119 = vmatmul.mubr.f32.gmra.mxu0 %v5959
      %v6120 = vpop.f32.mrf.mxu0
      %v6121 = vadd.f32 %v5912, %v6120
      %v6122 = vpop.f32.mrf.mxu0
      %6123 = vmatprep.mubr.f32.mxu0 0.0
      %6124 = vmatmul.mubr.f32.gmra.mxu0 %v5962
      %v6125 = vpop.f32.mrf.mxu0
      %v6126 = vadd.f32 %v5912, %v6125
      %v6127 = vpop.f32.mrf.mxu0
      %6128 = vmatprep.mubr.f32.mxu0 0.0
      %6129 = vmatmul.mubr.f32.gmra.mxu0 %v5965
      %v6130 = vpop.f32.mrf.mxu0
      %v6131 = vadd.f32 %v5912, %v6130
      %v6132 = vpop.f32.mrf.mxu0
      %6133 = vmatprep.mubr.f32.mxu0 0.0
      %6134 = vmatmul.mubr.f32.gmra.mxu0 %v5968
      %v6135 = vpop.f32.mrf.mxu0
      %v6136 = vadd.f32 %v5912, %v6135
      %v6137 = vpop.f32.mrf.mxu0
      %6138 = vmatprep.mubr.f32.mxu0 0.0
      %6139 = vmatmul.mubr.f32.gmra.mxu0 %v5971
      %v6140 = vpop.f32.mrf.mxu0
      %v6141 = vadd.f32 %v5912, %v6140
      %v6142 = vpop.f32.mrf.mxu0
      %6143 = vmatprep.mubr.f32.mxu0 0.0
      %6144 = vmatmul.mubr.f32.gmra.mxu0 %v5974
      %v6145 = vpop.f32.mrf.mxu0
      %v6146 = vadd.f32 %v5912, %v6145
      %v6147 = vpop.f32.mrf.mxu0
      %6148 = vdwg.mxu0
      %v6149 = vmax.f32 %v6046, 0.0
      %v6150 = vmax.f32 %v6051, 0.0
      %v6151 = vmax.f32 %v6056, 0.0
      %v6152 = vmax.f32 %v6061, 0.0
      %v6153 = vmax.f32 %v6066, 0.0
      %v6154 = vmax.f32 %v6071, 0.0
      %v6155 = vmax.f32 %v6076, 0.0
      %v6156 = vmax.f32 %v6081, 0.0
      %v6157 = vmax.f32 %v6086, 0.0
      %v6158 = vmax.f32 %v6091, 0.0
      %v6159 = vmax.f32 %v6096, 0.0
      %v6160 = vmax.f32 %v6101, 0.0
      %v6161 = vmax.f32 %v6106, 0.0
      %v6162 = vmax.f32 %v6111, 0.0
      %v6163 = vmax.f32 %v6116, 0.0
      %v6164 = vmax.f32 %v6121, 0.0
      %v6165 = vmax.f32 %v6126, 0.0
      %v6166 = vmax.f32 %v6131, 0.0
      %v6167 = vmax.f32 %v6136, 0.0
      %v6168 = vmax.f32 %v6141, 0.0
      %v6169 = vmax.f32 %v6146, 0.0
      %s6170 = scalar_lea.vmem %s275, 144
      %v6171 = vld [vmem:[%s6170] sm:$0xff]
      %v6172 = vld [vmem:[%s6170 + $0x8] sm:$0xff]
      %v6173 = vld [vmem:[%s6170 + $0x10] sm:$0xf]
      %v6174 = vld [vmem:[%s5704 + $0x2] sm:$0x1]
      %v6175 = vlaneseq
      %v6176 = vshrl.u32 %v6175, 7
      %v6177 = vsub.s32 0, %v6176
      %v6178 = vrot.slane %v6174, %v6177
      %v6180 = vsel %vm334, %v6149, 0
      %v6183 = vsel %vm334, %v6150, 0
      %v6186 = vsel %vm334, %v6151, 0
      %v6189 = vsel %vm334, %v6152, 0
      %v6192 = vsel %vm334, %v6153, 0
      %v6195 = vsel %vm334, %v6154, 0
      %v6198 = vsel %vm334, %v6155, 0
      %v6201 = vsel %vm334, %v6156, 0
      %v6204 = vsel %vm334, %v6157, 0
      %v6207 = vsel %vm334, %v6158, 0
      %v6210 = vsel %vm334, %v6159, 0
      %v6213 = vsel %vm334, %v6160, 0
      %v6216 = vsel %vm334, %v6161, 0
      %v6219 = vsel %vm334, %v6162, 0
      %v6222 = vsel %vm334, %v6163, 0
      %v6225 = vsel %vm334, %v6164, 0
      %v6228 = vsel %vm334, %v6165, 0
      %v6231 = vsel %vm334, %v6166, 0
      %v6234 = vsel %vm334, %v6167, 0
      %v6237 = vsel %vm334, %v6168, 0
      %v6240 = vsel %vm334, %v6169, 0
      %v6243 = vsel %vm398, %v6173, 0
      %6245 = vmatprep.subr.mxu0 0.0
      %6246 = vmatpush1.msra.mxu0 0.0
      %6247 = vmatprep.subr.mxu0 0.0
      %6248 = vmatpush1.msra.mxu0 0.0
      %6249 = vmatprep.subr.mxu0 0.0
      %6250 = vmatpush1.msra.mxu0 0.0
      %6251 = vmatprep.subr.mxu0 0.0
      %6252 = vmatpush1.msra.mxu0 0.0
      %6253 = vmatprep.subr.mxu0 0.0
      %6254 = vmatpush1.msra.mxu0 0.0
      %6255 = vmatprep.subr.mxu0 0.0
      %6256 = vmatpush1.msra.mxu0 0.0
      %6257 = vmatprep.subr.mxu0 0.0
      %6258 = vmatpush1.msra.mxu0 0.0
      %6259 = vmatprep.subr.mxu0 0.0
      %6260 = vmatpush1.msra.mxu0 0.0
      %6261 = vmatprep.subr.mxu0 0.0
      %6262 = vmatpush1.msra.mxu0 0.0
      %6263 = vmatprep.subr.mxu0 0.0
      %6264 = vmatpush1.msra.mxu0 0.0
      %6265 = vmatprep.subr.mxu0 0.0
      %6266 = vmatpush1.msra.mxu0 0.0
      %6267 = vmatprep.subr.mxu0 0.0
      %6268 = vmatpush1.msra.mxu0 0.0
      %6269 = vmatprep.subr.mxu0 0.0
      %6270 = vmatpush1.msra.mxu0 0.0
      %6271 = vmatprep.subr.mxu0 0.0
      %6272 = vmatpush1.msra.mxu0 %v6243
      %6273 = vmatprep.subr.mxu0 0.0
      %6274 = vmatpush1.msra.mxu0 %v6172
      %6275 = vmatprep.subr.mxu0 0.0
      %6276 = vmatpush1.msra.mxu0 %v6171
      %6277 = vmatprep.subr.mxu0 0.0
      %6278 = vmatpush2.msra.mxu0 0.0
      %6279 = vmatprep.subr.mxu0 0.0
      %6280 = vmatpush2.msra.mxu0 0.0
      %6281 = vmatprep.subr.mxu0 0.0
      %6282 = vmatpush2.msra.mxu0 0.0
      %6283 = vmatprep.subr.mxu0 0.0
      %6284 = vmatpush2.msra.mxu0 0.0
      %6285 = vmatprep.subr.mxu0 0.0
      %6286 = vmatpush2.msra.mxu0 0.0
      %6287 = vmatprep.subr.mxu0 0.0
      %6288 = vmatpush2.msra.mxu0 0.0
      %6289 = vmatprep.subr.mxu0 0.0
      %6290 = vmatpush2.msra.mxu0 0.0
      %6291 = vmatprep.subr.mxu0 0.0
      %6292 = vmatpush2.msra.mxu0 0.0
      %6293 = vmatprep.subr.mxu0 0.0
      %6294 = vmatpush2.msra.mxu0 0.0
      %6295 = vmatprep.subr.mxu0 0.0
      %6296 = vmatpush2.msra.mxu0 0.0
      %6297 = vmatprep.subr.mxu0 0.0
      %6298 = vmatpush2.msra.mxu0 0.0
      %6299 = vmatprep.subr.mxu0 0.0
      %6300 = vmatpush2.msra.mxu0 0.0
      %6301 = vmatprep.subr.mxu0 0.0
      %6302 = vmatpush2.msra.mxu0 0.0
      %6303 = vmatprep.subr.mxu0 0.0
      %6304 = vmatpush2.msra.mxu0 0.0
      %6305 = vmatprep.subr.mxu0 0.0
      %6306 = vmatpush2.msra.mxu0 0.0
      %6307 = vmatprep.subr.mxu0 0.0
      %6308 = vmatpush2.msra.mxu0 0.0
      %6309 = vmatprep.mubr.f32.mxu0 0.0
      %6310 = vmatmul.mubr.f32.gmra.mxu0 %v6180
      %v6311 = vpop.f32.mrf.mxu0
      %v6312 = vadd.f32 %v6178, %v6311
      %v6313 = vpop.f32.mrf.mxu0
      %6314 = vmatprep.mubr.f32.mxu0 0.0
      %6315 = vmatmul.mubr.f32.gmra.mxu0 %v6183
      %v6316 = vpop.f32.mrf.mxu0
      %v6317 = vadd.f32 %v6178, %v6316
      %v6318 = vpop.f32.mrf.mxu0
      %6319 = vmatprep.mubr.f32.mxu0 0.0
      %6320 = vmatmul.mubr.f32.gmra.mxu0 %v6186
      %v6321 = vpop.f32.mrf.mxu0
      %v6322 = vadd.f32 %v6178, %v6321
      %v6323 = vpop.f32.mrf.mxu0
      %6324 = vmatprep.mubr.f32.mxu0 0.0
      %6325 = vmatmul.mubr.f32.gmra.mxu0 %v6189
      %v6326 = vpop.f32.mrf.mxu0
      %v6327 = vadd.f32 %v6178, %v6326
      %v6328 = vpop.f32.mrf.mxu0
      %6329 = vmatprep.mubr.f32.mxu0 0.0
      %6330 = vmatmul.mubr.f32.gmra.mxu0 %v6192
      %v6331 = vpop.f32.mrf.mxu0
      %v6332 = vadd.f32 %v6178, %v6331
      %v6333 = vpop.f32.mrf.mxu0
      %6334 = vmatprep.mubr.f32.mxu0 0.0
      %6335 = vmatmul.mubr.f32.gmra.mxu0 %v6195
      %v6336 = vpop.f32.mrf.mxu0
      %v6337 = vadd.f32 %v6178, %v6336
      %v6338 = vpop.f32.mrf.mxu0
      %6339 = vmatprep.mubr.f32.mxu0 0.0
      %6340 = vmatmul.mubr.f32.gmra.mxu0 %v6198
      %v6341 = vpop.f32.mrf.mxu0
      %v6342 = vadd.f32 %v6178, %v6341
      %v6343 = vpop.f32.mrf.mxu0
      %6344 = vmatprep.mubr.f32.mxu0 0.0
      %6345 = vmatmul.mubr.f32.gmra.mxu0 %v6201
      %v6346 = vpop.f32.mrf.mxu0
      %v6347 = vadd.f32 %v6178, %v6346
      %v6348 = vpop.f32.mrf.mxu0
      %6349 = vmatprep.mubr.f32.mxu0 0.0
      %6350 = vmatmul.mubr.f32.gmra.mxu0 %v6204
      %v6351 = vpop.f32.mrf.mxu0
      %v6352 = vadd.f32 %v6178, %v6351
      %v6353 = vpop.f32.mrf.mxu0
      %6354 = vmatprep.mubr.f32.mxu0 0.0
      %6355 = vmatmul.mubr.f32.gmra.mxu0 %v6207
      %v6356 = vpop.f32.mrf.mxu0
      %v6357 = vadd.f32 %v6178, %v6356
      %v6358 = vpop.f32.mrf.mxu0
      %6359 = vmatprep.mubr.f32.mxu0 0.0
      %6360 = vmatmul.mubr.f32.gmra.mxu0 %v6210
      %v6361 = vpop.f32.mrf.mxu0
      %v6362 = vadd.f32 %v6178, %v6361
      %v6363 = vpop.f32.mrf.mxu0
      %6364 = vmatprep.mubr.f32.mxu0 0.0
      %6365 = vmatmul.mubr.f32.gmra.mxu0 %v6213
      %v6366 = vpop.f32.mrf.mxu0
      %v6367 = vadd.f32 %v6178, %v6366
      %v6368 = vpop.f32.mrf.mxu0
      %6369 = vmatprep.mubr.f32.mxu0 0.0
      %6370 = vmatmul.mubr.f32.gmra.mxu0 %v6216
      %v6371 = vpop.f32.mrf.mxu0
      %v6372 = vadd.f32 %v6178, %v6371
      %v6373 = vpop.f32.mrf.mxu0
      %6374 = vmatprep.mubr.f32.mxu0 0.0
      %6375 = vmatmul.mubr.f32.gmra.mxu0 %v6219
      %v6376 = vpop.f32.mrf.mxu0
      %v6377 = vadd.f32 %v6178, %v6376
      %v6378 = vpop.f32.mrf.mxu0
      %6379 = vmatprep.mubr.f32.mxu0 0.0
      %6380 = vmatmul.mubr.f32.gmra.mxu0 %v6222
      %v6381 = vpop.f32.mrf.mxu0
      %v6382 = vadd.f32 %v6178, %v6381
      %v6383 = vpop.f32.mrf.mxu0
      %6384 = vmatprep.mubr.f32.mxu0 0.0
      %6385 = vmatmul.mubr.f32.gmra.mxu0 %v6225
      %v6386 = vpop.f32.mrf.mxu0
      %v6387 = vadd.f32 %v6178, %v6386
      %v6388 = vpop.f32.mrf.mxu0
      %6389 = vmatprep.mubr.f32.mxu0 0.0
      %6390 = vmatmul.mubr.f32.gmra.mxu0 %v6228
      %v6391 = vpop.f32.mrf.mxu0
      %v6392 = vadd.f32 %v6178, %v6391
      %v6393 = vpop.f32.mrf.mxu0
      %6394 = vmatprep.mubr.f32.mxu0 0.0
      %6395 = vmatmul.mubr.f32.gmra.mxu0 %v6231
      %v6396 = vpop.f32.mrf.mxu0
      %v6397 = vadd.f32 %v6178, %v6396
      %v6398 = vpop.f32.mrf.mxu0
      %6399 = vmatprep.mubr.f32.mxu0 0.0
      %6400 = vmatmul.mubr.f32.gmra.mxu0 %v6234
      %v6401 = vpop.f32.mrf.mxu0
      %v6402 = vadd.f32 %v6178, %v6401
      %v6403 = vpop.f32.mrf.mxu0
      %6404 = vmatprep.mubr.f32.mxu0 0.0
      %6405 = vmatmul.mubr.f32.gmra.mxu0 %v6237
      %v6406 = vpop.f32.mrf.mxu0
      %v6407 = vadd.f32 %v6178, %v6406
      %v6408 = vpop.f32.mrf.mxu0
      %6409 = vmatprep.mubr.f32.mxu0 0.0
      %6410 = vmatmul.mubr.f32.gmra.mxu0 %v6240
      %v6411 = vpop.f32.mrf.mxu0
      %v6412 = vadd.f32 %v6178, %v6411
      %v6413 = vpop.f32.mrf.mxu0
      %6414 = vdwg.mxu0
      %v6415 = vmax.f32 %v6312, 0.0
      %v6416 = vmax.f32 %v6317, 0.0
      %v6417 = vmax.f32 %v6322, 0.0
      %v6418 = vmax.f32 %v6327, 0.0
      %v6419 = vmax.f32 %v6332, 0.0
      %v6420 = vmax.f32 %v6337, 0.0
      %v6421 = vmax.f32 %v6342, 0.0
      %v6422 = vmax.f32 %v6347, 0.0
      %v6423 = vmax.f32 %v6352, 0.0
      %v6424 = vmax.f32 %v6357, 0.0
      %v6425 = vmax.f32 %v6362, 0.0
      %v6426 = vmax.f32 %v6367, 0.0
      %v6427 = vmax.f32 %v6372, 0.0
      %v6428 = vmax.f32 %v6377, 0.0
      %v6429 = vmax.f32 %v6382, 0.0
      %v6430 = vmax.f32 %v6387, 0.0
      %v6431 = vmax.f32 %v6392, 0.0
      %v6432 = vmax.f32 %v6397, 0.0
      %v6433 = vmax.f32 %v6402, 0.0
      %v6434 = vmax.f32 %v6407, 0.0
      %v6435 = vmax.f32 %v6412, 0.0
      %v6436 = vpack.c.bf16 %v6415, %v6415
      %s6437 = scalar_lea.vmem %s282, 1260
      %v6438 = vld [vmem:[%s6437] sm:$0xff]
      %v6439 = vld [vmem:[%s6437 + $0x8] sm:$0xff]
      %v6440 = vld [vmem:[%s6437 + $0x10] sm:$0xf]
      %v6441 = vld [vmem:[%s6437 + $0x14] sm:$0xff]
      %v6442 = vld [vmem:[%s6437 + $0x1c] sm:$0xff]
      %v6443 = vld [vmem:[%s6437 + $0x24] sm:$0xf]
      %v6444 = vld [vmem:[%s6437 + $0x28] sm:$0x33]
      %v6445 = vld [vmem:[%s6437 + $0x30] sm:$0x33]
      %v6446 = vld [vmem:[%s6437 + $0x38] sm:$0x3]
      %v6447 = vpack.c.bf16 %v6416, %v6416
      %s6448 = scalar_lea.vmem %s282, 1320
      %v6449 = vld [vmem:[%s6448] sm:$0xff]
      %v6450 = vld [vmem:[%s6448 + $0x8] sm:$0xff]
      %v6451 = vld [vmem:[%s6448 + $0x10] sm:$0xf]
      %v6452 = vld [vmem:[%s6448 + $0x14] sm:$0xff]
      %v6453 = vld [vmem:[%s6448 + $0x1c] sm:$0xff]
      %v6454 = vld [vmem:[%s6448 + $0x24] sm:$0xf]
      %v6455 = vld [vmem:[%s6448 + $0x28] sm:$0x33]
      %v6456 = vld [vmem:[%s6448 + $0x30] sm:$0x33]
      %v6457 = vld [vmem:[%s6448 + $0x38] sm:$0x3]
      %v6467 = vunpack.c.l.b16 %v6449
      %v6468 = vunpack.c.h.b16 %v6449
      %v6469 = vunpack.c.l.b16 %v6450
      %v6470 = vunpack.c.h.b16 %v6450
      %v6471 = vunpack.c.l.b16 %v6451
      %v6472 = vunpack.c.l.b16 %v6452
      %v6473 = vunpack.c.h.b16 %v6452
      %v6474 = vunpack.c.l.b16 %v6453
      %v6475 = vunpack.c.h.b16 %v6453
      %v6476 = vunpack.c.l.b16 %v6454
      %v6477 = vunpack.c.l.b16 %v6455
      %v6478 = vunpack.c.h.b16 %v6455
      %v6479 = vunpack.c.l.b16 %v6456
      %v6480 = vunpack.c.h.b16 %v6456
      %v6481 = vunpack.c.l.b16 %v6457
      %v6482 = vpack.c.b16 %v6472, %v6467
      %v6483 = vpack.c.b16 %v6473, %v6468
      %v6484 = vpack.c.b16 %v6474, %v6469
      %v6485 = vpack.c.b16 %v6475, %v6470
      %v6486 = vpack.c.b16 %v6476, %v6471
      %v6487 = vpack.c.b16 %v6477, %v6477
      %v6488 = vpack.c.b16 %v6478, %v6478
      %v6489 = vpack.c.b16 %v6479, %v6479
      %v6490 = vpack.c.b16 %v6480, %v6480
      %v6491 = vpack.c.b16 %v6481, %v6481
      %v6498 = vsel %vm334, %v6447, 0
      %v6501 = vsel %vm1188, %v6487, 0
      %v6504 = vsel %vm1188, %v6488, 0
      %v6507 = vsel %vm1188, %v6489, 0
      %v6510 = vsel %vm1188, %v6490, 0
      %v6513 = vsel %vm1188, %v6491, 0
      %6515 = vmatprep.subr.bf16.mxu0 0
      %6516 = vmatpush1.bf16.msra.mxu0 0
      %6517 = vmatprep.subr.bf16.mxu0 0
      %6518 = vmatpush1.bf16.msra.mxu0 0
      %6519 = vmatprep.subr.bf16.mxu0 0
      %6520 = vmatpush1.bf16.msra.mxu0 0
      %6521 = vmatprep.subr.bf16.mxu0 0
      %6522 = vmatpush1.bf16.msra.mxu0 0
      %6523 = vmatprep.subr.bf16.mxu0 0
      %6524 = vmatpush1.bf16.msra.mxu0 0
      %6525 = vmatprep.subr.bf16.mxu0 0
      %6526 = vmatpush1.bf16.msra.mxu0 0
      %6527 = vmatprep.subr.bf16.mxu0 %v6504
      %6528 = vmatpush1.bf16.msra.mxu0 %v6501
      %6529 = vmatprep.subr.bf16.mxu0 %v6483
      %6530 = vmatpush1.bf16.msra.mxu0 %v6482
      %6531 = vmatprep.subr.bf16.mxu0 0
      %6532 = vmatpush2.bf16.msra.mxu0 0
      %6533 = vmatprep.subr.bf16.mxu0 0
      %6534 = vmatpush2.bf16.msra.mxu0 0
      %6535 = vmatprep.subr.bf16.mxu0 0
      %6536 = vmatpush2.bf16.msra.mxu0 0
      %6537 = vmatprep.subr.bf16.mxu0 0
      %6538 = vmatpush2.bf16.msra.mxu0 0
      %6539 = vmatprep.subr.bf16.mxu0 0
      %6540 = vmatpush2.bf16.msra.mxu0 0
      %6541 = vmatprep.subr.bf16.mxu0 0
      %6542 = vmatpush2.bf16.msra.mxu0 0
      %6543 = vmatprep.subr.bf16.mxu0 0
      %6544 = vmatpush2.bf16.msra.mxu0 0
      %6545 = vmatprep.subr.bf16.mxu0 0
      %6546 = vmatpush2.bf16.msra.mxu0 0
      %6547 = vmatprep.mubr.bf16.mxu0 0
      %6548 = vmatmul.mubr.bf16.gmra.mxu0 %v6498
      %v6549 = vpop.f32.mrf.mxu0
      %v6550 = vadd.f32 0.0, %v6549
      %v6551 = vpop.f32.mrf.mxu0
      %v6552 = vadd.f32 0.0, %v6551
      %v6553 = vpop.f32.mrf.mxu0
      %v6554 = vpop.f32.mrf.mxu0
      %6555 = vdwg.mxu0
      %6556 = vmatprep.subr.bf16.mxu0 0
      %6557 = vmatpush1.bf16.msra.mxu0 0
      %6558 = vmatprep.subr.bf16.mxu0 0
      %6559 = vmatpush1.bf16.msra.mxu0 0
      %6560 = vmatprep.subr.bf16.mxu0 0
      %6561 = vmatpush1.bf16.msra.mxu0 0
      %6562 = vmatprep.subr.bf16.mxu0 0
      %6563 = vmatpush1.bf16.msra.mxu0 0
      %6564 = vmatprep.subr.bf16.mxu0 0
      %6565 = vmatpush1.bf16.msra.mxu0 0
      %6566 = vmatprep.subr.bf16.mxu0 0
      %6567 = vmatpush1.bf16.msra.mxu0 0
      %6568 = vmatprep.subr.bf16.mxu0 %v6510
      %6569 = vmatpush1.bf16.msra.mxu0 %v6507
      %6570 = vmatprep.subr.bf16.mxu0 %v6485
      %6571 = vmatpush1.bf16.msra.mxu0 %v6484
      %6572 = vmatprep.subr.bf16.mxu0 0
      %6573 = vmatpush2.bf16.msra.mxu0 0
      %6574 = vmatprep.subr.bf16.mxu0 0
      %6575 = vmatpush2.bf16.msra.mxu0 0
      %6576 = vmatprep.subr.bf16.mxu0 0
      %6577 = vmatpush2.bf16.msra.mxu0 0
      %6578 = vmatprep.subr.bf16.mxu0 0
      %6579 = vmatpush2.bf16.msra.mxu0 0
      %6580 = vmatprep.subr.bf16.mxu0 0
      %6581 = vmatpush2.bf16.msra.mxu0 0
      %6582 = vmatprep.subr.bf16.mxu0 0
      %6583 = vmatpush2.bf16.msra.mxu0 0
      %6584 = vmatprep.subr.bf16.mxu0 0
      %6585 = vmatpush2.bf16.msra.mxu0 0
      %6586 = vmatprep.subr.bf16.mxu0 0
      %6587 = vmatpush2.bf16.msra.mxu0 0
      %6588 = vmatprep.mubr.bf16.mxu0 0
      %6589 = vmatmul.mubr.bf16.gmra.mxu0 %v6498
      %v6590 = vpop.f32.mrf.mxu0
      %v6591 = vadd.f32 0.0, %v6590
      %v6592 = vpop.f32.mrf.mxu0
      %v6593 = vadd.f32 0.0, %v6592
      %v6594 = vpop.f32.mrf.mxu0
      %v6595 = vpop.f32.mrf.mxu0
      %6596 = vdwg.mxu0
      %6597 = vmatprep.subr.bf16.mxu0 0
      %6598 = vmatpush1.bf16.msra.mxu0 0
      %6599 = vmatprep.subr.bf16.mxu0 0
      %6600 = vmatpush1.bf16.msra.mxu0 0
      %6601 = vmatprep.subr.bf16.mxu0 0
      %6602 = vmatpush1.bf16.msra.mxu0 0
      %6603 = vmatprep.subr.bf16.mxu0 0
      %6604 = vmatpush1.bf16.msra.mxu0 0
      %6605 = vmatprep.subr.bf16.mxu0 0
      %6606 = vmatpush1.bf16.msra.mxu0 0
      %6607 = vmatprep.subr.bf16.mxu0 0
      %6608 = vmatpush1.bf16.msra.mxu0 0
      %6609 = vmatprep.subr.bf16.mxu0 0
      %6610 = vmatpush1.bf16.msra.mxu0 %v6513
      %6611 = vmatprep.subr.bf16.mxu0 0
      %6612 = vmatpush1.bf16.msra.mxu0 %v6486
      %6613 = vmatprep.subr.bf16.mxu0 0
      %6614 = vmatpush2.bf16.msra.mxu0 0
      %6615 = vmatprep.subr.bf16.mxu0 0
      %6616 = vmatpush2.bf16.msra.mxu0 0
      %6617 = vmatprep.subr.bf16.mxu0 0
      %6618 = vmatpush2.bf16.msra.mxu0 0
      %6619 = vmatprep.subr.bf16.mxu0 0
      %6620 = vmatpush2.bf16.msra.mxu0 0
      %6621 = vmatprep.subr.bf16.mxu0 0
      %6622 = vmatpush2.bf16.msra.mxu0 0
      %6623 = vmatprep.subr.bf16.mxu0 0
      %6624 = vmatpush2.bf16.msra.mxu0 0
      %6625 = vmatprep.subr.bf16.mxu0 0
      %6626 = vmatpush2.bf16.msra.mxu0 0
      %6627 = vmatprep.subr.bf16.mxu0 0
      %6628 = vmatpush2.bf16.msra.mxu0 0
      %6629 = vmatprep.mubr.bf16.mxu0 0
      %6630 = vmatmul.mubr.bf16.gmra.mxu0 %v6498
      %v6631 = vpop.f32.mrf.mxu0
      %v6632 = vadd.f32 0.0, %v6631
      %v6633 = vpop.f32.mrf.mxu0
      %v6634 = vpop.f32.mrf.mxu0
      %v6635 = vpop.f32.mrf.mxu0
      %6636 = vdwg.mxu0
      %v6646 = vunpack.c.l.b16 %v6438
      %v6647 = vunpack.c.h.b16 %v6438
      %v6648 = vunpack.c.l.b16 %v6439
      %v6649 = vunpack.c.h.b16 %v6439
      %v6650 = vunpack.c.l.b16 %v6440
      %v6651 = vunpack.c.l.b16 %v6441
      %v6652 = vunpack.c.h.b16 %v6441
      %v6653 = vunpack.c.l.b16 %v6442
      %v6654 = vunpack.c.h.b16 %v6442
      %v6655 = vunpack.c.l.b16 %v6443
      %v6656 = vunpack.c.l.b16 %v6444
      %v6657 = vunpack.c.h.b16 %v6444
      %v6658 = vunpack.c.l.b16 %v6445
      %v6659 = vunpack.c.h.b16 %v6445
      %v6660 = vunpack.c.l.b16 %v6446
      %v6661 = vpack.c.b16 %v6651, %v6646
      %v6662 = vpack.c.b16 %v6652, %v6647
      %v6663 = vpack.c.b16 %v6653, %v6648
      %v6664 = vpack.c.b16 %v6654, %v6649
      %v6665 = vpack.c.b16 %v6655, %v6650
      %v6666 = vpack.c.b16 %v6656, %v6656
      %v6667 = vpack.c.b16 %v6657, %v6657
      %v6668 = vpack.c.b16 %v6658, %v6658
      %v6669 = vpack.c.b16 %v6659, %v6659
      %v6670 = vpack.c.b16 %v6660, %v6660
      %v6677 = vsel %vm334, %v6436, 0
      %v6680 = vsel %vm1188, %v6666, 0
      %v6683 = vsel %vm1188, %v6667, 0
      %v6686 = vsel %vm1188, %v6668, 0
      %v6689 = vsel %vm1188, %v6669, 0
      %v6692 = vsel %vm1188, %v6670, 0
      %6694 = vmatprep.subr.bf16.mxu0 0
      %6695 = vmatpush1.bf16.msra.mxu0 0
      %6696 = vmatprep.subr.bf16.mxu0 0
      %6697 = vmatpush1.bf16.msra.mxu0 0
      %6698 = vmatprep.subr.bf16.mxu0 0
      %6699 = vmatpush1.bf16.msra.mxu0 0
      %6700 = vmatprep.subr.bf16.mxu0 0
      %6701 = vmatpush1.bf16.msra.mxu0 0
      %6702 = vmatprep.subr.bf16.mxu0 0
      %6703 = vmatpush1.bf16.msra.mxu0 0
      %6704 = vmatprep.subr.bf16.mxu0 0
      %6705 = vmatpush1.bf16.msra.mxu0 0
      %6706 = vmatprep.subr.bf16.mxu0 %v6683
      %6707 = vmatpush1.bf16.msra.mxu0 %v6680
      %6708 = vmatprep.subr.bf16.mxu0 %v6662
      %6709 = vmatpush1.bf16.msra.mxu0 %v6661
      %6710 = vmatprep.subr.bf16.mxu0 0
      %6711 = vmatpush2.bf16.msra.mxu0 0
      %6712 = vmatprep.subr.bf16.mxu0 0
      %6713 = vmatpush2.bf16.msra.mxu0 0
      %6714 = vmatprep.subr.bf16.mxu0 0
      %6715 = vmatpush2.bf16.msra.mxu0 0
      %6716 = vmatprep.subr.bf16.mxu0 0
      %6717 = vmatpush2.bf16.msra.mxu0 0
      %6718 = vmatprep.subr.bf16.mxu0 0
      %6719 = vmatpush2.bf16.msra.mxu0 0
      %6720 = vmatprep.subr.bf16.mxu0 0
      %6721 = vmatpush2.bf16.msra.mxu0 0
      %6722 = vmatprep.subr.bf16.mxu0 0
      %6723 = vmatpush2.bf16.msra.mxu0 0
      %6724 = vmatprep.subr.bf16.mxu0 0
      %6725 = vmatpush2.bf16.msra.mxu0 0
      %6726 = vmatprep.mubr.bf16.mxu0 0
      %6727 = vmatmul.mubr.bf16.gmra.mxu0 %v6677
      %v6728 = vpop.f32.mrf.mxu0
      %v6729 = vadd.f32 %v6550, %v6728
      %v6730 = vpop.f32.mrf.mxu0
      %v6731 = vadd.f32 %v6552, %v6730
      %v6732 = vpop.f32.mrf.mxu0
      %v6733 = vpop.f32.mrf.mxu0
      %6734 = vdwg.mxu0
      %6735 = vmatprep.subr.bf16.mxu0 0
      %6736 = vmatpush1.bf16.msra.mxu0 0
      %6737 = vmatprep.subr.bf16.mxu0 0
      %6738 = vmatpush1.bf16.msra.mxu0 0
      %6739 = vmatprep.subr.bf16.mxu0 0
      %6740 = vmatpush1.bf16.msra.mxu0 0
      %6741 = vmatprep.subr.bf16.mxu0 0
      %6742 = vmatpush1.bf16.msra.mxu0 0
      %6743 = vmatprep.subr.bf16.mxu0 0
      %6744 = vmatpush1.bf16.msra.mxu0 0
      %6745 = vmatprep.subr.bf16.mxu0 0
      %6746 = vmatpush1.bf16.msra.mxu0 0
      %6747 = vmatprep.subr.bf16.mxu0 %v6689
      %6748 = vmatpush1.bf16.msra.mxu0 %v6686
      %6749 = vmatprep.subr.bf16.mxu0 %v6664
      %6750 = vmatpush1.bf16.msra.mxu0 %v6663
      %6751 = vmatprep.subr.bf16.mxu0 0
      %6752 = vmatpush2.bf16.msra.mxu0 0
      %6753 = vmatprep.subr.bf16.mxu0 0
      %6754 = vmatpush2.bf16.msra.mxu0 0
      %6755 = vmatprep.subr.bf16.mxu0 0
      %6756 = vmatpush2.bf16.msra.mxu0 0
      %6757 = vmatprep.subr.bf16.mxu0 0
      %6758 = vmatpush2.bf16.msra.mxu0 0
      %6759 = vmatprep.subr.bf16.mxu0 0
      %6760 = vmatpush2.bf16.msra.mxu0 0
      %6761 = vmatprep.subr.bf16.mxu0 0
      %6762 = vmatpush2.bf16.msra.mxu0 0
      %6763 = vmatprep.subr.bf16.mxu0 0
      %6764 = vmatpush2.bf16.msra.mxu0 0
      %6765 = vmatprep.subr.bf16.mxu0 0
      %6766 = vmatpush2.bf16.msra.mxu0 0
      %6767 = vmatprep.mubr.bf16.mxu0 0
      %6768 = vmatmul.mubr.bf16.gmra.mxu0 %v6677
      %v6769 = vpop.f32.mrf.mxu0
      %v6770 = vadd.f32 %v6591, %v6769
      %v6771 = vpop.f32.mrf.mxu0
      %v6772 = vadd.f32 %v6593, %v6771
      %v6773 = vpop.f32.mrf.mxu0
      %v6774 = vpop.f32.mrf.mxu0
      %6775 = vdwg.mxu0
      %6776 = vmatprep.subr.bf16.mxu0 0
      %6777 = vmatpush1.bf16.msra.mxu0 0
      %6778 = vmatprep.subr.bf16.mxu0 0
      %6779 = vmatpush1.bf16.msra.mxu0 0
      %6780 = vmatprep.subr.bf16.mxu0 0
      %6781 = vmatpush1.bf16.msra.mxu0 0
      %6782 = vmatprep.subr.bf16.mxu0 0
      %6783 = vmatpush1.bf16.msra.mxu0 0
      %6784 = vmatprep.subr.bf16.mxu0 0
      %6785 = vmatpush1.bf16.msra.mxu0 0
      %6786 = vmatprep.subr.bf16.mxu0 0
      %6787 = vmatpush1.bf16.msra.mxu0 0
      %6788 = vmatprep.subr.bf16.mxu0 0
      %6789 = vmatpush1.bf16.msra.mxu0 %v6692
      %6790 = vmatprep.subr.bf16.mxu0 0
      %6791 = vmatpush1.bf16.msra.mxu0 %v6665
      %6792 = vmatprep.subr.bf16.mxu0 0
      %6793 = vmatpush2.bf16.msra.mxu0 0
      %6794 = vmatprep.subr.bf16.mxu0 0
      %6795 = vmatpush2.bf16.msra.mxu0 0
      %6796 = vmatprep.subr.bf16.mxu0 0
      %6797 = vmatpush2.bf16.msra.mxu0 0
      %6798 = vmatprep.subr.bf16.mxu0 0
      %6799 = vmatpush2.bf16.msra.mxu0 0
      %6800 = vmatprep.subr.bf16.mxu0 0
      %6801 = vmatpush2.bf16.msra.mxu0 0
      %6802 = vmatprep.subr.bf16.mxu0 0
      %6803 = vmatpush2.bf16.msra.mxu0 0
      %6804 = vmatprep.subr.bf16.mxu0 0
      %6805 = vmatpush2.bf16.msra.mxu0 0
      %6806 = vmatprep.subr.bf16.mxu0 0
      %6807 = vmatpush2.bf16.msra.mxu0 0
      %6808 = vmatprep.mubr.bf16.mxu0 0
      %6809 = vmatmul.mubr.bf16.gmra.mxu0 %v6677
      %v6810 = vpop.f32.mrf.mxu0
      %v6811 = vadd.f32 %v6632, %v6810
      %v6812 = vpop.f32.mrf.mxu0
      %v6813 = vpop.f32.mrf.mxu0
      %v6814 = vpop.f32.mrf.mxu0
      %6815 = vdwg.mxu0
      %v6816 = vpack.c.bf16 %v6417, %v6417
      %s6817 = scalar_lea.vmem %s282, 1380
      %v6818 = vld [vmem:[%s6817] sm:$0xff]
      %v6819 = vld [vmem:[%s6817 + $0x8] sm:$0xff]
      %v6820 = vld [vmem:[%s6817 + $0x10] sm:$0xf]
      %v6821 = vld [vmem:[%s6817 + $0x14] sm:$0xff]
      %v6822 = vld [vmem:[%s6817 + $0x1c] sm:$0xff]
      %v6823 = vld [vmem:[%s6817 + $0x24] sm:$0xf]
      %v6824 = vld [vmem:[%s6817 + $0x28] sm:$0x33]
      %v6825 = vld [vmem:[%s6817 + $0x30] sm:$0x33]
      %v6826 = vld [vmem:[%s6817 + $0x38] sm:$0x3]
      %v6836 = vunpack.c.l.b16 %v6818
      %v6837 = vunpack.c.h.b16 %v6818
      %v6838 = vunpack.c.l.b16 %v6819
      %v6839 = vunpack.c.h.b16 %v6819
      %v6840 = vunpack.c.l.b16 %v6820
      %v6841 = vunpack.c.l.b16 %v6821
      %v6842 = vunpack.c.h.b16 %v6821
      %v6843 = vunpack.c.l.b16 %v6822
      %v6844 = vunpack.c.h.b16 %v6822
      %v6845 = vunpack.c.l.b16 %v6823
      %v6846 = vunpack.c.l.b16 %v6824
      %v6847 = vunpack.c.h.b16 %v6824
      %v6848 = vunpack.c.l.b16 %v6825
      %v6849 = vunpack.c.h.b16 %v6825
      %v6850 = vunpack.c.l.b16 %v6826
      %v6851 = vpack.c.b16 %v6841, %v6836
      %v6852 = vpack.c.b16 %v6842, %v6837
      %v6853 = vpack.c.b16 %v6843, %v6838
      %v6854 = vpack.c.b16 %v6844, %v6839
      %v6855 = vpack.c.b16 %v6845, %v6840
      %v6856 = vpack.c.b16 %v6846, %v6846
      %v6857 = vpack.c.b16 %v6847, %v6847
      %v6858 = vpack.c.b16 %v6848, %v6848
      %v6859 = vpack.c.b16 %v6849, %v6849
      %v6860 = vpack.c.b16 %v6850, %v6850
      %v6867 = vsel %vm334, %v6816, 0
      %v6870 = vsel %vm1188, %v6856, 0
      %v6873 = vsel %vm1188, %v6857, 0
      %v6876 = vsel %vm1188, %v6858, 0
      %v6879 = vsel %vm1188, %v6859, 0
      %v6882 = vsel %vm1188, %v6860, 0
      %6884 = vmatprep.subr.bf16.mxu0 0
      %6885 = vmatpush1.bf16.msra.mxu0 0
      %6886 = vmatprep.subr.bf16.mxu0 0
      %6887 = vmatpush1.bf16.msra.mxu0 0
      %6888 = vmatprep.subr.bf16.mxu0 0
      %6889 = vmatpush1.bf16.msra.mxu0 0
      %6890 = vmatprep.subr.bf16.mxu0 0
      %6891 = vmatpush1.bf16.msra.mxu0 0
      %6892 = vmatprep.subr.bf16.mxu0 0
      %6893 = vmatpush1.bf16.msra.mxu0 0
      %6894 = vmatprep.subr.bf16.mxu0 0
      %6895 = vmatpush1.bf16.msra.mxu0 0
      %6896 = vmatprep.subr.bf16.mxu0 %v6873
      %6897 = vmatpush1.bf16.msra.mxu0 %v6870
      %6898 = vmatprep.subr.bf16.mxu0 %v6852
      %6899 = vmatpush1.bf16.msra.mxu0 %v6851
      %6900 = vmatprep.subr.bf16.mxu0 0
      %6901 = vmatpush2.bf16.msra.mxu0 0
      %6902 = vmatprep.subr.bf16.mxu0 0
      %6903 = vmatpush2.bf16.msra.mxu0 0
      %6904 = vmatprep.subr.bf16.mxu0 0
      %6905 = vmatpush2.bf16.msra.mxu0 0
      %6906 = vmatprep.subr.bf16.mxu0 0
      %6907 = vmatpush2.bf16.msra.mxu0 0
      %6908 = vmatprep.subr.bf16.mxu0 0
      %6909 = vmatpush2.bf16.msra.mxu0 0
      %6910 = vmatprep.subr.bf16.mxu0 0
      %6911 = vmatpush2.bf16.msra.mxu0 0
      %6912 = vmatprep.subr.bf16.mxu0 0
      %6913 = vmatpush2.bf16.msra.mxu0 0
      %6914 = vmatprep.subr.bf16.mxu0 0
      %6915 = vmatpush2.bf16.msra.mxu0 0
      %6916 = vmatprep.mubr.bf16.mxu0 0
      %6917 = vmatmul.mubr.bf16.gmra.mxu0 %v6867
      %v6918 = vpop.f32.mrf.mxu0
      %v6919 = vadd.f32 0.0, %v6918
      %v6920 = vpop.f32.mrf.mxu0
      %v6921 = vadd.f32 0.0, %v6920
      %v6922 = vpop.f32.mrf.mxu0
      %v6923 = vpop.f32.mrf.mxu0
      %6924 = vdwg.mxu0
      %6925 = vmatprep.subr.bf16.mxu0 0
      %6926 = vmatpush1.bf16.msra.mxu0 0
      %6927 = vmatprep.subr.bf16.mxu0 0
      %6928 = vmatpush1.bf16.msra.mxu0 0
      %6929 = vmatprep.subr.bf16.mxu0 0
      %6930 = vmatpush1.bf16.msra.mxu0 0
      %6931 = vmatprep.subr.bf16.mxu0 0
      %6932 = vmatpush1.bf16.msra.mxu0 0
      %6933 = vmatprep.subr.bf16.mxu0 0
      %6934 = vmatpush1.bf16.msra.mxu0 0
      %6935 = vmatprep.subr.bf16.mxu0 0
      %6936 = vmatpush1.bf16.msra.mxu0 0
      %6937 = vmatprep.subr.bf16.mxu0 %v6879
      %6938 = vmatpush1.bf16.msra.mxu0 %v6876
      %6939 = vmatprep.subr.bf16.mxu0 %v6854
      %6940 = vmatpush1.bf16.msra.mxu0 %v6853
      %6941 = vmatprep.subr.bf16.mxu0 0
      %6942 = vmatpush2.bf16.msra.mxu0 0
      %6943 = vmatprep.subr.bf16.mxu0 0
      %6944 = vmatpush2.bf16.msra.mxu0 0
      %6945 = vmatprep.subr.bf16.mxu0 0
      %6946 = vmatpush2.bf16.msra.mxu0 0
      %6947 = vmatprep.subr.bf16.mxu0 0
      %6948 = vmatpush2.bf16.msra.mxu0 0
      %6949 = vmatprep.subr.bf16.mxu0 0
      %6950 = vmatpush2.bf16.msra.mxu0 0
      %6951 = vmatprep.subr.bf16.mxu0 0
      %6952 = vmatpush2.bf16.msra.mxu0 0
      %6953 = vmatprep.subr.bf16.mxu0 0
      %6954 = vmatpush2.bf16.msra.mxu0 0
      %6955 = vmatprep.subr.bf16.mxu0 0
      %6956 = vmatpush2.bf16.msra.mxu0 0
      %6957 = vmatprep.mubr.bf16.mxu0 0
      %6958 = vmatmul.mubr.bf16.gmra.mxu0 %v6867
      %v6959 = vpop.f32.mrf.mxu0
      %v6960 = vadd.f32 0.0, %v6959
      %v6961 = vpop.f32.mrf.mxu0
      %v6962 = vadd.f32 0.0, %v6961
      %v6963 = vpop.f32.mrf.mxu0
      %v6964 = vpop.f32.mrf.mxu0
      %6965 = vdwg.mxu0
      %6966 = vmatprep.subr.bf16.mxu0 0
      %6967 = vmatpush1.bf16.msra.mxu0 0
      %6968 = vmatprep.subr.bf16.mxu0 0
      %6969 = vmatpush1.bf16.msra.mxu0 0
      %6970 = vmatprep.subr.bf16.mxu0 0
      %6971 = vmatpush1.bf16.msra.mxu0 0
      %6972 = vmatprep.subr.bf16.mxu0 0
      %6973 = vmatpush1.bf16.msra.mxu0 0
      %6974 = vmatprep.subr.bf16.mxu0 0
      %6975 = vmatpush1.bf16.msra.mxu0 0
      %6976 = vmatprep.subr.bf16.mxu0 0
      %6977 = vmatpush1.bf16.msra.mxu0 0
      %6978 = vmatprep.subr.bf16.mxu0 0
      %6979 = vmatpush1.bf16.msra.mxu0 %v6882
      %6980 = vmatprep.subr.bf16.mxu0 0
      %6981 = vmatpush1.bf16.msra.mxu0 %v6855
      %6982 = vmatprep.subr.bf16.mxu0 0
      %6983 = vmatpush2.bf16.msra.mxu0 0
      %6984 = vmatprep.subr.bf16.mxu0 0
      %6985 = vmatpush2.bf16.msra.mxu0 0
      %6986 = vmatprep.subr.bf16.mxu0 0
      %6987 = vmatpush2.bf16.msra.mxu0 0
      %6988 = vmatprep.subr.bf16.mxu0 0
      %6989 = vmatpush2.bf16.msra.mxu0 0
      %6990 = vmatprep.subr.bf16.mxu0 0
      %6991 = vmatpush2.bf16.msra.mxu0 0
      %6992 = vmatprep.subr.bf16.mxu0 0
      %6993 = vmatpush2.bf16.msra.mxu0 0
      %6994 = vmatprep.subr.bf16.mxu0 0
      %6995 = vmatpush2.bf16.msra.mxu0 0
      %6996 = vmatprep.subr.bf16.mxu0 0
      %6997 = vmatpush2.bf16.msra.mxu0 0
      %6998 = vmatprep.mubr.bf16.mxu0 0
      %6999 = vmatmul.mubr.bf16.gmra.mxu0 %v6867
      %v7000 = vpop.f32.mrf.mxu0
      %v7001 = vadd.f32 0.0, %v7000
      %v7002 = vpop.f32.mrf.mxu0
      %v7003 = vpop.f32.mrf.mxu0
      %v7004 = vpop.f32.mrf.mxu0
      %7005 = vdwg.mxu0
      %v7006 = vadd.f32 %v6729, %v6919
      %v7007 = vadd.f32 %v6731, %v6921
      %v7008 = vadd.f32 %v6770, %v6960
      %v7009 = vadd.f32 %v6772, %v6962
      %v7010 = vadd.f32 %v6811, %v7001
      %v7011 = vpack.c.bf16 %v6418, %v6418
      %s7012 = scalar_lea.vmem %s282, 1440
      %v7013 = vld [vmem:[%s7012] sm:$0xff]
      %v7014 = vld [vmem:[%s7012 + $0x8] sm:$0xff]
      %v7015 = vld [vmem:[%s7012 + $0x10] sm:$0xf]
      %v7016 = vld [vmem:[%s7012 + $0x14] sm:$0xff]
      %v7017 = vld [vmem:[%s7012 + $0x1c] sm:$0xff]
      %v7018 = vld [vmem:[%s7012 + $0x24] sm:$0xf]
      %v7019 = vld [vmem:[%s7012 + $0x28] sm:$0x33]
      %v7020 = vld [vmem:[%s7012 + $0x30] sm:$0x33]
      %v7021 = vld [vmem:[%s7012 + $0x38] sm:$0x3]
      %v7031 = vunpack.c.l.b16 %v7013
      %v7032 = vunpack.c.h.b16 %v7013
      %v7033 = vunpack.c.l.b16 %v7014
      %v7034 = vunpack.c.h.b16 %v7014
      %v7035 = vunpack.c.l.b16 %v7015
      %v7036 = vunpack.c.l.b16 %v7016
      %v7037 = vunpack.c.h.b16 %v7016
      %v7038 = vunpack.c.l.b16 %v7017
      %v7039 = vunpack.c.h.b16 %v7017
      %v7040 = vunpack.c.l.b16 %v7018
      %v7041 = vunpack.c.l.b16 %v7019
      %v7042 = vunpack.c.h.b16 %v7019
      %v7043 = vunpack.c.l.b16 %v7020
      %v7044 = vunpack.c.h.b16 %v7020
      %v7045 = vunpack.c.l.b16 %v7021
      %v7046 = vpack.c.b16 %v7036, %v7031
      %v7047 = vpack.c.b16 %v7037, %v7032
      %v7048 = vpack.c.b16 %v7038, %v7033
      %v7049 = vpack.c.b16 %v7039, %v7034
      %v7050 = vpack.c.b16 %v7040, %v7035
      %v7051 = vpack.c.b16 %v7041, %v7041
      %v7052 = vpack.c.b16 %v7042, %v7042
      %v7053 = vpack.c.b16 %v7043, %v7043
      %v7054 = vpack.c.b16 %v7044, %v7044
      %v7055 = vpack.c.b16 %v7045, %v7045
      %v7062 = vsel %vm334, %v7011, 0
      %v7065 = vsel %vm1188, %v7051, 0
      %v7068 = vsel %vm1188, %v7052, 0
      %v7071 = vsel %vm1188, %v7053, 0
      %v7074 = vsel %vm1188, %v7054, 0
      %v7077 = vsel %vm1188, %v7055, 0
      %7079 = vmatprep.subr.bf16.mxu0 0
      %7080 = vmatpush1.bf16.msra.mxu0 0
      %7081 = vmatprep.subr.bf16.mxu0 0
      %7082 = vmatpush1.bf16.msra.mxu0 0
      %7083 = vmatprep.subr.bf16.mxu0 0
      %7084 = vmatpush1.bf16.msra.mxu0 0
      %7085 = vmatprep.subr.bf16.mxu0 0
      %7086 = vmatpush1.bf16.msra.mxu0 0
      %7087 = vmatprep.subr.bf16.mxu0 0
      %7088 = vmatpush1.bf16.msra.mxu0 0
      %7089 = vmatprep.subr.bf16.mxu0 0
      %7090 = vmatpush1.bf16.msra.mxu0 0
      %7091 = vmatprep.subr.bf16.mxu0 %v7068
      %7092 = vmatpush1.bf16.msra.mxu0 %v7065
      %7093 = vmatprep.subr.bf16.mxu0 %v7047
      %7094 = vmatpush1.bf16.msra.mxu0 %v7046
      %7095 = vmatprep.subr.bf16.mxu0 0
      %7096 = vmatpush2.bf16.msra.mxu0 0
      %7097 = vmatprep.subr.bf16.mxu0 0
      %7098 = vmatpush2.bf16.msra.mxu0 0
      %7099 = vmatprep.subr.bf16.mxu0 0
      %7100 = vmatpush2.bf16.msra.mxu0 0
      %7101 = vmatprep.subr.bf16.mxu0 0
      %7102 = vmatpush2.bf16.msra.mxu0 0
      %7103 = vmatprep.subr.bf16.mxu0 0
      %7104 = vmatpush2.bf16.msra.mxu0 0
      %7105 = vmatprep.subr.bf16.mxu0 0
      %7106 = vmatpush2.bf16.msra.mxu0 0
      %7107 = vmatprep.subr.bf16.mxu0 0
      %7108 = vmatpush2.bf16.msra.mxu0 0
      %7109 = vmatprep.subr.bf16.mxu0 0
      %7110 = vmatpush2.bf16.msra.mxu0 0
      %7111 = vmatprep.mubr.bf16.mxu0 0
      %7112 = vmatmul.mubr.bf16.gmra.mxu0 %v7062
      %v7113 = vpop.f32.mrf.mxu0
      %v7114 = vadd.f32 0.0, %v7113
      %v7115 = vpop.f32.mrf.mxu0
      %v7116 = vadd.f32 0.0, %v7115
      %v7117 = vpop.f32.mrf.mxu0
      %v7118 = vpop.f32.mrf.mxu0
      %7119 = vdwg.mxu0
      %7120 = vmatprep.subr.bf16.mxu0 0
      %7121 = vmatpush1.bf16.msra.mxu0 0
      %7122 = vmatprep.subr.bf16.mxu0 0
      %7123 = vmatpush1.bf16.msra.mxu0 0
      %7124 = vmatprep.subr.bf16.mxu0 0
      %7125 = vmatpush1.bf16.msra.mxu0 0
      %7126 = vmatprep.subr.bf16.mxu0 0
      %7127 = vmatpush1.bf16.msra.mxu0 0
      %7128 = vmatprep.subr.bf16.mxu0 0
      %7129 = vmatpush1.bf16.msra.mxu0 0
      %7130 = vmatprep.subr.bf16.mxu0 0
      %7131 = vmatpush1.bf16.msra.mxu0 0
      %7132 = vmatprep.subr.bf16.mxu0 %v7074
      %7133 = vmatpush1.bf16.msra.mxu0 %v7071
      %7134 = vmatprep.subr.bf16.mxu0 %v7049
      %7135 = vmatpush1.bf16.msra.mxu0 %v7048
      %7136 = vmatprep.subr.bf16.mxu0 0
      %7137 = vmatpush2.bf16.msra.mxu0 0
      %7138 = vmatprep.subr.bf16.mxu0 0
      %7139 = vmatpush2.bf16.msra.mxu0 0
      %7140 = vmatprep.subr.bf16.mxu0 0
      %7141 = vmatpush2.bf16.msra.mxu0 0
      %7142 = vmatprep.subr.bf16.mxu0 0
      %7143 = vmatpush2.bf16.msra.mxu0 0
      %7144 = vmatprep.subr.bf16.mxu0 0
      %7145 = vmatpush2.bf16.msra.mxu0 0
      %7146 = vmatprep.subr.bf16.mxu0 0
      %7147 = vmatpush2.bf16.msra.mxu0 0
      %7148 = vmatprep.subr.bf16.mxu0 0
      %7149 = vmatpush2.bf16.msra.mxu0 0
      %7150 = vmatprep.subr.bf16.mxu0 0
      %7151 = vmatpush2.bf16.msra.mxu0 0
      %7152 = vmatprep.mubr.bf16.mxu0 0
      %7153 = vmatmul.mubr.bf16.gmra.mxu0 %v7062
      %v7154 = vpop.f32.mrf.mxu0
      %v7155 = vadd.f32 0.0, %v7154
      %v7156 = vpop.f32.mrf.mxu0
      %v7157 = vadd.f32 0.0, %v7156
      %v7158 = vpop.f32.mrf.mxu0
      %v7159 = vpop.f32.mrf.mxu0
      %7160 = vdwg.mxu0
      %7161 = vmatprep.subr.bf16.mxu0 0
      %7162 = vmatpush1.bf16.msra.mxu0 0
      %7163 = vmatprep.subr.bf16.mxu0 0
      %7164 = vmatpush1.bf16.msra.mxu0 0
      %7165 = vmatprep.subr.bf16.mxu0 0
      %7166 = vmatpush1.bf16.msra.mxu0 0
      %7167 = vmatprep.subr.bf16.mxu0 0
      %7168 = vmatpush1.bf16.msra.mxu0 0
      %7169 = vmatprep.subr.bf16.mxu0 0
      %7170 = vmatpush1.bf16.msra.mxu0 0
      %7171 = vmatprep.subr.bf16.mxu0 0
      %7172 = vmatpush1.bf16.msra.mxu0 0
      %7173 = vmatprep.subr.bf16.mxu0 0
      %7174 = vmatpush1.bf16.msra.mxu0 %v7077
      %7175 = vmatprep.subr.bf16.mxu0 0
      %7176 = vmatpush1.bf16.msra.mxu0 %v7050
      %7177 = vmatprep.subr.bf16.mxu0 0
      %7178 = vmatpush2.bf16.msra.mxu0 0
      %7179 = vmatprep.subr.bf16.mxu0 0
      %7180 = vmatpush2.bf16.msra.mxu0 0
      %7181 = vmatprep.subr.bf16.mxu0 0
      %7182 = vmatpush2.bf16.msra.mxu0 0
      %7183 = vmatprep.subr.bf16.mxu0 0
      %7184 = vmatpush2.bf16.msra.mxu0 0
      %7185 = vmatprep.subr.bf16.mxu0 0
      %7186 = vmatpush2.bf16.msra.mxu0 0
      %7187 = vmatprep.subr.bf16.mxu0 0
      %7188 = vmatpush2.bf16.msra.mxu0 0
      %7189 = vmatprep.subr.bf16.mxu0 0
      %7190 = vmatpush2.bf16.msra.mxu0 0
      %7191 = vmatprep.subr.bf16.mxu0 0
      %7192 = vmatpush2.bf16.msra.mxu0 0
      %7193 = vmatprep.mubr.bf16.mxu0 0
      %7194 = vmatmul.mubr.bf16.gmra.mxu0 %v7062
      %v7195 = vpop.f32.mrf.mxu0
      %v7196 = vadd.f32 0.0, %v7195
      %v7197 = vpop.f32.mrf.mxu0
      %v7198 = vpop.f32.mrf.mxu0
      %v7199 = vpop.f32.mrf.mxu0
      %7200 = vdwg.mxu0
      %v7201 = vadd.f32 %v7006, %v7114
      %v7202 = vadd.f32 %v7007, %v7116
      %v7203 = vadd.f32 %v7008, %v7155
      %v7204 = vadd.f32 %v7009, %v7157
      %v7205 = vadd.f32 %v7010, %v7196
      %v7206 = vpack.c.bf16 %v6419, %v6419
      %s7207 = scalar_lea.vmem %s282, 1500
      %v7208 = vld [vmem:[%s7207] sm:$0xff]
      %v7209 = vld [vmem:[%s7207 + $0x8] sm:$0xff]
      %v7210 = vld [vmem:[%s7207 + $0x10] sm:$0xf]
      %v7211 = vld [vmem:[%s7207 + $0x14] sm:$0xff]
      %v7212 = vld [vmem:[%s7207 + $0x1c] sm:$0xff]
      %v7213 = vld [vmem:[%s7207 + $0x24] sm:$0xf]
      %v7214 = vld [vmem:[%s7207 + $0x28] sm:$0x33]
      %v7215 = vld [vmem:[%s7207 + $0x30] sm:$0x33]
      %v7216 = vld [vmem:[%s7207 + $0x38] sm:$0x3]
      %v7226 = vunpack.c.l.b16 %v7208
      %v7227 = vunpack.c.h.b16 %v7208
      %v7228 = vunpack.c.l.b16 %v7209
      %v7229 = vunpack.c.h.b16 %v7209
      %v7230 = vunpack.c.l.b16 %v7210
      %v7231 = vunpack.c.l.b16 %v7211
      %v7232 = vunpack.c.h.b16 %v7211
      %v7233 = vunpack.c.l.b16 %v7212
      %v7234 = vunpack.c.h.b16 %v7212
      %v7235 = vunpack.c.l.b16 %v7213
      %v7236 = vunpack.c.l.b16 %v7214
      %v7237 = vunpack.c.h.b16 %v7214
      %v7238 = vunpack.c.l.b16 %v7215
      %v7239 = vunpack.c.h.b16 %v7215
      %v7240 = vunpack.c.l.b16 %v7216
      %v7241 = vpack.c.b16 %v7231, %v7226
      %v7242 = vpack.c.b16 %v7232, %v7227
      %v7243 = vpack.c.b16 %v7233, %v7228
      %v7244 = vpack.c.b16 %v7234, %v7229
      %v7245 = vpack.c.b16 %v7235, %v7230
      %v7246 = vpack.c.b16 %v7236, %v7236
      %v7247 = vpack.c.b16 %v7237, %v7237
      %v7248 = vpack.c.b16 %v7238, %v7238
      %v7249 = vpack.c.b16 %v7239, %v7239
      %v7250 = vpack.c.b16 %v7240, %v7240
      %v7257 = vsel %vm334, %v7206, 0
      %v7260 = vsel %vm1188, %v7246, 0
      %v7263 = vsel %vm1188, %v7247, 0
      %v7266 = vsel %vm1188, %v7248, 0
      %v7269 = vsel %vm1188, %v7249, 0
      %v7272 = vsel %vm1188, %v7250, 0
      %7274 = vmatprep.subr.bf16.mxu0 0
      %7275 = vmatpush1.bf16.msra.mxu0 0
      %7276 = vmatprep.subr.bf16.mxu0 0
      %7277 = vmatpush1.bf16.msra.mxu0 0
      %7278 = vmatprep.subr.bf16.mxu0 0
      %7279 = vmatpush1.bf16.msra.mxu0 0
      %7280 = vmatprep.subr.bf16.mxu0 0
      %7281 = vmatpush1.bf16.msra.mxu0 0
      %7282 = vmatprep.subr.bf16.mxu0 0
      %7283 = vmatpush1.bf16.msra.mxu0 0
      %7284 = vmatprep.subr.bf16.mxu0 0
      %7285 = vmatpush1.bf16.msra.mxu0 0
      %7286 = vmatprep.subr.bf16.mxu0 %v7263
      %7287 = vmatpush1.bf16.msra.mxu0 %v7260
      %7288 = vmatprep.subr.bf16.mxu0 %v7242
      %7289 = vmatpush1.bf16.msra.mxu0 %v7241
      %7290 = vmatprep.subr.bf16.mxu0 0
      %7291 = vmatpush2.bf16.msra.mxu0 0
      %7292 = vmatprep.subr.bf16.mxu0 0
      %7293 = vmatpush2.bf16.msra.mxu0 0
      %7294 = vmatprep.subr.bf16.mxu0 0
      %7295 = vmatpush2.bf16.msra.mxu0 0
      %7296 = vmatprep.subr.bf16.mxu0 0
      %7297 = vmatpush2.bf16.msra.mxu0 0
      %7298 = vmatprep.subr.bf16.mxu0 0
      %7299 = vmatpush2.bf16.msra.mxu0 0
      %7300 = vmatprep.subr.bf16.mxu0 0
      %7301 = vmatpush2.bf16.msra.mxu0 0
      %7302 = vmatprep.subr.bf16.mxu0 0
      %7303 = vmatpush2.bf16.msra.mxu0 0
      %7304 = vmatprep.subr.bf16.mxu0 0
      %7305 = vmatpush2.bf16.msra.mxu0 0
      %7306 = vmatprep.mubr.bf16.mxu0 0
      %7307 = vmatmul.mubr.bf16.gmra.mxu0 %v7257
      %v7308 = vpop.f32.mrf.mxu0
      %v7309 = vadd.f32 0.0, %v7308
      %v7310 = vpop.f32.mrf.mxu0
      %v7311 = vadd.f32 0.0, %v7310
      %v7312 = vpop.f32.mrf.mxu0
      %v7313 = vpop.f32.mrf.mxu0
      %7314 = vdwg.mxu0
      %7315 = vmatprep.subr.bf16.mxu0 0
      %7316 = vmatpush1.bf16.msra.mxu0 0
      %7317 = vmatprep.subr.bf16.mxu0 0
      %7318 = vmatpush1.bf16.msra.mxu0 0
      %7319 = vmatprep.subr.bf16.mxu0 0
      %7320 = vmatpush1.bf16.msra.mxu0 0
      %7321 = vmatprep.subr.bf16.mxu0 0
      %7322 = vmatpush1.bf16.msra.mxu0 0
      %7323 = vmatprep.subr.bf16.mxu0 0
      %7324 = vmatpush1.bf16.msra.mxu0 0
      %7325 = vmatprep.subr.bf16.mxu0 0
      %7326 = vmatpush1.bf16.msra.mxu0 0
      %7327 = vmatprep.subr.bf16.mxu0 %v7269
      %7328 = vmatpush1.bf16.msra.mxu0 %v7266
      %7329 = vmatprep.subr.bf16.mxu0 %v7244
      %7330 = vmatpush1.bf16.msra.mxu0 %v7243
      %7331 = vmatprep.subr.bf16.mxu0 0
      %7332 = vmatpush2.bf16.msra.mxu0 0
      %7333 = vmatprep.subr.bf16.mxu0 0
      %7334 = vmatpush2.bf16.msra.mxu0 0
      %7335 = vmatprep.subr.bf16.mxu0 0
      %7336 = vmatpush2.bf16.msra.mxu0 0
      %7337 = vmatprep.subr.bf16.mxu0 0
      %7338 = vmatpush2.bf16.msra.mxu0 0
      %7339 = vmatprep.subr.bf16.mxu0 0
      %7340 = vmatpush2.bf16.msra.mxu0 0
      %7341 = vmatprep.subr.bf16.mxu0 0
      %7342 = vmatpush2.bf16.msra.mxu0 0
      %7343 = vmatprep.subr.bf16.mxu0 0
      %7344 = vmatpush2.bf16.msra.mxu0 0
      %7345 = vmatprep.subr.bf16.mxu0 0
      %7346 = vmatpush2.bf16.msra.mxu0 0
      %7347 = vmatprep.mubr.bf16.mxu0 0
      %7348 = vmatmul.mubr.bf16.gmra.mxu0 %v7257
      %v7349 = vpop.f32.mrf.mxu0
      %v7350 = vadd.f32 0.0, %v7349
      %v7351 = vpop.f32.mrf.mxu0
      %v7352 = vadd.f32 0.0, %v7351
      %v7353 = vpop.f32.mrf.mxu0
      %v7354 = vpop.f32.mrf.mxu0
      %7355 = vdwg.mxu0
      %7356 = vmatprep.subr.bf16.mxu0 0
      %7357 = vmatpush1.bf16.msra.mxu0 0
      %7358 = vmatprep.subr.bf16.mxu0 0
      %7359 = vmatpush1.bf16.msra.mxu0 0
      %7360 = vmatprep.subr.bf16.mxu0 0
      %7361 = vmatpush1.bf16.msra.mxu0 0
      %7362 = vmatprep.subr.bf16.mxu0 0
      %7363 = vmatpush1.bf16.msra.mxu0 0
      %7364 = vmatprep.subr.bf16.mxu0 0
      %7365 = vmatpush1.bf16.msra.mxu0 0
      %7366 = vmatprep.subr.bf16.mxu0 0
      %7367 = vmatpush1.bf16.msra.mxu0 0
      %7368 = vmatprep.subr.bf16.mxu0 0
      %7369 = vmatpush1.bf16.msra.mxu0 %v7272
      %7370 = vmatprep.subr.bf16.mxu0 0
      %7371 = vmatpush1.bf16.msra.mxu0 %v7245
      %7372 = vmatprep.subr.bf16.mxu0 0
      %7373 = vmatpush2.bf16.msra.mxu0 0
      %7374 = vmatprep.subr.bf16.mxu0 0
      %7375 = vmatpush2.bf16.msra.mxu0 0
      %7376 = vmatprep.subr.bf16.mxu0 0
      %7377 = vmatpush2.bf16.msra.mxu0 0
      %7378 = vmatprep.subr.bf16.mxu0 0
      %7379 = vmatpush2.bf16.msra.mxu0 0
      %7380 = vmatprep.subr.bf16.mxu0 0
      %7381 = vmatpush2.bf16.msra.mxu0 0
      %7382 = vmatprep.subr.bf16.mxu0 0
      %7383 = vmatpush2.bf16.msra.mxu0 0
      %7384 = vmatprep.subr.bf16.mxu0 0
      %7385 = vmatpush2.bf16.msra.mxu0 0
      %7386 = vmatprep.subr.bf16.mxu0 0
      %7387 = vmatpush2.bf16.msra.mxu0 0
      %7388 = vmatprep.mubr.bf16.mxu0 0
      %7389 = vmatmul.mubr.bf16.gmra.mxu0 %v7257
      %v7390 = vpop.f32.mrf.mxu0
      %v7391 = vadd.f32 0.0, %v7390
      %v7392 = vpop.f32.mrf.mxu0
      %v7393 = vpop.f32.mrf.mxu0
      %v7394 = vpop.f32.mrf.mxu0
      %7395 = vdwg.mxu0
      %v7396 = vadd.f32 %v7201, %v7309
      %v7397 = vadd.f32 %v7202, %v7311
      %v7398 = vadd.f32 %v7203, %v7350
      %v7399 = vadd.f32 %v7204, %v7352
      %v7400 = vadd.f32 %v7205, %v7391
      %v7401 = vpack.c.bf16 %v6420, %v6420
      %s7402 = scalar_lea.vmem %s282, 1560
      %v7403 = vld [vmem:[%s7402] sm:$0xff]
      %v7404 = vld [vmem:[%s7402 + $0x8] sm:$0xff]
      %v7405 = vld [vmem:[%s7402 + $0x10] sm:$0xf]
      %v7406 = vld [vmem:[%s7402 + $0x14] sm:$0xff]
      %v7407 = vld [vmem:[%s7402 + $0x1c] sm:$0xff]
      %v7408 = vld [vmem:[%s7402 + $0x24] sm:$0xf]
      %v7409 = vld [vmem:[%s7402 + $0x28] sm:$0x33]
      %v7410 = vld [vmem:[%s7402 + $0x30] sm:$0x33]
      %v7411 = vld [vmem:[%s7402 + $0x38] sm:$0x3]
      %v7421 = vunpack.c.l.b16 %v7403
      %v7422 = vunpack.c.h.b16 %v7403
      %v7423 = vunpack.c.l.b16 %v7404
      %v7424 = vunpack.c.h.b16 %v7404
      %v7425 = vunpack.c.l.b16 %v7405
      %v7426 = vunpack.c.l.b16 %v7406
      %v7427 = vunpack.c.h.b16 %v7406
      %v7428 = vunpack.c.l.b16 %v7407
      %v7429 = vunpack.c.h.b16 %v7407
      %v7430 = vunpack.c.l.b16 %v7408
      %v7431 = vunpack.c.l.b16 %v7409
      %v7432 = vunpack.c.h.b16 %v7409
      %v7433 = vunpack.c.l.b16 %v7410
      %v7434 = vunpack.c.h.b16 %v7410
      %v7435 = vunpack.c.l.b16 %v7411
      %v7436 = vpack.c.b16 %v7426, %v7421
      %v7437 = vpack.c.b16 %v7427, %v7422
      %v7438 = vpack.c.b16 %v7428, %v7423
      %v7439 = vpack.c.b16 %v7429, %v7424
      %v7440 = vpack.c.b16 %v7430, %v7425
      %v7441 = vpack.c.b16 %v7431, %v7431
      %v7442 = vpack.c.b16 %v7432, %v7432
      %v7443 = vpack.c.b16 %v7433, %v7433
      %v7444 = vpack.c.b16 %v7434, %v7434
      %v7445 = vpack.c.b16 %v7435, %v7435
      %v7452 = vsel %vm334, %v7401, 0
      %v7455 = vsel %vm1188, %v7441, 0
      %v7458 = vsel %vm1188, %v7442, 0
      %v7461 = vsel %vm1188, %v7443, 0
      %v7464 = vsel %vm1188, %v7444, 0
      %v7467 = vsel %vm1188, %v7445, 0
      %7469 = vmatprep.subr.bf16.mxu0 0
      %7470 = vmatpush1.bf16.msra.mxu0 0
      %7471 = vmatprep.subr.bf16.mxu0 0
      %7472 = vmatpush1.bf16.msra.mxu0 0
      %7473 = vmatprep.subr.bf16.mxu0 0
      %7474 = vmatpush1.bf16.msra.mxu0 0
      %7475 = vmatprep.subr.bf16.mxu0 0
      %7476 = vmatpush1.bf16.msra.mxu0 0
      %7477 = vmatprep.subr.bf16.mxu0 0
      %7478 = vmatpush1.bf16.msra.mxu0 0
      %7479 = vmatprep.subr.bf16.mxu0 0
      %7480 = vmatpush1.bf16.msra.mxu0 0
      %7481 = vmatprep.subr.bf16.mxu0 %v7458
      %7482 = vmatpush1.bf16.msra.mxu0 %v7455
      %7483 = vmatprep.subr.bf16.mxu0 %v7437
      %7484 = vmatpush1.bf16.msra.mxu0 %v7436
      %7485 = vmatprep.subr.bf16.mxu0 0
      %7486 = vmatpush2.bf16.msra.mxu0 0
      %7487 = vmatprep.subr.bf16.mxu0 0
      %7488 = vmatpush2.bf16.msra.mxu0 0
      %7489 = vmatprep.subr.bf16.mxu0 0
      %7490 = vmatpush2.bf16.msra.mxu0 0
      %7491 = vmatprep.subr.bf16.mxu0 0
      %7492 = vmatpush2.bf16.msra.mxu0 0
      %7493 = vmatprep.subr.bf16.mxu0 0
      %7494 = vmatpush2.bf16.msra.mxu0 0
      %7495 = vmatprep.subr.bf16.mxu0 0
      %7496 = vmatpush2.bf16.msra.mxu0 0
      %7497 = vmatprep.subr.bf16.mxu0 0
      %7498 = vmatpush2.bf16.msra.mxu0 0
      %7499 = vmatprep.subr.bf16.mxu0 0
      %7500 = vmatpush2.bf16.msra.mxu0 0
      %7501 = vmatprep.mubr.bf16.mxu0 0
      %7502 = vmatmul.mubr.bf16.gmra.mxu0 %v7452
      %v7503 = vpop.f32.mrf.mxu0
      %v7504 = vadd.f32 0.0, %v7503
      %v7505 = vpop.f32.mrf.mxu0
      %v7506 = vadd.f32 0.0, %v7505
      %v7507 = vpop.f32.mrf.mxu0
      %v7508 = vpop.f32.mrf.mxu0
      %7509 = vdwg.mxu0
      %7510 = vmatprep.subr.bf16.mxu0 0
      %7511 = vmatpush1.bf16.msra.mxu0 0
      %7512 = vmatprep.subr.bf16.mxu0 0
      %7513 = vmatpush1.bf16.msra.mxu0 0
      %7514 = vmatprep.subr.bf16.mxu0 0
      %7515 = vmatpush1.bf16.msra.mxu0 0
      %7516 = vmatprep.subr.bf16.mxu0 0
      %7517 = vmatpush1.bf16.msra.mxu0 0
      %7518 = vmatprep.subr.bf16.mxu0 0
      %7519 = vmatpush1.bf16.msra.mxu0 0
      %7520 = vmatprep.subr.bf16.mxu0 0
      %7521 = vmatpush1.bf16.msra.mxu0 0
      %7522 = vmatprep.subr.bf16.mxu0 %v7464
      %7523 = vmatpush1.bf16.msra.mxu0 %v7461
      %7524 = vmatprep.subr.bf16.mxu0 %v7439
      %7525 = vmatpush1.bf16.msra.mxu0 %v7438
      %7526 = vmatprep.subr.bf16.mxu0 0
      %7527 = vmatpush2.bf16.msra.mxu0 0
      %7528 = vmatprep.subr.bf16.mxu0 0
      %7529 = vmatpush2.bf16.msra.mxu0 0
      %7530 = vmatprep.subr.bf16.mxu0 0
      %7531 = vmatpush2.bf16.msra.mxu0 0
      %7532 = vmatprep.subr.bf16.mxu0 0
      %7533 = vmatpush2.bf16.msra.mxu0 0
      %7534 = vmatprep.subr.bf16.mxu0 0
      %7535 = vmatpush2.bf16.msra.mxu0 0
      %7536 = vmatprep.subr.bf16.mxu0 0
      %7537 = vmatpush2.bf16.msra.mxu0 0
      %7538 = vmatprep.subr.bf16.mxu0 0
      %7539 = vmatpush2.bf16.msra.mxu0 0
      %7540 = vmatprep.subr.bf16.mxu0 0
      %7541 = vmatpush2.bf16.msra.mxu0 0
      %7542 = vmatprep.mubr.bf16.mxu0 0
      %7543 = vmatmul.mubr.bf16.gmra.mxu0 %v7452
      %v7544 = vpop.f32.mrf.mxu0
      %v7545 = vadd.f32 0.0, %v7544
      %v7546 = vpop.f32.mrf.mxu0
      %v7547 = vadd.f32 0.0, %v7546
      %v7548 = vpop.f32.mrf.mxu0
      %v7549 = vpop.f32.mrf.mxu0
      %7550 = vdwg.mxu0
      %7551 = vmatprep.subr.bf16.mxu0 0
      %7552 = vmatpush1.bf16.msra.mxu0 0
      %7553 = vmatprep.subr.bf16.mxu0 0
      %7554 = vmatpush1.bf16.msra.mxu0 0
      %7555 = vmatprep.subr.bf16.mxu0 0
      %7556 = vmatpush1.bf16.msra.mxu0 0
      %7557 = vmatprep.subr.bf16.mxu0 0
      %7558 = vmatpush1.bf16.msra.mxu0 0
      %7559 = vmatprep.subr.bf16.mxu0 0
      %7560 = vmatpush1.bf16.msra.mxu0 0
      %7561 = vmatprep.subr.bf16.mxu0 0
      %7562 = vmatpush1.bf16.msra.mxu0 0
      %7563 = vmatprep.subr.bf16.mxu0 0
      %7564 = vmatpush1.bf16.msra.mxu0 %v7467
      %7565 = vmatprep.subr.bf16.mxu0 0
      %7566 = vmatpush1.bf16.msra.mxu0 %v7440
      %7567 = vmatprep.subr.bf16.mxu0 0
      %7568 = vmatpush2.bf16.msra.mxu0 0
      %7569 = vmatprep.subr.bf16.mxu0 0
      %7570 = vmatpush2.bf16.msra.mxu0 0
      %7571 = vmatprep.subr.bf16.mxu0 0
      %7572 = vmatpush2.bf16.msra.mxu0 0
      %7573 = vmatprep.subr.bf16.mxu0 0
      %7574 = vmatpush2.bf16.msra.mxu0 0
      %7575 = vmatprep.subr.bf16.mxu0 0
      %7576 = vmatpush2.bf16.msra.mxu0 0
      %7577 = vmatprep.subr.bf16.mxu0 0
      %7578 = vmatpush2.bf16.msra.mxu0 0
      %7579 = vmatprep.subr.bf16.mxu0 0
      %7580 = vmatpush2.bf16.msra.mxu0 0
      %7581 = vmatprep.subr.bf16.mxu0 0
      %7582 = vmatpush2.bf16.msra.mxu0 0
      %7583 = vmatprep.mubr.bf16.mxu0 0
      %7584 = vmatmul.mubr.bf16.gmra.mxu0 %v7452
      %v7585 = vpop.f32.mrf.mxu0
      %v7586 = vadd.f32 0.0, %v7585
      %v7587 = vpop.f32.mrf.mxu0
      %v7588 = vpop.f32.mrf.mxu0
      %v7589 = vpop.f32.mrf.mxu0
      %7590 = vdwg.mxu0
      %v7591 = vadd.f32 %v7396, %v7504
      %v7592 = vadd.f32 %v7397, %v7506
      %v7593 = vadd.f32 %v7398, %v7545
      %v7594 = vadd.f32 %v7399, %v7547
      %v7595 = vadd.f32 %v7400, %v7586
      %v7596 = vpack.c.bf16 %v6421, %v6421
      %s7597 = scalar_lea.vmem %s282, 1620
      %v7598 = vld [vmem:[%s7597] sm:$0xff]
      %v7599 = vld [vmem:[%s7597 + $0x8] sm:$0xff]
      %v7600 = vld [vmem:[%s7597 + $0x10] sm:$0xf]
      %v7601 = vld [vmem:[%s7597 + $0x14] sm:$0xff]
      %v7602 = vld [vmem:[%s7597 + $0x1c] sm:$0xff]
      %v7603 = vld [vmem:[%s7597 + $0x24] sm:$0xf]
      %v7604 = vld [vmem:[%s7597 + $0x28] sm:$0x33]
      %v7605 = vld [vmem:[%s7597 + $0x30] sm:$0x33]
      %v7606 = vld [vmem:[%s7597 + $0x38] sm:$0x3]
      %v7616 = vunpack.c.l.b16 %v7598
      %v7617 = vunpack.c.h.b16 %v7598
      %v7618 = vunpack.c.l.b16 %v7599
      %v7619 = vunpack.c.h.b16 %v7599
      %v7620 = vunpack.c.l.b16 %v7600
      %v7621 = vunpack.c.l.b16 %v7601
      %v7622 = vunpack.c.h.b16 %v7601
      %v7623 = vunpack.c.l.b16 %v7602
      %v7624 = vunpack.c.h.b16 %v7602
      %v7625 = vunpack.c.l.b16 %v7603
      %v7626 = vunpack.c.l.b16 %v7604
      %v7627 = vunpack.c.h.b16 %v7604
      %v7628 = vunpack.c.l.b16 %v7605
      %v7629 = vunpack.c.h.b16 %v7605
      %v7630 = vunpack.c.l.b16 %v7606
      %v7631 = vpack.c.b16 %v7621, %v7616
      %v7632 = vpack.c.b16 %v7622, %v7617
      %v7633 = vpack.c.b16 %v7623, %v7618
      %v7634 = vpack.c.b16 %v7624, %v7619
      %v7635 = vpack.c.b16 %v7625, %v7620
      %v7636 = vpack.c.b16 %v7626, %v7626
      %v7637 = vpack.c.b16 %v7627, %v7627
      %v7638 = vpack.c.b16 %v7628, %v7628
      %v7639 = vpack.c.b16 %v7629, %v7629
      %v7640 = vpack.c.b16 %v7630, %v7630
      %v7647 = vsel %vm334, %v7596, 0
      %v7650 = vsel %vm1188, %v7636, 0
      %v7653 = vsel %vm1188, %v7637, 0
      %v7656 = vsel %vm1188, %v7638, 0
      %v7659 = vsel %vm1188, %v7639, 0
      %v7662 = vsel %vm1188, %v7640, 0
      %7664 = vmatprep.subr.bf16.mxu0 0
      %7665 = vmatpush1.bf16.msra.mxu0 0
      %7666 = vmatprep.subr.bf16.mxu0 0
      %7667 = vmatpush1.bf16.msra.mxu0 0
      %7668 = vmatprep.subr.bf16.mxu0 0
      %7669 = vmatpush1.bf16.msra.mxu0 0
      %7670 = vmatprep.subr.bf16.mxu0 0
      %7671 = vmatpush1.bf16.msra.mxu0 0
      %7672 = vmatprep.subr.bf16.mxu0 0
      %7673 = vmatpush1.bf16.msra.mxu0 0
      %7674 = vmatprep.subr.bf16.mxu0 0
      %7675 = vmatpush1.bf16.msra.mxu0 0
      %7676 = vmatprep.subr.bf16.mxu0 %v7653
      %7677 = vmatpush1.bf16.msra.mxu0 %v7650
      %7678 = vmatprep.subr.bf16.mxu0 %v7632
      %7679 = vmatpush1.bf16.msra.mxu0 %v7631
      %7680 = vmatprep.subr.bf16.mxu0 0
      %7681 = vmatpush2.bf16.msra.mxu0 0
      %7682 = vmatprep.subr.bf16.mxu0 0
      %7683 = vmatpush2.bf16.msra.mxu0 0
      %7684 = vmatprep.subr.bf16.mxu0 0
      %7685 = vmatpush2.bf16.msra.mxu0 0
      %7686 = vmatprep.subr.bf16.mxu0 0
      %7687 = vmatpush2.bf16.msra.mxu0 0
      %7688 = vmatprep.subr.bf16.mxu0 0
      %7689 = vmatpush2.bf16.msra.mxu0 0
      %7690 = vmatprep.subr.bf16.mxu0 0
      %7691 = vmatpush2.bf16.msra.mxu0 0
      %7692 = vmatprep.subr.bf16.mxu0 0
      %7693 = vmatpush2.bf16.msra.mxu0 0
      %7694 = vmatprep.subr.bf16.mxu0 0
      %7695 = vmatpush2.bf16.msra.mxu0 0
      %7696 = vmatprep.mubr.bf16.mxu0 0
      %7697 = vmatmul.mubr.bf16.gmra.mxu0 %v7647
      %v7698 = vpop.f32.mrf.mxu0
      %v7699 = vadd.f32 0.0, %v7698
      %v7700 = vpop.f32.mrf.mxu0
      %v7701 = vadd.f32 0.0, %v7700
      %v7702 = vpop.f32.mrf.mxu0
      %v7703 = vpop.f32.mrf.mxu0
      %7704 = vdwg.mxu0
      %7705 = vmatprep.subr.bf16.mxu0 0
      %7706 = vmatpush1.bf16.msra.mxu0 0
      %7707 = vmatprep.subr.bf16.mxu0 0
      %7708 = vmatpush1.bf16.msra.mxu0 0
      %7709 = vmatprep.subr.bf16.mxu0 0
      %7710 = vmatpush1.bf16.msra.mxu0 0
      %7711 = vmatprep.subr.bf16.mxu0 0
      %7712 = vmatpush1.bf16.msra.mxu0 0
      %7713 = vmatprep.subr.bf16.mxu0 0
      %7714 = vmatpush1.bf16.msra.mxu0 0
      %7715 = vmatprep.subr.bf16.mxu0 0
      %7716 = vmatpush1.bf16.msra.mxu0 0
      %7717 = vmatprep.subr.bf16.mxu0 %v7659
      %7718 = vmatpush1.bf16.msra.mxu0 %v7656
      %7719 = vmatprep.subr.bf16.mxu0 %v7634
      %7720 = vmatpush1.bf16.msra.mxu0 %v7633
      %7721 = vmatprep.subr.bf16.mxu0 0
      %7722 = vmatpush2.bf16.msra.mxu0 0
      %7723 = vmatprep.subr.bf16.mxu0 0
      %7724 = vmatpush2.bf16.msra.mxu0 0
      %7725 = vmatprep.subr.bf16.mxu0 0
      %7726 = vmatpush2.bf16.msra.mxu0 0
      %7727 = vmatprep.subr.bf16.mxu0 0
      %7728 = vmatpush2.bf16.msra.mxu0 0
      %7729 = vmatprep.subr.bf16.mxu0 0
      %7730 = vmatpush2.bf16.msra.mxu0 0
      %7731 = vmatprep.subr.bf16.mxu0 0
      %7732 = vmatpush2.bf16.msra.mxu0 0
      %7733 = vmatprep.subr.bf16.mxu0 0
      %7734 = vmatpush2.bf16.msra.mxu0 0
      %7735 = vmatprep.subr.bf16.mxu0 0
      %7736 = vmatpush2.bf16.msra.mxu0 0
      %7737 = vmatprep.mubr.bf16.mxu0 0
      %7738 = vmatmul.mubr.bf16.gmra.mxu0 %v7647
      %v7739 = vpop.f32.mrf.mxu0
      %v7740 = vadd.f32 0.0, %v7739
      %v7741 = vpop.f32.mrf.mxu0
      %v7742 = vadd.f32 0.0, %v7741
      %v7743 = vpop.f32.mrf.mxu0
      %v7744 = vpop.f32.mrf.mxu0
      %7745 = vdwg.mxu0
      %7746 = vmatprep.subr.bf16.mxu0 0
      %7747 = vmatpush1.bf16.msra.mxu0 0
      %7748 = vmatprep.subr.bf16.mxu0 0
      %7749 = vmatpush1.bf16.msra.mxu0 0
      %7750 = vmatprep.subr.bf16.mxu0 0
      %7751 = vmatpush1.bf16.msra.mxu0 0
      %7752 = vmatprep.subr.bf16.mxu0 0
      %7753 = vmatpush1.bf16.msra.mxu0 0
      %7754 = vmatprep.subr.bf16.mxu0 0
      %7755 = vmatpush1.bf16.msra.mxu0 0
      %7756 = vmatprep.subr.bf16.mxu0 0
      %7757 = vmatpush1.bf16.msra.mxu0 0
      %7758 = vmatprep.subr.bf16.mxu0 0
      %7759 = vmatpush1.bf16.msra.mxu0 %v7662
      %7760 = vmatprep.subr.bf16.mxu0 0
      %7761 = vmatpush1.bf16.msra.mxu0 %v7635
      %7762 = vmatprep.subr.bf16.mxu0 0
      %7763 = vmatpush2.bf16.msra.mxu0 0
      %7764 = vmatprep.subr.bf16.mxu0 0
      %7765 = vmatpush2.bf16.msra.mxu0 0
      %7766 = vmatprep.subr.bf16.mxu0 0
      %7767 = vmatpush2.bf16.msra.mxu0 0
      %7768 = vmatprep.subr.bf16.mxu0 0
      %7769 = vmatpush2.bf16.msra.mxu0 0
      %7770 = vmatprep.subr.bf16.mxu0 0
      %7771 = vmatpush2.bf16.msra.mxu0 0
      %7772 = vmatprep.subr.bf16.mxu0 0
      %7773 = vmatpush2.bf16.msra.mxu0 0
      %7774 = vmatprep.subr.bf16.mxu0 0
      %7775 = vmatpush2.bf16.msra.mxu0 0
      %7776 = vmatprep.subr.bf16.mxu0 0
      %7777 = vmatpush2.bf16.msra.mxu0 0
      %7778 = vmatprep.mubr.bf16.mxu0 0
      %7779 = vmatmul.mubr.bf16.gmra.mxu0 %v7647
      %v7780 = vpop.f32.mrf.mxu0
      %v7781 = vadd.f32 0.0, %v7780
      %v7782 = vpop.f32.mrf.mxu0
      %v7783 = vpop.f32.mrf.mxu0
      %v7784 = vpop.f32.mrf.mxu0
      %7785 = vdwg.mxu0
      %v7786 = vadd.f32 %v7591, %v7699
      %v7787 = vadd.f32 %v7592, %v7701
      %v7788 = vadd.f32 %v7593, %v7740
      %v7789 = vadd.f32 %v7594, %v7742
      %v7790 = vadd.f32 %v7595, %v7781
      %v7791 = vpack.c.bf16 %v6422, %v6422
      %s7792 = scalar_lea.vmem %s282, 1680
      %v7793 = vld [vmem:[%s7792] sm:$0xff]
      %v7794 = vld [vmem:[%s7792 + $0x8] sm:$0xff]
      %v7795 = vld [vmem:[%s7792 + $0x10] sm:$0xf]
      %v7796 = vld [vmem:[%s7792 + $0x14] sm:$0xff]
      %v7797 = vld [vmem:[%s7792 + $0x1c] sm:$0xff]
      %v7798 = vld [vmem:[%s7792 + $0x24] sm:$0xf]
      %v7799 = vld [vmem:[%s7792 + $0x28] sm:$0x33]
      %v7800 = vld [vmem:[%s7792 + $0x30] sm:$0x33]
      %v7801 = vld [vmem:[%s7792 + $0x38] sm:$0x3]
      %v7811 = vunpack.c.l.b16 %v7793
      %v7812 = vunpack.c.h.b16 %v7793
      %v7813 = vunpack.c.l.b16 %v7794
      %v7814 = vunpack.c.h.b16 %v7794
      %v7815 = vunpack.c.l.b16 %v7795
      %v7816 = vunpack.c.l.b16 %v7796
      %v7817 = vunpack.c.h.b16 %v7796
      %v7818 = vunpack.c.l.b16 %v7797
      %v7819 = vunpack.c.h.b16 %v7797
      %v7820 = vunpack.c.l.b16 %v7798
      %v7821 = vunpack.c.l.b16 %v7799
      %v7822 = vunpack.c.h.b16 %v7799
      %v7823 = vunpack.c.l.b16 %v7800
      %v7824 = vunpack.c.h.b16 %v7800
      %v7825 = vunpack.c.l.b16 %v7801
      %v7826 = vpack.c.b16 %v7816, %v7811
      %v7827 = vpack.c.b16 %v7817, %v7812
      %v7828 = vpack.c.b16 %v7818, %v7813
      %v7829 = vpack.c.b16 %v7819, %v7814
      %v7830 = vpack.c.b16 %v7820, %v7815
      %v7831 = vpack.c.b16 %v7821, %v7821
      %v7832 = vpack.c.b16 %v7822, %v7822
      %v7833 = vpack.c.b16 %v7823, %v7823
      %v7834 = vpack.c.b16 %v7824, %v7824
      %v7835 = vpack.c.b16 %v7825, %v7825
      %v7842 = vsel %vm334, %v7791, 0
      %v7845 = vsel %vm1188, %v7831, 0
      %v7848 = vsel %vm1188, %v7832, 0
      %v7851 = vsel %vm1188, %v7833, 0
      %v7854 = vsel %vm1188, %v7834, 0
      %v7857 = vsel %vm1188, %v7835, 0
      %7859 = vmatprep.subr.bf16.mxu0 0
      %7860 = vmatpush1.bf16.msra.mxu0 0
      %7861 = vmatprep.subr.bf16.mxu0 0
      %7862 = vmatpush1.bf16.msra.mxu0 0
      %7863 = vmatprep.subr.bf16.mxu0 0
      %7864 = vmatpush1.bf16.msra.mxu0 0
      %7865 = vmatprep.subr.bf16.mxu0 0
      %7866 = vmatpush1.bf16.msra.mxu0 0
      %7867 = vmatprep.subr.bf16.mxu0 0
      %7868 = vmatpush1.bf16.msra.mxu0 0
      %7869 = vmatprep.subr.bf16.mxu0 0
      %7870 = vmatpush1.bf16.msra.mxu0 0
      %7871 = vmatprep.subr.bf16.mxu0 %v7848
      %7872 = vmatpush1.bf16.msra.mxu0 %v7845
      %7873 = vmatprep.subr.bf16.mxu0 %v7827
      %7874 = vmatpush1.bf16.msra.mxu0 %v7826
      %7875 = vmatprep.subr.bf16.mxu0 0
      %7876 = vmatpush2.bf16.msra.mxu0 0
      %7877 = vmatprep.subr.bf16.mxu0 0
      %7878 = vmatpush2.bf16.msra.mxu0 0
      %7879 = vmatprep.subr.bf16.mxu0 0
      %7880 = vmatpush2.bf16.msra.mxu0 0
      %7881 = vmatprep.subr.bf16.mxu0 0
      %7882 = vmatpush2.bf16.msra.mxu0 0
      %7883 = vmatprep.subr.bf16.mxu0 0
      %7884 = vmatpush2.bf16.msra.mxu0 0
      %7885 = vmatprep.subr.bf16.mxu0 0
      %7886 = vmatpush2.bf16.msra.mxu0 0
      %7887 = vmatprep.subr.bf16.mxu0 0
      %7888 = vmatpush2.bf16.msra.mxu0 0
      %7889 = vmatprep.subr.bf16.mxu0 0
      %7890 = vmatpush2.bf16.msra.mxu0 0
      %7891 = vmatprep.mubr.bf16.mxu0 0
      %7892 = vmatmul.mubr.bf16.gmra.mxu0 %v7842
      %v7893 = vpop.f32.mrf.mxu0
      %v7894 = vadd.f32 0.0, %v7893
      %v7895 = vpop.f32.mrf.mxu0
      %v7896 = vadd.f32 0.0, %v7895
      %v7897 = vpop.f32.mrf.mxu0
      %v7898 = vpop.f32.mrf.mxu0
      %7899 = vdwg.mxu0
      %7900 = vmatprep.subr.bf16.mxu0 0
      %7901 = vmatpush1.bf16.msra.mxu0 0
      %7902 = vmatprep.subr.bf16.mxu0 0
      %7903 = vmatpush1.bf16.msra.mxu0 0
      %7904 = vmatprep.subr.bf16.mxu0 0
      %7905 = vmatpush1.bf16.msra.mxu0 0
      %7906 = vmatprep.subr.bf16.mxu0 0
      %7907 = vmatpush1.bf16.msra.mxu0 0
      %7908 = vmatprep.subr.bf16.mxu0 0
      %7909 = vmatpush1.bf16.msra.mxu0 0
      %7910 = vmatprep.subr.bf16.mxu0 0
      %7911 = vmatpush1.bf16.msra.mxu0 0
      %7912 = vmatprep.subr.bf16.mxu0 %v7854
      %7913 = vmatpush1.bf16.msra.mxu0 %v7851
      %7914 = vmatprep.subr.bf16.mxu0 %v7829
      %7915 = vmatpush1.bf16.msra.mxu0 %v7828
      %7916 = vmatprep.subr.bf16.mxu0 0
      %7917 = vmatpush2.bf16.msra.mxu0 0
      %7918 = vmatprep.subr.bf16.mxu0 0
      %7919 = vmatpush2.bf16.msra.mxu0 0
      %7920 = vmatprep.subr.bf16.mxu0 0
      %7921 = vmatpush2.bf16.msra.mxu0 0
      %7922 = vmatprep.subr.bf16.mxu0 0
      %7923 = vmatpush2.bf16.msra.mxu0 0
      %7924 = vmatprep.subr.bf16.mxu0 0
      %7925 = vmatpush2.bf16.msra.mxu0 0
      %7926 = vmatprep.subr.bf16.mxu0 0
      %7927 = vmatpush2.bf16.msra.mxu0 0
      %7928 = vmatprep.subr.bf16.mxu0 0
      %7929 = vmatpush2.bf16.msra.mxu0 0
      %7930 = vmatprep.subr.bf16.mxu0 0
      %7931 = vmatpush2.bf16.msra.mxu0 0
      %7932 = vmatprep.mubr.bf16.mxu0 0
      %7933 = vmatmul.mubr.bf16.gmra.mxu0 %v7842
      %v7934 = vpop.f32.mrf.mxu0
      %v7935 = vadd.f32 0.0, %v7934
      %v7936 = vpop.f32.mrf.mxu0
      %v7937 = vadd.f32 0.0, %v7936
      %v7938 = vpop.f32.mrf.mxu0
      %v7939 = vpop.f32.mrf.mxu0
      %7940 = vdwg.mxu0
      %7941 = vmatprep.subr.bf16.mxu0 0
      %7942 = vmatpush1.bf16.msra.mxu0 0
      %7943 = vmatprep.subr.bf16.mxu0 0
      %7944 = vmatpush1.bf16.msra.mxu0 0
      %7945 = vmatprep.subr.bf16.mxu0 0
      %7946 = vmatpush1.bf16.msra.mxu0 0
      %7947 = vmatprep.subr.bf16.mxu0 0
      %7948 = vmatpush1.bf16.msra.mxu0 0
      %7949 = vmatprep.subr.bf16.mxu0 0
      %7950 = vmatpush1.bf16.msra.mxu0 0
      %7951 = vmatprep.subr.bf16.mxu0 0
      %7952 = vmatpush1.bf16.msra.mxu0 0
      %7953 = vmatprep.subr.bf16.mxu0 0
      %7954 = vmatpush1.bf16.msra.mxu0 %v7857
      %7955 = vmatprep.subr.bf16.mxu0 0
      %7956 = vmatpush1.bf16.msra.mxu0 %v7830
      %7957 = vmatprep.subr.bf16.mxu0 0
      %7958 = vmatpush2.bf16.msra.mxu0 0
      %7959 = vmatprep.subr.bf16.mxu0 0
      %7960 = vmatpush2.bf16.msra.mxu0 0
      %7961 = vmatprep.subr.bf16.mxu0 0
      %7962 = vmatpush2.bf16.msra.mxu0 0
      %7963 = vmatprep.subr.bf16.mxu0 0
      %7964 = vmatpush2.bf16.msra.mxu0 0
      %7965 = vmatprep.subr.bf16.mxu0 0
      %7966 = vmatpush2.bf16.msra.mxu0 0
      %7967 = vmatprep.subr.bf16.mxu0 0
      %7968 = vmatpush2.bf16.msra.mxu0 0
      %7969 = vmatprep.subr.bf16.mxu0 0
      %7970 = vmatpush2.bf16.msra.mxu0 0
      %7971 = vmatprep.subr.bf16.mxu0 0
      %7972 = vmatpush2.bf16.msra.mxu0 0
      %7973 = vmatprep.mubr.bf16.mxu0 0
      %7974 = vmatmul.mubr.bf16.gmra.mxu0 %v7842
      %v7975 = vpop.f32.mrf.mxu0
      %v7976 = vadd.f32 0.0, %v7975
      %v7977 = vpop.f32.mrf.mxu0
      %v7978 = vpop.f32.mrf.mxu0
      %v7979 = vpop.f32.mrf.mxu0
      %7980 = vdwg.mxu0
      %v7981 = vadd.f32 %v7786, %v7894
      %v7982 = vadd.f32 %v7787, %v7896
      %v7983 = vadd.f32 %v7788, %v7935
      %v7984 = vadd.f32 %v7789, %v7937
      %v7985 = vadd.f32 %v7790, %v7976
      %v7986 = vpack.c.bf16 %v6423, %v6423
      %s7987 = scalar_lea.vmem %s282, 1740
      %v7988 = vld [vmem:[%s7987] sm:$0xff]
      %v7989 = vld [vmem:[%s7987 + $0x8] sm:$0xff]
      %v7990 = vld [vmem:[%s7987 + $0x10] sm:$0xf]
      %v7991 = vld [vmem:[%s7987 + $0x14] sm:$0xff]
      %v7992 = vld [vmem:[%s7987 + $0x1c] sm:$0xff]
      %v7993 = vld [vmem:[%s7987 + $0x24] sm:$0xf]
      %v7994 = vld [vmem:[%s7987 + $0x28] sm:$0x33]
      %v7995 = vld [vmem:[%s7987 + $0x30] sm:$0x33]
      %v7996 = vld [vmem:[%s7987 + $0x38] sm:$0x3]
      %v8006 = vunpack.c.l.b16 %v7988
      %v8007 = vunpack.c.h.b16 %v7988
      %v8008 = vunpack.c.l.b16 %v7989
      %v8009 = vunpack.c.h.b16 %v7989
      %v8010 = vunpack.c.l.b16 %v7990
      %v8011 = vunpack.c.l.b16 %v7991
      %v8012 = vunpack.c.h.b16 %v7991
      %v8013 = vunpack.c.l.b16 %v7992
      %v8014 = vunpack.c.h.b16 %v7992
      %v8015 = vunpack.c.l.b16 %v7993
      %v8016 = vunpack.c.l.b16 %v7994
      %v8017 = vunpack.c.h.b16 %v7994
      %v8018 = vunpack.c.l.b16 %v7995
      %v8019 = vunpack.c.h.b16 %v7995
      %v8020 = vunpack.c.l.b16 %v7996
      %v8021 = vpack.c.b16 %v8011, %v8006
      %v8022 = vpack.c.b16 %v8012, %v8007
      %v8023 = vpack.c.b16 %v8013, %v8008
      %v8024 = vpack.c.b16 %v8014, %v8009
      %v8025 = vpack.c.b16 %v8015, %v8010
      %v8026 = vpack.c.b16 %v8016, %v8016
      %v8027 = vpack.c.b16 %v8017, %v8017
      %v8028 = vpack.c.b16 %v8018, %v8018
      %v8029 = vpack.c.b16 %v8019, %v8019
      %v8030 = vpack.c.b16 %v8020, %v8020
      %v8037 = vsel %vm334, %v7986, 0
      %v8040 = vsel %vm1188, %v8026, 0
      %v8043 = vsel %vm1188, %v8027, 0
      %v8046 = vsel %vm1188, %v8028, 0
      %v8049 = vsel %vm1188, %v8029, 0
      %v8052 = vsel %vm1188, %v8030, 0
      %8054 = vmatprep.subr.bf16.mxu0 0
      %8055 = vmatpush1.bf16.msra.mxu0 0
      %8056 = vmatprep.subr.bf16.mxu0 0
      %8057 = vmatpush1.bf16.msra.mxu0 0
      %8058 = vmatprep.subr.bf16.mxu0 0
      %8059 = vmatpush1.bf16.msra.mxu0 0
      %8060 = vmatprep.subr.bf16.mxu0 0
      %8061 = vmatpush1.bf16.msra.mxu0 0
      %8062 = vmatprep.subr.bf16.mxu0 0
      %8063 = vmatpush1.bf16.msra.mxu0 0
      %8064 = vmatprep.subr.bf16.mxu0 0
      %8065 = vmatpush1.bf16.msra.mxu0 0
      %8066 = vmatprep.subr.bf16.mxu0 %v8043
      %8067 = vmatpush1.bf16.msra.mxu0 %v8040
      %8068 = vmatprep.subr.bf16.mxu0 %v8022
      %8069 = vmatpush1.bf16.msra.mxu0 %v8021
      %8070 = vmatprep.subr.bf16.mxu0 0
      %8071 = vmatpush2.bf16.msra.mxu0 0
      %8072 = vmatprep.subr.bf16.mxu0 0
      %8073 = vmatpush2.bf16.msra.mxu0 0
      %8074 = vmatprep.subr.bf16.mxu0 0
      %8075 = vmatpush2.bf16.msra.mxu0 0
      %8076 = vmatprep.subr.bf16.mxu0 0
      %8077 = vmatpush2.bf16.msra.mxu0 0
      %8078 = vmatprep.subr.bf16.mxu0 0
      %8079 = vmatpush2.bf16.msra.mxu0 0
      %8080 = vmatprep.subr.bf16.mxu0 0
      %8081 = vmatpush2.bf16.msra.mxu0 0
      %8082 = vmatprep.subr.bf16.mxu0 0
      %8083 = vmatpush2.bf16.msra.mxu0 0
      %8084 = vmatprep.subr.bf16.mxu0 0
      %8085 = vmatpush2.bf16.msra.mxu0 0
      %8086 = vmatprep.mubr.bf16.mxu0 0
      %8087 = vmatmul.mubr.bf16.gmra.mxu0 %v8037
      %v8088 = vpop.f32.mrf.mxu0
      %v8089 = vadd.f32 0.0, %v8088
      %v8090 = vpop.f32.mrf.mxu0
      %v8091 = vadd.f32 0.0, %v8090
      %v8092 = vpop.f32.mrf.mxu0
      %v8093 = vpop.f32.mrf.mxu0
      %8094 = vdwg.mxu0
      %8095 = vmatprep.subr.bf16.mxu0 0
      %8096 = vmatpush1.bf16.msra.mxu0 0
      %8097 = vmatprep.subr.bf16.mxu0 0
      %8098 = vmatpush1.bf16.msra.mxu0 0
      %8099 = vmatprep.subr.bf16.mxu0 0
      %8100 = vmatpush1.bf16.msra.mxu0 0
      %8101 = vmatprep.subr.bf16.mxu0 0
      %8102 = vmatpush1.bf16.msra.mxu0 0
      %8103 = vmatprep.subr.bf16.mxu0 0
      %8104 = vmatpush1.bf16.msra.mxu0 0
      %8105 = vmatprep.subr.bf16.mxu0 0
      %8106 = vmatpush1.bf16.msra.mxu0 0
      %8107 = vmatprep.subr.bf16.mxu0 %v8049
      %8108 = vmatpush1.bf16.msra.mxu0 %v8046
      %8109 = vmatprep.subr.bf16.mxu0 %v8024
      %8110 = vmatpush1.bf16.msra.mxu0 %v8023
      %8111 = vmatprep.subr.bf16.mxu0 0
      %8112 = vmatpush2.bf16.msra.mxu0 0
      %8113 = vmatprep.subr.bf16.mxu0 0
      %8114 = vmatpush2.bf16.msra.mxu0 0
      %8115 = vmatprep.subr.bf16.mxu0 0
      %8116 = vmatpush2.bf16.msra.mxu0 0
      %8117 = vmatprep.subr.bf16.mxu0 0
      %8118 = vmatpush2.bf16.msra.mxu0 0
      %8119 = vmatprep.subr.bf16.mxu0 0
      %8120 = vmatpush2.bf16.msra.mxu0 0
      %8121 = vmatprep.subr.bf16.mxu0 0
      %8122 = vmatpush2.bf16.msra.mxu0 0
      %8123 = vmatprep.subr.bf16.mxu0 0
      %8124 = vmatpush2.bf16.msra.mxu0 0
      %8125 = vmatprep.subr.bf16.mxu0 0
      %8126 = vmatpush2.bf16.msra.mxu0 0
      %8127 = vmatprep.mubr.bf16.mxu0 0
      %8128 = vmatmul.mubr.bf16.gmra.mxu0 %v8037
      %v8129 = vpop.f32.mrf.mxu0
      %v8130 = vadd.f32 0.0, %v8129
      %v8131 = vpop.f32.mrf.mxu0
      %v8132 = vadd.f32 0.0, %v8131
      %v8133 = vpop.f32.mrf.mxu0
      %v8134 = vpop.f32.mrf.mxu0
      %8135 = vdwg.mxu0
      %8136 = vmatprep.subr.bf16.mxu0 0
      %8137 = vmatpush1.bf16.msra.mxu0 0
      %8138 = vmatprep.subr.bf16.mxu0 0
      %8139 = vmatpush1.bf16.msra.mxu0 0
      %8140 = vmatprep.subr.bf16.mxu0 0
      %8141 = vmatpush1.bf16.msra.mxu0 0
      %8142 = vmatprep.subr.bf16.mxu0 0
      %8143 = vmatpush1.bf16.msra.mxu0 0
      %8144 = vmatprep.subr.bf16.mxu0 0
      %8145 = vmatpush1.bf16.msra.mxu0 0
      %8146 = vmatprep.subr.bf16.mxu0 0
      %8147 = vmatpush1.bf16.msra.mxu0 0
      %8148 = vmatprep.subr.bf16.mxu0 0
      %8149 = vmatpush1.bf16.msra.mxu0 %v8052
      %8150 = vmatprep.subr.bf16.mxu0 0
      %8151 = vmatpush1.bf16.msra.mxu0 %v8025
      %8152 = vmatprep.subr.bf16.mxu0 0
      %8153 = vmatpush2.bf16.msra.mxu0 0
      %8154 = vmatprep.subr.bf16.mxu0 0
      %8155 = vmatpush2.bf16.msra.mxu0 0
      %8156 = vmatprep.subr.bf16.mxu0 0
      %8157 = vmatpush2.bf16.msra.mxu0 0
      %8158 = vmatprep.subr.bf16.mxu0 0
      %8159 = vmatpush2.bf16.msra.mxu0 0
      %8160 = vmatprep.subr.bf16.mxu0 0
      %8161 = vmatpush2.bf16.msra.mxu0 0
      %8162 = vmatprep.subr.bf16.mxu0 0
      %8163 = vmatpush2.bf16.msra.mxu0 0
      %8164 = vmatprep.subr.bf16.mxu0 0
      %8165 = vmatpush2.bf16.msra.mxu0 0
      %8166 = vmatprep.subr.bf16.mxu0 0
      %8167 = vmatpush2.bf16.msra.mxu0 0
      %8168 = vmatprep.mubr.bf16.mxu0 0
      %8169 = vmatmul.mubr.bf16.gmra.mxu0 %v8037
      %v8170 = vpop.f32.mrf.mxu0
      %v8171 = vadd.f32 0.0, %v8170
      %v8172 = vpop.f32.mrf.mxu0
      %v8173 = vpop.f32.mrf.mxu0
      %v8174 = vpop.f32.mrf.mxu0
      %8175 = vdwg.mxu0
      %v8176 = vadd.f32 %v7981, %v8089
      %v8177 = vadd.f32 %v7982, %v8091
      %v8178 = vadd.f32 %v7983, %v8130
      %v8179 = vadd.f32 %v7984, %v8132
      %v8180 = vadd.f32 %v7985, %v8171
      %v8181 = vpack.c.bf16 %v6424, %v6424
      %s8182 = scalar_lea.vmem %s282, 1800
      %v8183 = vld [vmem:[%s8182] sm:$0xff]
      %v8184 = vld [vmem:[%s8182 + $0x8] sm:$0xff]
      %v8185 = vld [vmem:[%s8182 + $0x10] sm:$0xf]
      %v8186 = vld [vmem:[%s8182 + $0x14] sm:$0xff]
      %v8187 = vld [vmem:[%s8182 + $0x1c] sm:$0xff]
      %v8188 = vld [vmem:[%s8182 + $0x24] sm:$0xf]
      %v8189 = vld [vmem:[%s8182 + $0x28] sm:$0x33]
      %v8190 = vld [vmem:[%s8182 + $0x30] sm:$0x33]
      %v8191 = vld [vmem:[%s8182 + $0x38] sm:$0x3]
      %v8201 = vunpack.c.l.b16 %v8183
      %v8202 = vunpack.c.h.b16 %v8183
      %v8203 = vunpack.c.l.b16 %v8184
      %v8204 = vunpack.c.h.b16 %v8184
      %v8205 = vunpack.c.l.b16 %v8185
      %v8206 = vunpack.c.l.b16 %v8186
      %v8207 = vunpack.c.h.b16 %v8186
      %v8208 = vunpack.c.l.b16 %v8187
      %v8209 = vunpack.c.h.b16 %v8187
      %v8210 = vunpack.c.l.b16 %v8188
      %v8211 = vunpack.c.l.b16 %v8189
      %v8212 = vunpack.c.h.b16 %v8189
      %v8213 = vunpack.c.l.b16 %v8190
      %v8214 = vunpack.c.h.b16 %v8190
      %v8215 = vunpack.c.l.b16 %v8191
      %v8216 = vpack.c.b16 %v8206, %v8201
      %v8217 = vpack.c.b16 %v8207, %v8202
      %v8218 = vpack.c.b16 %v8208, %v8203
      %v8219 = vpack.c.b16 %v8209, %v8204
      %v8220 = vpack.c.b16 %v8210, %v8205
      %v8221 = vpack.c.b16 %v8211, %v8211
      %v8222 = vpack.c.b16 %v8212, %v8212
      %v8223 = vpack.c.b16 %v8213, %v8213
      %v8224 = vpack.c.b16 %v8214, %v8214
      %v8225 = vpack.c.b16 %v8215, %v8215
      %v8232 = vsel %vm334, %v8181, 0
      %v8235 = vsel %vm1188, %v8221, 0
      %v8238 = vsel %vm1188, %v8222, 0
      %v8241 = vsel %vm1188, %v8223, 0
      %v8244 = vsel %vm1188, %v8224, 0
      %v8247 = vsel %vm1188, %v8225, 0
      %8249 = vmatprep.subr.bf16.mxu0 0
      %8250 = vmatpush1.bf16.msra.mxu0 0
      %8251 = vmatprep.subr.bf16.mxu0 0
      %8252 = vmatpush1.bf16.msra.mxu0 0
      %8253 = vmatprep.subr.bf16.mxu0 0
      %8254 = vmatpush1.bf16.msra.mxu0 0
      %8255 = vmatprep.subr.bf16.mxu0 0
      %8256 = vmatpush1.bf16.msra.mxu0 0
      %8257 = vmatprep.subr.bf16.mxu0 0
      %8258 = vmatpush1.bf16.msra.mxu0 0
      %8259 = vmatprep.subr.bf16.mxu0 0
      %8260 = vmatpush1.bf16.msra.mxu0 0
      %8261 = vmatprep.subr.bf16.mxu0 %v8238
      %8262 = vmatpush1.bf16.msra.mxu0 %v8235
      %8263 = vmatprep.subr.bf16.mxu0 %v8217
      %8264 = vmatpush1.bf16.msra.mxu0 %v8216
      %8265 = vmatprep.subr.bf16.mxu0 0
      %8266 = vmatpush2.bf16.msra.mxu0 0
      %8267 = vmatprep.subr.bf16.mxu0 0
      %8268 = vmatpush2.bf16.msra.mxu0 0
      %8269 = vmatprep.subr.bf16.mxu0 0
      %8270 = vmatpush2.bf16.msra.mxu0 0
      %8271 = vmatprep.subr.bf16.mxu0 0
      %8272 = vmatpush2.bf16.msra.mxu0 0
      %8273 = vmatprep.subr.bf16.mxu0 0
      %8274 = vmatpush2.bf16.msra.mxu0 0
      %8275 = vmatprep.subr.bf16.mxu0 0
      %8276 = vmatpush2.bf16.msra.mxu0 0
      %8277 = vmatprep.subr.bf16.mxu0 0
      %8278 = vmatpush2.bf16.msra.mxu0 0
      %8279 = vmatprep.subr.bf16.mxu0 0
      %8280 = vmatpush2.bf16.msra.mxu0 0
      %8281 = vmatprep.mubr.bf16.mxu0 0
      %8282 = vmatmul.mubr.bf16.gmra.mxu0 %v8232
      %v8283 = vpop.f32.mrf.mxu0
      %v8284 = vadd.f32 0.0, %v8283
      %v8285 = vpop.f32.mrf.mxu0
      %v8286 = vadd.f32 0.0, %v8285
      %v8287 = vpop.f32.mrf.mxu0
      %v8288 = vpop.f32.mrf.mxu0
      %8289 = vdwg.mxu0
      %8290 = vmatprep.subr.bf16.mxu0 0
      %8291 = vmatpush1.bf16.msra.mxu0 0
      %8292 = vmatprep.subr.bf16.mxu0 0
      %8293 = vmatpush1.bf16.msra.mxu0 0
      %8294 = vmatprep.subr.bf16.mxu0 0
      %8295 = vmatpush1.bf16.msra.mxu0 0
      %8296 = vmatprep.subr.bf16.mxu0 0
      %8297 = vmatpush1.bf16.msra.mxu0 0
      %8298 = vmatprep.subr.bf16.mxu0 0
      %8299 = vmatpush1.bf16.msra.mxu0 0
      %8300 = vmatprep.subr.bf16.mxu0 0
      %8301 = vmatpush1.bf16.msra.mxu0 0
      %8302 = vmatprep.subr.bf16.mxu0 %v8244
      %8303 = vmatpush1.bf16.msra.mxu0 %v8241
      %8304 = vmatprep.subr.bf16.mxu0 %v8219
      %8305 = vmatpush1.bf16.msra.mxu0 %v8218
      %8306 = vmatprep.subr.bf16.mxu0 0
      %8307 = vmatpush2.bf16.msra.mxu0 0
      %8308 = vmatprep.subr.bf16.mxu0 0
      %8309 = vmatpush2.bf16.msra.mxu0 0
      %8310 = vmatprep.subr.bf16.mxu0 0
      %8311 = vmatpush2.bf16.msra.mxu0 0
      %8312 = vmatprep.subr.bf16.mxu0 0
      %8313 = vmatpush2.bf16.msra.mxu0 0
      %8314 = vmatprep.subr.bf16.mxu0 0
      %8315 = vmatpush2.bf16.msra.mxu0 0
      %8316 = vmatprep.subr.bf16.mxu0 0
      %8317 = vmatpush2.bf16.msra.mxu0 0
      %8318 = vmatprep.subr.bf16.mxu0 0
      %8319 = vmatpush2.bf16.msra.mxu0 0
      %8320 = vmatprep.subr.bf16.mxu0 0
      %8321 = vmatpush2.bf16.msra.mxu0 0
      %8322 = vmatprep.mubr.bf16.mxu0 0
      %8323 = vmatmul.mubr.bf16.gmra.mxu0 %v8232
      %v8324 = vpop.f32.mrf.mxu0
      %v8325 = vadd.f32 0.0, %v8324
      %v8326 = vpop.f32.mrf.mxu0
      %v8327 = vadd.f32 0.0, %v8326
      %v8328 = vpop.f32.mrf.mxu0
      %v8329 = vpop.f32.mrf.mxu0
      %8330 = vdwg.mxu0
      %8331 = vmatprep.subr.bf16.mxu0 0
      %8332 = vmatpush1.bf16.msra.mxu0 0
      %8333 = vmatprep.subr.bf16.mxu0 0
      %8334 = vmatpush1.bf16.msra.mxu0 0
      %8335 = vmatprep.subr.bf16.mxu0 0
      %8336 = vmatpush1.bf16.msra.mxu0 0
      %8337 = vmatprep.subr.bf16.mxu0 0
      %8338 = vmatpush1.bf16.msra.mxu0 0
      %8339 = vmatprep.subr.bf16.mxu0 0
      %8340 = vmatpush1.bf16.msra.mxu0 0
      %8341 = vmatprep.subr.bf16.mxu0 0
      %8342 = vmatpush1.bf16.msra.mxu0 0
      %8343 = vmatprep.subr.bf16.mxu0 0
      %8344 = vmatpush1.bf16.msra.mxu0 %v8247
      %8345 = vmatprep.subr.bf16.mxu0 0
      %8346 = vmatpush1.bf16.msra.mxu0 %v8220
      %8347 = vmatprep.subr.bf16.mxu0 0
      %8348 = vmatpush2.bf16.msra.mxu0 0
      %8349 = vmatprep.subr.bf16.mxu0 0
      %8350 = vmatpush2.bf16.msra.mxu0 0
      %8351 = vmatprep.subr.bf16.mxu0 0
      %8352 = vmatpush2.bf16.msra.mxu0 0
      %8353 = vmatprep.subr.bf16.mxu0 0
      %8354 = vmatpush2.bf16.msra.mxu0 0
      %8355 = vmatprep.subr.bf16.mxu0 0
      %8356 = vmatpush2.bf16.msra.mxu0 0
      %8357 = vmatprep.subr.bf16.mxu0 0
      %8358 = vmatpush2.bf16.msra.mxu0 0
      %8359 = vmatprep.subr.bf16.mxu0 0
      %8360 = vmatpush2.bf16.msra.mxu0 0
      %8361 = vmatprep.subr.bf16.mxu0 0
      %8362 = vmatpush2.bf16.msra.mxu0 0
      %8363 = vmatprep.mubr.bf16.mxu0 0
      %8364 = vmatmul.mubr.bf16.gmra.mxu0 %v8232
      %v8365 = vpop.f32.mrf.mxu0
      %v8366 = vadd.f32 0.0, %v8365
      %v8367 = vpop.f32.mrf.mxu0
      %v8368 = vpop.f32.mrf.mxu0
      %v8369 = vpop.f32.mrf.mxu0
      %8370 = vdwg.mxu0
      %v8371 = vadd.f32 %v8176, %v8284
      %v8372 = vadd.f32 %v8177, %v8286
      %v8373 = vadd.f32 %v8178, %v8325
      %v8374 = vadd.f32 %v8179, %v8327
      %v8375 = vadd.f32 %v8180, %v8366
      %v8376 = vpack.c.bf16 %v6425, %v6425
      %s8377 = scalar_lea.vmem %s282, 1860
      %v8378 = vld [vmem:[%s8377] sm:$0xff]
      %v8379 = vld [vmem:[%s8377 + $0x8] sm:$0xff]
      %v8380 = vld [vmem:[%s8377 + $0x10] sm:$0xf]
      %v8381 = vld [vmem:[%s8377 + $0x14] sm:$0xff]
      %v8382 = vld [vmem:[%s8377 + $0x1c] sm:$0xff]
      %v8383 = vld [vmem:[%s8377 + $0x24] sm:$0xf]
      %v8384 = vld [vmem:[%s8377 + $0x28] sm:$0x33]
      %v8385 = vld [vmem:[%s8377 + $0x30] sm:$0x33]
      %v8386 = vld [vmem:[%s8377 + $0x38] sm:$0x3]
      %v8396 = vunpack.c.l.b16 %v8378
      %v8397 = vunpack.c.h.b16 %v8378
      %v8398 = vunpack.c.l.b16 %v8379
      %v8399 = vunpack.c.h.b16 %v8379
      %v8400 = vunpack.c.l.b16 %v8380
      %v8401 = vunpack.c.l.b16 %v8381
      %v8402 = vunpack.c.h.b16 %v8381
      %v8403 = vunpack.c.l.b16 %v8382
      %v8404 = vunpack.c.h.b16 %v8382
      %v8405 = vunpack.c.l.b16 %v8383
      %v8406 = vunpack.c.l.b16 %v8384
      %v8407 = vunpack.c.h.b16 %v8384
      %v8408 = vunpack.c.l.b16 %v8385
      %v8409 = vunpack.c.h.b16 %v8385
      %v8410 = vunpack.c.l.b16 %v8386
      %v8411 = vpack.c.b16 %v8401, %v8396
      %v8412 = vpack.c.b16 %v8402, %v8397
      %v8413 = vpack.c.b16 %v8403, %v8398
      %v8414 = vpack.c.b16 %v8404, %v8399
      %v8415 = vpack.c.b16 %v8405, %v8400
      %v8416 = vpack.c.b16 %v8406, %v8406
      %v8417 = vpack.c.b16 %v8407, %v8407
      %v8418 = vpack.c.b16 %v8408, %v8408
      %v8419 = vpack.c.b16 %v8409, %v8409
      %v8420 = vpack.c.b16 %v8410, %v8410
      %v8427 = vsel %vm334, %v8376, 0
      %v8430 = vsel %vm1188, %v8416, 0
      %v8433 = vsel %vm1188, %v8417, 0
      %v8436 = vsel %vm1188, %v8418, 0
      %v8439 = vsel %vm1188, %v8419, 0
      %v8442 = vsel %vm1188, %v8420, 0
      %8444 = vmatprep.subr.bf16.mxu0 0
      %8445 = vmatpush1.bf16.msra.mxu0 0
      %8446 = vmatprep.subr.bf16.mxu0 0
      %8447 = vmatpush1.bf16.msra.mxu0 0
      %8448 = vmatprep.subr.bf16.mxu0 0
      %8449 = vmatpush1.bf16.msra.mxu0 0
      %8450 = vmatprep.subr.bf16.mxu0 0
      %8451 = vmatpush1.bf16.msra.mxu0 0
      %8452 = vmatprep.subr.bf16.mxu0 0
      %8453 = vmatpush1.bf16.msra.mxu0 0
      %8454 = vmatprep.subr.bf16.mxu0 0
      %8455 = vmatpush1.bf16.msra.mxu0 0
      %8456 = vmatprep.subr.bf16.mxu0 %v8433
      %8457 = vmatpush1.bf16.msra.mxu0 %v8430
      %8458 = vmatprep.subr.bf16.mxu0 %v8412
      %8459 = vmatpush1.bf16.msra.mxu0 %v8411
      %8460 = vmatprep.subr.bf16.mxu0 0
      %8461 = vmatpush2.bf16.msra.mxu0 0
      %8462 = vmatprep.subr.bf16.mxu0 0
      %8463 = vmatpush2.bf16.msra.mxu0 0
      %8464 = vmatprep.subr.bf16.mxu0 0
      %8465 = vmatpush2.bf16.msra.mxu0 0
      %8466 = vmatprep.subr.bf16.mxu0 0
      %8467 = vmatpush2.bf16.msra.mxu0 0
      %8468 = vmatprep.subr.bf16.mxu0 0
      %8469 = vmatpush2.bf16.msra.mxu0 0
      %8470 = vmatprep.subr.bf16.mxu0 0
      %8471 = vmatpush2.bf16.msra.mxu0 0
      %8472 = vmatprep.subr.bf16.mxu0 0
      %8473 = vmatpush2.bf16.msra.mxu0 0
      %8474 = vmatprep.subr.bf16.mxu0 0
      %8475 = vmatpush2.bf16.msra.mxu0 0
      %8476 = vmatprep.mubr.bf16.mxu0 0
      %8477 = vmatmul.mubr.bf16.gmra.mxu0 %v8427
      %v8478 = vpop.f32.mrf.mxu0
      %v8479 = vadd.f32 0.0, %v8478
      %v8480 = vpop.f32.mrf.mxu0
      %v8481 = vadd.f32 0.0, %v8480
      %v8482 = vpop.f32.mrf.mxu0
      %v8483 = vpop.f32.mrf.mxu0
      %8484 = vdwg.mxu0
      %8485 = vmatprep.subr.bf16.mxu0 0
      %8486 = vmatpush1.bf16.msra.mxu0 0
      %8487 = vmatprep.subr.bf16.mxu0 0
      %8488 = vmatpush1.bf16.msra.mxu0 0
      %8489 = vmatprep.subr.bf16.mxu0 0
      %8490 = vmatpush1.bf16.msra.mxu0 0
      %8491 = vmatprep.subr.bf16.mxu0 0
      %8492 = vmatpush1.bf16.msra.mxu0 0
      %8493 = vmatprep.subr.bf16.mxu0 0
      %8494 = vmatpush1.bf16.msra.mxu0 0
      %8495 = vmatprep.subr.bf16.mxu0 0
      %8496 = vmatpush1.bf16.msra.mxu0 0
      %8497 = vmatprep.subr.bf16.mxu0 %v8439
      %8498 = vmatpush1.bf16.msra.mxu0 %v8436
      %8499 = vmatprep.subr.bf16.mxu0 %v8414
      %8500 = vmatpush1.bf16.msra.mxu0 %v8413
      %8501 = vmatprep.subr.bf16.mxu0 0
      %8502 = vmatpush2.bf16.msra.mxu0 0
      %8503 = vmatprep.subr.bf16.mxu0 0
      %8504 = vmatpush2.bf16.msra.mxu0 0
      %8505 = vmatprep.subr.bf16.mxu0 0
      %8506 = vmatpush2.bf16.msra.mxu0 0
      %8507 = vmatprep.subr.bf16.mxu0 0
      %8508 = vmatpush2.bf16.msra.mxu0 0
      %8509 = vmatprep.subr.bf16.mxu0 0
      %8510 = vmatpush2.bf16.msra.mxu0 0
      %8511 = vmatprep.subr.bf16.mxu0 0
      %8512 = vmatpush2.bf16.msra.mxu0 0
      %8513 = vmatprep.subr.bf16.mxu0 0
      %8514 = vmatpush2.bf16.msra.mxu0 0
      %8515 = vmatprep.subr.bf16.mxu0 0
      %8516 = vmatpush2.bf16.msra.mxu0 0
      %8517 = vmatprep.mubr.bf16.mxu0 0
      %8518 = vmatmul.mubr.bf16.gmra.mxu0 %v8427
      %v8519 = vpop.f32.mrf.mxu0
      %v8520 = vadd.f32 0.0, %v8519
      %v8521 = vpop.f32.mrf.mxu0
      %v8522 = vadd.f32 0.0, %v8521
      %v8523 = vpop.f32.mrf.mxu0
      %v8524 = vpop.f32.mrf.mxu0
      %8525 = vdwg.mxu0
      %8526 = vmatprep.subr.bf16.mxu0 0
      %8527 = vmatpush1.bf16.msra.mxu0 0
      %8528 = vmatprep.subr.bf16.mxu0 0
      %8529 = vmatpush1.bf16.msra.mxu0 0
      %8530 = vmatprep.subr.bf16.mxu0 0
      %8531 = vmatpush1.bf16.msra.mxu0 0
      %8532 = vmatprep.subr.bf16.mxu0 0
      %8533 = vmatpush1.bf16.msra.mxu0 0
      %8534 = vmatprep.subr.bf16.mxu0 0
      %8535 = vmatpush1.bf16.msra.mxu0 0
      %8536 = vmatprep.subr.bf16.mxu0 0
      %8537 = vmatpush1.bf16.msra.mxu0 0
      %8538 = vmatprep.subr.bf16.mxu0 0
      %8539 = vmatpush1.bf16.msra.mxu0 %v8442
      %8540 = vmatprep.subr.bf16.mxu0 0
      %8541 = vmatpush1.bf16.msra.mxu0 %v8415
      %8542 = vmatprep.subr.bf16.mxu0 0
      %8543 = vmatpush2.bf16.msra.mxu0 0
      %8544 = vmatprep.subr.bf16.mxu0 0
      %8545 = vmatpush2.bf16.msra.mxu0 0
      %8546 = vmatprep.subr.bf16.mxu0 0
      %8547 = vmatpush2.bf16.msra.mxu0 0
      %8548 = vmatprep.subr.bf16.mxu0 0
      %8549 = vmatpush2.bf16.msra.mxu0 0
      %8550 = vmatprep.subr.bf16.mxu0 0
      %8551 = vmatpush2.bf16.msra.mxu0 0
      %8552 = vmatprep.subr.bf16.mxu0 0
      %8553 = vmatpush2.bf16.msra.mxu0 0
      %8554 = vmatprep.subr.bf16.mxu0 0
      %8555 = vmatpush2.bf16.msra.mxu0 0
      %8556 = vmatprep.subr.bf16.mxu0 0
      %8557 = vmatpush2.bf16.msra.mxu0 0
      %8558 = vmatprep.mubr.bf16.mxu0 0
      %8559 = vmatmul.mubr.bf16.gmra.mxu0 %v8427
      %v8560 = vpop.f32.mrf.mxu0
      %v8561 = vadd.f32 0.0, %v8560
      %v8562 = vpop.f32.mrf.mxu0
      %v8563 = vpop.f32.mrf.mxu0
      %v8564 = vpop.f32.mrf.mxu0
      %8565 = vdwg.mxu0
      %v8566 = vadd.f32 %v8371, %v8479
      %v8567 = vadd.f32 %v8372, %v8481
      %v8568 = vadd.f32 %v8373, %v8520
      %v8569 = vadd.f32 %v8374, %v8522
      %v8570 = vadd.f32 %v8375, %v8561
      %v8571 = vpack.c.bf16 %v6426, %v6426
      %s8572 = scalar_lea.vmem %s282, 1920
      %v8573 = vld [vmem:[%s8572] sm:$0xff]
      %v8574 = vld [vmem:[%s8572 + $0x8] sm:$0xff]
      %v8575 = vld [vmem:[%s8572 + $0x10] sm:$0xf]
      %v8576 = vld [vmem:[%s8572 + $0x14] sm:$0xff]
      %v8577 = vld [vmem:[%s8572 + $0x1c] sm:$0xff]
      %v8578 = vld [vmem:[%s8572 + $0x24] sm:$0xf]
      %v8579 = vld [vmem:[%s8572 + $0x28] sm:$0x33]
      %v8580 = vld [vmem:[%s8572 + $0x30] sm:$0x33]
      %v8581 = vld [vmem:[%s8572 + $0x38] sm:$0x3]
      %v8591 = vunpack.c.l.b16 %v8573
      %v8592 = vunpack.c.h.b16 %v8573
      %v8593 = vunpack.c.l.b16 %v8574
      %v8594 = vunpack.c.h.b16 %v8574
      %v8595 = vunpack.c.l.b16 %v8575
      %v8596 = vunpack.c.l.b16 %v8576
      %v8597 = vunpack.c.h.b16 %v8576
      %v8598 = vunpack.c.l.b16 %v8577
      %v8599 = vunpack.c.h.b16 %v8577
      %v8600 = vunpack.c.l.b16 %v8578
      %v8601 = vunpack.c.l.b16 %v8579
      %v8602 = vunpack.c.h.b16 %v8579
      %v8603 = vunpack.c.l.b16 %v8580
      %v8604 = vunpack.c.h.b16 %v8580
      %v8605 = vunpack.c.l.b16 %v8581
      %v8606 = vpack.c.b16 %v8596, %v8591
      %v8607 = vpack.c.b16 %v8597, %v8592
      %v8608 = vpack.c.b16 %v8598, %v8593
      %v8609 = vpack.c.b16 %v8599, %v8594
      %v8610 = vpack.c.b16 %v8600, %v8595
      %v8611 = vpack.c.b16 %v8601, %v8601
      %v8612 = vpack.c.b16 %v8602, %v8602
      %v8613 = vpack.c.b16 %v8603, %v8603
      %v8614 = vpack.c.b16 %v8604, %v8604
      %v8615 = vpack.c.b16 %v8605, %v8605
      %v8622 = vsel %vm334, %v8571, 0
      %v8625 = vsel %vm1188, %v8611, 0
      %v8628 = vsel %vm1188, %v8612, 0
      %v8631 = vsel %vm1188, %v8613, 0
      %v8634 = vsel %vm1188, %v8614, 0
      %v8637 = vsel %vm1188, %v8615, 0
      %8639 = vmatprep.subr.bf16.mxu0 0
      %8640 = vmatpush1.bf16.msra.mxu0 0
      %8641 = vmatprep.subr.bf16.mxu0 0
      %8642 = vmatpush1.bf16.msra.mxu0 0
      %8643 = vmatprep.subr.bf16.mxu0 0
      %8644 = vmatpush1.bf16.msra.mxu0 0
      %8645 = vmatprep.subr.bf16.mxu0 0
      %8646 = vmatpush1.bf16.msra.mxu0 0
      %8647 = vmatprep.subr.bf16.mxu0 0
      %8648 = vmatpush1.bf16.msra.mxu0 0
      %8649 = vmatprep.subr.bf16.mxu0 0
      %8650 = vmatpush1.bf16.msra.mxu0 0
      %8651 = vmatprep.subr.bf16.mxu0 %v8628
      %8652 = vmatpush1.bf16.msra.mxu0 %v8625
      %8653 = vmatprep.subr.bf16.mxu0 %v8607
      %8654 = vmatpush1.bf16.msra.mxu0 %v8606
      %8655 = vmatprep.subr.bf16.mxu0 0
      %8656 = vmatpush2.bf16.msra.mxu0 0
      %8657 = vmatprep.subr.bf16.mxu0 0
      %8658 = vmatpush2.bf16.msra.mxu0 0
      %8659 = vmatprep.subr.bf16.mxu0 0
      %8660 = vmatpush2.bf16.msra.mxu0 0
      %8661 = vmatprep.subr.bf16.mxu0 0
      %8662 = vmatpush2.bf16.msra.mxu0 0
      %8663 = vmatprep.subr.bf16.mxu0 0
      %8664 = vmatpush2.bf16.msra.mxu0 0
      %8665 = vmatprep.subr.bf16.mxu0 0
      %8666 = vmatpush2.bf16.msra.mxu0 0
      %8667 = vmatprep.subr.bf16.mxu0 0
      %8668 = vmatpush2.bf16.msra.mxu0 0
      %8669 = vmatprep.subr.bf16.mxu0 0
      %8670 = vmatpush2.bf16.msra.mxu0 0
      %8671 = vmatprep.mubr.bf16.mxu0 0
      %8672 = vmatmul.mubr.bf16.gmra.mxu0 %v8622
      %v8673 = vpop.f32.mrf.mxu0
      %v8674 = vadd.f32 0.0, %v8673
      %v8675 = vpop.f32.mrf.mxu0
      %v8676 = vadd.f32 0.0, %v8675
      %v8677 = vpop.f32.mrf.mxu0
      %v8678 = vpop.f32.mrf.mxu0
      %8679 = vdwg.mxu0
      %8680 = vmatprep.subr.bf16.mxu0 0
      %8681 = vmatpush1.bf16.msra.mxu0 0
      %8682 = vmatprep.subr.bf16.mxu0 0
      %8683 = vmatpush1.bf16.msra.mxu0 0
      %8684 = vmatprep.subr.bf16.mxu0 0
      %8685 = vmatpush1.bf16.msra.mxu0 0
      %8686 = vmatprep.subr.bf16.mxu0 0
      %8687 = vmatpush1.bf16.msra.mxu0 0
      %8688 = vmatprep.subr.bf16.mxu0 0
      %8689 = vmatpush1.bf16.msra.mxu0 0
      %8690 = vmatprep.subr.bf16.mxu0 0
      %8691 = vmatpush1.bf16.msra.mxu0 0
      %8692 = vmatprep.subr.bf16.mxu0 %v8634
      %8693 = vmatpush1.bf16.msra.mxu0 %v8631
      %8694 = vmatprep.subr.bf16.mxu0 %v8609
      %8695 = vmatpush1.bf16.msra.mxu0 %v8608
      %8696 = vmatprep.subr.bf16.mxu0 0
      %8697 = vmatpush2.bf16.msra.mxu0 0
      %8698 = vmatprep.subr.bf16.mxu0 0
      %8699 = vmatpush2.bf16.msra.mxu0 0
      %8700 = vmatprep.subr.bf16.mxu0 0
      %8701 = vmatpush2.bf16.msra.mxu0 0
      %8702 = vmatprep.subr.bf16.mxu0 0
      %8703 = vmatpush2.bf16.msra.mxu0 0
      %8704 = vmatprep.subr.bf16.mxu0 0
      %8705 = vmatpush2.bf16.msra.mxu0 0
      %8706 = vmatprep.subr.bf16.mxu0 0
      %8707 = vmatpush2.bf16.msra.mxu0 0
      %8708 = vmatprep.subr.bf16.mxu0 0
      %8709 = vmatpush2.bf16.msra.mxu0 0
      %8710 = vmatprep.subr.bf16.mxu0 0
      %8711 = vmatpush2.bf16.msra.mxu0 0
      %8712 = vmatprep.mubr.bf16.mxu0 0
      %8713 = vmatmul.mubr.bf16.gmra.mxu0 %v8622
      %v8714 = vpop.f32.mrf.mxu0
      %v8715 = vadd.f32 0.0, %v8714
      %v8716 = vpop.f32.mrf.mxu0
      %v8717 = vadd.f32 0.0, %v8716
      %v8718 = vpop.f32.mrf.mxu0
      %v8719 = vpop.f32.mrf.mxu0
      %8720 = vdwg.mxu0
      %8721 = vmatprep.subr.bf16.mxu0 0
      %8722 = vmatpush1.bf16.msra.mxu0 0
      %8723 = vmatprep.subr.bf16.mxu0 0
      %8724 = vmatpush1.bf16.msra.mxu0 0
      %8725 = vmatprep.subr.bf16.mxu0 0
      %8726 = vmatpush1.bf16.msra.mxu0 0
      %8727 = vmatprep.subr.bf16.mxu0 0
      %8728 = vmatpush1.bf16.msra.mxu0 0
      %8729 = vmatprep.subr.bf16.mxu0 0
      %8730 = vmatpush1.bf16.msra.mxu0 0
      %8731 = vmatprep.subr.bf16.mxu0 0
      %8732 = vmatpush1.bf16.msra.mxu0 0
      %8733 = vmatprep.subr.bf16.mxu0 0
      %8734 = vmatpush1.bf16.msra.mxu0 %v8637
      %8735 = vmatprep.subr.bf16.mxu0 0
      %8736 = vmatpush1.bf16.msra.mxu0 %v8610
      %8737 = vmatprep.subr.bf16.mxu0 0
      %8738 = vmatpush2.bf16.msra.mxu0 0
      %8739 = vmatprep.subr.bf16.mxu0 0
      %8740 = vmatpush2.bf16.msra.mxu0 0
      %8741 = vmatprep.subr.bf16.mxu0 0
      %8742 = vmatpush2.bf16.msra.mxu0 0
      %8743 = vmatprep.subr.bf16.mxu0 0
      %8744 = vmatpush2.bf16.msra.mxu0 0
      %8745 = vmatprep.subr.bf16.mxu0 0
      %8746 = vmatpush2.bf16.msra.mxu0 0
      %8747 = vmatprep.subr.bf16.mxu0 0
      %8748 = vmatpush2.bf16.msra.mxu0 0
      %8749 = vmatprep.subr.bf16.mxu0 0
      %8750 = vmatpush2.bf16.msra.mxu0 0
      %8751 = vmatprep.subr.bf16.mxu0 0
      %8752 = vmatpush2.bf16.msra.mxu0 0
      %8753 = vmatprep.mubr.bf16.mxu0 0
      %8754 = vmatmul.mubr.bf16.gmra.mxu0 %v8622
      %v8755 = vpop.f32.mrf.mxu0
      %v8756 = vadd.f32 0.0, %v8755
      %v8757 = vpop.f32.mrf.mxu0
      %v8758 = vpop.f32.mrf.mxu0
      %v8759 = vpop.f32.mrf.mxu0
      %8760 = vdwg.mxu0
      %v8761 = vadd.f32 %v8566, %v8674
      %v8762 = vadd.f32 %v8567, %v8676
      %v8763 = vadd.f32 %v8568, %v8715
      %v8764 = vadd.f32 %v8569, %v8717
      %v8765 = vadd.f32 %v8570, %v8756
      %v8766 = vpack.c.bf16 %v6427, %v6427
      %s8767 = scalar_lea.vmem %s282, 1980
      %v8768 = vld [vmem:[%s8767] sm:$0xff]
      %v8769 = vld [vmem:[%s8767 + $0x8] sm:$0xff]
      %v8770 = vld [vmem:[%s8767 + $0x10] sm:$0xf]
      %v8771 = vld [vmem:[%s8767 + $0x14] sm:$0xff]
      %v8772 = vld [vmem:[%s8767 + $0x1c] sm:$0xff]
      %v8773 = vld [vmem:[%s8767 + $0x24] sm:$0xf]
      %v8774 = vld [vmem:[%s8767 + $0x28] sm:$0x33]
      %v8775 = vld [vmem:[%s8767 + $0x30] sm:$0x33]
      %v8776 = vld [vmem:[%s8767 + $0x38] sm:$0x3]
      %v8786 = vunpack.c.l.b16 %v8768
      %v8787 = vunpack.c.h.b16 %v8768
      %v8788 = vunpack.c.l.b16 %v8769
      %v8789 = vunpack.c.h.b16 %v8769
      %v8790 = vunpack.c.l.b16 %v8770
      %v8791 = vunpack.c.l.b16 %v8771
      %v8792 = vunpack.c.h.b16 %v8771
      %v8793 = vunpack.c.l.b16 %v8772
      %v8794 = vunpack.c.h.b16 %v8772
      %v8795 = vunpack.c.l.b16 %v8773
      %v8796 = vunpack.c.l.b16 %v8774
      %v8797 = vunpack.c.h.b16 %v8774
      %v8798 = vunpack.c.l.b16 %v8775
      %v8799 = vunpack.c.h.b16 %v8775
      %v8800 = vunpack.c.l.b16 %v8776
      %v8801 = vpack.c.b16 %v8791, %v8786
      %v8802 = vpack.c.b16 %v8792, %v8787
      %v8803 = vpack.c.b16 %v8793, %v8788
      %v8804 = vpack.c.b16 %v8794, %v8789
      %v8805 = vpack.c.b16 %v8795, %v8790
      %v8806 = vpack.c.b16 %v8796, %v8796
      %v8807 = vpack.c.b16 %v8797, %v8797
      %v8808 = vpack.c.b16 %v8798, %v8798
      %v8809 = vpack.c.b16 %v8799, %v8799
      %v8810 = vpack.c.b16 %v8800, %v8800
      %v8817 = vsel %vm334, %v8766, 0
      %v8820 = vsel %vm1188, %v8806, 0
      %v8823 = vsel %vm1188, %v8807, 0
      %v8826 = vsel %vm1188, %v8808, 0
      %v8829 = vsel %vm1188, %v8809, 0
      %v8832 = vsel %vm1188, %v8810, 0
      %8834 = vmatprep.subr.bf16.mxu0 0
      %8835 = vmatpush1.bf16.msra.mxu0 0
      %8836 = vmatprep.subr.bf16.mxu0 0
      %8837 = vmatpush1.bf16.msra.mxu0 0
      %8838 = vmatprep.subr.bf16.mxu0 0
      %8839 = vmatpush1.bf16.msra.mxu0 0
      %8840 = vmatprep.subr.bf16.mxu0 0
      %8841 = vmatpush1.bf16.msra.mxu0 0
      %8842 = vmatprep.subr.bf16.mxu0 0
      %8843 = vmatpush1.bf16.msra.mxu0 0
      %8844 = vmatprep.subr.bf16.mxu0 0
      %8845 = vmatpush1.bf16.msra.mxu0 0
      %8846 = vmatprep.subr.bf16.mxu0 %v8823
      %8847 = vmatpush1.bf16.msra.mxu0 %v8820
      %8848 = vmatprep.subr.bf16.mxu0 %v8802
      %8849 = vmatpush1.bf16.msra.mxu0 %v8801
      %8850 = vmatprep.subr.bf16.mxu0 0
      %8851 = vmatpush2.bf16.msra.mxu0 0
      %8852 = vmatprep.subr.bf16.mxu0 0
      %8853 = vmatpush2.bf16.msra.mxu0 0
      %8854 = vmatprep.subr.bf16.mxu0 0
      %8855 = vmatpush2.bf16.msra.mxu0 0
      %8856 = vmatprep.subr.bf16.mxu0 0
      %8857 = vmatpush2.bf16.msra.mxu0 0
      %8858 = vmatprep.subr.bf16.mxu0 0
      %8859 = vmatpush2.bf16.msra.mxu0 0
      %8860 = vmatprep.subr.bf16.mxu0 0
      %8861 = vmatpush2.bf16.msra.mxu0 0
      %8862 = vmatprep.subr.bf16.mxu0 0
      %8863 = vmatpush2.bf16.msra.mxu0 0
      %8864 = vmatprep.subr.bf16.mxu0 0
      %8865 = vmatpush2.bf16.msra.mxu0 0
      %8866 = vmatprep.mubr.bf16.mxu0 0
      %8867 = vmatmul.mubr.bf16.gmra.mxu0 %v8817
      %v8868 = vpop.f32.mrf.mxu0
      %v8869 = vadd.f32 0.0, %v8868
      %v8870 = vpop.f32.mrf.mxu0
      %v8871 = vadd.f32 0.0, %v8870
      %v8872 = vpop.f32.mrf.mxu0
      %v8873 = vpop.f32.mrf.mxu0
      %8874 = vdwg.mxu0
      %8875 = vmatprep.subr.bf16.mxu0 0
      %8876 = vmatpush1.bf16.msra.mxu0 0
      %8877 = vmatprep.subr.bf16.mxu0 0
      %8878 = vmatpush1.bf16.msra.mxu0 0
      %8879 = vmatprep.subr.bf16.mxu0 0
      %8880 = vmatpush1.bf16.msra.mxu0 0
      %8881 = vmatprep.subr.bf16.mxu0 0
      %8882 = vmatpush1.bf16.msra.mxu0 0
      %8883 = vmatprep.subr.bf16.mxu0 0
      %8884 = vmatpush1.bf16.msra.mxu0 0
      %8885 = vmatprep.subr.bf16.mxu0 0
      %8886 = vmatpush1.bf16.msra.mxu0 0
      %8887 = vmatprep.subr.bf16.mxu0 %v8829
      %8888 = vmatpush1.bf16.msra.mxu0 %v8826
      %8889 = vmatprep.subr.bf16.mxu0 %v8804
      %8890 = vmatpush1.bf16.msra.mxu0 %v8803
      %8891 = vmatprep.subr.bf16.mxu0 0
      %8892 = vmatpush2.bf16.msra.mxu0 0
      %8893 = vmatprep.subr.bf16.mxu0 0
      %8894 = vmatpush2.bf16.msra.mxu0 0
      %8895 = vmatprep.subr.bf16.mxu0 0
      %8896 = vmatpush2.bf16.msra.mxu0 0
      %8897 = vmatprep.subr.bf16.mxu0 0
      %8898 = vmatpush2.bf16.msra.mxu0 0
      %8899 = vmatprep.subr.bf16.mxu0 0
      %8900 = vmatpush2.bf16.msra.mxu0 0
      %8901 = vmatprep.subr.bf16.mxu0 0
      %8902 = vmatpush2.bf16.msra.mxu0 0
      %8903 = vmatprep.subr.bf16.mxu0 0
      %8904 = vmatpush2.bf16.msra.mxu0 0
      %8905 = vmatprep.subr.bf16.mxu0 0
      %8906 = vmatpush2.bf16.msra.mxu0 0
      %8907 = vmatprep.mubr.bf16.mxu0 0
      %8908 = vmatmul.mubr.bf16.gmra.mxu0 %v8817
      %v8909 = vpop.f32.mrf.mxu0
      %v8910 = vadd.f32 0.0, %v8909
      %v8911 = vpop.f32.mrf.mxu0
      %v8912 = vadd.f32 0.0, %v8911
      %v8913 = vpop.f32.mrf.mxu0
      %v8914 = vpop.f32.mrf.mxu0
      %8915 = vdwg.mxu0
      %8916 = vmatprep.subr.bf16.mxu0 0
      %8917 = vmatpush1.bf16.msra.mxu0 0
      %8918 = vmatprep.subr.bf16.mxu0 0
      %8919 = vmatpush1.bf16.msra.mxu0 0
      %8920 = vmatprep.subr.bf16.mxu0 0
      %8921 = vmatpush1.bf16.msra.mxu0 0
      %8922 = vmatprep.subr.bf16.mxu0 0
      %8923 = vmatpush1.bf16.msra.mxu0 0
      %8924 = vmatprep.subr.bf16.mxu0 0
      %8925 = vmatpush1.bf16.msra.mxu0 0
      %8926 = vmatprep.subr.bf16.mxu0 0
      %8927 = vmatpush1.bf16.msra.mxu0 0
      %8928 = vmatprep.subr.bf16.mxu0 0
      %8929 = vmatpush1.bf16.msra.mxu0 %v8832
      %8930 = vmatprep.subr.bf16.mxu0 0
      %8931 = vmatpush1.bf16.msra.mxu0 %v8805
      %8932 = vmatprep.subr.bf16.mxu0 0
      %8933 = vmatpush2.bf16.msra.mxu0 0
      %8934 = vmatprep.subr.bf16.mxu0 0
      %8935 = vmatpush2.bf16.msra.mxu0 0
      %8936 = vmatprep.subr.bf16.mxu0 0
      %8937 = vmatpush2.bf16.msra.mxu0 0
      %8938 = vmatprep.subr.bf16.mxu0 0
      %8939 = vmatpush2.bf16.msra.mxu0 0
      %8940 = vmatprep.subr.bf16.mxu0 0
      %8941 = vmatpush2.bf16.msra.mxu0 0
      %8942 = vmatprep.subr.bf16.mxu0 0
      %8943 = vmatpush2.bf16.msra.mxu0 0
      %8944 = vmatprep.subr.bf16.mxu0 0
      %8945 = vmatpush2.bf16.msra.mxu0 0
      %8946 = vmatprep.subr.bf16.mxu0 0
      %8947 = vmatpush2.bf16.msra.mxu0 0
      %8948 = vmatprep.mubr.bf16.mxu0 0
      %8949 = vmatmul.mubr.bf16.gmra.mxu0 %v8817
      %v8950 = vpop.f32.mrf.mxu0
      %v8951 = vadd.f32 0.0, %v8950
      %v8952 = vpop.f32.mrf.mxu0
      %v8953 = vpop.f32.mrf.mxu0
      %v8954 = vpop.f32.mrf.mxu0
      %8955 = vdwg.mxu0
      %v8956 = vadd.f32 %v8761, %v8869
      %v8957 = vadd.f32 %v8762, %v8871
      %v8958 = vadd.f32 %v8763, %v8910
      %v8959 = vadd.f32 %v8764, %v8912
      %v8960 = vadd.f32 %v8765, %v8951
      %v8961 = vpack.c.bf16 %v6428, %v6428
      %s8962 = scalar_lea.vmem %s282, 2040
      %v8963 = vld [vmem:[%s8962] sm:$0xff]
      %v8964 = vld [vmem:[%s8962 + $0x8] sm:$0xff]
      %v8965 = vld [vmem:[%s8962 + $0x10] sm:$0xf]
      %v8966 = vld [vmem:[%s8962 + $0x14] sm:$0xff]
      %v8967 = vld [vmem:[%s8962 + $0x1c] sm:$0xff]
      %v8968 = vld [vmem:[%s8962 + $0x24] sm:$0xf]
      %v8969 = vld [vmem:[%s8962 + $0x28] sm:$0x33]
      %v8970 = vld [vmem:[%s8962 + $0x30] sm:$0x33]
      %v8971 = vld [vmem:[%s8962 + $0x38] sm:$0x3]
      %v8981 = vunpack.c.l.b16 %v8963
      %v8982 = vunpack.c.h.b16 %v8963
      %v8983 = vunpack.c.l.b16 %v8964
      %v8984 = vunpack.c.h.b16 %v8964
      %v8985 = vunpack.c.l.b16 %v8965
      %v8986 = vunpack.c.l.b16 %v8966
      %v8987 = vunpack.c.h.b16 %v8966
      %v8988 = vunpack.c.l.b16 %v8967
      %v8989 = vunpack.c.h.b16 %v8967
      %v8990 = vunpack.c.l.b16 %v8968
      %v8991 = vunpack.c.l.b16 %v8969
      %v8992 = vunpack.c.h.b16 %v8969
      %v8993 = vunpack.c.l.b16 %v8970
      %v8994 = vunpack.c.h.b16 %v8970
      %v8995 = vunpack.c.l.b16 %v8971
      %v8996 = vpack.c.b16 %v8986, %v8981
      %v8997 = vpack.c.b16 %v8987, %v8982
      %v8998 = vpack.c.b16 %v8988, %v8983
      %v8999 = vpack.c.b16 %v8989, %v8984
      %v9000 = vpack.c.b16 %v8990, %v8985
      %v9001 = vpack.c.b16 %v8991, %v8991
      %v9002 = vpack.c.b16 %v8992, %v8992
      %v9003 = vpack.c.b16 %v8993, %v8993
      %v9004 = vpack.c.b16 %v8994, %v8994
      %v9005 = vpack.c.b16 %v8995, %v8995
      %v9012 = vsel %vm334, %v8961, 0
      %v9015 = vsel %vm1188, %v9001, 0
      %v9018 = vsel %vm1188, %v9002, 0
      %v9021 = vsel %vm1188, %v9003, 0
      %v9024 = vsel %vm1188, %v9004, 0
      %v9027 = vsel %vm1188, %v9005, 0
      %9029 = vmatprep.subr.bf16.mxu0 0
      %9030 = vmatpush1.bf16.msra.mxu0 0
      %9031 = vmatprep.subr.bf16.mxu0 0
      %9032 = vmatpush1.bf16.msra.mxu0 0
      %9033 = vmatprep.subr.bf16.mxu0 0
      %9034 = vmatpush1.bf16.msra.mxu0 0
      %9035 = vmatprep.subr.bf16.mxu0 0
      %9036 = vmatpush1.bf16.msra.mxu0 0
      %9037 = vmatprep.subr.bf16.mxu0 0
      %9038 = vmatpush1.bf16.msra.mxu0 0
      %9039 = vmatprep.subr.bf16.mxu0 0
      %9040 = vmatpush1.bf16.msra.mxu0 0
      %9041 = vmatprep.subr.bf16.mxu0 %v9018
      %9042 = vmatpush1.bf16.msra.mxu0 %v9015
      %9043 = vmatprep.subr.bf16.mxu0 %v8997
      %9044 = vmatpush1.bf16.msra.mxu0 %v8996
      %9045 = vmatprep.subr.bf16.mxu0 0
      %9046 = vmatpush2.bf16.msra.mxu0 0
      %9047 = vmatprep.subr.bf16.mxu0 0
      %9048 = vmatpush2.bf16.msra.mxu0 0
      %9049 = vmatprep.subr.bf16.mxu0 0
      %9050 = vmatpush2.bf16.msra.mxu0 0
      %9051 = vmatprep.subr.bf16.mxu0 0
      %9052 = vmatpush2.bf16.msra.mxu0 0
      %9053 = vmatprep.subr.bf16.mxu0 0
      %9054 = vmatpush2.bf16.msra.mxu0 0
      %9055 = vmatprep.subr.bf16.mxu0 0
      %9056 = vmatpush2.bf16.msra.mxu0 0
      %9057 = vmatprep.subr.bf16.mxu0 0
      %9058 = vmatpush2.bf16.msra.mxu0 0
      %9059 = vmatprep.subr.bf16.mxu0 0
      %9060 = vmatpush2.bf16.msra.mxu0 0
      %9061 = vmatprep.mubr.bf16.mxu0 0
      %9062 = vmatmul.mubr.bf16.gmra.mxu0 %v9012
      %v9063 = vpop.f32.mrf.mxu0
      %v9064 = vadd.f32 0.0, %v9063
      %v9065 = vpop.f32.mrf.mxu0
      %v9066 = vadd.f32 0.0, %v9065
      %v9067 = vpop.f32.mrf.mxu0
      %v9068 = vpop.f32.mrf.mxu0
      %9069 = vdwg.mxu0
      %9070 = vmatprep.subr.bf16.mxu0 0
      %9071 = vmatpush1.bf16.msra.mxu0 0
      %9072 = vmatprep.subr.bf16.mxu0 0
      %9073 = vmatpush1.bf16.msra.mxu0 0
      %9074 = vmatprep.subr.bf16.mxu0 0
      %9075 = vmatpush1.bf16.msra.mxu0 0
      %9076 = vmatprep.subr.bf16.mxu0 0
      %9077 = vmatpush1.bf16.msra.mxu0 0
      %9078 = vmatprep.subr.bf16.mxu0 0
      %9079 = vmatpush1.bf16.msra.mxu0 0
      %9080 = vmatprep.subr.bf16.mxu0 0
      %9081 = vmatpush1.bf16.msra.mxu0 0
      %9082 = vmatprep.subr.bf16.mxu0 %v9024
      %9083 = vmatpush1.bf16.msra.mxu0 %v9021
      %9084 = vmatprep.subr.bf16.mxu0 %v8999
      %9085 = vmatpush1.bf16.msra.mxu0 %v8998
      %9086 = vmatprep.subr.bf16.mxu0 0
      %9087 = vmatpush2.bf16.msra.mxu0 0
      %9088 = vmatprep.subr.bf16.mxu0 0
      %9089 = vmatpush2.bf16.msra.mxu0 0
      %9090 = vmatprep.subr.bf16.mxu0 0
      %9091 = vmatpush2.bf16.msra.mxu0 0
      %9092 = vmatprep.subr.bf16.mxu0 0
      %9093 = vmatpush2.bf16.msra.mxu0 0
      %9094 = vmatprep.subr.bf16.mxu0 0
      %9095 = vmatpush2.bf16.msra.mxu0 0
      %9096 = vmatprep.subr.bf16.mxu0 0
      %9097 = vmatpush2.bf16.msra.mxu0 0
      %9098 = vmatprep.subr.bf16.mxu0 0
      %9099 = vmatpush2.bf16.msra.mxu0 0
      %9100 = vmatprep.subr.bf16.mxu0 0
      %9101 = vmatpush2.bf16.msra.mxu0 0
      %9102 = vmatprep.mubr.bf16.mxu0 0
      %9103 = vmatmul.mubr.bf16.gmra.mxu0 %v9012
      %v9104 = vpop.f32.mrf.mxu0
      %v9105 = vadd.f32 0.0, %v9104
      %v9106 = vpop.f32.mrf.mxu0
      %v9107 = vadd.f32 0.0, %v9106
      %v9108 = vpop.f32.mrf.mxu0
      %v9109 = vpop.f32.mrf.mxu0
      %9110 = vdwg.mxu0
      %9111 = vmatprep.subr.bf16.mxu0 0
      %9112 = vmatpush1.bf16.msra.mxu0 0
      %9113 = vmatprep.subr.bf16.mxu0 0
      %9114 = vmatpush1.bf16.msra.mxu0 0
      %9115 = vmatprep.subr.bf16.mxu0 0
      %9116 = vmatpush1.bf16.msra.mxu0 0
      %9117 = vmatprep.subr.bf16.mxu0 0
      %9118 = vmatpush1.bf16.msra.mxu0 0
      %9119 = vmatprep.subr.bf16.mxu0 0
      %9120 = vmatpush1.bf16.msra.mxu0 0
      %9121 = vmatprep.subr.bf16.mxu0 0
      %9122 = vmatpush1.bf16.msra.mxu0 0
      %9123 = vmatprep.subr.bf16.mxu0 0
      %9124 = vmatpush1.bf16.msra.mxu0 %v9027
      %9125 = vmatprep.subr.bf16.mxu0 0
      %9126 = vmatpush1.bf16.msra.mxu0 %v9000
      %9127 = vmatprep.subr.bf16.mxu0 0
      %9128 = vmatpush2.bf16.msra.mxu0 0
      %9129 = vmatprep.subr.bf16.mxu0 0
      %9130 = vmatpush2.bf16.msra.mxu0 0
      %9131 = vmatprep.subr.bf16.mxu0 0
      %9132 = vmatpush2.bf16.msra.mxu0 0
      %9133 = vmatprep.subr.bf16.mxu0 0
      %9134 = vmatpush2.bf16.msra.mxu0 0
      %9135 = vmatprep.subr.bf16.mxu0 0
      %9136 = vmatpush2.bf16.msra.mxu0 0
      %9137 = vmatprep.subr.bf16.mxu0 0
      %9138 = vmatpush2.bf16.msra.mxu0 0
      %9139 = vmatprep.subr.bf16.mxu0 0
      %9140 = vmatpush2.bf16.msra.mxu0 0
      %9141 = vmatprep.subr.bf16.mxu0 0
      %9142 = vmatpush2.bf16.msra.mxu0 0
      %9143 = vmatprep.mubr.bf16.mxu0 0
      %9144 = vmatmul.mubr.bf16.gmra.mxu0 %v9012
      %v9145 = vpop.f32.mrf.mxu0
      %v9146 = vadd.f32 0.0, %v9145
      %v9147 = vpop.f32.mrf.mxu0
      %v9148 = vpop.f32.mrf.mxu0
      %v9149 = vpop.f32.mrf.mxu0
      %9150 = vdwg.mxu0
      %v9151 = vadd.f32 %v8956, %v9064
      %v9152 = vadd.f32 %v8957, %v9066
      %v9153 = vadd.f32 %v8958, %v9105
      %v9154 = vadd.f32 %v8959, %v9107
      %v9155 = vadd.f32 %v8960, %v9146
      %v9156 = vpack.c.bf16 %v6429, %v6429
      %s9157 = scalar_lea.vmem %s282, 2100
      %v9158 = vld [vmem:[%s9157] sm:$0xff]
      %v9159 = vld [vmem:[%s9157 + $0x8] sm:$0xff]
      %v9160 = vld [vmem:[%s9157 + $0x10] sm:$0xf]
      %v9161 = vld [vmem:[%s9157 + $0x14] sm:$0xff]
      %v9162 = vld [vmem:[%s9157 + $0x1c] sm:$0xff]
      %v9163 = vld [vmem:[%s9157 + $0x24] sm:$0xf]
      %v9164 = vld [vmem:[%s9157 + $0x28] sm:$0x33]
      %v9165 = vld [vmem:[%s9157 + $0x30] sm:$0x33]
      %v9166 = vld [vmem:[%s9157 + $0x38] sm:$0x3]
      %v9176 = vunpack.c.l.b16 %v9158
      %v9177 = vunpack.c.h.b16 %v9158
      %v9178 = vunpack.c.l.b16 %v9159
      %v9179 = vunpack.c.h.b16 %v9159
      %v9180 = vunpack.c.l.b16 %v9160
      %v9181 = vunpack.c.l.b16 %v9161
      %v9182 = vunpack.c.h.b16 %v9161
      %v9183 = vunpack.c.l.b16 %v9162
      %v9184 = vunpack.c.h.b16 %v9162
      %v9185 = vunpack.c.l.b16 %v9163
      %v9186 = vunpack.c.l.b16 %v9164
      %v9187 = vunpack.c.h.b16 %v9164
      %v9188 = vunpack.c.l.b16 %v9165
      %v9189 = vunpack.c.h.b16 %v9165
      %v9190 = vunpack.c.l.b16 %v9166
      %v9191 = vpack.c.b16 %v9181, %v9176
      %v9192 = vpack.c.b16 %v9182, %v9177
      %v9193 = vpack.c.b16 %v9183, %v9178
      %v9194 = vpack.c.b16 %v9184, %v9179
      %v9195 = vpack.c.b16 %v9185, %v9180
      %v9196 = vpack.c.b16 %v9186, %v9186
      %v9197 = vpack.c.b16 %v9187, %v9187
      %v9198 = vpack.c.b16 %v9188, %v9188
      %v9199 = vpack.c.b16 %v9189, %v9189
      %v9200 = vpack.c.b16 %v9190, %v9190
      %v9207 = vsel %vm334, %v9156, 0
      %v9210 = vsel %vm1188, %v9196, 0
      %v9213 = vsel %vm1188, %v9197, 0
      %v9216 = vsel %vm1188, %v9198, 0
      %v9219 = vsel %vm1188, %v9199, 0
      %v9222 = vsel %vm1188, %v9200, 0
      %9224 = vmatprep.subr.bf16.mxu0 0
      %9225 = vmatpush1.bf16.msra.mxu0 0
      %9226 = vmatprep.subr.bf16.mxu0 0
      %9227 = vmatpush1.bf16.msra.mxu0 0
      %9228 = vmatprep.subr.bf16.mxu0 0
      %9229 = vmatpush1.bf16.msra.mxu0 0
      %9230 = vmatprep.subr.bf16.mxu0 0
      %9231 = vmatpush1.bf16.msra.mxu0 0
      %9232 = vmatprep.subr.bf16.mxu0 0
      %9233 = vmatpush1.bf16.msra.mxu0 0
      %9234 = vmatprep.subr.bf16.mxu0 0
      %9235 = vmatpush1.bf16.msra.mxu0 0
      %9236 = vmatprep.subr.bf16.mxu0 %v9213
      %9237 = vmatpush1.bf16.msra.mxu0 %v9210
      %9238 = vmatprep.subr.bf16.mxu0 %v9192
      %9239 = vmatpush1.bf16.msra.mxu0 %v9191
      %9240 = vmatprep.subr.bf16.mxu0 0
      %9241 = vmatpush2.bf16.msra.mxu0 0
      %9242 = vmatprep.subr.bf16.mxu0 0
      %9243 = vmatpush2.bf16.msra.mxu0 0
      %9244 = vmatprep.subr.bf16.mxu0 0
      %9245 = vmatpush2.bf16.msra.mxu0 0
      %9246 = vmatprep.subr.bf16.mxu0 0
      %9247 = vmatpush2.bf16.msra.mxu0 0
      %9248 = vmatprep.subr.bf16.mxu0 0
      %9249 = vmatpush2.bf16.msra.mxu0 0
      %9250 = vmatprep.subr.bf16.mxu0 0
      %9251 = vmatpush2.bf16.msra.mxu0 0
      %9252 = vmatprep.subr.bf16.mxu0 0
      %9253 = vmatpush2.bf16.msra.mxu0 0
      %9254 = vmatprep.subr.bf16.mxu0 0
      %9255 = vmatpush2.bf16.msra.mxu0 0
      %9256 = vmatprep.mubr.bf16.mxu0 0
      %9257 = vmatmul.mubr.bf16.gmra.mxu0 %v9207
      %v9258 = vpop.f32.mrf.mxu0
      %v9259 = vadd.f32 0.0, %v9258
      %v9260 = vpop.f32.mrf.mxu0
      %v9261 = vadd.f32 0.0, %v9260
      %v9262 = vpop.f32.mrf.mxu0
      %v9263 = vpop.f32.mrf.mxu0
      %9264 = vdwg.mxu0
      %9265 = vmatprep.subr.bf16.mxu0 0
      %9266 = vmatpush1.bf16.msra.mxu0 0
      %9267 = vmatprep.subr.bf16.mxu0 0
      %9268 = vmatpush1.bf16.msra.mxu0 0
      %9269 = vmatprep.subr.bf16.mxu0 0
      %9270 = vmatpush1.bf16.msra.mxu0 0
      %9271 = vmatprep.subr.bf16.mxu0 0
      %9272 = vmatpush1.bf16.msra.mxu0 0
      %9273 = vmatprep.subr.bf16.mxu0 0
      %9274 = vmatpush1.bf16.msra.mxu0 0
      %9275 = vmatprep.subr.bf16.mxu0 0
      %9276 = vmatpush1.bf16.msra.mxu0 0
      %9277 = vmatprep.subr.bf16.mxu0 %v9219
      %9278 = vmatpush1.bf16.msra.mxu0 %v9216
      %9279 = vmatprep.subr.bf16.mxu0 %v9194
      %9280 = vmatpush1.bf16.msra.mxu0 %v9193
      %9281 = vmatprep.subr.bf16.mxu0 0
      %9282 = vmatpush2.bf16.msra.mxu0 0
      %9283 = vmatprep.subr.bf16.mxu0 0
      %9284 = vmatpush2.bf16.msra.mxu0 0
      %9285 = vmatprep.subr.bf16.mxu0 0
      %9286 = vmatpush2.bf16.msra.mxu0 0
      %9287 = vmatprep.subr.bf16.mxu0 0
      %9288 = vmatpush2.bf16.msra.mxu0 0
      %9289 = vmatprep.subr.bf16.mxu0 0
      %9290 = vmatpush2.bf16.msra.mxu0 0
      %9291 = vmatprep.subr.bf16.mxu0 0
      %9292 = vmatpush2.bf16.msra.mxu0 0
      %9293 = vmatprep.subr.bf16.mxu0 0
      %9294 = vmatpush2.bf16.msra.mxu0 0
      %9295 = vmatprep.subr.bf16.mxu0 0
      %9296 = vmatpush2.bf16.msra.mxu0 0
      %9297 = vmatprep.mubr.bf16.mxu0 0
      %9298 = vmatmul.mubr.bf16.gmra.mxu0 %v9207
      %v9299 = vpop.f32.mrf.mxu0
      %v9300 = vadd.f32 0.0, %v9299
      %v9301 = vpop.f32.mrf.mxu0
      %v9302 = vadd.f32 0.0, %v9301
      %v9303 = vpop.f32.mrf.mxu0
      %v9304 = vpop.f32.mrf.mxu0
      %9305 = vdwg.mxu0
      %9306 = vmatprep.subr.bf16.mxu0 0
      %9307 = vmatpush1.bf16.msra.mxu0 0
      %9308 = vmatprep.subr.bf16.mxu0 0
      %9309 = vmatpush1.bf16.msra.mxu0 0
      %9310 = vmatprep.subr.bf16.mxu0 0
      %9311 = vmatpush1.bf16.msra.mxu0 0
      %9312 = vmatprep.subr.bf16.mxu0 0
      %9313 = vmatpush1.bf16.msra.mxu0 0
      %9314 = vmatprep.subr.bf16.mxu0 0
      %9315 = vmatpush1.bf16.msra.mxu0 0
      %9316 = vmatprep.subr.bf16.mxu0 0
      %9317 = vmatpush1.bf16.msra.mxu0 0
      %9318 = vmatprep.subr.bf16.mxu0 0
      %9319 = vmatpush1.bf16.msra.mxu0 %v9222
      %9320 = vmatprep.subr.bf16.mxu0 0
      %9321 = vmatpush1.bf16.msra.mxu0 %v9195
      %9322 = vmatprep.subr.bf16.mxu0 0
      %9323 = vmatpush2.bf16.msra.mxu0 0
      %9324 = vmatprep.subr.bf16.mxu0 0
      %9325 = vmatpush2.bf16.msra.mxu0 0
      %9326 = vmatprep.subr.bf16.mxu0 0
      %9327 = vmatpush2.bf16.msra.mxu0 0
      %9328 = vmatprep.subr.bf16.mxu0 0
      %9329 = vmatpush2.bf16.msra.mxu0 0
      %9330 = vmatprep.subr.bf16.mxu0 0
      %9331 = vmatpush2.bf16.msra.mxu0 0
      %9332 = vmatprep.subr.bf16.mxu0 0
      %9333 = vmatpush2.bf16.msra.mxu0 0
      %9334 = vmatprep.subr.bf16.mxu0 0
      %9335 = vmatpush2.bf16.msra.mxu0 0
      %9336 = vmatprep.subr.bf16.mxu0 0
      %9337 = vmatpush2.bf16.msra.mxu0 0
      %9338 = vmatprep.mubr.bf16.mxu0 0
      %9339 = vmatmul.mubr.bf16.gmra.mxu0 %v9207
      %v9340 = vpop.f32.mrf.mxu0
      %v9341 = vadd.f32 0.0, %v9340
      %v9342 = vpop.f32.mrf.mxu0
      %v9343 = vpop.f32.mrf.mxu0
      %v9344 = vpop.f32.mrf.mxu0
      %9345 = vdwg.mxu0
      %v9346 = vadd.f32 %v9151, %v9259
      %v9347 = vadd.f32 %v9152, %v9261
      %v9348 = vadd.f32 %v9153, %v9300
      %v9349 = vadd.f32 %v9154, %v9302
      %v9350 = vadd.f32 %v9155, %v9341
      %v9351 = vpack.c.bf16 %v6430, %v6430
      %s9352 = scalar_lea.vmem %s282, 2160
      %v9353 = vld [vmem:[%s9352] sm:$0xff]
      %v9354 = vld [vmem:[%s9352 + $0x8] sm:$0xff]
      %v9355 = vld [vmem:[%s9352 + $0x10] sm:$0xf]
      %v9356 = vld [vmem:[%s9352 + $0x14] sm:$0xff]
      %v9357 = vld [vmem:[%s9352 + $0x1c] sm:$0xff]
      %v9358 = vld [vmem:[%s9352 + $0x24] sm:$0xf]
      %v9359 = vld [vmem:[%s9352 + $0x28] sm:$0x33]
      %v9360 = vld [vmem:[%s9352 + $0x30] sm:$0x33]
      %v9361 = vld [vmem:[%s9352 + $0x38] sm:$0x3]
      %v9371 = vunpack.c.l.b16 %v9353
      %v9372 = vunpack.c.h.b16 %v9353
      %v9373 = vunpack.c.l.b16 %v9354
      %v9374 = vunpack.c.h.b16 %v9354
      %v9375 = vunpack.c.l.b16 %v9355
      %v9376 = vunpack.c.l.b16 %v9356
      %v9377 = vunpack.c.h.b16 %v9356
      %v9378 = vunpack.c.l.b16 %v9357
      %v9379 = vunpack.c.h.b16 %v9357
      %v9380 = vunpack.c.l.b16 %v9358
      %v9381 = vunpack.c.l.b16 %v9359
      %v9382 = vunpack.c.h.b16 %v9359
      %v9383 = vunpack.c.l.b16 %v9360
      %v9384 = vunpack.c.h.b16 %v9360
      %v9385 = vunpack.c.l.b16 %v9361
      %v9386 = vpack.c.b16 %v9376, %v9371
      %v9387 = vpack.c.b16 %v9377, %v9372
      %v9388 = vpack.c.b16 %v9378, %v9373
      %v9389 = vpack.c.b16 %v9379, %v9374
      %v9390 = vpack.c.b16 %v9380, %v9375
      %v9391 = vpack.c.b16 %v9381, %v9381
      %v9392 = vpack.c.b16 %v9382, %v9382
      %v9393 = vpack.c.b16 %v9383, %v9383
      %v9394 = vpack.c.b16 %v9384, %v9384
      %v9395 = vpack.c.b16 %v9385, %v9385
      %v9402 = vsel %vm334, %v9351, 0
      %v9405 = vsel %vm1188, %v9391, 0
      %v9408 = vsel %vm1188, %v9392, 0
      %v9411 = vsel %vm1188, %v9393, 0
      %v9414 = vsel %vm1188, %v9394, 0
      %v9417 = vsel %vm1188, %v9395, 0
      %9419 = vmatprep.subr.bf16.mxu0 0
      %9420 = vmatpush1.bf16.msra.mxu0 0
      %9421 = vmatprep.subr.bf16.mxu0 0
      %9422 = vmatpush1.bf16.msra.mxu0 0
      %9423 = vmatprep.subr.bf16.mxu0 0
      %9424 = vmatpush1.bf16.msra.mxu0 0
      %9425 = vmatprep.subr.bf16.mxu0 0
      %9426 = vmatpush1.bf16.msra.mxu0 0
      %9427 = vmatprep.subr.bf16.mxu0 0
      %9428 = vmatpush1.bf16.msra.mxu0 0
      %9429 = vmatprep.subr.bf16.mxu0 0
      %9430 = vmatpush1.bf16.msra.mxu0 0
      %9431 = vmatprep.subr.bf16.mxu0 %v9408
      %9432 = vmatpush1.bf16.msra.mxu0 %v9405
      %9433 = vmatprep.subr.bf16.mxu0 %v9387
      %9434 = vmatpush1.bf16.msra.mxu0 %v9386
      %9435 = vmatprep.subr.bf16.mxu0 0
      %9436 = vmatpush2.bf16.msra.mxu0 0
      %9437 = vmatprep.subr.bf16.mxu0 0
      %9438 = vmatpush2.bf16.msra.mxu0 0
      %9439 = vmatprep.subr.bf16.mxu0 0
      %9440 = vmatpush2.bf16.msra.mxu0 0
      %9441 = vmatprep.subr.bf16.mxu0 0
      %9442 = vmatpush2.bf16.msra.mxu0 0
      %9443 = vmatprep.subr.bf16.mxu0 0
      %9444 = vmatpush2.bf16.msra.mxu0 0
      %9445 = vmatprep.subr.bf16.mxu0 0
      %9446 = vmatpush2.bf16.msra.mxu0 0
      %9447 = vmatprep.subr.bf16.mxu0 0
      %9448 = vmatpush2.bf16.msra.mxu0 0
      %9449 = vmatprep.subr.bf16.mxu0 0
      %9450 = vmatpush2.bf16.msra.mxu0 0
      %9451 = vmatprep.mubr.bf16.mxu0 0
      %9452 = vmatmul.mubr.bf16.gmra.mxu0 %v9402
      %v9453 = vpop.f32.mrf.mxu0
      %v9454 = vadd.f32 0.0, %v9453
      %v9455 = vpop.f32.mrf.mxu0
      %v9456 = vadd.f32 0.0, %v9455
      %v9457 = vpop.f32.mrf.mxu0
      %v9458 = vpop.f32.mrf.mxu0
      %9459 = vdwg.mxu0
      %9460 = vmatprep.subr.bf16.mxu0 0
      %9461 = vmatpush1.bf16.msra.mxu0 0
      %9462 = vmatprep.subr.bf16.mxu0 0
      %9463 = vmatpush1.bf16.msra.mxu0 0
      %9464 = vmatprep.subr.bf16.mxu0 0
      %9465 = vmatpush1.bf16.msra.mxu0 0
      %9466 = vmatprep.subr.bf16.mxu0 0
      %9467 = vmatpush1.bf16.msra.mxu0 0
      %9468 = vmatprep.subr.bf16.mxu0 0
      %9469 = vmatpush1.bf16.msra.mxu0 0
      %9470 = vmatprep.subr.bf16.mxu0 0
      %9471 = vmatpush1.bf16.msra.mxu0 0
      %9472 = vmatprep.subr.bf16.mxu0 %v9414
      %9473 = vmatpush1.bf16.msra.mxu0 %v9411
      %9474 = vmatprep.subr.bf16.mxu0 %v9389
      %9475 = vmatpush1.bf16.msra.mxu0 %v9388
      %9476 = vmatprep.subr.bf16.mxu0 0
      %9477 = vmatpush2.bf16.msra.mxu0 0
      %9478 = vmatprep.subr.bf16.mxu0 0
      %9479 = vmatpush2.bf16.msra.mxu0 0
      %9480 = vmatprep.subr.bf16.mxu0 0
      %9481 = vmatpush2.bf16.msra.mxu0 0
      %9482 = vmatprep.subr.bf16.mxu0 0
      %9483 = vmatpush2.bf16.msra.mxu0 0
      %9484 = vmatprep.subr.bf16.mxu0 0
      %9485 = vmatpush2.bf16.msra.mxu0 0
      %9486 = vmatprep.subr.bf16.mxu0 0
      %9487 = vmatpush2.bf16.msra.mxu0 0
      %9488 = vmatprep.subr.bf16.mxu0 0
      %9489 = vmatpush2.bf16.msra.mxu0 0
      %9490 = vmatprep.subr.bf16.mxu0 0
      %9491 = vmatpush2.bf16.msra.mxu0 0
      %9492 = vmatprep.mubr.bf16.mxu0 0
      %9493 = vmatmul.mubr.bf16.gmra.mxu0 %v9402
      %v9494 = vpop.f32.mrf.mxu0
      %v9495 = vadd.f32 0.0, %v9494
      %v9496 = vpop.f32.mrf.mxu0
      %v9497 = vadd.f32 0.0, %v9496
      %v9498 = vpop.f32.mrf.mxu0
      %v9499 = vpop.f32.mrf.mxu0
      %9500 = vdwg.mxu0
      %9501 = vmatprep.subr.bf16.mxu0 0
      %9502 = vmatpush1.bf16.msra.mxu0 0
      %9503 = vmatprep.subr.bf16.mxu0 0
      %9504 = vmatpush1.bf16.msra.mxu0 0
      %9505 = vmatprep.subr.bf16.mxu0 0
      %9506 = vmatpush1.bf16.msra.mxu0 0
      %9507 = vmatprep.subr.bf16.mxu0 0
      %9508 = vmatpush1.bf16.msra.mxu0 0
      %9509 = vmatprep.subr.bf16.mxu0 0
      %9510 = vmatpush1.bf16.msra.mxu0 0
      %9511 = vmatprep.subr.bf16.mxu0 0
      %9512 = vmatpush1.bf16.msra.mxu0 0
      %9513 = vmatprep.subr.bf16.mxu0 0
      %9514 = vmatpush1.bf16.msra.mxu0 %v9417
      %9515 = vmatprep.subr.bf16.mxu0 0
      %9516 = vmatpush1.bf16.msra.mxu0 %v9390
      %9517 = vmatprep.subr.bf16.mxu0 0
      %9518 = vmatpush2.bf16.msra.mxu0 0
      %9519 = vmatprep.subr.bf16.mxu0 0
      %9520 = vmatpush2.bf16.msra.mxu0 0
      %9521 = vmatprep.subr.bf16.mxu0 0
      %9522 = vmatpush2.bf16.msra.mxu0 0
      %9523 = vmatprep.subr.bf16.mxu0 0
      %9524 = vmatpush2.bf16.msra.mxu0 0
      %9525 = vmatprep.subr.bf16.mxu0 0
      %9526 = vmatpush2.bf16.msra.mxu0 0
      %9527 = vmatprep.subr.bf16.mxu0 0
      %9528 = vmatpush2.bf16.msra.mxu0 0
      %9529 = vmatprep.subr.bf16.mxu0 0
      %9530 = vmatpush2.bf16.msra.mxu0 0
      %9531 = vmatprep.subr.bf16.mxu0 0
      %9532 = vmatpush2.bf16.msra.mxu0 0
      %9533 = vmatprep.mubr.bf16.mxu0 0
      %9534 = vmatmul.mubr.bf16.gmra.mxu0 %v9402
      %v9535 = vpop.f32.mrf.mxu0
      %v9536 = vadd.f32 0.0, %v9535
      %v9537 = vpop.f32.mrf.mxu0
      %v9538 = vpop.f32.mrf.mxu0
      %v9539 = vpop.f32.mrf.mxu0
      %9540 = vdwg.mxu0
      %v9541 = vadd.f32 %v9346, %v9454
      %v9542 = vadd.f32 %v9347, %v9456
      %v9543 = vadd.f32 %v9348, %v9495
      %v9544 = vadd.f32 %v9349, %v9497
      %v9545 = vadd.f32 %v9350, %v9536
      %v9546 = vpack.c.bf16 %v6431, %v6431
      %s9547 = scalar_lea.vmem %s282, 2220
      %v9548 = vld [vmem:[%s9547] sm:$0xff]
      %v9549 = vld [vmem:[%s9547 + $0x8] sm:$0xff]
      %v9550 = vld [vmem:[%s9547 + $0x10] sm:$0xf]
      %v9551 = vld [vmem:[%s9547 + $0x14] sm:$0xff]
      %v9552 = vld [vmem:[%s9547 + $0x1c] sm:$0xff]
      %v9553 = vld [vmem:[%s9547 + $0x24] sm:$0xf]
      %v9554 = vld [vmem:[%s9547 + $0x28] sm:$0x33]
      %v9555 = vld [vmem:[%s9547 + $0x30] sm:$0x33]
      %v9556 = vld [vmem:[%s9547 + $0x38] sm:$0x3]
      %v9566 = vunpack.c.l.b16 %v9548
      %v9567 = vunpack.c.h.b16 %v9548
      %v9568 = vunpack.c.l.b16 %v9549
      %v9569 = vunpack.c.h.b16 %v9549
      %v9570 = vunpack.c.l.b16 %v9550
      %v9571 = vunpack.c.l.b16 %v9551
      %v9572 = vunpack.c.h.b16 %v9551
      %v9573 = vunpack.c.l.b16 %v9552
      %v9574 = vunpack.c.h.b16 %v9552
      %v9575 = vunpack.c.l.b16 %v9553
      %v9576 = vunpack.c.l.b16 %v9554
      %v9577 = vunpack.c.h.b16 %v9554
      %v9578 = vunpack.c.l.b16 %v9555
      %v9579 = vunpack.c.h.b16 %v9555
      %v9580 = vunpack.c.l.b16 %v9556
      %v9581 = vpack.c.b16 %v9571, %v9566
      %v9582 = vpack.c.b16 %v9572, %v9567
      %v9583 = vpack.c.b16 %v9573, %v9568
      %v9584 = vpack.c.b16 %v9574, %v9569
      %v9585 = vpack.c.b16 %v9575, %v9570
      %v9586 = vpack.c.b16 %v9576, %v9576
      %v9587 = vpack.c.b16 %v9577, %v9577
      %v9588 = vpack.c.b16 %v9578, %v9578
      %v9589 = vpack.c.b16 %v9579, %v9579
      %v9590 = vpack.c.b16 %v9580, %v9580
      %v9597 = vsel %vm334, %v9546, 0
      %v9600 = vsel %vm1188, %v9586, 0
      %v9603 = vsel %vm1188, %v9587, 0
      %v9606 = vsel %vm1188, %v9588, 0
      %v9609 = vsel %vm1188, %v9589, 0
      %v9612 = vsel %vm1188, %v9590, 0
      %9614 = vmatprep.subr.bf16.mxu0 0
      %9615 = vmatpush1.bf16.msra.mxu0 0
      %9616 = vmatprep.subr.bf16.mxu0 0
      %9617 = vmatpush1.bf16.msra.mxu0 0
      %9618 = vmatprep.subr.bf16.mxu0 0
      %9619 = vmatpush1.bf16.msra.mxu0 0
      %9620 = vmatprep.subr.bf16.mxu0 0
      %9621 = vmatpush1.bf16.msra.mxu0 0
      %9622 = vmatprep.subr.bf16.mxu0 0
      %9623 = vmatpush1.bf16.msra.mxu0 0
      %9624 = vmatprep.subr.bf16.mxu0 0
      %9625 = vmatpush1.bf16.msra.mxu0 0
      %9626 = vmatprep.subr.bf16.mxu0 %v9603
      %9627 = vmatpush1.bf16.msra.mxu0 %v9600
      %9628 = vmatprep.subr.bf16.mxu0 %v9582
      %9629 = vmatpush1.bf16.msra.mxu0 %v9581
      %9630 = vmatprep.subr.bf16.mxu0 0
      %9631 = vmatpush2.bf16.msra.mxu0 0
      %9632 = vmatprep.subr.bf16.mxu0 0
      %9633 = vmatpush2.bf16.msra.mxu0 0
      %9634 = vmatprep.subr.bf16.mxu0 0
      %9635 = vmatpush2.bf16.msra.mxu0 0
      %9636 = vmatprep.subr.bf16.mxu0 0
      %9637 = vmatpush2.bf16.msra.mxu0 0
      %9638 = vmatprep.subr.bf16.mxu0 0
      %9639 = vmatpush2.bf16.msra.mxu0 0
      %9640 = vmatprep.subr.bf16.mxu0 0
      %9641 = vmatpush2.bf16.msra.mxu0 0
      %9642 = vmatprep.subr.bf16.mxu0 0
      %9643 = vmatpush2.bf16.msra.mxu0 0
      %9644 = vmatprep.subr.bf16.mxu0 0
      %9645 = vmatpush2.bf16.msra.mxu0 0
      %9646 = vmatprep.mubr.bf16.mxu0 0
      %9647 = vmatmul.mubr.bf16.gmra.mxu0 %v9597
      %v9648 = vpop.f32.mrf.mxu0
      %v9649 = vadd.f32 0.0, %v9648
      %v9650 = vpop.f32.mrf.mxu0
      %v9651 = vadd.f32 0.0, %v9650
      %v9652 = vpop.f32.mrf.mxu0
      %v9653 = vpop.f32.mrf.mxu0
      %9654 = vdwg.mxu0
      %9655 = vmatprep.subr.bf16.mxu0 0
      %9656 = vmatpush1.bf16.msra.mxu0 0
      %9657 = vmatprep.subr.bf16.mxu0 0
      %9658 = vmatpush1.bf16.msra.mxu0 0
      %9659 = vmatprep.subr.bf16.mxu0 0
      %9660 = vmatpush1.bf16.msra.mxu0 0
      %9661 = vmatprep.subr.bf16.mxu0 0
      %9662 = vmatpush1.bf16.msra.mxu0 0
      %9663 = vmatprep.subr.bf16.mxu0 0
      %9664 = vmatpush1.bf16.msra.mxu0 0
      %9665 = vmatprep.subr.bf16.mxu0 0
      %9666 = vmatpush1.bf16.msra.mxu0 0
      %9667 = vmatprep.subr.bf16.mxu0 %v9609
      %9668 = vmatpush1.bf16.msra.mxu0 %v9606
      %9669 = vmatprep.subr.bf16.mxu0 %v9584
      %9670 = vmatpush1.bf16.msra.mxu0 %v9583
      %9671 = vmatprep.subr.bf16.mxu0 0
      %9672 = vmatpush2.bf16.msra.mxu0 0
      %9673 = vmatprep.subr.bf16.mxu0 0
      %9674 = vmatpush2.bf16.msra.mxu0 0
      %9675 = vmatprep.subr.bf16.mxu0 0
      %9676 = vmatpush2.bf16.msra.mxu0 0
      %9677 = vmatprep.subr.bf16.mxu0 0
      %9678 = vmatpush2.bf16.msra.mxu0 0
      %9679 = vmatprep.subr.bf16.mxu0 0
      %9680 = vmatpush2.bf16.msra.mxu0 0
      %9681 = vmatprep.subr.bf16.mxu0 0
      %9682 = vmatpush2.bf16.msra.mxu0 0
      %9683 = vmatprep.subr.bf16.mxu0 0
      %9684 = vmatpush2.bf16.msra.mxu0 0
      %9685 = vmatprep.subr.bf16.mxu0 0
      %9686 = vmatpush2.bf16.msra.mxu0 0
      %9687 = vmatprep.mubr.bf16.mxu0 0
      %9688 = vmatmul.mubr.bf16.gmra.mxu0 %v9597
      %v9689 = vpop.f32.mrf.mxu0
      %v9690 = vadd.f32 0.0, %v9689
      %v9691 = vpop.f32.mrf.mxu0
      %v9692 = vadd.f32 0.0, %v9691
      %v9693 = vpop.f32.mrf.mxu0
      %v9694 = vpop.f32.mrf.mxu0
      %9695 = vdwg.mxu0
      %9696 = vmatprep.subr.bf16.mxu0 0
      %9697 = vmatpush1.bf16.msra.mxu0 0
      %9698 = vmatprep.subr.bf16.mxu0 0
      %9699 = vmatpush1.bf16.msra.mxu0 0
      %9700 = vmatprep.subr.bf16.mxu0 0
      %9701 = vmatpush1.bf16.msra.mxu0 0
      %9702 = vmatprep.subr.bf16.mxu0 0
      %9703 = vmatpush1.bf16.msra.mxu0 0
      %9704 = vmatprep.subr.bf16.mxu0 0
      %9705 = vmatpush1.bf16.msra.mxu0 0
      %9706 = vmatprep.subr.bf16.mxu0 0
      %9707 = vmatpush1.bf16.msra.mxu0 0
      %9708 = vmatprep.subr.bf16.mxu0 0
      %9709 = vmatpush1.bf16.msra.mxu0 %v9612
      %9710 = vmatprep.subr.bf16.mxu0 0
      %9711 = vmatpush1.bf16.msra.mxu0 %v9585
      %9712 = vmatprep.subr.bf16.mxu0 0
      %9713 = vmatpush2.bf16.msra.mxu0 0
      %9714 = vmatprep.subr.bf16.mxu0 0
      %9715 = vmatpush2.bf16.msra.mxu0 0
      %9716 = vmatprep.subr.bf16.mxu0 0
      %9717 = vmatpush2.bf16.msra.mxu0 0
      %9718 = vmatprep.subr.bf16.mxu0 0
      %9719 = vmatpush2.bf16.msra.mxu0 0
      %9720 = vmatprep.subr.bf16.mxu0 0
      %9721 = vmatpush2.bf16.msra.mxu0 0
      %9722 = vmatprep.subr.bf16.mxu0 0
      %9723 = vmatpush2.bf16.msra.mxu0 0
      %9724 = vmatprep.subr.bf16.mxu0 0
      %9725 = vmatpush2.bf16.msra.mxu0 0
      %9726 = vmatprep.subr.bf16.mxu0 0
      %9727 = vmatpush2.bf16.msra.mxu0 0
      %9728 = vmatprep.mubr.bf16.mxu0 0
      %9729 = vmatmul.mubr.bf16.gmra.mxu0 %v9597
      %v9730 = vpop.f32.mrf.mxu0
      %v9731 = vadd.f32 0.0, %v9730
      %v9732 = vpop.f32.mrf.mxu0
      %v9733 = vpop.f32.mrf.mxu0
      %v9734 = vpop.f32.mrf.mxu0
      %9735 = vdwg.mxu0
      %v9736 = vadd.f32 %v9541, %v9649
      %v9737 = vadd.f32 %v9542, %v9651
      %v9738 = vadd.f32 %v9543, %v9690
      %v9739 = vadd.f32 %v9544, %v9692
      %v9740 = vadd.f32 %v9545, %v9731
      %v9741 = vpack.c.bf16 %v6432, %v6432
      %s9742 = scalar_lea.vmem %s282, 2280
      %v9743 = vld [vmem:[%s9742] sm:$0xff]
      %v9744 = vld [vmem:[%s9742 + $0x8] sm:$0xff]
      %v9745 = vld [vmem:[%s9742 + $0x10] sm:$0xf]
      %v9746 = vld [vmem:[%s9742 + $0x14] sm:$0xff]
      %v9747 = vld [vmem:[%s9742 + $0x1c] sm:$0xff]
      %v9748 = vld [vmem:[%s9742 + $0x24] sm:$0xf]
      %v9749 = vld [vmem:[%s9742 + $0x28] sm:$0x33]
      %v9750 = vld [vmem:[%s9742 + $0x30] sm:$0x33]
      %v9751 = vld [vmem:[%s9742 + $0x38] sm:$0x3]
      %v9761 = vunpack.c.l.b16 %v9743
      %v9762 = vunpack.c.h.b16 %v9743
      %v9763 = vunpack.c.l.b16 %v9744
      %v9764 = vunpack.c.h.b16 %v9744
      %v9765 = vunpack.c.l.b16 %v9745
      %v9766 = vunpack.c.l.b16 %v9746
      %v9767 = vunpack.c.h.b16 %v9746
      %v9768 = vunpack.c.l.b16 %v9747
      %v9769 = vunpack.c.h.b16 %v9747
      %v9770 = vunpack.c.l.b16 %v9748
      %v9771 = vunpack.c.l.b16 %v9749
      %v9772 = vunpack.c.h.b16 %v9749
      %v9773 = vunpack.c.l.b16 %v9750
      %v9774 = vunpack.c.h.b16 %v9750
      %v9775 = vunpack.c.l.b16 %v9751
      %v9776 = vpack.c.b16 %v9766, %v9761
      %v9777 = vpack.c.b16 %v9767, %v9762
      %v9778 = vpack.c.b16 %v9768, %v9763
      %v9779 = vpack.c.b16 %v9769, %v9764
      %v9780 = vpack.c.b16 %v9770, %v9765
      %v9781 = vpack.c.b16 %v9771, %v9771
      %v9782 = vpack.c.b16 %v9772, %v9772
      %v9783 = vpack.c.b16 %v9773, %v9773
      %v9784 = vpack.c.b16 %v9774, %v9774
      %v9785 = vpack.c.b16 %v9775, %v9775
      %v9792 = vsel %vm334, %v9741, 0
      %v9795 = vsel %vm1188, %v9781, 0
      %v9798 = vsel %vm1188, %v9782, 0
      %v9801 = vsel %vm1188, %v9783, 0
      %v9804 = vsel %vm1188, %v9784, 0
      %v9807 = vsel %vm1188, %v9785, 0
      %9809 = vmatprep.subr.bf16.mxu0 0
      %9810 = vmatpush1.bf16.msra.mxu0 0
      %9811 = vmatprep.subr.bf16.mxu0 0
      %9812 = vmatpush1.bf16.msra.mxu0 0
      %9813 = vmatprep.subr.bf16.mxu0 0
      %9814 = vmatpush1.bf16.msra.mxu0 0
      %9815 = vmatprep.subr.bf16.mxu0 0
      %9816 = vmatpush1.bf16.msra.mxu0 0
      %9817 = vmatprep.subr.bf16.mxu0 0
      %9818 = vmatpush1.bf16.msra.mxu0 0
      %9819 = vmatprep.subr.bf16.mxu0 0
      %9820 = vmatpush1.bf16.msra.mxu0 0
      %9821 = vmatprep.subr.bf16.mxu0 %v9798
      %9822 = vmatpush1.bf16.msra.mxu0 %v9795
      %9823 = vmatprep.subr.bf16.mxu0 %v9777
      %9824 = vmatpush1.bf16.msra.mxu0 %v9776
      %9825 = vmatprep.subr.bf16.mxu0 0
      %9826 = vmatpush2.bf16.msra.mxu0 0
      %9827 = vmatprep.subr.bf16.mxu0 0
      %9828 = vmatpush2.bf16.msra.mxu0 0
      %9829 = vmatprep.subr.bf16.mxu0 0
      %9830 = vmatpush2.bf16.msra.mxu0 0
      %9831 = vmatprep.subr.bf16.mxu0 0
      %9832 = vmatpush2.bf16.msra.mxu0 0
      %9833 = vmatprep.subr.bf16.mxu0 0
      %9834 = vmatpush2.bf16.msra.mxu0 0
      %9835 = vmatprep.subr.bf16.mxu0 0
      %9836 = vmatpush2.bf16.msra.mxu0 0
      %9837 = vmatprep.subr.bf16.mxu0 0
      %9838 = vmatpush2.bf16.msra.mxu0 0
      %9839 = vmatprep.subr.bf16.mxu0 0
      %9840 = vmatpush2.bf16.msra.mxu0 0
      %9841 = vmatprep.mubr.bf16.mxu0 0
      %9842 = vmatmul.mubr.bf16.gmra.mxu0 %v9792
      %v9843 = vpop.f32.mrf.mxu0
      %v9844 = vadd.f32 0.0, %v9843
      %v9845 = vpop.f32.mrf.mxu0
      %v9846 = vadd.f32 0.0, %v9845
      %v9847 = vpop.f32.mrf.mxu0
      %v9848 = vpop.f32.mrf.mxu0
      %9849 = vdwg.mxu0
      %9850 = vmatprep.subr.bf16.mxu0 0
      %9851 = vmatpush1.bf16.msra.mxu0 0
      %9852 = vmatprep.subr.bf16.mxu0 0
      %9853 = vmatpush1.bf16.msra.mxu0 0
      %9854 = vmatprep.subr.bf16.mxu0 0
      %9855 = vmatpush1.bf16.msra.mxu0 0
      %9856 = vmatprep.subr.bf16.mxu0 0
      %9857 = vmatpush1.bf16.msra.mxu0 0
      %9858 = vmatprep.subr.bf16.mxu0 0
      %9859 = vmatpush1.bf16.msra.mxu0 0
      %9860 = vmatprep.subr.bf16.mxu0 0
      %9861 = vmatpush1.bf16.msra.mxu0 0
      %9862 = vmatprep.subr.bf16.mxu0 %v9804
      %9863 = vmatpush1.bf16.msra.mxu0 %v9801
      %9864 = vmatprep.subr.bf16.mxu0 %v9779
      %9865 = vmatpush1.bf16.msra.mxu0 %v9778
      %9866 = vmatprep.subr.bf16.mxu0 0
      %9867 = vmatpush2.bf16.msra.mxu0 0
      %9868 = vmatprep.subr.bf16.mxu0 0
      %9869 = vmatpush2.bf16.msra.mxu0 0
      %9870 = vmatprep.subr.bf16.mxu0 0
      %9871 = vmatpush2.bf16.msra.mxu0 0
      %9872 = vmatprep.subr.bf16.mxu0 0
      %9873 = vmatpush2.bf16.msra.mxu0 0
      %9874 = vmatprep.subr.bf16.mxu0 0
      %9875 = vmatpush2.bf16.msra.mxu0 0
      %9876 = vmatprep.subr.bf16.mxu0 0
      %9877 = vmatpush2.bf16.msra.mxu0 0
      %9878 = vmatprep.subr.bf16.mxu0 0
      %9879 = vmatpush2.bf16.msra.mxu0 0
      %9880 = vmatprep.subr.bf16.mxu0 0
      %9881 = vmatpush2.bf16.msra.mxu0 0
      %9882 = vmatprep.mubr.bf16.mxu0 0
      %9883 = vmatmul.mubr.bf16.gmra.mxu0 %v9792
      %v9884 = vpop.f32.mrf.mxu0
      %v9885 = vadd.f32 0.0, %v9884
      %v9886 = vpop.f32.mrf.mxu0
      %v9887 = vadd.f32 0.0, %v9886
      %v9888 = vpop.f32.mrf.mxu0
      %v9889 = vpop.f32.mrf.mxu0
      %9890 = vdwg.mxu0
      %9891 = vmatprep.subr.bf16.mxu0 0
      %9892 = vmatpush1.bf16.msra.mxu0 0
      %9893 = vmatprep.subr.bf16.mxu0 0
      %9894 = vmatpush1.bf16.msra.mxu0 0
      %9895 = vmatprep.subr.bf16.mxu0 0
      %9896 = vmatpush1.bf16.msra.mxu0 0
      %9897 = vmatprep.subr.bf16.mxu0 0
      %9898 = vmatpush1.bf16.msra.mxu0 0
      %9899 = vmatprep.subr.bf16.mxu0 0
      %9900 = vmatpush1.bf16.msra.mxu0 0
      %9901 = vmatprep.subr.bf16.mxu0 0
      %9902 = vmatpush1.bf16.msra.mxu0 0
      %9903 = vmatprep.subr.bf16.mxu0 0
      %9904 = vmatpush1.bf16.msra.mxu0 %v9807
      %9905 = vmatprep.subr.bf16.mxu0 0
      %9906 = vmatpush1.bf16.msra.mxu0 %v9780
      %9907 = vmatprep.subr.bf16.mxu0 0
      %9908 = vmatpush2.bf16.msra.mxu0 0
      %9909 = vmatprep.subr.bf16.mxu0 0
      %9910 = vmatpush2.bf16.msra.mxu0 0
      %9911 = vmatprep.subr.bf16.mxu0 0
      %9912 = vmatpush2.bf16.msra.mxu0 0
      %9913 = vmatprep.subr.bf16.mxu0 0
      %9914 = vmatpush2.bf16.msra.mxu0 0
      %9915 = vmatprep.subr.bf16.mxu0 0
      %9916 = vmatpush2.bf16.msra.mxu0 0
      %9917 = vmatprep.subr.bf16.mxu0 0
      %9918 = vmatpush2.bf16.msra.mxu0 0
      %9919 = vmatprep.subr.bf16.mxu0 0
      %9920 = vmatpush2.bf16.msra.mxu0 0
      %9921 = vmatprep.subr.bf16.mxu0 0
      %9922 = vmatpush2.bf16.msra.mxu0 0
      %9923 = vmatprep.mubr.bf16.mxu0 0
      %9924 = vmatmul.mubr.bf16.gmra.mxu0 %v9792
      %v9925 = vpop.f32.mrf.mxu0
      %v9926 = vadd.f32 0.0, %v9925
      %v9927 = vpop.f32.mrf.mxu0
      %v9928 = vpop.f32.mrf.mxu0
      %v9929 = vpop.f32.mrf.mxu0
      %9930 = vdwg.mxu0
      %v9931 = vadd.f32 %v9736, %v9844
      %v9932 = vadd.f32 %v9737, %v9846
      %v9933 = vadd.f32 %v9738, %v9885
      %v9934 = vadd.f32 %v9739, %v9887
      %v9935 = vadd.f32 %v9740, %v9926
      %v9936 = vpack.c.bf16 %v6433, %v6433
      %s9937 = scalar_lea.vmem %s282, 2340
      %v9938 = vld [vmem:[%s9937] sm:$0xff]
      %v9939 = vld [vmem:[%s9937 + $0x8] sm:$0xff]
      %v9940 = vld [vmem:[%s9937 + $0x10] sm:$0xf]
      %v9941 = vld [vmem:[%s9937 + $0x14] sm:$0xff]
      %v9942 = vld [vmem:[%s9937 + $0x1c] sm:$0xff]
      %v9943 = vld [vmem:[%s9937 + $0x24] sm:$0xf]
      %v9944 = vld [vmem:[%s9937 + $0x28] sm:$0x33]
      %v9945 = vld [vmem:[%s9937 + $0x30] sm:$0x33]
      %v9946 = vld [vmem:[%s9937 + $0x38] sm:$0x3]
      %v9956 = vunpack.c.l.b16 %v9938
      %v9957 = vunpack.c.h.b16 %v9938
      %v9958 = vunpack.c.l.b16 %v9939
      %v9959 = vunpack.c.h.b16 %v9939
      %v9960 = vunpack.c.l.b16 %v9940
      %v9961 = vunpack.c.l.b16 %v9941
      %v9962 = vunpack.c.h.b16 %v9941
      %v9963 = vunpack.c.l.b16 %v9942
      %v9964 = vunpack.c.h.b16 %v9942
      %v9965 = vunpack.c.l.b16 %v9943
      %v9966 = vunpack.c.l.b16 %v9944
      %v9967 = vunpack.c.h.b16 %v9944
      %v9968 = vunpack.c.l.b16 %v9945
      %v9969 = vunpack.c.h.b16 %v9945
      %v9970 = vunpack.c.l.b16 %v9946
      %v9971 = vpack.c.b16 %v9961, %v9956
      %v9972 = vpack.c.b16 %v9962, %v9957
      %v9973 = vpack.c.b16 %v9963, %v9958
      %v9974 = vpack.c.b16 %v9964, %v9959
      %v9975 = vpack.c.b16 %v9965, %v9960
      %v9976 = vpack.c.b16 %v9966, %v9966
      %v9977 = vpack.c.b16 %v9967, %v9967
      %v9978 = vpack.c.b16 %v9968, %v9968
      %v9979 = vpack.c.b16 %v9969, %v9969
      %v9980 = vpack.c.b16 %v9970, %v9970
      %v9987 = vsel %vm334, %v9936, 0
      %v9990 = vsel %vm1188, %v9976, 0
      %v9993 = vsel %vm1188, %v9977, 0
      %v9996 = vsel %vm1188, %v9978, 0
      %v9999 = vsel %vm1188, %v9979, 0
      %v10002 = vsel %vm1188, %v9980, 0
      %10004 = vmatprep.subr.bf16.mxu0 0
      %10005 = vmatpush1.bf16.msra.mxu0 0
      %10006 = vmatprep.subr.bf16.mxu0 0
      %10007 = vmatpush1.bf16.msra.mxu0 0
      %10008 = vmatprep.subr.bf16.mxu0 0
      %10009 = vmatpush1.bf16.msra.mxu0 0
      %10010 = vmatprep.subr.bf16.mxu0 0
      %10011 = vmatpush1.bf16.msra.mxu0 0
      %10012 = vmatprep.subr.bf16.mxu0 0
      %10013 = vmatpush1.bf16.msra.mxu0 0
      %10014 = vmatprep.subr.bf16.mxu0 0
      %10015 = vmatpush1.bf16.msra.mxu0 0
      %10016 = vmatprep.subr.bf16.mxu0 %v9993
      %10017 = vmatpush1.bf16.msra.mxu0 %v9990
      %10018 = vmatprep.subr.bf16.mxu0 %v9972
      %10019 = vmatpush1.bf16.msra.mxu0 %v9971
      %10020 = vmatprep.subr.bf16.mxu0 0
      %10021 = vmatpush2.bf16.msra.mxu0 0
      %10022 = vmatprep.subr.bf16.mxu0 0
      %10023 = vmatpush2.bf16.msra.mxu0 0
      %10024 = vmatprep.subr.bf16.mxu0 0
      %10025 = vmatpush2.bf16.msra.mxu0 0
      %10026 = vmatprep.subr.bf16.mxu0 0
      %10027 = vmatpush2.bf16.msra.mxu0 0
      %10028 = vmatprep.subr.bf16.mxu0 0
      %10029 = vmatpush2.bf16.msra.mxu0 0
      %10030 = vmatprep.subr.bf16.mxu0 0
      %10031 = vmatpush2.bf16.msra.mxu0 0
      %10032 = vmatprep.subr.bf16.mxu0 0
      %10033 = vmatpush2.bf16.msra.mxu0 0
      %10034 = vmatprep.subr.bf16.mxu0 0
      %10035 = vmatpush2.bf16.msra.mxu0 0
      %10036 = vmatprep.mubr.bf16.mxu0 0
      %10037 = vmatmul.mubr.bf16.gmra.mxu0 %v9987
      %v10038 = vpop.f32.mrf.mxu0
      %v10039 = vadd.f32 0.0, %v10038
      %v10040 = vpop.f32.mrf.mxu0
      %v10041 = vadd.f32 0.0, %v10040
      %v10042 = vpop.f32.mrf.mxu0
      %v10043 = vpop.f32.mrf.mxu0
      %10044 = vdwg.mxu0
      %10045 = vmatprep.subr.bf16.mxu0 0
      %10046 = vmatpush1.bf16.msra.mxu0 0
      %10047 = vmatprep.subr.bf16.mxu0 0
      %10048 = vmatpush1.bf16.msra.mxu0 0
      %10049 = vmatprep.subr.bf16.mxu0 0
      %10050 = vmatpush1.bf16.msra.mxu0 0
      %10051 = vmatprep.subr.bf16.mxu0 0
      %10052 = vmatpush1.bf16.msra.mxu0 0
      %10053 = vmatprep.subr.bf16.mxu0 0
      %10054 = vmatpush1.bf16.msra.mxu0 0
      %10055 = vmatprep.subr.bf16.mxu0 0
      %10056 = vmatpush1.bf16.msra.mxu0 0
      %10057 = vmatprep.subr.bf16.mxu0 %v9999
      %10058 = vmatpush1.bf16.msra.mxu0 %v9996
      %10059 = vmatprep.subr.bf16.mxu0 %v9974
      %10060 = vmatpush1.bf16.msra.mxu0 %v9973
      %10061 = vmatprep.subr.bf16.mxu0 0
      %10062 = vmatpush2.bf16.msra.mxu0 0
      %10063 = vmatprep.subr.bf16.mxu0 0
      %10064 = vmatpush2.bf16.msra.mxu0 0
      %10065 = vmatprep.subr.bf16.mxu0 0
      %10066 = vmatpush2.bf16.msra.mxu0 0
      %10067 = vmatprep.subr.bf16.mxu0 0
      %10068 = vmatpush2.bf16.msra.mxu0 0
      %10069 = vmatprep.subr.bf16.mxu0 0
      %10070 = vmatpush2.bf16.msra.mxu0 0
      %10071 = vmatprep.subr.bf16.mxu0 0
      %10072 = vmatpush2.bf16.msra.mxu0 0
      %10073 = vmatprep.subr.bf16.mxu0 0
      %10074 = vmatpush2.bf16.msra.mxu0 0
      %10075 = vmatprep.subr.bf16.mxu0 0
      %10076 = vmatpush2.bf16.msra.mxu0 0
      %10077 = vmatprep.mubr.bf16.mxu0 0
      %10078 = vmatmul.mubr.bf16.gmra.mxu0 %v9987
      %v10079 = vpop.f32.mrf.mxu0
      %v10080 = vadd.f32 0.0, %v10079
      %v10081 = vpop.f32.mrf.mxu0
      %v10082 = vadd.f32 0.0, %v10081
      %v10083 = vpop.f32.mrf.mxu0
      %v10084 = vpop.f32.mrf.mxu0
      %10085 = vdwg.mxu0
      %10086 = vmatprep.subr.bf16.mxu0 0
      %10087 = vmatpush1.bf16.msra.mxu0 0
      %10088 = vmatprep.subr.bf16.mxu0 0
      %10089 = vmatpush1.bf16.msra.mxu0 0
      %10090 = vmatprep.subr.bf16.mxu0 0
      %10091 = vmatpush1.bf16.msra.mxu0 0
      %10092 = vmatprep.subr.bf16.mxu0 0
      %10093 = vmatpush1.bf16.msra.mxu0 0
      %10094 = vmatprep.subr.bf16.mxu0 0
      %10095 = vmatpush1.bf16.msra.mxu0 0
      %10096 = vmatprep.subr.bf16.mxu0 0
      %10097 = vmatpush1.bf16.msra.mxu0 0
      %10098 = vmatprep.subr.bf16.mxu0 0
      %10099 = vmatpush1.bf16.msra.mxu0 %v10002
      %10100 = vmatprep.subr.bf16.mxu0 0
      %10101 = vmatpush1.bf16.msra.mxu0 %v9975
      %10102 = vmatprep.subr.bf16.mxu0 0
      %10103 = vmatpush2.bf16.msra.mxu0 0
      %10104 = vmatprep.subr.bf16.mxu0 0
      %10105 = vmatpush2.bf16.msra.mxu0 0
      %10106 = vmatprep.subr.bf16.mxu0 0
      %10107 = vmatpush2.bf16.msra.mxu0 0
      %10108 = vmatprep.subr.bf16.mxu0 0
      %10109 = vmatpush2.bf16.msra.mxu0 0
      %10110 = vmatprep.subr.bf16.mxu0 0
      %10111 = vmatpush2.bf16.msra.mxu0 0
      %10112 = vmatprep.subr.bf16.mxu0 0
      %10113 = vmatpush2.bf16.msra.mxu0 0
      %10114 = vmatprep.subr.bf16.mxu0 0
      %10115 = vmatpush2.bf16.msra.mxu0 0
      %10116 = vmatprep.subr.bf16.mxu0 0
      %10117 = vmatpush2.bf16.msra.mxu0 0
      %10118 = vmatprep.mubr.bf16.mxu0 0
      %10119 = vmatmul.mubr.bf16.gmra.mxu0 %v9987
      %v10120 = vpop.f32.mrf.mxu0
      %v10121 = vadd.f32 0.0, %v10120
      %v10122 = vpop.f32.mrf.mxu0
      %v10123 = vpop.f32.mrf.mxu0
      %v10124 = vpop.f32.mrf.mxu0
      %10125 = vdwg.mxu0
      %v10126 = vadd.f32 %v9931, %v10039
      %v10127 = vadd.f32 %v9932, %v10041
      %v10128 = vadd.f32 %v9933, %v10080
      %v10129 = vadd.f32 %v9934, %v10082
      %v10130 = vadd.f32 %v9935, %v10121
      %v10131 = vpack.c.bf16 %v6434, %v6434
      %s10132 = scalar_lea.vmem %s282, 2400
      %v10133 = vld [vmem:[%s10132] sm:$0xff]
      %v10134 = vld [vmem:[%s10132 + $0x8] sm:$0xff]
      %v10135 = vld [vmem:[%s10132 + $0x10] sm:$0xf]
      %v10136 = vld [vmem:[%s10132 + $0x14] sm:$0xff]
      %v10137 = vld [vmem:[%s10132 + $0x1c] sm:$0xff]
      %v10138 = vld [vmem:[%s10132 + $0x24] sm:$0xf]
      %v10139 = vld [vmem:[%s10132 + $0x28] sm:$0x33]
      %v10140 = vld [vmem:[%s10132 + $0x30] sm:$0x33]
      %v10141 = vld [vmem:[%s10132 + $0x38] sm:$0x3]
      %v10151 = vunpack.c.l.b16 %v10133
      %v10152 = vunpack.c.h.b16 %v10133
      %v10153 = vunpack.c.l.b16 %v10134
      %v10154 = vunpack.c.h.b16 %v10134
      %v10155 = vunpack.c.l.b16 %v10135
      %v10156 = vunpack.c.l.b16 %v10136
      %v10157 = vunpack.c.h.b16 %v10136
      %v10158 = vunpack.c.l.b16 %v10137
      %v10159 = vunpack.c.h.b16 %v10137
      %v10160 = vunpack.c.l.b16 %v10138
      %v10161 = vunpack.c.l.b16 %v10139
      %v10162 = vunpack.c.h.b16 %v10139
      %v10163 = vunpack.c.l.b16 %v10140
      %v10164 = vunpack.c.h.b16 %v10140
      %v10165 = vunpack.c.l.b16 %v10141
      %v10166 = vpack.c.b16 %v10156, %v10151
      %v10167 = vpack.c.b16 %v10157, %v10152
      %v10168 = vpack.c.b16 %v10158, %v10153
      %v10169 = vpack.c.b16 %v10159, %v10154
      %v10170 = vpack.c.b16 %v10160, %v10155
      %v10171 = vpack.c.b16 %v10161, %v10161
      %v10172 = vpack.c.b16 %v10162, %v10162
      %v10173 = vpack.c.b16 %v10163, %v10163
      %v10174 = vpack.c.b16 %v10164, %v10164
      %v10175 = vpack.c.b16 %v10165, %v10165
      %v10182 = vsel %vm334, %v10131, 0
      %v10185 = vsel %vm1188, %v10171, 0
      %v10188 = vsel %vm1188, %v10172, 0
      %v10191 = vsel %vm1188, %v10173, 0
      %v10194 = vsel %vm1188, %v10174, 0
      %v10197 = vsel %vm1188, %v10175, 0
      %10199 = vmatprep.subr.bf16.mxu0 0
      %10200 = vmatpush1.bf16.msra.mxu0 0
      %10201 = vmatprep.subr.bf16.mxu0 0
      %10202 = vmatpush1.bf16.msra.mxu0 0
      %10203 = vmatprep.subr.bf16.mxu0 0
      %10204 = vmatpush1.bf16.msra.mxu0 0
      %10205 = vmatprep.subr.bf16.mxu0 0
      %10206 = vmatpush1.bf16.msra.mxu0 0
      %10207 = vmatprep.subr.bf16.mxu0 0
      %10208 = vmatpush1.bf16.msra.mxu0 0
      %10209 = vmatprep.subr.bf16.mxu0 0
      %10210 = vmatpush1.bf16.msra.mxu0 0
      %10211 = vmatprep.subr.bf16.mxu0 %v10188
      %10212 = vmatpush1.bf16.msra.mxu0 %v10185
      %10213 = vmatprep.subr.bf16.mxu0 %v10167
      %10214 = vmatpush1.bf16.msra.mxu0 %v10166
      %10215 = vmatprep.subr.bf16.mxu0 0
      %10216 = vmatpush2.bf16.msra.mxu0 0
      %10217 = vmatprep.subr.bf16.mxu0 0
      %10218 = vmatpush2.bf16.msra.mxu0 0
      %10219 = vmatprep.subr.bf16.mxu0 0
      %10220 = vmatpush2.bf16.msra.mxu0 0
      %10221 = vmatprep.subr.bf16.mxu0 0
      %10222 = vmatpush2.bf16.msra.mxu0 0
      %10223 = vmatprep.subr.bf16.mxu0 0
      %10224 = vmatpush2.bf16.msra.mxu0 0
      %10225 = vmatprep.subr.bf16.mxu0 0
      %10226 = vmatpush2.bf16.msra.mxu0 0
      %10227 = vmatprep.subr.bf16.mxu0 0
      %10228 = vmatpush2.bf16.msra.mxu0 0
      %10229 = vmatprep.subr.bf16.mxu0 0
      %10230 = vmatpush2.bf16.msra.mxu0 0
      %10231 = vmatprep.mubr.bf16.mxu0 0
      %10232 = vmatmul.mubr.bf16.gmra.mxu0 %v10182
      %v10233 = vpop.f32.mrf.mxu0
      %v10234 = vadd.f32 0.0, %v10233
      %v10235 = vpop.f32.mrf.mxu0
      %v10236 = vadd.f32 0.0, %v10235
      %v10237 = vpop.f32.mrf.mxu0
      %v10238 = vpop.f32.mrf.mxu0
      %10239 = vdwg.mxu0
      %10240 = vmatprep.subr.bf16.mxu0 0
      %10241 = vmatpush1.bf16.msra.mxu0 0
      %10242 = vmatprep.subr.bf16.mxu0 0
      %10243 = vmatpush1.bf16.msra.mxu0 0
      %10244 = vmatprep.subr.bf16.mxu0 0
      %10245 = vmatpush1.bf16.msra.mxu0 0
      %10246 = vmatprep.subr.bf16.mxu0 0
      %10247 = vmatpush1.bf16.msra.mxu0 0
      %10248 = vmatprep.subr.bf16.mxu0 0
      %10249 = vmatpush1.bf16.msra.mxu0 0
      %10250 = vmatprep.subr.bf16.mxu0 0
      %10251 = vmatpush1.bf16.msra.mxu0 0
      %10252 = vmatprep.subr.bf16.mxu0 %v10194
      %10253 = vmatpush1.bf16.msra.mxu0 %v10191
      %10254 = vmatprep.subr.bf16.mxu0 %v10169
      %10255 = vmatpush1.bf16.msra.mxu0 %v10168
      %10256 = vmatprep.subr.bf16.mxu0 0
      %10257 = vmatpush2.bf16.msra.mxu0 0
      %10258 = vmatprep.subr.bf16.mxu0 0
      %10259 = vmatpush2.bf16.msra.mxu0 0
      %10260 = vmatprep.subr.bf16.mxu0 0
      %10261 = vmatpush2.bf16.msra.mxu0 0
      %10262 = vmatprep.subr.bf16.mxu0 0
      %10263 = vmatpush2.bf16.msra.mxu0 0
      %10264 = vmatprep.subr.bf16.mxu0 0
      %10265 = vmatpush2.bf16.msra.mxu0 0
      %10266 = vmatprep.subr.bf16.mxu0 0
      %10267 = vmatpush2.bf16.msra.mxu0 0
      %10268 = vmatprep.subr.bf16.mxu0 0
      %10269 = vmatpush2.bf16.msra.mxu0 0
      %10270 = vmatprep.subr.bf16.mxu0 0
      %10271 = vmatpush2.bf16.msra.mxu0 0
      %10272 = vmatprep.mubr.bf16.mxu0 0
      %10273 = vmatmul.mubr.bf16.gmra.mxu0 %v10182
      %v10274 = vpop.f32.mrf.mxu0
      %v10275 = vadd.f32 0.0, %v10274
      %v10276 = vpop.f32.mrf.mxu0
      %v10277 = vadd.f32 0.0, %v10276
      %v10278 = vpop.f32.mrf.mxu0
      %v10279 = vpop.f32.mrf.mxu0
      %10280 = vdwg.mxu0
      %10281 = vmatprep.subr.bf16.mxu0 0
      %10282 = vmatpush1.bf16.msra.mxu0 0
      %10283 = vmatprep.subr.bf16.mxu0 0
      %10284 = vmatpush1.bf16.msra.mxu0 0
      %10285 = vmatprep.subr.bf16.mxu0 0
      %10286 = vmatpush1.bf16.msra.mxu0 0
      %10287 = vmatprep.subr.bf16.mxu0 0
      %10288 = vmatpush1.bf16.msra.mxu0 0
      %10289 = vmatprep.subr.bf16.mxu0 0
      %10290 = vmatpush1.bf16.msra.mxu0 0
      %10291 = vmatprep.subr.bf16.mxu0 0
      %10292 = vmatpush1.bf16.msra.mxu0 0
      %10293 = vmatprep.subr.bf16.mxu0 0
      %10294 = vmatpush1.bf16.msra.mxu0 %v10197
      %10295 = vmatprep.subr.bf16.mxu0 0
      %10296 = vmatpush1.bf16.msra.mxu0 %v10170
      %10297 = vmatprep.subr.bf16.mxu0 0
      %10298 = vmatpush2.bf16.msra.mxu0 0
      %10299 = vmatprep.subr.bf16.mxu0 0
      %10300 = vmatpush2.bf16.msra.mxu0 0
      %10301 = vmatprep.subr.bf16.mxu0 0
      %10302 = vmatpush2.bf16.msra.mxu0 0
      %10303 = vmatprep.subr.bf16.mxu0 0
      %10304 = vmatpush2.bf16.msra.mxu0 0
      %10305 = vmatprep.subr.bf16.mxu0 0
      %10306 = vmatpush2.bf16.msra.mxu0 0
      %10307 = vmatprep.subr.bf16.mxu0 0
      %10308 = vmatpush2.bf16.msra.mxu0 0
      %10309 = vmatprep.subr.bf16.mxu0 0
      %10310 = vmatpush2.bf16.msra.mxu0 0
      %10311 = vmatprep.subr.bf16.mxu0 0
      %10312 = vmatpush2.bf16.msra.mxu0 0
      %10313 = vmatprep.mubr.bf16.mxu0 0
      %10314 = vmatmul.mubr.bf16.gmra.mxu0 %v10182
      %v10315 = vpop.f32.mrf.mxu0
      %v10316 = vadd.f32 0.0, %v10315
      %v10317 = vpop.f32.mrf.mxu0
      %v10318 = vpop.f32.mrf.mxu0
      %v10319 = vpop.f32.mrf.mxu0
      %10320 = vdwg.mxu0
      %v10321 = vadd.f32 %v10126, %v10234
      %v10322 = vadd.f32 %v10127, %v10236
      %v10323 = vadd.f32 %v10128, %v10275
      %v10324 = vadd.f32 %v10129, %v10277
      %v10325 = vadd.f32 %v10130, %v10316
      %v10326 = vpack.c.bf16 %v6435, %v6435
      %s10327 = scalar_lea.vmem %s282, 2460
      %v10328 = vld [vmem:[%s10327] sm:$0xff]
      %v10329 = vld [vmem:[%s10327 + $0x8] sm:$0xff]
      %v10330 = vld [vmem:[%s10327 + $0x10] sm:$0xf]
      %v10331 = vld [vmem:[%s10327 + $0x14] sm:$0xff]
      %v10332 = vld [vmem:[%s10327 + $0x1c] sm:$0xff]
      %v10333 = vld [vmem:[%s10327 + $0x24] sm:$0xf]
      %v10334 = vld [vmem:[%s10327 + $0x28] sm:$0x33]
      %v10335 = vld [vmem:[%s10327 + $0x30] sm:$0x33]
      %v10336 = vld [vmem:[%s10327 + $0x38] sm:$0x3]
      %v10346 = vunpack.c.l.b16 %v10328
      %v10347 = vunpack.c.h.b16 %v10328
      %v10348 = vunpack.c.l.b16 %v10329
      %v10349 = vunpack.c.h.b16 %v10329
      %v10350 = vunpack.c.l.b16 %v10330
      %v10351 = vunpack.c.l.b16 %v10331
      %v10352 = vunpack.c.h.b16 %v10331
      %v10353 = vunpack.c.l.b16 %v10332
      %v10354 = vunpack.c.h.b16 %v10332
      %v10355 = vunpack.c.l.b16 %v10333
      %v10356 = vunpack.c.l.b16 %v10334
      %v10357 = vunpack.c.h.b16 %v10334
      %v10358 = vunpack.c.l.b16 %v10335
      %v10359 = vunpack.c.h.b16 %v10335
      %v10360 = vunpack.c.l.b16 %v10336
      %v10361 = vpack.c.b16 %v10351, %v10346
      %v10362 = vpack.c.b16 %v10352, %v10347
      %v10363 = vpack.c.b16 %v10353, %v10348
      %v10364 = vpack.c.b16 %v10354, %v10349
      %v10365 = vpack.c.b16 %v10355, %v10350
      %v10366 = vpack.c.b16 %v10356, %v10356
      %v10367 = vpack.c.b16 %v10357, %v10357
      %v10368 = vpack.c.b16 %v10358, %v10358
      %v10369 = vpack.c.b16 %v10359, %v10359
      %v10370 = vpack.c.b16 %v10360, %v10360
      %v10377 = vsel %vm334, %v10326, 0
      %v10380 = vsel %vm1188, %v10366, 0
      %v10383 = vsel %vm1188, %v10367, 0
      %v10386 = vsel %vm1188, %v10368, 0
      %v10389 = vsel %vm1188, %v10369, 0
      %v10392 = vsel %vm1188, %v10370, 0
      %10394 = vmatprep.subr.bf16.mxu0 0
      %10395 = vmatpush1.bf16.msra.mxu0 0
      %10396 = vmatprep.subr.bf16.mxu0 0
      %10397 = vmatpush1.bf16.msra.mxu0 0
      %10398 = vmatprep.subr.bf16.mxu0 0
      %10399 = vmatpush1.bf16.msra.mxu0 0
      %10400 = vmatprep.subr.bf16.mxu0 0
      %10401 = vmatpush1.bf16.msra.mxu0 0
      %10402 = vmatprep.subr.bf16.mxu0 0
      %10403 = vmatpush1.bf16.msra.mxu0 0
      %10404 = vmatprep.subr.bf16.mxu0 0
      %10405 = vmatpush1.bf16.msra.mxu0 0
      %10406 = vmatprep.subr.bf16.mxu0 %v10383
      %10407 = vmatpush1.bf16.msra.mxu0 %v10380
      %10408 = vmatprep.subr.bf16.mxu0 %v10362
      %10409 = vmatpush1.bf16.msra.mxu0 %v10361
      %10410 = vmatprep.subr.bf16.mxu0 0
      %10411 = vmatpush2.bf16.msra.mxu0 0
      %10412 = vmatprep.subr.bf16.mxu0 0
      %10413 = vmatpush2.bf16.msra.mxu0 0
      %10414 = vmatprep.subr.bf16.mxu0 0
      %10415 = vmatpush2.bf16.msra.mxu0 0
      %10416 = vmatprep.subr.bf16.mxu0 0
      %10417 = vmatpush2.bf16.msra.mxu0 0
      %10418 = vmatprep.subr.bf16.mxu0 0
      %10419 = vmatpush2.bf16.msra.mxu0 0
      %10420 = vmatprep.subr.bf16.mxu0 0
      %10421 = vmatpush2.bf16.msra.mxu0 0
      %10422 = vmatprep.subr.bf16.mxu0 0
      %10423 = vmatpush2.bf16.msra.mxu0 0
      %10424 = vmatprep.subr.bf16.mxu0 0
      %10425 = vmatpush2.bf16.msra.mxu0 0
      %10426 = vmatprep.mubr.bf16.mxu0 0
      %10427 = vmatmul.mubr.bf16.gmra.mxu0 %v10377
      %v10428 = vpop.f32.mrf.mxu0
      %v10429 = vadd.f32 0.0, %v10428
      %v10430 = vpop.f32.mrf.mxu0
      %v10431 = vadd.f32 0.0, %v10430
      %v10432 = vpop.f32.mrf.mxu0
      %v10433 = vpop.f32.mrf.mxu0
      %10434 = vdwg.mxu0
      %10435 = vmatprep.subr.bf16.mxu0 0
      %10436 = vmatpush1.bf16.msra.mxu0 0
      %10437 = vmatprep.subr.bf16.mxu0 0
      %10438 = vmatpush1.bf16.msra.mxu0 0
      %10439 = vmatprep.subr.bf16.mxu0 0
      %10440 = vmatpush1.bf16.msra.mxu0 0
      %10441 = vmatprep.subr.bf16.mxu0 0
      %10442 = vmatpush1.bf16.msra.mxu0 0
      %10443 = vmatprep.subr.bf16.mxu0 0
      %10444 = vmatpush1.bf16.msra.mxu0 0
      %10445 = vmatprep.subr.bf16.mxu0 0
      %10446 = vmatpush1.bf16.msra.mxu0 0
      %10447 = vmatprep.subr.bf16.mxu0 %v10389
      %10448 = vmatpush1.bf16.msra.mxu0 %v10386
      %10449 = vmatprep.subr.bf16.mxu0 %v10364
      %10450 = vmatpush1.bf16.msra.mxu0 %v10363
      %10451 = vmatprep.subr.bf16.mxu0 0
      %10452 = vmatpush2.bf16.msra.mxu0 0
      %10453 = vmatprep.subr.bf16.mxu0 0
      %10454 = vmatpush2.bf16.msra.mxu0 0
      %10455 = vmatprep.subr.bf16.mxu0 0
      %10456 = vmatpush2.bf16.msra.mxu0 0
      %10457 = vmatprep.subr.bf16.mxu0 0
      %10458 = vmatpush2.bf16.msra.mxu0 0
      %10459 = vmatprep.subr.bf16.mxu0 0
      %10460 = vmatpush2.bf16.msra.mxu0 0
      %10461 = vmatprep.subr.bf16.mxu0 0
      %10462 = vmatpush2.bf16.msra.mxu0 0
      %10463 = vmatprep.subr.bf16.mxu0 0
      %10464 = vmatpush2.bf16.msra.mxu0 0
      %10465 = vmatprep.subr.bf16.mxu0 0
      %10466 = vmatpush2.bf16.msra.mxu0 0
      %10467 = vmatprep.mubr.bf16.mxu0 0
      %10468 = vmatmul.mubr.bf16.gmra.mxu0 %v10377
      %v10469 = vpop.f32.mrf.mxu0
      %v10470 = vadd.f32 0.0, %v10469
      %v10471 = vpop.f32.mrf.mxu0
      %v10472 = vadd.f32 0.0, %v10471
      %v10473 = vpop.f32.mrf.mxu0
      %v10474 = vpop.f32.mrf.mxu0
      %10475 = vdwg.mxu0
      %10476 = vmatprep.subr.bf16.mxu0 0
      %10477 = vmatpush1.bf16.msra.mxu0 0
      %10478 = vmatprep.subr.bf16.mxu0 0
      %10479 = vmatpush1.bf16.msra.mxu0 0
      %10480 = vmatprep.subr.bf16.mxu0 0
      %10481 = vmatpush1.bf16.msra.mxu0 0
      %10482 = vmatprep.subr.bf16.mxu0 0
      %10483 = vmatpush1.bf16.msra.mxu0 0
      %10484 = vmatprep.subr.bf16.mxu0 0
      %10485 = vmatpush1.bf16.msra.mxu0 0
      %10486 = vmatprep.subr.bf16.mxu0 0
      %10487 = vmatpush1.bf16.msra.mxu0 0
      %10488 = vmatprep.subr.bf16.mxu0 0
      %10489 = vmatpush1.bf16.msra.mxu0 %v10392
      %10490 = vmatprep.subr.bf16.mxu0 0
      %10491 = vmatpush1.bf16.msra.mxu0 %v10365
      %10492 = vmatprep.subr.bf16.mxu0 0
      %10493 = vmatpush2.bf16.msra.mxu0 0
      %10494 = vmatprep.subr.bf16.mxu0 0
      %10495 = vmatpush2.bf16.msra.mxu0 0
      %10496 = vmatprep.subr.bf16.mxu0 0
      %10497 = vmatpush2.bf16.msra.mxu0 0
      %10498 = vmatprep.subr.bf16.mxu0 0
      %10499 = vmatpush2.bf16.msra.mxu0 0
      %10500 = vmatprep.subr.bf16.mxu0 0
      %10501 = vmatpush2.bf16.msra.mxu0 0
      %10502 = vmatprep.subr.bf16.mxu0 0
      %10503 = vmatpush2.bf16.msra.mxu0 0
      %10504 = vmatprep.subr.bf16.mxu0 0
      %10505 = vmatpush2.bf16.msra.mxu0 0
      %10506 = vmatprep.subr.bf16.mxu0 0
      %10507 = vmatpush2.bf16.msra.mxu0 0
      %10508 = vmatprep.mubr.bf16.mxu0 0
      %10509 = vmatmul.mubr.bf16.gmra.mxu0 %v10377
      %v10510 = vpop.f32.mrf.mxu0
      %v10511 = vadd.f32 0.0, %v10510
      %v10512 = vpop.f32.mrf.mxu0
      %v10513 = vpop.f32.mrf.mxu0
      %v10514 = vpop.f32.mrf.mxu0
      %10515 = vdwg.mxu0
      %v10516 = vadd.f32 %v10321, %v10429
      %v10517 = vadd.f32 %v10322, %v10431
      %v10518 = vadd.f32 %v10323, %v10470
      %v10519 = vadd.f32 %v10324, %v10472
      %v10520 = vadd.f32 %v10325, %v10511
      %s10521 = scalar_lea.vmem %s295, 6
      %v10522 = vld [vmem:[%s10521] sm:$0x1f]
      %v10524 = vlaneseq
      %v10525 = vshrl.u32 %v10524, 7
      %v10526 = vsub.s32 0, %v10525
      %v10527 = vrot.slane %v10522, %v10526
      %v10528 = vlaneseq
      %v10529 = vshrl.u32 %v10528, 7
      %v10530 = vsub.s32 1, %v10529
      %v10531 = vrot.slane %v10522, %v10530
      %v10532 = vlaneseq
      %v10533 = vshrl.u32 %v10532, 7
      %v10534 = vsub.s32 2, %v10533
      %v10535 = vrot.slane %v10522, %v10534
      %v10536 = vlaneseq
      %v10537 = vshrl.u32 %v10536, 7
      %v10538 = vsub.s32 3, %v10537
      %v10539 = vrot.slane %v10522, %v10538
      %v10540 = vlaneseq
      %v10541 = vshrl.u32 %v10540, 7
      %v10542 = vsub.s32 4, %v10541
      %v10543 = vrot.slane %v10522, %v10542
      %v10549 = vadd.f32 %v10516, %v10527
      %v10550 = vadd.f32 %v10517, %v10531
      %v10551 = vadd.f32 %v10518, %v10535
      %v10552 = vadd.f32 %v10519, %v10539
      %v10553 = vadd.f32 %v10520, %v10543
      %v10554 = vmax.f32 %v10549, 0.0
      %v10555 = vmax.f32 %v10550, 0.0
      %v10556 = vmax.f32 %v10551, 0.0
      %v10557 = vmax.f32 %v10552, 0.0
      %v10558 = vmax.f32 %v10553, 0.0
      %v10559 = vpack.c.bf16 %v10554, %v10554
      %v10560 = vpack.c.bf16 %v10555, %v10555
      %v10561 = vpack.c.bf16 %v10556, %v10556
      %v10562 = vpack.c.bf16 %v10557, %v10557
      %v10563 = vpack.c.bf16 %v10558, %v10558
      %s10564 = scalar_lea.vmem %s289, 320
      %v10565 = vld [vmem:[%s10564] sm:$0xf]
      %v10566 = vld [vmem:[%s10564 + $0x4] sm:$0xf]
      %v10567 = vld [vmem:[%s10564 + $0x8] sm:$0xf]
      %v10568 = vld [vmem:[%s10564 + $0xc] sm:$0xf]
      %v10569 = vld [vmem:[%s10564 + $0x10] sm:$0xf]
      %v10570 = vld [vmem:[%s10564 + $0x14] sm:$0xf]
      %v10571 = vld [vmem:[%s10564 + $0x18] sm:$0xf]
      %v10572 = vld [vmem:[%s10564 + $0x1c] sm:$0xf]
      %v10573 = vld [vmem:[%s10564 + $0x20] sm:$0xf]
      %v10574 = vld [vmem:[%s10564 + $0x24] sm:$0xf]
      %v10575 = vld [vmem:[%s10564 + $0x28] sm:$0xf]
      %v10576 = vld [vmem:[%s10564 + $0x2c] sm:$0xf]
      %v10577 = vld [vmem:[%s10564 + $0x30] sm:$0xf]
      %v10578 = vld [vmem:[%s10564 + $0x34] sm:$0xf]
      %v10579 = vld [vmem:[%s10564 + $0x38] sm:$0xf]
      %v10580 = vld [vmem:[%s10564 + $0x3c] sm:$0xf]
      %v10581 = vld [vmem:[%s10564 + $0x40] sm:$0xf]
      %v10582 = vld [vmem:[%s10564 + $0x44] sm:$0xf]
      %v10583 = vld [vmem:[%s10564 + $0x48] sm:$0xf]
      %v10584 = vld [vmem:[%s10564 + $0x4c] sm:$0xf]
      %v10585 = vld [vmem:[%s10564 + $0x50] sm:$0xf]
      %v10586 = vld [vmem:[%s10564 + $0x54] sm:$0xf]
      %v10587 = vld [vmem:[%s10564 + $0x58] sm:$0xf]
      %v10588 = vld [vmem:[%s10564 + $0x5c] sm:$0xf]
      %v10589 = vld [vmem:[%s10564 + $0x60] sm:$0xf]
      %v10590 = vld [vmem:[%s10564 + $0x64] sm:$0xf]
      %v10591 = vld [vmem:[%s10564 + $0x68] sm:$0xf]
      %v10592 = vld [vmem:[%s10564 + $0x6c] sm:$0xf]
      %v10593 = vld [vmem:[%s10564 + $0x70] sm:$0xf]
      %v10594 = vld [vmem:[%s10564 + $0x74] sm:$0xf]
      %v10595 = vld [vmem:[%s10564 + $0x78] sm:$0xf]
      %v10596 = vld [vmem:[%s10564 + $0x7c] sm:$0xf]
      %v10597 = vld [vmem:[%s10564 + $0x80] sm:$0xf]
      %v10598 = vld [vmem:[%s10564 + $0x84] sm:$0xf]
      %v10599 = vld [vmem:[%s10564 + $0x88] sm:$0xf]
      %v10600 = vld [vmem:[%s10564 + $0x8c] sm:$0xf]
      %v10601 = vld [vmem:[%s10564 + $0x90] sm:$0xf]
      %v10602 = vld [vmem:[%s10564 + $0x94] sm:$0xf]
      %v10603 = vld [vmem:[%s10564 + $0x98] sm:$0xf]
      %v10604 = vld [vmem:[%s10564 + $0x9c] sm:$0xf]
      %v10605 = vld [vmem:[%s10564 + $0xa0] sm:$0xf]
      %v10606 = vld [vmem:[%s10564 + $0xa4] sm:$0xf]
      %v10607 = vld [vmem:[%s10564 + $0xa8] sm:$0xf]
      %v10608 = vld [vmem:[%s10564 + $0xac] sm:$0xf]
      %v10609 = vld [vmem:[%s10564 + $0xb0] sm:$0xf]
      %v10610 = vld [vmem:[%s10564 + $0xb4] sm:$0xf]
      %v10611 = vld [vmem:[%s10564 + $0xb8] sm:$0xf]
      %v10612 = vld [vmem:[%s10564 + $0xbc] sm:$0xf]
      %v10613 = vld [vmem:[%s10564 + $0xc0] sm:$0xf]
      %v10614 = vld [vmem:[%s10564 + $0xc4] sm:$0xf]
      %v10615 = vld [vmem:[%s10564 + $0xc8] sm:$0xf]
      %v10616 = vld [vmem:[%s10564 + $0xcc] sm:$0xf]
      %v10617 = vld [vmem:[%s10564 + $0xd0] sm:$0xf]
      %v10618 = vld [vmem:[%s10564 + $0xd4] sm:$0xf]
      %v10619 = vld [vmem:[%s10564 + $0xd8] sm:$0xf]
      %v10620 = vld [vmem:[%s10564 + $0xdc] sm:$0xf]
      %v10621 = vld [vmem:[%s10564 + $0xe0] sm:$0xf]
      %v10622 = vld [vmem:[%s10564 + $0xe4] sm:$0xf]
      %v10623 = vld [vmem:[%s10564 + $0xe8] sm:$0xf]
      %v10624 = vld [vmem:[%s10564 + $0xec] sm:$0xf]
      %v10625 = vld [vmem:[%s10564 + $0xf0] sm:$0xf]
      %v10626 = vld [vmem:[%s10564 + $0xf4] sm:$0xf]
      %v10627 = vld [vmem:[%s10564 + $0xf8] sm:$0xf]
      %v10628 = vld [vmem:[%s10564 + $0xfc] sm:$0xf]
      %v10629 = vld [vmem:[%s10564 + $0x100] sm:$0xf]
      %v10630 = vld [vmem:[%s10564 + $0x104] sm:$0xf]
      %v10631 = vld [vmem:[%s10564 + $0x108] sm:$0xf]
      %v10632 = vld [vmem:[%s10564 + $0x10c] sm:$0xf]
      %v10633 = vld [vmem:[%s10564 + $0x110] sm:$0xf]
      %v10634 = vld [vmem:[%s10564 + $0x114] sm:$0xf]
      %v10635 = vld [vmem:[%s10564 + $0x118] sm:$0xf]
      %v10636 = vld [vmem:[%s10564 + $0x11c] sm:$0xf]
      %v10637 = vld [vmem:[%s10564 + $0x120] sm:$0xf]
      %v10638 = vld [vmem:[%s10564 + $0x124] sm:$0xf]
      %v10639 = vld [vmem:[%s10564 + $0x128] sm:$0xf]
      %v10640 = vld [vmem:[%s10564 + $0x12c] sm:$0xf]
      %v10641 = vld [vmem:[%s10564 + $0x130] sm:$0xf]
      %v10642 = vld [vmem:[%s10564 + $0x134] sm:$0xf]
      %v10643 = vld [vmem:[%s10564 + $0x138] sm:$0xf]
      %v10644 = vld [vmem:[%s10564 + $0x13c] sm:$0xf]
      %v10645 = vld [vmem:[%s10521 + $0x5] sm:$0x1]
      %v10647 = vlaneseq
      %v10648 = vshrl.u32 %v10647, 7
      %v10649 = vsub.s32 0, %v10648
      %v10650 = vrot.slane %v10645, %v10649
      %v10732 = vunpack.c.l.b16 %v10565
      %v10733 = vunpack.c.l.b16 %v10566
      %v10734 = vunpack.c.l.b16 %v10567
      %v10735 = vunpack.c.l.b16 %v10568
      %v10736 = vunpack.c.l.b16 %v10569
      %v10737 = vunpack.c.l.b16 %v10570
      %v10738 = vunpack.c.l.b16 %v10571
      %v10739 = vunpack.c.l.b16 %v10572
      %v10740 = vunpack.c.l.b16 %v10573
      %v10741 = vunpack.c.l.b16 %v10574
      %v10742 = vunpack.c.l.b16 %v10575
      %v10743 = vunpack.c.l.b16 %v10576
      %v10744 = vunpack.c.l.b16 %v10577
      %v10745 = vunpack.c.l.b16 %v10578
      %v10746 = vunpack.c.l.b16 %v10579
      %v10747 = vunpack.c.l.b16 %v10580
      %v10748 = vunpack.c.l.b16 %v10581
      %v10749 = vunpack.c.l.b16 %v10582
      %v10750 = vunpack.c.l.b16 %v10583
      %v10751 = vunpack.c.l.b16 %v10584
      %v10752 = vunpack.c.l.b16 %v10585
      %v10753 = vunpack.c.l.b16 %v10586
      %v10754 = vunpack.c.l.b16 %v10587
      %v10755 = vunpack.c.l.b16 %v10588
      %v10756 = vunpack.c.l.b16 %v10589
      %v10757 = vunpack.c.l.b16 %v10590
      %v10758 = vunpack.c.l.b16 %v10591
      %v10759 = vunpack.c.l.b16 %v10592
      %v10760 = vunpack.c.l.b16 %v10593
      %v10761 = vunpack.c.l.b16 %v10594
      %v10762 = vunpack.c.l.b16 %v10595
      %v10763 = vunpack.c.l.b16 %v10596
      %v10764 = vunpack.c.l.b16 %v10597
      %v10765 = vunpack.c.l.b16 %v10598
      %v10766 = vunpack.c.l.b16 %v10599
      %v10767 = vunpack.c.l.b16 %v10600
      %v10768 = vunpack.c.l.b16 %v10601
      %v10769 = vunpack.c.l.b16 %v10602
      %v10770 = vunpack.c.l.b16 %v10603
      %v10771 = vunpack.c.l.b16 %v10604
      %v10772 = vunpack.c.l.b16 %v10605
      %v10773 = vunpack.c.l.b16 %v10606
      %v10774 = vunpack.c.l.b16 %v10607
      %v10775 = vunpack.c.l.b16 %v10608
      %v10776 = vunpack.c.l.b16 %v10609
      %v10777 = vunpack.c.l.b16 %v10610
      %v10778 = vunpack.c.l.b16 %v10611
      %v10779 = vunpack.c.l.b16 %v10612
      %v10780 = vunpack.c.l.b16 %v10613
      %v10781 = vunpack.c.l.b16 %v10614
      %v10782 = vunpack.c.l.b16 %v10615
      %v10783 = vunpack.c.l.b16 %v10616
      %v10784 = vunpack.c.l.b16 %v10617
      %v10785 = vunpack.c.l.b16 %v10618
      %v10786 = vunpack.c.l.b16 %v10619
      %v10787 = vunpack.c.l.b16 %v10620
      %v10788 = vunpack.c.l.b16 %v10621
      %v10789 = vunpack.c.l.b16 %v10622
      %v10790 = vunpack.c.l.b16 %v10623
      %v10791 = vunpack.c.l.b16 %v10624
      %v10792 = vunpack.c.l.b16 %v10625
      %v10793 = vunpack.c.l.b16 %v10626
      %v10794 = vunpack.c.l.b16 %v10627
      %v10795 = vunpack.c.l.b16 %v10628
      %v10796 = vunpack.c.l.b16 %v10629
      %v10797 = vunpack.c.l.b16 %v10630
      %v10798 = vunpack.c.l.b16 %v10631
      %v10799 = vunpack.c.l.b16 %v10632
      %v10800 = vunpack.c.l.b16 %v10633
      %v10801 = vunpack.c.l.b16 %v10634
      %v10802 = vunpack.c.l.b16 %v10635
      %v10803 = vunpack.c.l.b16 %v10636
      %v10804 = vunpack.c.l.b16 %v10637
      %v10805 = vunpack.c.l.b16 %v10638
      %v10806 = vunpack.c.l.b16 %v10639
      %v10807 = vunpack.c.l.b16 %v10640
      %v10808 = vunpack.c.l.b16 %v10641
      %v10809 = vunpack.c.l.b16 %v10642
      %v10810 = vunpack.c.l.b16 %v10643
      %v10811 = vunpack.c.l.b16 %v10644
      %v10812 = vpack.c.b16 %v10733, %v10732
      %v10813 = vpack.c.b16 %v10735, %v10734
      %v10814 = vpack.c.b16 %v10737, %v10736
      %v10815 = vpack.c.b16 %v10739, %v10738
      %v10816 = vpack.c.b16 %v10741, %v10740
      %v10817 = vpack.c.b16 %v10743, %v10742
      %v10818 = vpack.c.b16 %v10745, %v10744
      %v10819 = vpack.c.b16 %v10747, %v10746
      %v10820 = vpack.c.b16 %v10749, %v10748
      %v10821 = vpack.c.b16 %v10751, %v10750
      %v10822 = vpack.c.b16 %v10753, %v10752
      %v10823 = vpack.c.b16 %v10755, %v10754
      %v10824 = vpack.c.b16 %v10757, %v10756
      %v10825 = vpack.c.b16 %v10759, %v10758
      %v10826 = vpack.c.b16 %v10761, %v10760
      %v10827 = vpack.c.b16 %v10763, %v10762
      %v10828 = vpack.c.b16 %v10765, %v10764
      %v10829 = vpack.c.b16 %v10767, %v10766
      %v10830 = vpack.c.b16 %v10769, %v10768
      %v10831 = vpack.c.b16 %v10771, %v10770
      %v10832 = vpack.c.b16 %v10773, %v10772
      %v10833 = vpack.c.b16 %v10775, %v10774
      %v10834 = vpack.c.b16 %v10777, %v10776
      %v10835 = vpack.c.b16 %v10779, %v10778
      %v10836 = vpack.c.b16 %v10781, %v10780
      %v10837 = vpack.c.b16 %v10783, %v10782
      %v10838 = vpack.c.b16 %v10785, %v10784
      %v10839 = vpack.c.b16 %v10787, %v10786
      %v10840 = vpack.c.b16 %v10789, %v10788
      %v10841 = vpack.c.b16 %v10791, %v10790
      %v10842 = vpack.c.b16 %v10793, %v10792
      %v10843 = vpack.c.b16 %v10795, %v10794
      %v10844 = vpack.c.b16 %v10797, %v10796
      %v10845 = vpack.c.b16 %v10799, %v10798
      %v10846 = vpack.c.b16 %v10801, %v10800
      %v10847 = vpack.c.b16 %v10803, %v10802
      %v10848 = vpack.c.b16 %v10805, %v10804
      %v10849 = vpack.c.b16 %v10807, %v10806
      %v10850 = vpack.c.b16 %v10809, %v10808
      %v10851 = vpack.c.b16 %v10811, %v10810
      %10892 = vmatprep.subr.bf16.mxu0 0
      %10893 = vmatpush1.bf16.msra.mxu0 %v10819
      %10894 = vmatprep.subr.bf16.mxu0 0
      %10895 = vmatpush1.bf16.msra.mxu0 %v10818
      %10896 = vmatprep.subr.bf16.mxu0 0
      %10897 = vmatpush1.bf16.msra.mxu0 %v10817
      %10898 = vmatprep.subr.bf16.mxu0 0
      %10899 = vmatpush1.bf16.msra.mxu0 %v10816
      %10900 = vmatprep.subr.bf16.mxu0 0
      %10901 = vmatpush1.bf16.msra.mxu0 %v10815
      %10902 = vmatprep.subr.bf16.mxu0 0
      %10903 = vmatpush1.bf16.msra.mxu0 %v10814
      %10904 = vmatprep.subr.bf16.mxu0 0
      %10905 = vmatpush1.bf16.msra.mxu0 %v10813
      %10906 = vmatprep.subr.bf16.mxu0 0
      %10907 = vmatpush1.bf16.msra.mxu0 %v10812
      %10908 = vmatprep.subr.bf16.mxu0 0
      %10909 = vmatpush2.bf16.msra.mxu0 %v10827
      %10910 = vmatprep.subr.bf16.mxu0 0
      %10911 = vmatpush2.bf16.msra.mxu0 %v10826
      %10912 = vmatprep.subr.bf16.mxu0 0
      %10913 = vmatpush2.bf16.msra.mxu0 %v10825
      %10914 = vmatprep.subr.bf16.mxu0 0
      %10915 = vmatpush2.bf16.msra.mxu0 %v10824
      %10916 = vmatprep.subr.bf16.mxu0 0
      %10917 = vmatpush2.bf16.msra.mxu0 %v10823
      %10918 = vmatprep.subr.bf16.mxu0 0
      %10919 = vmatpush2.bf16.msra.mxu0 %v10822
      %10920 = vmatprep.subr.bf16.mxu0 0
      %10921 = vmatpush2.bf16.msra.mxu0 %v10821
      %10922 = vmatprep.subr.bf16.mxu0 0
      %10923 = vmatpush2.bf16.msra.mxu0 %v10820
      %10924 = vmatprep.mubr.bf16.mxu0 %v10560
      %10925 = vmatmul.mubr.bf16.gmra.mxu0 %v10559
      %v10926 = vpop.f32.mrf.mxu0
      %v10927 = vadd.f32 %v10650, %v10926
      %v10928 = vpop.f32.mrf.mxu0
      %v10929 = vpop.f32.mrf.mxu0
      %v10930 = vpop.f32.mrf.mxu0
      %10931 = vdwg.mxu0
      %10932 = vmatprep.subr.bf16.mxu0 0
      %10933 = vmatpush1.bf16.msra.mxu0 %v10835
      %10934 = vmatprep.subr.bf16.mxu0 0
      %10935 = vmatpush1.bf16.msra.mxu0 %v10834
      %10936 = vmatprep.subr.bf16.mxu0 0
      %10937 = vmatpush1.bf16.msra.mxu0 %v10833
      %10938 = vmatprep.subr.bf16.mxu0 0
      %10939 = vmatpush1.bf16.msra.mxu0 %v10832
      %10940 = vmatprep.subr.bf16.mxu0 0
      %10941 = vmatpush1.bf16.msra.mxu0 %v10831
      %10942 = vmatprep.subr.bf16.mxu0 0
      %10943 = vmatpush1.bf16.msra.mxu0 %v10830
      %10944 = vmatprep.subr.bf16.mxu0 0
      %10945 = vmatpush1.bf16.msra.mxu0 %v10829
      %10946 = vmatprep.subr.bf16.mxu0 0
      %10947 = vmatpush1.bf16.msra.mxu0 %v10828
      %10948 = vmatprep.subr.bf16.mxu0 0
      %10949 = vmatpush2.bf16.msra.mxu0 %v10843
      %10950 = vmatprep.subr.bf16.mxu0 0
      %10951 = vmatpush2.bf16.msra.mxu0 %v10842
      %10952 = vmatprep.subr.bf16.mxu0 0
      %10953 = vmatpush2.bf16.msra.mxu0 %v10841
      %10954 = vmatprep.subr.bf16.mxu0 0
      %10955 = vmatpush2.bf16.msra.mxu0 %v10840
      %10956 = vmatprep.subr.bf16.mxu0 0
      %10957 = vmatpush2.bf16.msra.mxu0 %v10839
      %10958 = vmatprep.subr.bf16.mxu0 0
      %10959 = vmatpush2.bf16.msra.mxu0 %v10838
      %10960 = vmatprep.subr.bf16.mxu0 0
      %10961 = vmatpush2.bf16.msra.mxu0 %v10837
      %10962 = vmatprep.subr.bf16.mxu0 0
      %10963 = vmatpush2.bf16.msra.mxu0 %v10836
      %10964 = vmatprep.mubr.bf16.mxu0 %v10562
      %10965 = vmatmul.mubr.bf16.gmra.mxu0 %v10561
      %v10966 = vpop.f32.mrf.mxu0
      %v10967 = vadd.f32 %v10927, %v10966
      %v10968 = vpop.f32.mrf.mxu0
      %v10969 = vpop.f32.mrf.mxu0
      %v10970 = vpop.f32.mrf.mxu0
      %10971 = vdwg.mxu0
      %10972 = vmatprep.subr.bf16.mxu0 0
      %10973 = vmatpush1.bf16.msra.mxu0 %v10851
      %10974 = vmatprep.subr.bf16.mxu0 0
      %10975 = vmatpush1.bf16.msra.mxu0 %v10850
      %10976 = vmatprep.subr.bf16.mxu0 0
      %10977 = vmatpush1.bf16.msra.mxu0 %v10849
      %10978 = vmatprep.subr.bf16.mxu0 0
      %10979 = vmatpush1.bf16.msra.mxu0 %v10848
      %10980 = vmatprep.subr.bf16.mxu0 0
      %10981 = vmatpush1.bf16.msra.mxu0 %v10847
      %10982 = vmatprep.subr.bf16.mxu0 0
      %10983 = vmatpush1.bf16.msra.mxu0 %v10846
      %10984 = vmatprep.subr.bf16.mxu0 0
      %10985 = vmatpush1.bf16.msra.mxu0 %v10845
      %10986 = vmatprep.subr.bf16.mxu0 0
      %10987 = vmatpush1.bf16.msra.mxu0 %v10844
      %10988 = vmatprep.subr.bf16.mxu0 0
      %10989 = vmatpush2.bf16.msra.mxu0 0
      %10990 = vmatprep.subr.bf16.mxu0 0
      %10991 = vmatpush2.bf16.msra.mxu0 0
      %10992 = vmatprep.subr.bf16.mxu0 0
      %10993 = vmatpush2.bf16.msra.mxu0 0
      %10994 = vmatprep.subr.bf16.mxu0 0
      %10995 = vmatpush2.bf16.msra.mxu0 0
      %10996 = vmatprep.subr.bf16.mxu0 0
      %10997 = vmatpush2.bf16.msra.mxu0 0
      %10998 = vmatprep.subr.bf16.mxu0 0
      %10999 = vmatpush2.bf16.msra.mxu0 0
      %11000 = vmatprep.subr.bf16.mxu0 0
      %11001 = vmatpush2.bf16.msra.mxu0 0
      %11002 = vmatprep.subr.bf16.mxu0 0
      %11003 = vmatpush2.bf16.msra.mxu0 0
      %11004 = vmatprep.mubr.bf16.mxu0 0
      %11005 = vmatmul.mubr.bf16.gmra.mxu0 %v10563
      %v11006 = vpop.f32.mrf.mxu0
      %v11007 = vadd.f32 %v10967, %v11006
      %v11008 = vpop.f32.mrf.mxu0
      %v11009 = vpop.f32.mrf.mxu0
      %v11010 = vpop.f32.mrf.mxu0
      %11011 = vdwg.mxu0
      %s11012 = scalar_lea.vmem %s301, 8
      %11013 = vst [vmem:[%s11012] sm:$0xff] %v11007
      %s11014 = smul.u32 2, %s16
      %p11015 = scmp.lt.s32.totalorder %s11014, 3
      %s11016 = scalar_select %p11015, %s11014, 3
      %s11017 = smul.addr %s11016, 8
      %s11018 = scalar_lea.vmem %s5, %s11017
      // Predicated region
      $region41: #{network_forward.1} parent=39 // pred_check
        %p11019 = pneg %p159
      $region42: #{network_forward.1} parent=39 // pred_check_branch
        %11021 = sbr.rel (%p11019) target = $region44
      $region43: #{network_forward.1} parent=39 // pred_region
        %s11022 = smul.u32 2, %s16
      $region44: #{network_forward.1} parent=39 // pred_fallthru
        _
    $region40: #{network_forward.1} parent=5 // pred_fallthru
      _
    %p11023 = scmp.le.s32.totalorder 2, %s11
    // Predicated region
    $region45: #{network_forward.1} parent=5 // pred_check
      %p11024 = pneg %p11023
    $region46: #{network_forward.1} parent=5 // pred_check_branch
      %11026 = sbr.rel (%p11024) target = $region48
    $region47: #{network_forward.1} parent=5 // pred_region
      %s11027 = ssub.s32 %s11, 2
      // Predicated region
      $region49: #{network_forward.1} parent=47 // pred_check
        %p11028 = pneg %p165
      $region50: #{network_forward.1} parent=47 // pred_check_branch
        %11030 = sbr.rel (%p11028) target = $region52
      $region51: #{network_forward.1} parent=47 // pred_region
        %s11031 = smul.u32 2, %s17
        %p11032 = scmp.lt.s32.totalorder %s11031, 3
        %s11033 = scalar_select %p11032, %s11031, 3
        %s11034 = smul.addr %s11033, 8
        %s11035 = scalar_lea.vmem %s5, %s11034
      $region52: #{network_forward.1} parent=47 // pred_fallthru
        _
    $region48: #{network_forward.1} parent=5 // pred_fallthru
      _
  $region6: #{network_forward.1} parent=0 // loop_footer
    %s15 = sadd.s32 1, %s11
  $region7: #{network_forward.1} parent=0 // loop_footer_branch
    %10 = sbr.rel target = $region3
  $region8: #{network_forward.1} parent=0 // loop_exit
    _

</llo_original>
